<compile_context>
chip_gen: v5e
topology: v5e:2x2
jax: 0.10.0
libtpu: 0.0.40
codegen_flags: <defaults>
</compile_context>

<pallas_src>
import functools

import jax
import jax.numpy as jnp
import numpy as np
from jax.experimental import pallas as pl
from jax.experimental.pallas import tpu as pltpu


# ----------------------------- fused Pallas kernel ---------------------------

def _lenet5_kernel(x_ref, m1_ref, b1_ref, m2_ref, b2_ref,
                   a1_ref, fb1_ref, a2_ref, fb2_ref, a3_ref, fb3_ref,
                   out_ref):
    """One batch tile (Bt samples), fully VMEM-resident.

    Column index is always (per-sample spatial index) * Bt + sample:
      x_ref : (1, 4, 36, 9*Bt)  residue-split padded input, X[j][h, q*Bt+b] = xp[h, 4q+j]
      pool1 : two (96, 8*Bt) halves (even / odd pooled column), rows = (c1, h1)
      pool2 : (96, 6*Bt), rows = (c2, h2), cols = (w2, b)
      fc    : (120, Bt) -> (84, Bt) -> (num_classes, Bt)
    """
    bt = out_ref.shape[-1]
    n1, n2 = 8 * bt, 6 * bt

    def mm(a, b):
        return jnp.dot(a, b, preferred_element_type=jnp.float32)

    x = x_ref[0]                        # (4, 36, 9*Bt)
    xs = [x[j] for j in range(4)]       # padded-input columns with w % 4 == j

    # conv1 + relu + 2x2 pool.  Quadrant (p, r) = conv1 at rows 2*ih+p and
    # columns 4*q+r; the stride-2 pool is the elementwise max of quadrants.
    def conv1_q(p, r):
        acc = None
        for kw in range(5):
            j, s = (r + kw) % 4, (r + kw) // 4
            term = mm(m1_ref[p * 5 + kw], xs[j][:, s * bt:s * bt + n1])
            acc = term if acc is None else acc + term
        return acc

    p1e = jnp.maximum(jnp.maximum(conv1_q(0, 0), conv1_q(0, 1)),
                      jnp.maximum(conv1_q(1, 0), conv1_q(1, 1)))
    p1o = jnp.maximum(jnp.maximum(conv1_q(0, 2), conv1_q(0, 3)),
                      jnp.maximum(conv1_q(1, 2), conv1_q(1, 3)))
    p1e = jnp.maximum(p1e + b1_ref[...], 0.0)        # pool1 columns 0,2,...,14
    p1o = jnp.maximum(p1o + b1_ref[...], 0.0)        # pool1 columns 1,3,...,15
    p1 = (p1e, p1o)

    # conv2 + relu + 2x2 pool, same quadrant trick (column parity already
    # split in the pool1 halves).
    def conv2_q(p, r):
        acc = None
        for kw in range(5):
            par, s = (r + kw) % 2, (r + kw) // 2
            term = mm(m2_ref[p * 5 + kw], p1[par][:, s * bt:s * bt + n2])
            acc = term if acc is None else acc + term
        return acc

    p2 = jnp.maximum(jnp.maximum(conv2_q(0, 0), conv2_q(0, 1)),
                     jnp.maximum(conv2_q(1, 0), conv2_q(1, 1)))
    p2 = jnp.maximum(p2 + b2_ref[...], 0.0)          # (96, 6*Bt)

    # fc1 (torch.flatten(C,H,W) order folded into a1) + relu — whole tile at once.
    h = None
    for w in range(6):
        term = mm(a1_ref[w], p2[:, w * bt:(w + 1) * bt])
        h = term if h is None else h + term
    h = jnp.maximum(h + fb1_ref[...], 0.0)                       # (120, Bt)

    h = jnp.maximum(mm(a2_ref[...], h) + fb2_ref[...], 0.0)      # (84, Bt)
    out_ref[0] = mm(a3_ref[...], h) + fb3_ref[...]               # (nc, Bt)


# --------------------------- parameter preparation ---------------------------

def prepare_params(params):
    """One-time fold of PyTorch-layout parameters into the matrices consumed
    by the fused kernel (zero runtime cost)."""
    (w1c, b1c, w2c, b2c, fw1, fb1, fw2, fb2, fw3, fb3) = [
        np.asarray(p, np.float32) for p in params]

    # Banded conv row-mixing matrices with the 2x2 pool's row parity folded in:
    # m[p*5+kw][co*H_out + ih, ci*H_in + 2*ih + p + kh] = w[co, ci, kh, kw]
    def conv_row_mats(w, h_in, h_out):
        c_out, c_in, k, _ = w.shape
        m = np.zeros((2 * k, c_out * h_out, c_in * h_in), np.float32)
        for p in range(2):
            for kw in range(k):
                for kh in range(k):
                    for ih in range(h_out):
                        rows = np.arange(c_out) * h_out + ih
                        cols = np.arange(c_in) * h_in + 2 * ih + p + kh
                        m[p * k + kw][rows[:, None], cols[None, :]] = w[:, :, kh, kw]
        return m

    m1 = conv_row_mats(w1c, 36, 16)                  # (10, 96, 36)
    m2 = conv_row_mats(w2c, 16, 6)                   # (10, 96, 96)
    b1 = np.repeat(b1c, 16).reshape(-1, 1)           # (96, 1)
    b2 = np.repeat(b2c, 6).reshape(-1, 1)            # (96, 1)
    # fc1: fold the NCHW flatten order; a1[w, n, d*6+ih] = fw1[d*36 + ih*6 + w, n]
    a1 = np.transpose(fw1.reshape(16, 6, 6, 120), (2, 3, 0, 1)).reshape(6, 120, 96)
    a2 = fw2.T                                       # (84, 120)
    a3 = fw3.T                                       # (num_classes, 84)
    prepared = (m1, b1, m2, b2, a1, fb1.reshape(-1, 1), a2,
                fb2.reshape(-1, 1), a3, fb3.reshape(-1, 1))
    return tuple(jnp.asarray(p) for p in prepared)


# --------------------------------- forward -----------------------------------

def lenet5_forward(x, prepared, *, bt=4):
    """x: (B, 1, 32, 32) float32 NCHW -> logits (B, num_classes).

    bt = samples per grid step (lane-packing factor).  Use bt=16 on v5e
    (8*16 = 128 conv1 lanes) and bt=32 on v6e/v7x (256 lanes); per-step VMEM
    stays ~1 MB, well under v7x's 64 MiB.
    """
    batch = x.shape[0]
    nc = prepared[-2].shape[0]
    pad_b = (-batch) % bt
    if pad_b:
        x = jnp.concatenate([x, jnp.zeros((pad_b,) + x.shape[1:], x.dtype)], 0)
    nt = (batch + pad_b) // bt

    # conv1 padding (=2), mod-4 column-residue split and (w, b) lane packing
    # as one cheap layout transform of the tiny input tensor.
    xp = jnp.pad(x[:, 0], ((0, 0), (2, 2), (2, 2)))              # (B', 36, 36)
    xp = xp.reshape(nt, bt, 36, 9, 4).transpose(0, 4, 2, 3, 1)    # (T, 4, 36, 9, Bt)
    xp = xp.reshape(nt, 4, 36, 9 * bt)

    def full_spec(a):
        nd = a.ndim
        return pl.BlockSpec(a.shape, lambda i, _nd=nd: (0,) * _nd)

    out = pl.pallas_call(
        _lenet5_kernel,
        grid=(nt,),
        in_specs=[pl.BlockSpec((1, 4, 36, 9 * bt), lambda i: (i, 0, 0, 0))]
                 + [full_spec(p) for p in prepared],
        out_specs=pl.BlockSpec((1, nc, bt), lambda i: (i, 0, 0)),
        out_shape=jax.ShapeDtypeStruct((nt, nc, bt), jnp.float32),
        compiler_params=pltpu.CompilerParams(
            dimension_semantics=("parallel",),
            vmem_limit_bytes=32 * 1024 * 1024),
    )(xp, *prepared)
    out = out.transpose(0, 2, 1).reshape(batch + pad_b, nc)
    return out[:batch]


# ------------------------------ parameter init --------------------------------

def init_params(key, num_classes=10):
    def uniform(k, shape, fan_in):
        bound = 1.0 / np.sqrt(fan_in)
        return jax.random.uniform(k, shape, jnp.float32, -bound, bound)

    ks = jax.random.split(key, 10)
    w1c = uniform(ks[0], (6, 1, 5, 5), 1 * 5 * 5)
    b1c = uniform(ks[1], (6,), 1 * 5 * 5)
    w2c = uniform(ks[2], (16, 6, 5, 5), 6 * 5 * 5)
    b2c = uniform(ks[3], (16,), 6 * 5 * 5)
    fw1 = uniform(ks[4], (16 * 6 * 6, 120), 16 * 6 * 6)
    fb1 = uniform(ks[5], (120,), 16 * 6 * 6)
    fw2 = uniform(ks[6], (120, 84), 120)
    fb2 = uniform(ks[7], (84,), 120)
    fw3 = uniform(ks[8], (84, num_classes), 84)
    fb3 = uniform(ks[9], (num_classes,), 84)
    return (w1c, b1c, w2c, b2c, fw1, fb1, fw2, fb2, fw3, fb3)


# --------------------------------- reference ----------------------------------

def reference_forward(x, params):
    (w1c, b1c, w2c, b2c, fw1, fb1, fw2, fb2, fw3, fb3) = params
    dn = ("NCHW", "OIHW", "NCHW")
    y = jax.lax.conv_general_dilated(x, w1c, (1, 1), ((2, 2), (2, 2)),
                                     dimension_numbers=dn)
    y = jax.nn.relu(y + b1c[None, :, None, None])
    y = jax.lax.reduce_window(y, -jnp.inf, jax.lax.max,
                              (1, 1, 2, 2), (1, 1, 2, 2), "VALID")
    y = jax.lax.conv_general_dilated(y, w2c, (1, 1), "VALID",
                                     dimension_numbers=dn)
    y = jax.nn.relu(y + b2c[None, :, None, None])
    y = jax.lax.reduce_window(y, -jnp.inf, jax.lax.max,
                              (1, 1, 2, 2), (1, 1, 2, 2), "VALID")
    y = y.reshape(y.shape[0], -1)
    y = jax.nn.relu(y @ fw1 + fb1)
    y = jax.nn.relu(y @ fw2 + fb2)
    return y @ fw3 + fb3


# ----------------------------------- main --------------------------------------

if __name__ == "__main__":
    key = jax.random.PRNGKey(0)
    k_in, k_par = jax.random.split(key)

    # LeNet5 with fc1 = 16*6*6 implies 32x32 single-channel input.
    batch = 8
    x = jax.random.normal(k_in, (batch, 1, 32, 32), jnp.float32)
    params = init_params(k_par, num_classes=10)
    prepared = prepare_params(params)

    # bt=4 -> 2 grid steps at batch=8 (exercises the parallel grid); raise bt
    # to 16 / 32 on real batches for lane-dense MXU work.
    fwd = jax.jit(functools.partial(lenet5_forward, prepared=prepared, bt=4))
    out = jax.block_until_ready(fwd(x))

    ref = reference_forward(x, params)
    np.testing.assert_allclose(np.asarray(out), np.asarray(ref),
                               rtol=1e-3, atol=1e-3)
    print("KERNEL_OK")
</pallas_src>

<mosaic_0001>
module attributes {stable_mosaic.version = 11 : i64} {
  func.func @_lenet5_kernel(%arg0: i32, %arg1: memref<1x4x36x36xf32, #tpu.memory_space<vmem>>, %arg2: memref<10x96x36xf32, #tpu.memory_space<vmem>>, %arg3: memref<96x1xf32, #tpu.memory_space<vmem>>, %arg4: memref<10x96x96xf32, #tpu.memory_space<vmem>>, %arg5: memref<96x1xf32, #tpu.memory_space<vmem>>, %arg6: memref<6x120x96xf32, #tpu.memory_space<vmem>>, %arg7: memref<120x1xf32, #tpu.memory_space<vmem>>, %arg8: memref<84x120xf32, #tpu.memory_space<vmem>>, %arg9: memref<84x1xf32, #tpu.memory_space<vmem>>, %arg10: memref<10x84xf32, #tpu.memory_space<vmem>>, %arg11: memref<10x1xf32, #tpu.memory_space<vmem>>, %arg12: memref<1x10x4xf32, #tpu.memory_space<vmem>>) attributes {dimension_semantics = [#tpu.dimension_semantics<parallel>], iteration_bounds = array<i64: 2>, scalar_prefetch = 0 : i64, scratch_operands = 0 : i64, tpu.core_type = #tpu.core_type<tc>, window_params = [{transform_indices = @transform_0, window_bounds = array<i64: 1, 4, 36, 36>}, {pipeline_mode = #tpu.pipeline_mode<synchronous>, transform_indices = @transform_1, window_bounds = array<i64: 10, 96, 36>}, {pipeline_mode = #tpu.pipeline_mode<synchronous>, transform_indices = @transform_2, window_bounds = array<i64: 96, 1>}, {pipeline_mode = #tpu.pipeline_mode<synchronous>, transform_indices = @transform_3, window_bounds = array<i64: 10, 96, 96>}, {pipeline_mode = #tpu.pipeline_mode<synchronous>, transform_indices = @transform_4, window_bounds = array<i64: 96, 1>}, {pipeline_mode = #tpu.pipeline_mode<synchronous>, transform_indices = @transform_5, window_bounds = array<i64: 6, 120, 96>}, {pipeline_mode = #tpu.pipeline_mode<synchronous>, transform_indices = @transform_6, window_bounds = array<i64: 120, 1>}, {pipeline_mode = #tpu.pipeline_mode<synchronous>, transform_indices = @transform_7, window_bounds = array<i64: 84, 120>}, {pipeline_mode = #tpu.pipeline_mode<synchronous>, transform_indices = @transform_8, window_bounds = array<i64: 84, 1>}, {pipeline_mode = #tpu.pipeline_mode<synchronous>, transform_indices = @transform_9, window_bounds = array<i64: 10, 84>}, {pipeline_mode = #tpu.pipeline_mode<synchronous>, transform_indices = @transform_10, window_bounds = array<i64: 10, 1>}, {transform_indices = @transform_11, window_bounds = array<i64: 1, 10, 4>}]} {
    %c0 = arith.constant 0 : index
    %c0_0 = arith.constant 0 : index
    %c0_1 = arith.constant 0 : index
    %c0_2 = arith.constant 0 : index
    %0 = vector.load %arg1[%c0, %c0_0, %c0_1, %c0_2] : memref<1x4x36x36xf32, #tpu.memory_space<vmem>>, vector<1x4x36x36xf32>
    %1 = vector.shape_cast %0 : vector<1x4x36x36xf32> to vector<4x36x36xf32>
    %2 = vector.extract_strided_slice %1 {offsets = [0, 0, 0], sizes = [1, 36, 36], strides = [1, 1, 1]} : vector<4x36x36xf32> to vector<1x36x36xf32>
    %3 = vector.shape_cast %2 : vector<1x36x36xf32> to vector<36x36xf32>
    %4 = vector.extract_strided_slice %1 {offsets = [1, 0, 0], sizes = [1, 36, 36], strides = [1, 1, 1]} : vector<4x36x36xf32> to vector<1x36x36xf32>
    %5 = vector.shape_cast %4 : vector<1x36x36xf32> to vector<36x36xf32>
    %6 = vector.extract_strided_slice %1 {offsets = [2, 0, 0], sizes = [1, 36, 36], strides = [1, 1, 1]} : vector<4x36x36xf32> to vector<1x36x36xf32>
    %7 = vector.shape_cast %6 : vector<1x36x36xf32> to vector<36x36xf32>
    %8 = vector.extract_strided_slice %1 {offsets = [3, 0, 0], sizes = [1, 36, 36], strides = [1, 1, 1]} : vector<4x36x36xf32> to vector<1x36x36xf32>
    %9 = vector.shape_cast %8 : vector<1x36x36xf32> to vector<36x36xf32>
    %c0_3 = arith.constant 0 : index
    %c0_4 = arith.constant 0 : index
    %c0_5 = arith.constant 0 : index
    %10 = vector.load %arg2[%c0_3, %c0_4, %c0_5] : memref<10x96x36xf32, #tpu.memory_space<vmem>>, vector<1x96x36xf32>
    %11 = vector.shape_cast %10 : vector<1x96x36xf32> to vector<96x36xf32>
    %12 = vector.extract_strided_slice %3 {offsets = [0, 0], sizes = [36, 32], strides = [1, 1]} : vector<36x36xf32> to vector<36x32xf32>
    %cst = arith.constant dense<0.000000e+00> : vector<96x32xf32>
    %13 = tpu.matmul %11, %12, %cst {dimension_numbers = #tpu.dot_dimension_numbers<[1], [0], [0], [1], [0, 0, 1, 1], [], []>} : vector<96x36xf32>, vector<36x32xf32>, vector<96x32xf32> -> vector<96x32xf32>
    %c1 = arith.constant 1 : index
    %c0_6 = arith.constant 0 : index
    %c0_7 = arith.constant 0 : index
    %14 = vector.load %arg2[%c1, %c0_6, %c0_7] : memref<10x96x36xf32, #tpu.memory_space<vmem>>, vector<1x96x36xf32>
    %15 = vector.shape_cast %14 : vector<1x96x36xf32> to vector<96x36xf32>
    %16 = vector.extract_strided_slice %5 {offsets = [0, 0], sizes = [36, 32], strides = [1, 1]} : vector<36x36xf32> to vector<36x32xf32>
    %cst_8 = arith.constant dense<0.000000e+00> : vector<96x32xf32>
    %17 = tpu.matmul %15, %16, %cst_8 {dimension_numbers = #tpu.dot_dimension_numbers<[1], [0], [0], [1], [0, 0, 1, 1], [], []>} : vector<96x36xf32>, vector<36x32xf32>, vector<96x32xf32> -> vector<96x32xf32>
    %18 = arith.addf %13, %17 : vector<96x32xf32>
    %c2 = arith.constant 2 : index
    %c0_9 = arith.constant 0 : index
    %c0_10 = arith.constant 0 : index
    %19 = vector.load %arg2[%c2, %c0_9, %c0_10] : memref<10x96x36xf32, #tpu.memory_space<vmem>>, vector<1x96x36xf32>
    %20 = vector.shape_cast %19 : vector<1x96x36xf32> to vector<96x36xf32>
    %21 = vector.extract_strided_slice %7 {offsets = [0, 0], sizes = [36, 32], strides = [1, 1]} : vector<36x36xf32> to vector<36x32xf32>
    %cst_11 = arith.constant dense<0.000000e+00> : vector<96x32xf32>
    %22 = tpu.matmul %20, %21, %cst_11 {dimension_numbers = #tpu.dot_dimension_numbers<[1], [0], [0], [1], [0, 0, 1, 1], [], []>} : vector<96x36xf32>, vector<36x32xf32>, vector<96x32xf32> -> vector<96x32xf32>
    %23 = arith.addf %18, %22 : vector<96x32xf32>
    %c3 = arith.constant 3 : index
    %c0_12 = arith.constant 0 : index
    %c0_13 = arith.constant 0 : index
    %24 = vector.load %arg2[%c3, %c0_12, %c0_13] : memref<10x96x36xf32, #tpu.memory_space<vmem>>, vector<1x96x36xf32>
    %25 = vector.shape_cast %24 : vector<1x96x36xf32> to vector<96x36xf32>
    %26 = vector.extract_strided_slice %9 {offsets = [0, 0], sizes = [36, 32], strides = [1, 1]} : vector<36x36xf32> to vector<36x32xf32>
    %cst_14 = arith.constant dense<0.000000e+00> : vector<96x32xf32>
    %27 = tpu.matmul %25, %26, %cst_14 {dimension_numbers = #tpu.dot_dimension_numbers<[1], [0], [0], [1], [0, 0, 1, 1], [], []>} : vector<96x36xf32>, vector<36x32xf32>, vector<96x32xf32> -> vector<96x32xf32>
    %28 = arith.addf %23, %27 : vector<96x32xf32>
    %c4 = arith.constant 4 : index
    %c0_15 = arith.constant 0 : index
    %c0_16 = arith.constant 0 : index
    %29 = vector.load %arg2[%c4, %c0_15, %c0_16] : memref<10x96x36xf32, #tpu.memory_space<vmem>>, vector<1x96x36xf32>
    %30 = vector.shape_cast %29 : vector<1x96x36xf32> to vector<96x36xf32>
    %31 = vector.extract_strided_slice %3 {offsets = [0, 4], sizes = [36, 32], strides = [1, 1]} : vector<36x36xf32> to vector<36x32xf32>
    %cst_17 = arith.constant dense<0.000000e+00> : vector<96x32xf32>
    %32 = tpu.matmul %30, %31, %cst_17 {dimension_numbers = #tpu.dot_dimension_numbers<[1], [0], [0], [1], [0, 0, 1, 1], [], []>} : vector<96x36xf32>, vector<36x32xf32>, vector<96x32xf32> -> vector<96x32xf32>
    %33 = arith.addf %28, %32 : vector<96x32xf32>
    %c0_18 = arith.constant 0 : index
    %c0_19 = arith.constant 0 : index
    %c0_20 = arith.constant 0 : index
    %34 = vector.load %arg2[%c0_18, %c0_19, %c0_20] : memref<10x96x36xf32, #tpu.memory_space<vmem>>, vector<1x96x36xf32>
    %35 = vector.shape_cast %34 : vector<1x96x36xf32> to vector<96x36xf32>
    %36 = vector.extract_strided_slice %5 {offsets = [0, 0], sizes = [36, 32], strides = [1, 1]} : vector<36x36xf32> to vector<36x32xf32>
    %cst_21 = arith.constant dense<0.000000e+00> : vector<96x32xf32>
    %37 = tpu.matmul %35, %36, %cst_21 {dimension_numbers = #tpu.dot_dimension_numbers<[1], [0], [0], [1], [0, 0, 1, 1], [], []>} : vector<96x36xf32>, vector<36x32xf32>, vector<96x32xf32> -> vector<96x32xf32>
    %c1_22 = arith.constant 1 : index
    %c0_23 = arith.constant 0 : index
    %c0_24 = arith.constant 0 : index
    %38 = vector.load %arg2[%c1_22, %c0_23, %c0_24] : memref<10x96x36xf32, #tpu.memory_space<vmem>>, vector<1x96x36xf32>
    %39 = vector.shape_cast %38 : vector<1x96x36xf32> to vector<96x36xf32>
    %40 = vector.extract_strided_slice %7 {offsets = [0, 0], sizes = [36, 32], strides = [1, 1]} : vector<36x36xf32> to vector<36x32xf32>
    %cst_25 = arith.constant dense<0.000000e+00> : vector<96x32xf32>
    %41 = tpu.matmul %39, %40, %cst_25 {dimension_numbers = #tpu.dot_dimension_numbers<[1], [0], [0], [1], [0, 0, 1, 1], [], []>} : vector<96x36xf32>, vector<36x32xf32>, vector<96x32xf32> -> vector<96x32xf32>
    %42 = arith.addf %37, %41 : vector<96x32xf32>
    %c2_26 = arith.constant 2 : index
    %c0_27 = arith.constant 0 : index
    %c0_28 = arith.constant 0 : index
    %43 = vector.load %arg2[%c2_26, %c0_27, %c0_28] : memref<10x96x36xf32, #tpu.memory_space<vmem>>, vector<1x96x36xf32>
    %44 = vector.shape_cast %43 : vector<1x96x36xf32> to vector<96x36xf32>
    %45 = vector.extract_strided_slice %9 {offsets = [0, 0], sizes = [36, 32], strides = [1, 1]} : vector<36x36xf32> to vector<36x32xf32>
    %cst_29 = arith.constant dense<0.000000e+00> : vector<96x32xf32>
    %46 = tpu.matmul %44, %45, %cst_29 {dimension_numbers = #tpu.dot_dimension_numbers<[1], [0], [0], [1], [0, 0, 1, 1], [], []>} : vector<96x36xf32>, vector<36x32xf32>, vector<96x32xf32> -> vector<96x32xf32>
    %47 = arith.addf %42, %46 : vector<96x32xf32>
    %c3_30 = arith.constant 3 : index
    %c0_31 = arith.constant 0 : index
    %c0_32 = arith.constant 0 : index
    %48 = vector.load %arg2[%c3_30, %c0_31, %c0_32] : memref<10x96x36xf32, #tpu.memory_space<vmem>>, vector<1x96x36xf32>
    %49 = vector.shape_cast %48 : vector<1x96x36xf32> to vector<96x36xf32>
    %50 = vector.extract_strided_slice %3 {offsets = [0, 4], sizes = [36, 32], strides = [1, 1]} : vector<36x36xf32> to vector<36x32xf32>
    %cst_33 = arith.constant dense<0.000000e+00> : vector<96x32xf32>
    %51 = tpu.matmul %49, %50, %cst_33 {dimension_numbers = #tpu.dot_dimension_numbers<[1], [0], [0], [1], [0, 0, 1, 1], [], []>} : vector<96x36xf32>, vector<36x32xf32>, vector<96x32xf32> -> vector<96x32xf32>
    %52 = arith.addf %47, %51 : vector<96x32xf32>
    %c4_34 = arith.constant 4 : index
    %c0_35 = arith.constant 0 : index
    %c0_36 = arith.constant 0 : index
    %53 = vector.load %arg2[%c4_34, %c0_35, %c0_36] : memref<10x96x36xf32, #tpu.memory_space<vmem>>, vector<1x96x36xf32>
    %54 = vector.shape_cast %53 : vector<1x96x36xf32> to vector<96x36xf32>
    %55 = vector.extract_strided_slice %5 {offsets = [0, 4], sizes = [36, 32], strides = [1, 1]} : vector<36x36xf32> to vector<36x32xf32>
    %cst_37 = arith.constant dense<0.000000e+00> : vector<96x32xf32>
    %56 = tpu.matmul %54, %55, %cst_37 {dimension_numbers = #tpu.dot_dimension_numbers<[1], [0], [0], [1], [0, 0, 1, 1], [], []>} : vector<96x36xf32>, vector<36x32xf32>, vector<96x32xf32> -> vector<96x32xf32>
    %57 = arith.addf %52, %56 : vector<96x32xf32>
    %58 = arith.maximumf %33, %57 : vector<96x32xf32>
    %c5 = arith.constant 5 : index
    %c0_38 = arith.constant 0 : index
    %c0_39 = arith.constant 0 : index
    %59 = vector.load %arg2[%c5, %c0_38, %c0_39] : memref<10x96x36xf32, #tpu.memory_space<vmem>>, vector<1x96x36xf32>
    %60 = vector.shape_cast %59 : vector<1x96x36xf32> to vector<96x36xf32>
    %61 = vector.extract_strided_slice %3 {offsets = [0, 0], sizes = [36, 32], strides = [1, 1]} : vector<36x36xf32> to vector<36x32xf32>
    %cst_40 = arith.constant dense<0.000000e+00> : vector<96x32xf32>
    %62 = tpu.matmul %60, %61, %cst_40 {dimension_numbers = #tpu.dot_dimension_numbers<[1], [0], [0], [1], [0, 0, 1, 1], [], []>} : vector<96x36xf32>, vector<36x32xf32>, vector<96x32xf32> -> vector<96x32xf32>
    %c6 = arith.constant 6 : index
    %c0_41 = arith.constant 0 : index
    %c0_42 = arith.constant 0 : index
    %63 = vector.load %arg2[%c6, %c0_41, %c0_42] : memref<10x96x36xf32, #tpu.memory_space<vmem>>, vector<1x96x36xf32>
    %64 = vector.shape_cast %63 : vector<1x96x36xf32> to vector<96x36xf32>
    %65 = vector.extract_strided_slice %5 {offsets = [0, 0], sizes = [36, 32], strides = [1, 1]} : vector<36x36xf32> to vector<36x32xf32>
    %cst_43 = arith.constant dense<0.000000e+00> : vector<96x32xf32>
    %66 = tpu.matmul %64, %65, %cst_43 {dimension_numbers = #tpu.dot_dimension_numbers<[1], [0], [0], [1], [0, 0, 1, 1], [], []>} : vector<96x36xf32>, vector<36x32xf32>, vector<96x32xf32> -> vector<96x32xf32>
    %67 = arith.addf %62, %66 : vector<96x32xf32>
    %c7 = arith.constant 7 : index
    %c0_44 = arith.constant 0 : index
    %c0_45 = arith.constant 0 : index
    %68 = vector.load %arg2[%c7, %c0_44, %c0_45] : memref<10x96x36xf32, #tpu.memory_space<vmem>>, vector<1x96x36xf32>
    %69 = vector.shape_cast %68 : vector<1x96x36xf32> to vector<96x36xf32>
    %70 = vector.extract_strided_slice %7 {offsets = [0, 0], sizes = [36, 32], strides = [1, 1]} : vector<36x36xf32> to vector<36x32xf32>
    %cst_46 = arith.constant dense<0.000000e+00> : vector<96x32xf32>
    %71 = tpu.matmul %69, %70, %cst_46 {dimension_numbers = #tpu.dot_dimension_numbers<[1], [0], [0], [1], [0, 0, 1, 1], [], []>} : vector<96x36xf32>, vector<36x32xf32>, vector<96x32xf32> -> vector<96x32xf32>
    %72 = arith.addf %67, %71 : vector<96x32xf32>
    %c8 = arith.constant 8 : index
    %c0_47 = arith.constant 0 : index
    %c0_48 = arith.constant 0 : index
    %73 = vector.load %arg2[%c8, %c0_47, %c0_48] : memref<10x96x36xf32, #tpu.memory_space<vmem>>, vector<1x96x36xf32>
    %74 = vector.shape_cast %73 : vector<1x96x36xf32> to vector<96x36xf32>
    %75 = vector.extract_strided_slice %9 {offsets = [0, 0], sizes = [36, 32], strides = [1, 1]} : vector<36x36xf32> to vector<36x32xf32>
    %cst_49 = arith.constant dense<0.000000e+00> : vector<96x32xf32>
    %76 = tpu.matmul %74, %75, %cst_49 {dimension_numbers = #tpu.dot_dimension_numbers<[1], [0], [0], [1], [0, 0, 1, 1], [], []>} : vector<96x36xf32>, vector<36x32xf32>, vector<96x32xf32> -> vector<96x32xf32>
    %77 = arith.addf %72, %76 : vector<96x32xf32>
    %c9 = arith.constant 9 : index
    %c0_50 = arith.constant 0 : index
    %c0_51 = arith.constant 0 : index
    %78 = vector.load %arg2[%c9, %c0_50, %c0_51] : memref<10x96x36xf32, #tpu.memory_space<vmem>>, vector<1x96x36xf32>
    %79 = vector.shape_cast %78 : vector<1x96x36xf32> to vector<96x36xf32>
    %80 = vector.extract_strided_slice %3 {offsets = [0, 4], sizes = [36, 32], strides = [1, 1]} : vector<36x36xf32> to vector<36x32xf32>
    %cst_52 = arith.constant dense<0.000000e+00> : vector<96x32xf32>
    %81 = tpu.matmul %79, %80, %cst_52 {dimension_numbers = #tpu.dot_dimension_numbers<[1], [0], [0], [1], [0, 0, 1, 1], [], []>} : vector<96x36xf32>, vector<36x32xf32>, vector<96x32xf32> -> vector<96x32xf32>
    %82 = arith.addf %77, %81 : vector<96x32xf32>
    %c5_53 = arith.constant 5 : index
    %c0_54 = arith.constant 0 : index
    %c0_55 = arith.constant 0 : index
    %83 = vector.load %arg2[%c5_53, %c0_54, %c0_55] : memref<10x96x36xf32, #tpu.memory_space<vmem>>, vector<1x96x36xf32>
    %84 = vector.shape_cast %83 : vector<1x96x36xf32> to vector<96x36xf32>
    %85 = vector.extract_strided_slice %5 {offsets = [0, 0], sizes = [36, 32], strides = [1, 1]} : vector<36x36xf32> to vector<36x32xf32>
    %cst_56 = arith.constant dense<0.000000e+00> : vector<96x32xf32>
    %86 = tpu.matmul %84, %85, %cst_56 {dimension_numbers = #tpu.dot_dimension_numbers<[1], [0], [0], [1], [0, 0, 1, 1], [], []>} : vector<96x36xf32>, vector<36x32xf32>, vector<96x32xf32> -> vector<96x32xf32>
    %c6_57 = arith.constant 6 : index
    %c0_58 = arith.constant 0 : index
    %c0_59 = arith.constant 0 : index
    %87 = vector.load %arg2[%c6_57, %c0_58, %c0_59] : memref<10x96x36xf32, #tpu.memory_space<vmem>>, vector<1x96x36xf32>
    %88 = vector.shape_cast %87 : vector<1x96x36xf32> to vector<96x36xf32>
    %89 = vector.extract_strided_slice %7 {offsets = [0, 0], sizes = [36, 32], strides = [1, 1]} : vector<36x36xf32> to vector<36x32xf32>
    %cst_60 = arith.constant dense<0.000000e+00> : vector<96x32xf32>
    %90 = tpu.matmul %88, %89, %cst_60 {dimension_numbers = #tpu.dot_dimension_numbers<[1], [0], [0], [1], [0, 0, 1, 1], [], []>} : vector<96x36xf32>, vector<36x32xf32>, vector<96x32xf32> -> vector<96x32xf32>
    %91 = arith.addf %86, %90 : vector<96x32xf32>
    %c7_61 = arith.constant 7 : index
    %c0_62 = arith.constant 0 : index
    %c0_63 = arith.constant 0 : index
    %92 = vector.load %arg2[%c7_61, %c0_62, %c0_63] : memref<10x96x36xf32, #tpu.memory_space<vmem>>, vector<1x96x36xf32>
    %93 = vector.shape_cast %92 : vector<1x96x36xf32> to vector<96x36xf32>
    %94 = vector.extract_strided_slice %9 {offsets = [0, 0], sizes = [36, 32], strides = [1, 1]} : vector<36x36xf32> to vector<36x32xf32>
    %cst_64 = arith.constant dense<0.000000e+00> : vector<96x32xf32>
    %95 = tpu.matmul %93, %94, %cst_64 {dimension_numbers = #tpu.dot_dimension_numbers<[1], [0], [0], [1], [0, 0, 1, 1], [], []>} : vector<96x36xf32>, vector<36x32xf32>, vector<96x32xf32> -> vector<96x32xf32>
    %96 = arith.addf %91, %95 : vector<96x32xf32>
    %c8_65 = arith.constant 8 : index
    %c0_66 = arith.constant 0 : index
    %c0_67 = arith.constant 0 : index
    %97 = vector.load %arg2[%c8_65, %c0_66, %c0_67] : memref<10x96x36xf32, #tpu.memory_space<vmem>>, vector<1x96x36xf32>
    %98 = vector.shape_cast %97 : vector<1x96x36xf32> to vector<96x36xf32>
    %99 = vector.extract_strided_slice %3 {offsets = [0, 4], sizes = [36, 32], strides = [1, 1]} : vector<36x36xf32> to vector<36x32xf32>
    %cst_68 = arith.constant dense<0.000000e+00> : vector<96x32xf32>
    %100 = tpu.matmul %98, %99, %cst_68 {dimension_numbers = #tpu.dot_dimension_numbers<[1], [0], [0], [1], [0, 0, 1, 1], [], []>} : vector<96x36xf32>, vector<36x32xf32>, vector<96x32xf32> -> vector<96x32xf32>
    %101 = arith.addf %96, %100 : vector<96x32xf32>
    %c9_69 = arith.constant 9 : index
    %c0_70 = arith.constant 0 : index
    %c0_71 = arith.constant 0 : index
    %102 = vector.load %arg2[%c9_69, %c0_70, %c0_71] : memref<10x96x36xf32, #tpu.memory_space<vmem>>, vector<1x96x36xf32>
    %103 = vector.shape_cast %102 : vector<1x96x36xf32> to vector<96x36xf32>
    %104 = vector.extract_strided_slice %5 {offsets = [0, 4], sizes = [36, 32], strides = [1, 1]} : vector<36x36xf32> to vector<36x32xf32>
    %cst_72 = arith.constant dense<0.000000e+00> : vector<96x32xf32>
    %105 = tpu.matmul %103, %104, %cst_72 {dimension_numbers = #tpu.dot_dimension_numbers<[1], [0], [0], [1], [0, 0, 1, 1], [], []>} : vector<96x36xf32>, vector<36x32xf32>, vector<96x32xf32> -> vector<96x32xf32>
    %106 = arith.addf %101, %105 : vector<96x32xf32>
    %107 = arith.maximumf %82, %106 : vector<96x32xf32>
    %108 = arith.maximumf %58, %107 : vector<96x32xf32>
    %c0_73 = arith.constant 0 : index
    %c0_74 = arith.constant 0 : index
    %c0_75 = arith.constant 0 : index
    %109 = vector.load %arg2[%c0_73, %c0_74, %c0_75] : memref<10x96x36xf32, #tpu.memory_space<vmem>>, vector<1x96x36xf32>
    %110 = vector.shape_cast %109 : vector<1x96x36xf32> to vector<96x36xf32>
    %111 = vector.extract_strided_slice %7 {offsets = [0, 0], sizes = [36, 32], strides = [1, 1]} : vector<36x36xf32> to vector<36x32xf32>
    %cst_76 = arith.constant dense<0.000000e+00> : vector<96x32xf32>
    %112 = tpu.matmul %110, %111, %cst_76 {dimension_numbers = #tpu.dot_dimension_numbers<[1], [0], [0], [1], [0, 0, 1, 1], [], []>} : vector<96x36xf32>, vector<36x32xf32>, vector<96x32xf32> -> vector<96x32xf32>
    %c1_77 = arith.constant 1 : index
    %c0_78 = arith.constant 0 : index
    %c0_79 = arith.constant 0 : index
    %113 = vector.load %arg2[%c1_77, %c0_78, %c0_79] : memref<10x96x36xf32, #tpu.memory_space<vmem>>, vector<1x96x36xf32>
    %114 = vector.shape_cast %113 : vector<1x96x36xf32> to vector<96x36xf32>
    %115 = vector.extract_strided_slice %9 {offsets = [0, 0], sizes = [36, 32], strides = [1, 1]} : vector<36x36xf32> to vector<36x32xf32>
    %cst_80 = arith.constant dense<0.000000e+00> : vector<96x32xf32>
    %116 = tpu.matmul %114, %115, %cst_80 {dimension_numbers = #tpu.dot_dimension_numbers<[1], [0], [0], [1], [0, 0, 1, 1], [], []>} : vector<96x36xf32>, vector<36x32xf32>, vector<96x32xf32> -> vector<96x32xf32>
    %117 = arith.addf %112, %116 : vector<96x32xf32>
    %c2_81 = arith.constant 2 : index
    %c0_82 = arith.constant 0 : index
    %c0_83 = arith.constant 0 : index
    %118 = vector.load %arg2[%c2_81, %c0_82, %c0_83] : memref<10x96x36xf32, #tpu.memory_space<vmem>>, vector<1x96x36xf32>
    %119 = vector.shape_cast %118 : vector<1x96x36xf32> to vector<96x36xf32>
    %120 = vector.extract_strided_slice %3 {offsets = [0, 4], sizes = [36, 32], strides = [1, 1]} : vector<36x36xf32> to vector<36x32xf32>
    %cst_84 = arith.constant dense<0.000000e+00> : vector<96x32xf32>
    %121 = tpu.matmul %119, %120, %cst_84 {dimension_numbers = #tpu.dot_dimension_numbers<[1], [0], [0], [1], [0, 0, 1, 1], [], []>} : vector<96x36xf32>, vector<36x32xf32>, vector<96x32xf32> -> vector<96x32xf32>
    %122 = arith.addf %117, %121 : vector<96x32xf32>
    %c3_85 = arith.constant 3 : index
    %c0_86 = arith.constant 0 : index
    %c0_87 = arith.constant 0 : index
    %123 = vector.load %arg2[%c3_85, %c0_86, %c0_87] : memref<10x96x36xf32, #tpu.memory_space<vmem>>, vector<1x96x36xf32>
    %124 = vector.shape_cast %123 : vector<1x96x36xf32> to vector<96x36xf32>
    %125 = vector.extract_strided_slice %5 {offsets = [0, 4], sizes = [36, 32], strides = [1, 1]} : vector<36x36xf32> to vector<36x32xf32>
    %cst_88 = arith.constant dense<0.000000e+00> : vector<96x32xf32>
    %126 = tpu.matmul %124, %125, %cst_88 {dimension_numbers = #tpu.dot_dimension_numbers<[1], [0], [0], [1], [0, 0, 1, 1], [], []>} : vector<96x36xf32>, vector<36x32xf32>, vector<96x32xf32> -> vector<96x32xf32>
    %127 = arith.addf %122, %126 : vector<96x32xf32>
    %c4_89 = arith.constant 4 : index
    %c0_90 = arith.constant 0 : index
    %c0_91 = arith.constant 0 : index
    %128 = vector.load %arg2[%c4_89, %c0_90, %c0_91] : memref<10x96x36xf32, #tpu.memory_space<vmem>>, vector<1x96x36xf32>
    %129 = vector.shape_cast %128 : vector<1x96x36xf32> to vector<96x36xf32>
    %130 = vector.extract_strided_slice %7 {offsets = [0, 4], sizes = [36, 32], strides = [1, 1]} : vector<36x36xf32> to vector<36x32xf32>
    %cst_92 = arith.constant dense<0.000000e+00> : vector<96x32xf32>
    %131 = tpu.matmul %129, %130, %cst_92 {dimension_numbers = #tpu.dot_dimension_numbers<[1], [0], [0], [1], [0, 0, 1, 1], [], []>} : vector<96x36xf32>, vector<36x32xf32>, vector<96x32xf32> -> vector<96x32xf32>
    %132 = arith.addf %127, %131 : vector<96x32xf32>
    %c0_93 = arith.constant 0 : index
    %c0_94 = arith.constant 0 : index
    %c0_95 = arith.constant 0 : index
    %133 = vector.load %arg2[%c0_93, %c0_94, %c0_95] : memref<10x96x36xf32, #tpu.memory_space<vmem>>, vector<1x96x36xf32>
    %134 = vector.shape_cast %133 : vector<1x96x36xf32> to vector<96x36xf32>
    %135 = vector.extract_strided_slice %9 {offsets = [0, 0], sizes = [36, 32], strides = [1, 1]} : vector<36x36xf32> to vector<36x32xf32>
    %cst_96 = arith.constant dense<0.000000e+00> : vector<96x32xf32>
    %136 = tpu.matmul %134, %135, %cst_96 {dimension_numbers = #tpu.dot_dimension_numbers<[1], [0], [0], [1], [0, 0, 1, 1], [], []>} : vector<96x36xf32>, vector<36x32xf32>, vector<96x32xf32> -> vector<96x32xf32>
    %c1_97 = arith.constant 1 : index
    %c0_98 = arith.constant 0 : index
    %c0_99 = arith.constant 0 : index
    %137 = vector.load %arg2[%c1_97, %c0_98, %c0_99] : memref<10x96x36xf32, #tpu.memory_space<vmem>>, vector<1x96x36xf32>
    %138 = vector.shape_cast %137 : vector<1x96x36xf32> to vector<96x36xf32>
    %139 = vector.extract_strided_slice %3 {offsets = [0, 4], sizes = [36, 32], strides = [1, 1]} : vector<36x36xf32> to vector<36x32xf32>
    %cst_100 = arith.constant dense<0.000000e+00> : vector<96x32xf32>
    %140 = tpu.matmul %138, %139, %cst_100 {dimension_numbers = #tpu.dot_dimension_numbers<[1], [0], [0], [1], [0, 0, 1, 1], [], []>} : vector<96x36xf32>, vector<36x32xf32>, vector<96x32xf32> -> vector<96x32xf32>
    %141 = arith.addf %136, %140 : vector<96x32xf32>
    %c2_101 = arith.constant 2 : index
    %c0_102 = arith.constant 0 : index
    %c0_103 = arith.constant 0 : index
    %142 = vector.load %arg2[%c2_101, %c0_102, %c0_103] : memref<10x96x36xf32, #tpu.memory_space<vmem>>, vector<1x96x36xf32>
    %143 = vector.shape_cast %142 : vector<1x96x36xf32> to vector<96x36xf32>
    %144 = vector.extract_strided_slice %5 {offsets = [0, 4], sizes = [36, 32], strides = [1, 1]} : vector<36x36xf32> to vector<36x32xf32>
    %cst_104 = arith.constant dense<0.000000e+00> : vector<96x32xf32>
    %145 = tpu.matmul %143, %144, %cst_104 {dimension_numbers = #tpu.dot_dimension_numbers<[1], [0], [0], [1], [0, 0, 1, 1], [], []>} : vector<96x36xf32>, vector<36x32xf32>, vector<96x32xf32> -> vector<96x32xf32>
    %146 = arith.addf %141, %145 : vector<96x32xf32>
    %c3_105 = arith.constant 3 : index
    %c0_106 = arith.constant 0 : index
    %c0_107 = arith.constant 0 : index
    %147 = vector.load %arg2[%c3_105, %c0_106, %c0_107] : memref<10x96x36xf32, #tpu.memory_space<vmem>>, vector<1x96x36xf32>
    %148 = vector.shape_cast %147 : vector<1x96x36xf32> to vector<96x36xf32>
    %149 = vector.extract_strided_slice %7 {offsets = [0, 4], sizes = [36, 32], strides = [1, 1]} : vector<36x36xf32> to vector<36x32xf32>
    %cst_108 = arith.constant dense<0.000000e+00> : vector<96x32xf32>
    %150 = tpu.matmul %148, %149, %cst_108 {dimension_numbers = #tpu.dot_dimension_numbers<[1], [0], [0], [1], [0, 0, 1, 1], [], []>} : vector<96x36xf32>, vector<36x32xf32>, vector<96x32xf32> -> vector<96x32xf32>
    %151 = arith.addf %146, %150 : vector<96x32xf32>
    %c4_109 = arith.constant 4 : index
    %c0_110 = arith.constant 0 : index
    %c0_111 = arith.constant 0 : index
    %152 = vector.load %arg2[%c4_109, %c0_110, %c0_111] : memref<10x96x36xf32, #tpu.memory_space<vmem>>, vector<1x96x36xf32>
    %153 = vector.shape_cast %152 : vector<1x96x36xf32> to vector<96x36xf32>
    %154 = vector.extract_strided_slice %9 {offsets = [0, 4], sizes = [36, 32], strides = [1, 1]} : vector<36x36xf32> to vector<36x32xf32>
    %cst_112 = arith.constant dense<0.000000e+00> : vector<96x32xf32>
    %155 = tpu.matmul %153, %154, %cst_112 {dimension_numbers = #tpu.dot_dimension_numbers<[1], [0], [0], [1], [0, 0, 1, 1], [], []>} : vector<96x36xf32>, vector<36x32xf32>, vector<96x32xf32> -> vector<96x32xf32>
    %156 = arith.addf %151, %155 : vector<96x32xf32>
    %157 = arith.maximumf %132, %156 : vector<96x32xf32>
    %c5_113 = arith.constant 5 : index
    %c0_114 = arith.constant 0 : index
    %c0_115 = arith.constant 0 : index
    %158 = vector.load %arg2[%c5_113, %c0_114, %c0_115] : memref<10x96x36xf32, #tpu.memory_space<vmem>>, vector<1x96x36xf32>
    %159 = vector.shape_cast %158 : vector<1x96x36xf32> to vector<96x36xf32>
    %160 = vector.extract_strided_slice %7 {offsets = [0, 0], sizes = [36, 32], strides = [1, 1]} : vector<36x36xf32> to vector<36x32xf32>
    %cst_116 = arith.constant dense<0.000000e+00> : vector<96x32xf32>
    %161 = tpu.matmul %159, %160, %cst_116 {dimension_numbers = #tpu.dot_dimension_numbers<[1], [0], [0], [1], [0, 0, 1, 1], [], []>} : vector<96x36xf32>, vector<36x32xf32>, vector<96x32xf32> -> vector<96x32xf32>
    %c6_117 = arith.constant 6 : index
    %c0_118 = arith.constant 0 : index
    %c0_119 = arith.constant 0 : index
    %162 = vector.load %arg2[%c6_117, %c0_118, %c0_119] : memref<10x96x36xf32, #tpu.memory_space<vmem>>, vector<1x96x36xf32>
    %163 = vector.shape_cast %162 : vector<1x96x36xf32> to vector<96x36xf32>
    %164 = vector.extract_strided_slice %9 {offsets = [0, 0], sizes = [36, 32], strides = [1, 1]} : vector<36x36xf32> to vector<36x32xf32>
    %cst_120 = arith.constant dense<0.000000e+00> : vector<96x32xf32>
    %165 = tpu.matmul %163, %164, %cst_120 {dimension_numbers = #tpu.dot_dimension_numbers<[1], [0], [0], [1], [0, 0, 1, 1], [], []>} : vector<96x36xf32>, vector<36x32xf32>, vector<96x32xf32> -> vector<96x32xf32>
    %166 = arith.addf %161, %165 : vector<96x32xf32>
    %c7_121 = arith.constant 7 : index
    %c0_122 = arith.constant 0 : index
    %c0_123 = arith.constant 0 : index
    %167 = vector.load %arg2[%c7_121, %c0_122, %c0_123] : memref<10x96x36xf32, #tpu.memory_space<vmem>>, vector<1x96x36xf32>
    %168 = vector.shape_cast %167 : vector<1x96x36xf32> to vector<96x36xf32>
    %169 = vector.extract_strided_slice %3 {offsets = [0, 4], sizes = [36, 32], strides = [1, 1]} : vector<36x36xf32> to vector<36x32xf32>
    %cst_124 = arith.constant dense<0.000000e+00> : vector<96x32xf32>
    %170 = tpu.matmul %168, %169, %cst_124 {dimension_numbers = #tpu.dot_dimension_numbers<[1], [0], [0], [1], [0, 0, 1, 1], [], []>} : vector<96x36xf32>, vector<36x32xf32>, vector<96x32xf32> -> vector<96x32xf32>
    %171 = arith.addf %166, %170 : vector<96x32xf32>
    %c8_125 = arith.constant 8 : index
    %c0_126 = arith.constant 0 : index
    %c0_127 = arith.constant 0 : index
    %172 = vector.load %arg2[%c8_125, %c0_126, %c0_127] : memref<10x96x36xf32, #tpu.memory_space<vmem>>, vector<1x96x36xf32>
    %173 = vector.shape_cast %172 : vector<1x96x36xf32> to vector<96x36xf32>
    %174 = vector.extract_strided_slice %5 {offsets = [0, 4], sizes = [36, 32], strides = [1, 1]} : vector<36x36xf32> to vector<36x32xf32>
    %cst_128 = arith.constant dense<0.000000e+00> : vector<96x32xf32>
    %175 = tpu.matmul %173, %174, %cst_128 {dimension_numbers = #tpu.dot_dimension_numbers<[1], [0], [0], [1], [0, 0, 1, 1], [], []>} : vector<96x36xf32>, vector<36x32xf32>, vector<96x32xf32> -> vector<96x32xf32>
    %176 = arith.addf %171, %175 : vector<96x32xf32>
    %c9_129 = arith.constant 9 : index
    %c0_130 = arith.constant 0 : index
    %c0_131 = arith.constant 0 : index
    %177 = vector.load %arg2[%c9_129, %c0_130, %c0_131] : memref<10x96x36xf32, #tpu.memory_space<vmem>>, vector<1x96x36xf32>
    %178 = vector.shape_cast %177 : vector<1x96x36xf32> to vector<96x36xf32>
    %179 = vector.extract_strided_slice %7 {offsets = [0, 4], sizes = [36, 32], strides = [1, 1]} : vector<36x36xf32> to vector<36x32xf32>
    %cst_132 = arith.constant dense<0.000000e+00> : vector<96x32xf32>
    %180 = tpu.matmul %178, %179, %cst_132 {dimension_numbers = #tpu.dot_dimension_numbers<[1], [0], [0], [1], [0, 0, 1, 1], [], []>} : vector<96x36xf32>, vector<36x32xf32>, vector<96x32xf32> -> vector<96x32xf32>
    %181 = arith.addf %176, %180 : vector<96x32xf32>
    %c5_133 = arith.constant 5 : index
    %c0_134 = arith.constant 0 : index
    %c0_135 = arith.constant 0 : index
    %182 = vector.load %arg2[%c5_133, %c0_134, %c0_135] : memref<10x96x36xf32, #tpu.memory_space<vmem>>, vector<1x96x36xf32>
    %183 = vector.shape_cast %182 : vector<1x96x36xf32> to vector<96x36xf32>
    %184 = vector.extract_strided_slice %9 {offsets = [0, 0], sizes = [36, 32], strides = [1, 1]} : vector<36x36xf32> to vector<36x32xf32>
    %cst_136 = arith.constant dense<0.000000e+00> : vector<96x32xf32>
    %185 = tpu.matmul %183, %184, %cst_136 {dimension_numbers = #tpu.dot_dimension_numbers<[1], [0], [0], [1], [0, 0, 1, 1], [], []>} : vector<96x36xf32>, vector<36x32xf32>, vector<96x32xf32> -> vector<96x32xf32>
    %c6_137 = arith.constant 6 : index
    %c0_138 = arith.constant 0 : index
    %c0_139 = arith.constant 0 : index
    %186 = vector.load %arg2[%c6_137, %c0_138, %c0_139] : memref<10x96x36xf32, #tpu.memory_space<vmem>>, vector<1x96x36xf32>
    %187 = vector.shape_cast %186 : vector<1x96x36xf32> to vector<96x36xf32>
    %188 = vector.extract_strided_slice %3 {offsets = [0, 4], sizes = [36, 32], strides = [1, 1]} : vector<36x36xf32> to vector<36x32xf32>
    %cst_140 = arith.constant dense<0.000000e+00> : vector<96x32xf32>
    %189 = tpu.matmul %187, %188, %cst_140 {dimension_numbers = #tpu.dot_dimension_numbers<[1], [0], [0], [1], [0, 0, 1, 1], [], []>} : vector<96x36xf32>, vector<36x32xf32>, vector<96x32xf32> -> vector<96x32xf32>
    %190 = arith.addf %185, %189 : vector<96x32xf32>
    %c7_141 = arith.constant 7 : index
    %c0_142 = arith.constant 0 : index
    %c0_143 = arith.constant 0 : index
    %191 = vector.load %arg2[%c7_141, %c0_142, %c0_143] : memref<10x96x36xf32, #tpu.memory_space<vmem>>, vector<1x96x36xf32>
    %192 = vector.shape_cast %191 : vector<1x96x36xf32> to vector<96x36xf32>
    %193 = vector.extract_strided_slice %5 {offsets = [0, 4], sizes = [36, 32], strides = [1, 1]} : vector<36x36xf32> to vector<36x32xf32>
    %cst_144 = arith.constant dense<0.000000e+00> : vector<96x32xf32>
    %194 = tpu.matmul %192, %193, %cst_144 {dimension_numbers = #tpu.dot_dimension_numbers<[1], [0], [0], [1], [0, 0, 1, 1], [], []>} : vector<96x36xf32>, vector<36x32xf32>, vector<96x32xf32> -> vector<96x32xf32>
    %195 = arith.addf %190, %194 : vector<96x32xf32>
    %c8_145 = arith.constant 8 : index
    %c0_146 = arith.constant 0 : index
    %c0_147 = arith.constant 0 : index
    %196 = vector.load %arg2[%c8_145, %c0_146, %c0_147] : memref<10x96x36xf32, #tpu.memory_space<vmem>>, vector<1x96x36xf32>
    %197 = vector.shape_cast %196 : vector<1x96x36xf32> to vector<96x36xf32>
    %198 = vector.extract_strided_slice %7 {offsets = [0, 4], sizes = [36, 32], strides = [1, 1]} : vector<36x36xf32> to vector<36x32xf32>
    %cst_148 = arith.constant dense<0.000000e+00> : vector<96x32xf32>
    %199 = tpu.matmul %197, %198, %cst_148 {dimension_numbers = #tpu.dot_dimension_numbers<[1], [0], [0], [1], [0, 0, 1, 1], [], []>} : vector<96x36xf32>, vector<36x32xf32>, vector<96x32xf32> -> vector<96x32xf32>
    %200 = arith.addf %195, %199 : vector<96x32xf32>
    %c9_149 = arith.constant 9 : index
    %c0_150 = arith.constant 0 : index
    %c0_151 = arith.constant 0 : index
    %201 = vector.load %arg2[%c9_149, %c0_150, %c0_151] : memref<10x96x36xf32, #tpu.memory_space<vmem>>, vector<1x96x36xf32>
    %202 = vector.shape_cast %201 : vector<1x96x36xf32> to vector<96x36xf32>
    %203 = vector.extract_strided_slice %9 {offsets = [0, 4], sizes = [36, 32], strides = [1, 1]} : vector<36x36xf32> to vector<36x32xf32>
    %cst_152 = arith.constant dense<0.000000e+00> : vector<96x32xf32>
    %204 = tpu.matmul %202, %203, %cst_152 {dimension_numbers = #tpu.dot_dimension_numbers<[1], [0], [0], [1], [0, 0, 1, 1], [], []>} : vector<96x36xf32>, vector<36x32xf32>, vector<96x32xf32> -> vector<96x32xf32>
    %205 = arith.addf %200, %204 : vector<96x32xf32>
    %206 = arith.maximumf %181, %205 : vector<96x32xf32>
    %207 = arith.maximumf %157, %206 : vector<96x32xf32>
    %c0_153 = arith.constant 0 : index
    %c0_154 = arith.constant 0 : index
    %208 = vector.load %arg3[%c0_153, %c0_154] : memref<96x1xf32, #tpu.memory_space<vmem>>, vector<96x1xf32>
    %209 = vector.broadcast %208 : vector<96x1xf32> to vector<96x32xf32>
    %210 = arith.addf %108, %209 : vector<96x32xf32>
    %cst_155 = arith.constant 0.000000e+00 : f32
    %211 = vector.broadcast %cst_155 : f32 to vector<96x32xf32>
    %212 = arith.maximumf %210, %211 : vector<96x32xf32>
    %c0_156 = arith.constant 0 : index
    %c0_157 = arith.constant 0 : index
    %213 = vector.load %arg3[%c0_156, %c0_157] : memref<96x1xf32, #tpu.memory_space<vmem>>, vector<96x1xf32>
    %214 = vector.broadcast %213 : vector<96x1xf32> to vector<96x32xf32>
    %215 = arith.addf %207, %214 : vector<96x32xf32>
    %cst_158 = arith.constant 0.000000e+00 : f32
    %216 = vector.broadcast %cst_158 : f32 to vector<96x32xf32>
    %217 = arith.maximumf %215, %216 : vector<96x32xf32>
    %c0_159 = arith.constant 0 : index
    %c0_160 = arith.constant 0 : index
    %c0_161 = arith.constant 0 : index
    %218 = vector.load %arg4[%c0_159, %c0_160, %c0_161] : memref<10x96x96xf32, #tpu.memory_space<vmem>>, vector<1x96x96xf32>
    %219 = vector.shape_cast %218 : vector<1x96x96xf32> to vector<96x96xf32>
    %220 = vector.extract_strided_slice %212 {offsets = [0, 0], sizes = [96, 24], strides = [1, 1]} : vector<96x32xf32> to vector<96x24xf32>
    %cst_162 = arith.constant dense<0.000000e+00> : vector<96x24xf32>
    %221 = tpu.matmul %219, %220, %cst_162 {dimension_numbers = #tpu.dot_dimension_numbers<[1], [0], [0], [1], [0, 0, 1, 1], [], []>} : vector<96x96xf32>, vector<96x24xf32>, vector<96x24xf32> -> vector<96x24xf32>
    %c1_163 = arith.constant 1 : index
    %c0_164 = arith.constant 0 : index
    %c0_165 = arith.constant 0 : index
    %222 = vector.load %arg4[%c1_163, %c0_164, %c0_165] : memref<10x96x96xf32, #tpu.memory_space<vmem>>, vector<1x96x96xf32>
    %223 = vector.shape_cast %222 : vector<1x96x96xf32> to vector<96x96xf32>
    %224 = vector.extract_strided_slice %217 {offsets = [0, 0], sizes = [96, 24], strides = [1, 1]} : vector<96x32xf32> to vector<96x24xf32>
    %cst_166 = arith.constant dense<0.000000e+00> : vector<96x24xf32>
    %225 = tpu.matmul %223, %224, %cst_166 {dimension_numbers = #tpu.dot_dimension_numbers<[1], [0], [0], [1], [0, 0, 1, 1], [], []>} : vector<96x96xf32>, vector<96x24xf32>, vector<96x24xf32> -> vector<96x24xf32>
    %226 = arith.addf %221, %225 : vector<96x24xf32>
    %c2_167 = arith.constant 2 : index
    %c0_168 = arith.constant 0 : index
    %c0_169 = arith.constant 0 : index
    %227 = vector.load %arg4[%c2_167, %c0_168, %c0_169] : memref<10x96x96xf32, #tpu.memory_space<vmem>>, vector<1x96x96xf32>
    %228 = vector.shape_cast %227 : vector<1x96x96xf32> to vector<96x96xf32>
    %229 = vector.extract_strided_slice %212 {offsets = [0, 4], sizes = [96, 24], strides = [1, 1]} : vector<96x32xf32> to vector<96x24xf32>
    %cst_170 = arith.constant dense<0.000000e+00> : vector<96x24xf32>
    %230 = tpu.matmul %228, %229, %cst_170 {dimension_numbers = #tpu.dot_dimension_numbers<[1], [0], [0], [1], [0, 0, 1, 1], [], []>} : vector<96x96xf32>, vector<96x24xf32>, vector<96x24xf32> -> vector<96x24xf32>
    %231 = arith.addf %226, %230 : vector<96x24xf32>
    %c3_171 = arith.constant 3 : index
    %c0_172 = arith.constant 0 : index
    %c0_173 = arith.constant 0 : index
    %232 = vector.load %arg4[%c3_171, %c0_172, %c0_173] : memref<10x96x96xf32, #tpu.memory_space<vmem>>, vector<1x96x96xf32>
    %233 = vector.shape_cast %232 : vector<1x96x96xf32> to vector<96x96xf32>
    %234 = vector.extract_strided_slice %217 {offsets = [0, 4], sizes = [96, 24], strides = [1, 1]} : vector<96x32xf32> to vector<96x24xf32>
    %cst_174 = arith.constant dense<0.000000e+00> : vector<96x24xf32>
    %235 = tpu.matmul %233, %234, %cst_174 {dimension_numbers = #tpu.dot_dimension_numbers<[1], [0], [0], [1], [0, 0, 1, 1], [], []>} : vector<96x96xf32>, vector<96x24xf32>, vector<96x24xf32> -> vector<96x24xf32>
    %236 = arith.addf %231, %235 : vector<96x24xf32>
    %c4_175 = arith.constant 4 : index
    %c0_176 = arith.constant 0 : index
    %c0_177 = arith.constant 0 : index
    %237 = vector.load %arg4[%c4_175, %c0_176, %c0_177] : memref<10x96x96xf32, #tpu.memory_space<vmem>>, vector<1x96x96xf32>
    %238 = vector.shape_cast %237 : vector<1x96x96xf32> to vector<96x96xf32>
    %239 = vector.extract_strided_slice %212 {offsets = [0, 8], sizes = [96, 24], strides = [1, 1]} : vector<96x32xf32> to vector<96x24xf32>
    %cst_178 = arith.constant dense<0.000000e+00> : vector<96x24xf32>
    %240 = tpu.matmul %238, %239, %cst_178 {dimension_numbers = #tpu.dot_dimension_numbers<[1], [0], [0], [1], [0, 0, 1, 1], [], []>} : vector<96x96xf32>, vector<96x24xf32>, vector<96x24xf32> -> vector<96x24xf32>
    %241 = arith.addf %236, %240 : vector<96x24xf32>
    %c0_179 = arith.constant 0 : index
    %c0_180 = arith.constant 0 : index
    %c0_181 = arith.constant 0 : index
    %242 = vector.load %arg4[%c0_179, %c0_180, %c0_181] : memref<10x96x96xf32, #tpu.memory_space<vmem>>, vector<1x96x96xf32>
    %243 = vector.shape_cast %242 : vector<1x96x96xf32> to vector<96x96xf32>
    %244 = vector.extract_strided_slice %217 {offsets = [0, 0], sizes = [96, 24], strides = [1, 1]} : vector<96x32xf32> to vector<96x24xf32>
    %cst_182 = arith.constant dense<0.000000e+00> : vector<96x24xf32>
    %245 = tpu.matmul %243, %244, %cst_182 {dimension_numbers = #tpu.dot_dimension_numbers<[1], [0], [0], [1], [0, 0, 1, 1], [], []>} : vector<96x96xf32>, vector<96x24xf32>, vector<96x24xf32> -> vector<96x24xf32>
    %c1_183 = arith.constant 1 : index
    %c0_184 = arith.constant 0 : index
    %c0_185 = arith.constant 0 : index
    %246 = vector.load %arg4[%c1_183, %c0_184, %c0_185] : memref<10x96x96xf32, #tpu.memory_space<vmem>>, vector<1x96x96xf32>
    %247 = vector.shape_cast %246 : vector<1x96x96xf32> to vector<96x96xf32>
    %248 = vector.extract_strided_slice %212 {offsets = [0, 4], sizes = [96, 24], strides = [1, 1]} : vector<96x32xf32> to vector<96x24xf32>
    %cst_186 = arith.constant dense<0.000000e+00> : vector<96x24xf32>
    %249 = tpu.matmul %247, %248, %cst_186 {dimension_numbers = #tpu.dot_dimension_numbers<[1], [0], [0], [1], [0, 0, 1, 1], [], []>} : vector<96x96xf32>, vector<96x24xf32>, vector<96x24xf32> -> vector<96x24xf32>
    %250 = arith.addf %245, %249 : vector<96x24xf32>
    %c2_187 = arith.constant 2 : index
    %c0_188 = arith.constant 0 : index
    %c0_189 = arith.constant 0 : index
    %251 = vector.load %arg4[%c2_187, %c0_188, %c0_189] : memref<10x96x96xf32, #tpu.memory_space<vmem>>, vector<1x96x96xf32>
    %252 = vector.shape_cast %251 : vector<1x96x96xf32> to vector<96x96xf32>
    %253 = vector.extract_strided_slice %217 {offsets = [0, 4], sizes = [96, 24], strides = [1, 1]} : vector<96x32xf32> to vector<96x24xf32>
    %cst_190 = arith.constant dense<0.000000e+00> : vector<96x24xf32>
    %254 = tpu.matmul %252, %253, %cst_190 {dimension_numbers = #tpu.dot_dimension_numbers<[1], [0], [0], [1], [0, 0, 1, 1], [], []>} : vector<96x96xf32>, vector<96x24xf32>, vector<96x24xf32> -> vector<96x24xf32>
    %255 = arith.addf %250, %254 : vector<96x24xf32>
    %c3_191 = arith.constant 3 : index
    %c0_192 = arith.constant 0 : index
    %c0_193 = arith.constant 0 : index
    %256 = vector.load %arg4[%c3_191, %c0_192, %c0_193] : memref<10x96x96xf32, #tpu.memory_space<vmem>>, vector<1x96x96xf32>
    %257 = vector.shape_cast %256 : vector<1x96x96xf32> to vector<96x96xf32>
    %258 = vector.extract_strided_slice %212 {offsets = [0, 8], sizes = [96, 24], strides = [1, 1]} : vector<96x32xf32> to vector<96x24xf32>
    %cst_194 = arith.constant dense<0.000000e+00> : vector<96x24xf32>
    %259 = tpu.matmul %257, %258, %cst_194 {dimension_numbers = #tpu.dot_dimension_numbers<[1], [0], [0], [1], [0, 0, 1, 1], [], []>} : vector<96x96xf32>, vector<96x24xf32>, vector<96x24xf32> -> vector<96x24xf32>
    %260 = arith.addf %255, %259 : vector<96x24xf32>
    %c4_195 = arith.constant 4 : index
    %c0_196 = arith.constant 0 : index
    %c0_197 = arith.constant 0 : index
    %261 = vector.load %arg4[%c4_195, %c0_196, %c0_197] : memref<10x96x96xf32, #tpu.memory_space<vmem>>, vector<1x96x96xf32>
    %262 = vector.shape_cast %261 : vector<1x96x96xf32> to vector<96x96xf32>
    %263 = vector.extract_strided_slice %217 {offsets = [0, 8], sizes = [96, 24], strides = [1, 1]} : vector<96x32xf32> to vector<96x24xf32>
    %cst_198 = arith.constant dense<0.000000e+00> : vector<96x24xf32>
    %264 = tpu.matmul %262, %263, %cst_198 {dimension_numbers = #tpu.dot_dimension_numbers<[1], [0], [0], [1], [0, 0, 1, 1], [], []>} : vector<96x96xf32>, vector<96x24xf32>, vector<96x24xf32> -> vector<96x24xf32>
    %265 = arith.addf %260, %264 : vector<96x24xf32>
    %266 = arith.maximumf %241, %265 : vector<96x24xf32>
    %c5_199 = arith.constant 5 : index
    %c0_200 = arith.constant 0 : index
    %c0_201 = arith.constant 0 : index
    %267 = vector.load %arg4[%c5_199, %c0_200, %c0_201] : memref<10x96x96xf32, #tpu.memory_space<vmem>>, vector<1x96x96xf32>
    %268 = vector.shape_cast %267 : vector<1x96x96xf32> to vector<96x96xf32>
    %269 = vector.extract_strided_slice %212 {offsets = [0, 0], sizes = [96, 24], strides = [1, 1]} : vector<96x32xf32> to vector<96x24xf32>
    %cst_202 = arith.constant dense<0.000000e+00> : vector<96x24xf32>
    %270 = tpu.matmul %268, %269, %cst_202 {dimension_numbers = #tpu.dot_dimension_numbers<[1], [0], [0], [1], [0, 0, 1, 1], [], []>} : vector<96x96xf32>, vector<96x24xf32>, vector<96x24xf32> -> vector<96x24xf32>
    %c6_203 = arith.constant 6 : index
    %c0_204 = arith.constant 0 : index
    %c0_205 = arith.constant 0 : index
    %271 = vector.load %arg4[%c6_203, %c0_204, %c0_205] : memref<10x96x96xf32, #tpu.memory_space<vmem>>, vector<1x96x96xf32>
    %272 = vector.shape_cast %271 : vector<1x96x96xf32> to vector<96x96xf32>
    %273 = vector.extract_strided_slice %217 {offsets = [0, 0], sizes = [96, 24], strides = [1, 1]} : vector<96x32xf32> to vector<96x24xf32>
    %cst_206 = arith.constant dense<0.000000e+00> : vector<96x24xf32>
    %274 = tpu.matmul %272, %273, %cst_206 {dimension_numbers = #tpu.dot_dimension_numbers<[1], [0], [0], [1], [0, 0, 1, 1], [], []>} : vector<96x96xf32>, vector<96x24xf32>, vector<96x24xf32> -> vector<96x24xf32>
    %275 = arith.addf %270, %274 : vector<96x24xf32>
    %c7_207 = arith.constant 7 : index
    %c0_208 = arith.constant 0 : index
    %c0_209 = arith.constant 0 : index
    %276 = vector.load %arg4[%c7_207, %c0_208, %c0_209] : memref<10x96x96xf32, #tpu.memory_space<vmem>>, vector<1x96x96xf32>
    %277 = vector.shape_cast %276 : vector<1x96x96xf32> to vector<96x96xf32>
    %278 = vector.extract_strided_slice %212 {offsets = [0, 4], sizes = [96, 24], strides = [1, 1]} : vector<96x32xf32> to vector<96x24xf32>
    %cst_210 = arith.constant dense<0.000000e+00> : vector<96x24xf32>
    %279 = tpu.matmul %277, %278, %cst_210 {dimension_numbers = #tpu.dot_dimension_numbers<[1], [0], [0], [1], [0, 0, 1, 1], [], []>} : vector<96x96xf32>, vector<96x24xf32>, vector<96x24xf32> -> vector<96x24xf32>
    %280 = arith.addf %275, %279 : vector<96x24xf32>
    %c8_211 = arith.constant 8 : index
    %c0_212 = arith.constant 0 : index
    %c0_213 = arith.constant 0 : index
    %281 = vector.load %arg4[%c8_211, %c0_212, %c0_213] : memref<10x96x96xf32, #tpu.memory_space<vmem>>, vector<1x96x96xf32>
    %282 = vector.shape_cast %281 : vector<1x96x96xf32> to vector<96x96xf32>
    %283 = vector.extract_strided_slice %217 {offsets = [0, 4], sizes = [96, 24], strides = [1, 1]} : vector<96x32xf32> to vector<96x24xf32>
    %cst_214 = arith.constant dense<0.000000e+00> : vector<96x24xf32>
    %284 = tpu.matmul %282, %283, %cst_214 {dimension_numbers = #tpu.dot_dimension_numbers<[1], [0], [0], [1], [0, 0, 1, 1], [], []>} : vector<96x96xf32>, vector<96x24xf32>, vector<96x24xf32> -> vector<96x24xf32>
    %285 = arith.addf %280, %284 : vector<96x24xf32>
    %c9_215 = arith.constant 9 : index
    %c0_216 = arith.constant 0 : index
    %c0_217 = arith.constant 0 : index
    %286 = vector.load %arg4[%c9_215, %c0_216, %c0_217] : memref<10x96x96xf32, #tpu.memory_space<vmem>>, vector<1x96x96xf32>
    %287 = vector.shape_cast %286 : vector<1x96x96xf32> to vector<96x96xf32>
    %288 = vector.extract_strided_slice %212 {offsets = [0, 8], sizes = [96, 24], strides = [1, 1]} : vector<96x32xf32> to vector<96x24xf32>
    %cst_218 = arith.constant dense<0.000000e+00> : vector<96x24xf32>
    %289 = tpu.matmul %287, %288, %cst_218 {dimension_numbers = #tpu.dot_dimension_numbers<[1], [0], [0], [1], [0, 0, 1, 1], [], []>} : vector<96x96xf32>, vector<96x24xf32>, vector<96x24xf32> -> vector<96x24xf32>
    %290 = arith.addf %285, %289 : vector<96x24xf32>
    %c5_219 = arith.constant 5 : index
    %c0_220 = arith.constant 0 : index
    %c0_221 = arith.constant 0 : index
    %291 = vector.load %arg4[%c5_219, %c0_220, %c0_221] : memref<10x96x96xf32, #tpu.memory_space<vmem>>, vector<1x96x96xf32>
    %292 = vector.shape_cast %291 : vector<1x96x96xf32> to vector<96x96xf32>
    %293 = vector.extract_strided_slice %217 {offsets = [0, 0], sizes = [96, 24], strides = [1, 1]} : vector<96x32xf32> to vector<96x24xf32>
    %cst_222 = arith.constant dense<0.000000e+00> : vector<96x24xf32>
    %294 = tpu.matmul %292, %293, %cst_222 {dimension_numbers = #tpu.dot_dimension_numbers<[1], [0], [0], [1], [0, 0, 1, 1], [], []>} : vector<96x96xf32>, vector<96x24xf32>, vector<96x24xf32> -> vector<96x24xf32>
    %c6_223 = arith.constant 6 : index
    %c0_224 = arith.constant 0 : index
    %c0_225 = arith.constant 0 : index
    %295 = vector.load %arg4[%c6_223, %c0_224, %c0_225] : memref<10x96x96xf32, #tpu.memory_space<vmem>>, vector<1x96x96xf32>
    %296 = vector.shape_cast %295 : vector<1x96x96xf32> to vector<96x96xf32>
    %297 = vector.extract_strided_slice %212 {offsets = [0, 4], sizes = [96, 24], strides = [1, 1]} : vector<96x32xf32> to vector<96x24xf32>
    %cst_226 = arith.constant dense<0.000000e+00> : vector<96x24xf32>
    %298 = tpu.matmul %296, %297, %cst_226 {dimension_numbers = #tpu.dot_dimension_numbers<[1], [0], [0], [1], [0, 0, 1, 1], [], []>} : vector<96x96xf32>, vector<96x24xf32>, vector<96x24xf32> -> vector<96x24xf32>
    %299 = arith.addf %294, %298 : vector<96x24xf32>
    %c7_227 = arith.constant 7 : index
    %c0_228 = arith.constant 0 : index
    %c0_229 = arith.constant 0 : index
    %300 = vector.load %arg4[%c7_227, %c0_228, %c0_229] : memref<10x96x96xf32, #tpu.memory_space<vmem>>, vector<1x96x96xf32>
    %301 = vector.shape_cast %300 : vector<1x96x96xf32> to vector<96x96xf32>
    %302 = vector.extract_strided_slice %217 {offsets = [0, 4], sizes = [96, 24], strides = [1, 1]} : vector<96x32xf32> to vector<96x24xf32>
    %cst_230 = arith.constant dense<0.000000e+00> : vector<96x24xf32>
    %303 = tpu.matmul %301, %302, %cst_230 {dimension_numbers = #tpu.dot_dimension_numbers<[1], [0], [0], [1], [0, 0, 1, 1], [], []>} : vector<96x96xf32>, vector<96x24xf32>, vector<96x24xf32> -> vector<96x24xf32>
    %304 = arith.addf %299, %303 : vector<96x24xf32>
    %c8_231 = arith.constant 8 : index
    %c0_232 = arith.constant 0 : index
    %c0_233 = arith.constant 0 : index
    %305 = vector.load %arg4[%c8_231, %c0_232, %c0_233] : memref<10x96x96xf32, #tpu.memory_space<vmem>>, vector<1x96x96xf32>
    %306 = vector.shape_cast %305 : vector<1x96x96xf32> to vector<96x96xf32>
    %307 = vector.extract_strided_slice %212 {offsets = [0, 8], sizes = [96, 24], strides = [1, 1]} : vector<96x32xf32> to vector<96x24xf32>
    %cst_234 = arith.constant dense<0.000000e+00> : vector<96x24xf32>
    %308 = tpu.matmul %306, %307, %cst_234 {dimension_numbers = #tpu.dot_dimension_numbers<[1], [0], [0], [1], [0, 0, 1, 1], [], []>} : vector<96x96xf32>, vector<96x24xf32>, vector<96x24xf32> -> vector<96x24xf32>
    %309 = arith.addf %304, %308 : vector<96x24xf32>
    %c9_235 = arith.constant 9 : index
    %c0_236 = arith.constant 0 : index
    %c0_237 = arith.constant 0 : index
    %310 = vector.load %arg4[%c9_235, %c0_236, %c0_237] : memref<10x96x96xf32, #tpu.memory_space<vmem>>, vector<1x96x96xf32>
    %311 = vector.shape_cast %310 : vector<1x96x96xf32> to vector<96x96xf32>
    %312 = vector.extract_strided_slice %217 {offsets = [0, 8], sizes = [96, 24], strides = [1, 1]} : vector<96x32xf32> to vector<96x24xf32>
    %cst_238 = arith.constant dense<0.000000e+00> : vector<96x24xf32>
    %313 = tpu.matmul %311, %312, %cst_238 {dimension_numbers = #tpu.dot_dimension_numbers<[1], [0], [0], [1], [0, 0, 1, 1], [], []>} : vector<96x96xf32>, vector<96x24xf32>, vector<96x24xf32> -> vector<96x24xf32>
    %314 = arith.addf %309, %313 : vector<96x24xf32>
    %315 = arith.maximumf %290, %314 : vector<96x24xf32>
    %316 = arith.maximumf %266, %315 : vector<96x24xf32>
    %c0_239 = arith.constant 0 : index
    %c0_240 = arith.constant 0 : index
    %317 = vector.load %arg5[%c0_239, %c0_240] : memref<96x1xf32, #tpu.memory_space<vmem>>, vector<96x1xf32>
    %318 = vector.broadcast %317 : vector<96x1xf32> to vector<96x24xf32>
    %319 = arith.addf %316, %318 : vector<96x24xf32>
    %cst_241 = arith.constant 0.000000e+00 : f32
    %320 = vector.broadcast %cst_241 : f32 to vector<96x24xf32>
    %321 = arith.maximumf %319, %320 : vector<96x24xf32>
    %c0_242 = arith.constant 0 : index
    %c0_243 = arith.constant 0 : index
    %c0_244 = arith.constant 0 : index
    %322 = vector.load %arg6[%c0_242, %c0_243, %c0_244] : memref<6x120x96xf32, #tpu.memory_space<vmem>>, vector<1x120x96xf32>
    %323 = vector.shape_cast %322 : vector<1x120x96xf32> to vector<120x96xf32>
    %324 = vector.extract_strided_slice %321 {offsets = [0, 0], sizes = [96, 4], strides = [1, 1]} : vector<96x24xf32> to vector<96x4xf32>
    %cst_245 = arith.constant dense<0.000000e+00> : vector<120x4xf32>
    %325 = tpu.matmul %323, %324, %cst_245 {dimension_numbers = #tpu.dot_dimension_numbers<[1], [0], [0], [1], [0, 0, 1, 1], [], []>} : vector<120x96xf32>, vector<96x4xf32>, vector<120x4xf32> -> vector<120x4xf32>
    %c1_246 = arith.constant 1 : index
    %c0_247 = arith.constant 0 : index
    %c0_248 = arith.constant 0 : index
    %326 = vector.load %arg6[%c1_246, %c0_247, %c0_248] : memref<6x120x96xf32, #tpu.memory_space<vmem>>, vector<1x120x96xf32>
    %327 = vector.shape_cast %326 : vector<1x120x96xf32> to vector<120x96xf32>
    %328 = vector.extract_strided_slice %321 {offsets = [0, 4], sizes = [96, 4], strides = [1, 1]} : vector<96x24xf32> to vector<96x4xf32>
    %cst_249 = arith.constant dense<0.000000e+00> : vector<120x4xf32>
    %329 = tpu.matmul %327, %328, %cst_249 {dimension_numbers = #tpu.dot_dimension_numbers<[1], [0], [0], [1], [0, 0, 1, 1], [], []>} : vector<120x96xf32>, vector<96x4xf32>, vector<120x4xf32> -> vector<120x4xf32>
    %330 = arith.addf %325, %329 : vector<120x4xf32>
    %c2_250 = arith.constant 2 : index
    %c0_251 = arith.constant 0 : index
    %c0_252 = arith.constant 0 : index
    %331 = vector.load %arg6[%c2_250, %c0_251, %c0_252] : memref<6x120x96xf32, #tpu.memory_space<vmem>>, vector<1x120x96xf32>
    %332 = vector.shape_cast %331 : vector<1x120x96xf32> to vector<120x96xf32>
    %333 = vector.extract_strided_slice %321 {offsets = [0, 8], sizes = [96, 4], strides = [1, 1]} : vector<96x24xf32> to vector<96x4xf32>
    %cst_253 = arith.constant dense<0.000000e+00> : vector<120x4xf32>
    %334 = tpu.matmul %332, %333, %cst_253 {dimension_numbers = #tpu.dot_dimension_numbers<[1], [0], [0], [1], [0, 0, 1, 1], [], []>} : vector<120x96xf32>, vector<96x4xf32>, vector<120x4xf32> -> vector<120x4xf32>
    %335 = arith.addf %330, %334 : vector<120x4xf32>
    %c3_254 = arith.constant 3 : index
    %c0_255 = arith.constant 0 : index
    %c0_256 = arith.constant 0 : index
    %336 = vector.load %arg6[%c3_254, %c0_255, %c0_256] : memref<6x120x96xf32, #tpu.memory_space<vmem>>, vector<1x120x96xf32>
    %337 = vector.shape_cast %336 : vector<1x120x96xf32> to vector<120x96xf32>
    %338 = vector.extract_strided_slice %321 {offsets = [0, 12], sizes = [96, 4], strides = [1, 1]} : vector<96x24xf32> to vector<96x4xf32>
    %cst_257 = arith.constant dense<0.000000e+00> : vector<120x4xf32>
    %339 = tpu.matmul %337, %338, %cst_257 {dimension_numbers = #tpu.dot_dimension_numbers<[1], [0], [0], [1], [0, 0, 1, 1], [], []>} : vector<120x96xf32>, vector<96x4xf32>, vector<120x4xf32> -> vector<120x4xf32>
    %340 = arith.addf %335, %339 : vector<120x4xf32>
    %c4_258 = arith.constant 4 : index
    %c0_259 = arith.constant 0 : index
    %c0_260 = arith.constant 0 : index
    %341 = vector.load %arg6[%c4_258, %c0_259, %c0_260] : memref<6x120x96xf32, #tpu.memory_space<vmem>>, vector<1x120x96xf32>
    %342 = vector.shape_cast %341 : vector<1x120x96xf32> to vector<120x96xf32>
    %343 = vector.extract_strided_slice %321 {offsets = [0, 16], sizes = [96, 4], strides = [1, 1]} : vector<96x24xf32> to vector<96x4xf32>
    %cst_261 = arith.constant dense<0.000000e+00> : vector<120x4xf32>
    %344 = tpu.matmul %342, %343, %cst_261 {dimension_numbers = #tpu.dot_dimension_numbers<[1], [0], [0], [1], [0, 0, 1, 1], [], []>} : vector<120x96xf32>, vector<96x4xf32>, vector<120x4xf32> -> vector<120x4xf32>
    %345 = arith.addf %340, %344 : vector<120x4xf32>
    %c5_262 = arith.constant 5 : index
    %c0_263 = arith.constant 0 : index
    %c0_264 = arith.constant 0 : index
    %346 = vector.load %arg6[%c5_262, %c0_263, %c0_264] : memref<6x120x96xf32, #tpu.memory_space<vmem>>, vector<1x120x96xf32>
    %347 = vector.shape_cast %346 : vector<1x120x96xf32> to vector<120x96xf32>
    %348 = vector.extract_strided_slice %321 {offsets = [0, 20], sizes = [96, 4], strides = [1, 1]} : vector<96x24xf32> to vector<96x4xf32>
    %cst_265 = arith.constant dense<0.000000e+00> : vector<120x4xf32>
    %349 = tpu.matmul %347, %348, %cst_265 {dimension_numbers = #tpu.dot_dimension_numbers<[1], [0], [0], [1], [0, 0, 1, 1], [], []>} : vector<120x96xf32>, vector<96x4xf32>, vector<120x4xf32> -> vector<120x4xf32>
    %350 = arith.addf %345, %349 : vector<120x4xf32>
    %c0_266 = arith.constant 0 : index
    %c0_267 = arith.constant 0 : index
    %351 = vector.load %arg7[%c0_266, %c0_267] : memref<120x1xf32, #tpu.memory_space<vmem>>, vector<120x1xf32>
    %352 = vector.broadcast %351 : vector<120x1xf32> to vector<120x4xf32>
    %353 = arith.addf %350, %352 : vector<120x4xf32>
    %cst_268 = arith.constant 0.000000e+00 : f32
    %354 = vector.broadcast %cst_268 : f32 to vector<120x4xf32>
    %355 = arith.maximumf %353, %354 : vector<120x4xf32>
    %c0_269 = arith.constant 0 : index
    %c0_270 = arith.constant 0 : index
    %356 = vector.load %arg8[%c0_269, %c0_270] : memref<84x120xf32, #tpu.memory_space<vmem>>, vector<84x120xf32>
    %cst_271 = arith.constant dense<0.000000e+00> : vector<84x4xf32>
    %357 = tpu.matmul %356, %355, %cst_271 {dimension_numbers = #tpu.dot_dimension_numbers<[1], [0], [0], [1], [0, 0, 1, 1], [], []>} : vector<84x120xf32>, vector<120x4xf32>, vector<84x4xf32> -> vector<84x4xf32>
    %c0_272 = arith.constant 0 : index
    %c0_273 = arith.constant 0 : index
    %358 = vector.load %arg9[%c0_272, %c0_273] : memref<84x1xf32, #tpu.memory_space<vmem>>, vector<84x1xf32>
    %359 = vector.broadcast %358 : vector<84x1xf32> to vector<84x4xf32>
    %360 = arith.addf %357, %359 : vector<84x4xf32>
    %cst_274 = arith.constant 0.000000e+00 : f32
    %361 = vector.broadcast %cst_274 : f32 to vector<84x4xf32>
    %362 = arith.maximumf %360, %361 : vector<84x4xf32>
    %c0_275 = arith.constant 0 : index
    %c0_276 = arith.constant 0 : index
    %363 = vector.load %arg10[%c0_275, %c0_276] : memref<10x84xf32, #tpu.memory_space<vmem>>, vector<10x84xf32>
    %cst_277 = arith.constant dense<0.000000e+00> : vector<10x4xf32>
    %364 = tpu.matmul %363, %362, %cst_277 {dimension_numbers = #tpu.dot_dimension_numbers<[1], [0], [0], [1], [0, 0, 1, 1], [], []>} : vector<10x84xf32>, vector<84x4xf32>, vector<10x4xf32> -> vector<10x4xf32>
    %c0_278 = arith.constant 0 : index
    %c0_279 = arith.constant 0 : index
    %365 = vector.load %arg11[%c0_278, %c0_279] : memref<10x1xf32, #tpu.memory_space<vmem>>, vector<10x1xf32>
    %366 = vector.broadcast %365 : vector<10x1xf32> to vector<10x4xf32>
    %367 = arith.addf %364, %366 : vector<10x4xf32>
    %c0_280 = arith.constant 0 : index
    %c0_281 = arith.constant 0 : index
    %c0_282 = arith.constant 0 : index
    %368 = vector.load %arg12[%c0_280, %c0_281, %c0_282] : memref<1x10x4xf32, #tpu.memory_space<vmem>>, vector<1x10x4xf32>
    %369 = vector.shape_cast %368 : vector<1x10x4xf32> to vector<10x4xf32>
    %370 = vector.shape_cast %367 : vector<10x4xf32> to vector<1x10x4xf32>
    tpu.vector_store %arg12[%c0_280, %c0_281, %c0_282], %370 {strides = array<i32>} : memref<1x10x4xf32, #tpu.memory_space<vmem>>, vector<1x10x4xf32>,
    return
  }
  func.func @transform_0(%arg0: i32) -> (i32, i32, i32, i32) {
    %c0_i32 = arith.constant 0 : i32
    %c0_i32_0 = arith.constant 0 : i32
    %c0_i32_1 = arith.constant 0 : i32
    %c0_i32_2 = arith.constant 0 : i32
    return %arg0, %c0_i32, %c0_i32_0, %c0_i32_1 : i32, i32, i32, i32
  }
  func.func @transform_1(%arg0: i32) -> (i32, i32, i32) {
    %c0_i32 = arith.constant 0 : i32
    %c0_i32_0 = arith.constant 0 : i32
    %c0_i32_1 = arith.constant 0 : i32
    %c0_i32_2 = arith.constant 0 : i32
    return %c0_i32, %c0_i32_0, %c0_i32_1 : i32, i32, i32
  }
  func.func @transform_2(%arg0: i32) -> (i32, i32) {
    %c0_i32 = arith.constant 0 : i32
    %c0_i32_0 = arith.constant 0 : i32
    %c0_i32_1 = arith.constant 0 : i32
    return %c0_i32, %c0_i32_0 : i32, i32
  }
  func.func @transform_3(%arg0: i32) -> (i32, i32, i32) {
    %c0_i32 = arith.constant 0 : i32
    %c0_i32_0 = arith.constant 0 : i32
    %c0_i32_1 = arith.constant 0 : i32
    %c0_i32_2 = arith.constant 0 : i32
    return %c0_i32, %c0_i32_0, %c0_i32_1 : i32, i32, i32
  }
  func.func @transform_4(%arg0: i32) -> (i32, i32) {
    %c0_i32 = arith.constant 0 : i32
    %c0_i32_0 = arith.constant 0 : i32
    %c0_i32_1 = arith.constant 0 : i32
    return %c0_i32, %c0_i32_0 : i32, i32
  }
  func.func @transform_5(%arg0: i32) -> (i32, i32, i32) {
    %c0_i32 = arith.constant 0 : i32
    %c0_i32_0 = arith.constant 0 : i32
    %c0_i32_1 = arith.constant 0 : i32
    %c0_i32_2 = arith.constant 0 : i32
    return %c0_i32, %c0_i32_0, %c0_i32_1 : i32, i32, i32
  }
  func.func @transform_6(%arg0: i32) -> (i32, i32) {
    %c0_i32 = arith.constant 0 : i32
    %c0_i32_0 = arith.constant 0 : i32
    %c0_i32_1 = arith.constant 0 : i32
    return %c0_i32, %c0_i32_0 : i32, i32
  }
  func.func @transform_7(%arg0: i32) -> (i32, i32) {
    %c0_i32 = arith.constant 0 : i32
    %c0_i32_0 = arith.constant 0 : i32
    %c0_i32_1 = arith.constant 0 : i32
    return %c0_i32, %c0_i32_0 : i32, i32
  }
  func.func @transform_8(%arg0: i32) -> (i32, i32) {
    %c0_i32 = arith.constant 0 : i32
    %c0_i32_0 = arith.constant 0 : i32
    %c0_i32_1 = arith.constant 0 : i32
    return %c0_i32, %c0_i32_0 : i32, i32
  }
  func.func @transform_9(%arg0: i32) -> (i32, i32) {
    %c0_i32 = arith.constant 0 : i32
    %c0_i32_0 = arith.constant 0 : i32
    %c0_i32_1 = arith.constant 0 : i32
    return %c0_i32, %c0_i32_0 : i32, i32
  }
  func.func @transform_10(%arg0: i32) -> (i32, i32) {
    %c0_i32 = arith.constant 0 : i32
    %c0_i32_0 = arith.constant 0 : i32
    %c0_i32_1 = arith.constant 0 : i32
    return %c0_i32, %c0_i32_0 : i32, i32
  }
  func.func @transform_11(%arg0: i32) -> (i32, i32, i32) {
    %c0_i32 = arith.constant 0 : i32
    %c0_i32_0 = arith.constant 0 : i32
    %c0_i32_1 = arith.constant 0 : i32
    return %arg0, %c0_i32, %c0_i32_0 : i32, i32, i32
  }
}

</mosaic_0001>

<llo_original>
// kernel: lenet5_forward.1
$region0: #{lenet5_forward.1}
  #allocation0 [shape = 'u32[]', space=smem, size = 0x4, offset = 0x4, fixed_abs, tag = 'smem constant byte address 0x4 - core index']
  #allocation1 [shape = 'u32[72,128]{1,0:T(1,128)}', space=vmem, size = 0x9000, scoped, tag = 'internal scratch']
  %s0 = inlined_call_operand.vmem [shape: f32[2,4,36,36], index: 0, kind: input, shape index: {}]
  %s1 = inlined_call_operand.vmem [shape: f32[10,96,36], index: 1, kind: input, shape index: {}]
  %s2 = inlined_call_operand.vmem [shape: f32[96,1], index: 2, kind: input, shape index: {}]
  %s3 = inlined_call_operand.vmem [shape: f32[10,96,96], index: 3, kind: input, shape index: {}]
  %s4 = inlined_call_operand.vmem [shape: f32[96,1], index: 4, kind: input, shape index: {}]
  %s5 = inlined_call_operand.hbm [shape: f32[6,120,96], index: 5, kind: input, shape index: {}]
  %s6 = inlined_call_operand.vmem [shape: f32[120,1], index: 6, kind: input, shape index: {}]
  %s7 = inlined_call_operand.hbm [shape: f32[84,120], index: 7, kind: input, shape index: {}]
  %s8 = inlined_call_operand.hbm [shape: f32[84,1], index: 8, kind: input, shape index: {}]
  %s9 = inlined_call_operand.hbm [shape: f32[10,84], index: 9, kind: input, shape index: {}]
  %s10 = inlined_call_operand.hbm [shape: f32[10,1], index: 10, kind: input, shape index: {}]
  %s11 = inlined_call_operand.vmem [shape: f32[2,10,4], index: 11, kind: output, shape index: {}]
  %s12 = sld [smem:[#allocation0]]
  $region97: #{lenet5_forward.1} parent=0
    _
  %s14 = ssub.s32 1, %s12
  %s15 = scalar_select 0, %s14, %s12
  $region1: #{lenet5_forward.1} parent=0
    #allocation2 [shape = 'u8[368640]{0}', space=vmem, size = 0x5a000, scoped, tag = 'input window, operand 5, single buffered']
    #allocation3 [shape = 's32[2]{0}', space=sflag, size = 0x8, scoped, tag = 'scoped memory for lenet5_forward.1']
    #allocation4 [shape = 'u8[45056]{0}', space=vmem, size = 0xb000, scoped, tag = 'input window, operand 7, single buffered']
    #allocation5 [shape = 's32[1]{0}', space=sflag, size = 0x4, scoped, tag = 'scoped memory for lenet5_forward.1']
    #allocation6 [shape = 'u8[45056]{0}', space=vmem, size = 0xb000, scoped, tag = 'input window, operand 8, single buffered']
    #allocation7 [shape = 'u8[8192]{0}', space=vmem, size = 0x2000, scoped, tag = 'input window, operand 9, single buffered']
    #allocation8 [shape = 's32[1]{0}', space=sflag, size = 0x4, scoped, tag = 'scoped memory for lenet5_forward.1']
    #allocation9 [shape = 'u8[8192]{0}', space=vmem, size = 0x2000, scoped, tag = 'input window, operand 10, single buffered']
    %16 = vsyncpa [#allocation3], 0
    %17 = vsyncpa [#allocation5], 0
    %18 = vsyncpa [#allocation8], 0
    loop: start=0, step=1, limit=4
    $region2: #{lenet5_forward.1} parent=1 // loop_pre_header
      _
    $region3: #{lenet5_forward.1} parent=1 // loop_header
      %s20 = sphi 0, %s24
      %p21 = scmp.ge.s32.totalorder %s20, 4
      %s30 = sphi 0, %s32
      %s33 = sphi 0, %s30
      %s34 = sphi 0, %s33
      %s50 = sphi 0, %s34
      %s54 = sphi 0, %s54
      %s56 = sphi 0, %s54
      %s57 = sphi 0, %s56
      %s71 = sphi 0, %s57
      %s75 = sphi 0, %s75
      %s77 = sphi 0, %s75
      %s78 = sphi 0, %s77
      %s92 = sphi 0, %s78
      %s96 = sphi 0, %s96
      %s98 = sphi 0, %s96
      %s99 = sphi 0, %s98
      %s113 = sphi 0, %s99
      %s117 = sphi 0, %s117
      %s119 = sphi 0, %s117
      %s120 = sphi 0, %s119
      %s134 = sphi 0, %s120
      %s138 = sphi 0, %s138
      %s140 = sphi 0, %s138
      %s141 = sphi 0, %s140
      %s155 = sphi 0, %s141
      %s159 = sphi 0, %s159
      %s161 = sphi 0, %s159
      %s162 = sphi 0, %s161
      %s176 = sphi 0, %s162
      %s180 = sphi 0, %s180
      %s182 = sphi 0, %s180
      %s183 = sphi 0, %s182
      %s197 = sphi 0, %s183
      %s201 = sphi 0, %s201
      %s203 = sphi 0, %s201
      %s204 = sphi 0, %s203
      %s218 = sphi 0, %s204
      %s222 = sphi 0, %s222
      %s224 = sphi 0, %s222
      %s225 = sphi 0, %s224
      %s239 = sphi 0, %s225
      %s243 = sphi 0, %s243
      %s245 = sphi 0, %s243
      %s246 = sphi 0, %s245
      %s260 = sphi 0, %s246
      %s266 = sphi 0, %s268
      %s269 = sphi 0, %s266
      %s270 = sphi 0, %s269
      %s286 = sphi 0, %s270
    $region4: #{lenet5_forward.1} parent=1 // loop_header_branch
      %23 = sbr.rel (%p21) target = $region8
    $region5: #{lenet5_forward.1} parent=1 // loop_body
      %s25 = ssub.s32 %s20, 1
      %s26 = ssub.s32 %s20, 2
      %s27 = sadd.s32 %s20, 1
      %s28 = ssub.s32 %s20, %s27
      %p29 = scmp.eq.s32.totalorder %s28, 0
      %s31 = sadd.s32 %s30, 1
      %s32 = scalar_select %p29, %s30, %s31
      %p35 = pneg %p29
      %p36 = scmp.eq.s32.totalorder %s20, 1
      %p37 = por %p35, %p36
      %p38 = scmp.ne.s32.totalorder %s30, %s33
      %p39 = scmp.eq.s32.totalorder %s20, 0
      %p40 = por %p38, %p39
      %p41 = scmp.ne.s32.totalorder %s30, %s33
      %p42 = scmp.eq.s32.totalorder %s25, 1
      %p43 = por %p41, %p42
      %p44 = scmp.ne.s32.totalorder %s33, %s34
      %p45 = scmp.eq.s32.totalorder %s25, 0
      %p46 = por %p44, %p45
      %p47 = scmp.ne.s32.totalorder %s33, %s34
      %p48 = scmp.eq.s32.totalorder %s26, 1
      %p49 = por %p47, %p48
      %p51 = scmp.ne.s32.totalorder %s34, %s50
      %p52 = scmp.eq.s32.totalorder %s26, 0
      %p53 = por %p51, %p52
      %s55 = sadd.s32 %s54, 1
      %p58 = scmp.eq.s32.totalorder %s20, 1
      %p59 = scmp.ne.s32.totalorder %s54, %s56
      %p60 = scmp.eq.s32.totalorder %s20, 0
      %p61 = por %p59, %p60
      %p62 = scmp.ne.s32.totalorder %s54, %s56
      %p63 = scmp.eq.s32.totalorder %s25, 1
      %p64 = por %p62, %p63
      %p65 = scmp.ne.s32.totalorder %s56, %s57
      %p66 = scmp.eq.s32.totalorder %s25, 0
      %p67 = por %p65, %p66
      %p68 = scmp.ne.s32.totalorder %s56, %s57
      %p69 = scmp.eq.s32.totalorder %s26, 1
      %p70 = por %p68, %p69
      %p72 = scmp.ne.s32.totalorder %s57, %s71
      %p73 = scmp.eq.s32.totalorder %s26, 0
      %p74 = por %p72, %p73
      %s76 = sadd.s32 %s75, 1
      %p79 = scmp.eq.s32.totalorder %s20, 1
      %p80 = scmp.ne.s32.totalorder %s75, %s77
      %p81 = scmp.eq.s32.totalorder %s20, 0
      %p82 = por %p80, %p81
      %p83 = scmp.ne.s32.totalorder %s75, %s77
      %p84 = scmp.eq.s32.totalorder %s25, 1
      %p85 = por %p83, %p84
      %p86 = scmp.ne.s32.totalorder %s77, %s78
      %p87 = scmp.eq.s32.totalorder %s25, 0
      %p88 = por %p86, %p87
      %p89 = scmp.ne.s32.totalorder %s77, %s78
      %p90 = scmp.eq.s32.totalorder %s26, 1
      %p91 = por %p89, %p90
      %p93 = scmp.ne.s32.totalorder %s78, %s92
      %p94 = scmp.eq.s32.totalorder %s26, 0
      %p95 = por %p93, %p94
      %s97 = sadd.s32 %s96, 1
      %p100 = scmp.eq.s32.totalorder %s20, 1
      %p101 = scmp.ne.s32.totalorder %s96, %s98
      %p102 = scmp.eq.s32.totalorder %s20, 0
      %p103 = por %p101, %p102
      %p104 = scmp.ne.s32.totalorder %s96, %s98
      %p105 = scmp.eq.s32.totalorder %s25, 1
      %p106 = por %p104, %p105
      %p107 = scmp.ne.s32.totalorder %s98, %s99
      %p108 = scmp.eq.s32.totalorder %s25, 0
      %p109 = por %p107, %p108
      %p110 = scmp.ne.s32.totalorder %s98, %s99
      %p111 = scmp.eq.s32.totalorder %s26, 1
      %p112 = por %p110, %p111
      %p114 = scmp.ne.s32.totalorder %s99, %s113
      %p115 = scmp.eq.s32.totalorder %s26, 0
      %p116 = por %p114, %p115
      %s118 = sadd.s32 %s117, 1
      %p121 = scmp.eq.s32.totalorder %s20, 1
      %p122 = scmp.ne.s32.totalorder %s117, %s119
      %p123 = scmp.eq.s32.totalorder %s20, 0
      %p124 = por %p122, %p123
      %p125 = scmp.ne.s32.totalorder %s117, %s119
      %p126 = scmp.eq.s32.totalorder %s25, 1
      %p127 = por %p125, %p126
      %p128 = scmp.ne.s32.totalorder %s119, %s120
      %p129 = scmp.eq.s32.totalorder %s25, 0
      %p130 = por %p128, %p129
      %p131 = scmp.ne.s32.totalorder %s119, %s120
      %p132 = scmp.eq.s32.totalorder %s26, 1
      %p133 = por %p131, %p132
      %p135 = scmp.ne.s32.totalorder %s120, %s134
      %p136 = scmp.eq.s32.totalorder %s26, 0
      %p137 = por %p135, %p136
      %s139 = sadd.s32 %s138, 1
      %p142 = scmp.eq.s32.totalorder %s20, 1
      %p143 = scmp.ne.s32.totalorder %s138, %s140
      %p144 = scmp.eq.s32.totalorder %s20, 0
      %p145 = por %p143, %p144
      %p146 = scmp.ne.s32.totalorder %s138, %s140
      %p147 = scmp.eq.s32.totalorder %s25, 1
      %p148 = por %p146, %p147
      %p149 = scmp.ne.s32.totalorder %s140, %s141
      %p150 = scmp.eq.s32.totalorder %s25, 0
      %p151 = por %p149, %p150
      %p152 = scmp.ne.s32.totalorder %s140, %s141
      %p153 = scmp.eq.s32.totalorder %s26, 1
      %p154 = por %p152, %p153
      %p156 = scmp.ne.s32.totalorder %s141, %s155
      %p157 = scmp.eq.s32.totalorder %s26, 0
      %p158 = por %p156, %p157
      %s160 = sadd.s32 %s159, 1
      %p163 = scmp.eq.s32.totalorder %s20, 1
      %p164 = scmp.ne.s32.totalorder %s159, %s161
      %p165 = scmp.eq.s32.totalorder %s20, 0
      %p166 = por %p164, %p165
      %p167 = scmp.ne.s32.totalorder %s159, %s161
      %p168 = scmp.eq.s32.totalorder %s25, 1
      %p169 = por %p167, %p168
      %p170 = scmp.ne.s32.totalorder %s161, %s162
      %p171 = scmp.eq.s32.totalorder %s25, 0
      %p172 = por %p170, %p171
      %p173 = scmp.ne.s32.totalorder %s161, %s162
      %p174 = scmp.eq.s32.totalorder %s26, 1
      %p175 = por %p173, %p174
      %p177 = scmp.ne.s32.totalorder %s162, %s176
      %p178 = scmp.eq.s32.totalorder %s26, 0
      %p179 = por %p177, %p178
      %s181 = sadd.s32 %s180, 1
      %p184 = scmp.eq.s32.totalorder %s20, 1
      %p185 = scmp.ne.s32.totalorder %s180, %s182
      %p186 = scmp.eq.s32.totalorder %s20, 0
      %p187 = por %p185, %p186
      %p188 = scmp.ne.s32.totalorder %s180, %s182
      %p189 = scmp.eq.s32.totalorder %s25, 1
      %p190 = por %p188, %p189
      %p191 = scmp.ne.s32.totalorder %s182, %s183
      %p192 = scmp.eq.s32.totalorder %s25, 0
      %p193 = por %p191, %p192
      %p194 = scmp.ne.s32.totalorder %s182, %s183
      %p195 = scmp.eq.s32.totalorder %s26, 1
      %p196 = por %p194, %p195
      %p198 = scmp.ne.s32.totalorder %s183, %s197
      %p199 = scmp.eq.s32.totalorder %s26, 0
      %p200 = por %p198, %p199
      %s202 = sadd.s32 %s201, 1
      %p205 = scmp.eq.s32.totalorder %s20, 1
      %p206 = scmp.ne.s32.totalorder %s201, %s203
      %p207 = scmp.eq.s32.totalorder %s20, 0
      %p208 = por %p206, %p207
      %p209 = scmp.ne.s32.totalorder %s201, %s203
      %p210 = scmp.eq.s32.totalorder %s25, 1
      %p211 = por %p209, %p210
      %p212 = scmp.ne.s32.totalorder %s203, %s204
      %p213 = scmp.eq.s32.totalorder %s25, 0
      %p214 = por %p212, %p213
      %p215 = scmp.ne.s32.totalorder %s203, %s204
      %p216 = scmp.eq.s32.totalorder %s26, 1
      %p217 = por %p215, %p216
      %p219 = scmp.ne.s32.totalorder %s204, %s218
      %p220 = scmp.eq.s32.totalorder %s26, 0
      %p221 = por %p219, %p220
      %s223 = sadd.s32 %s222, 1
      %p226 = scmp.eq.s32.totalorder %s20, 1
      %p227 = scmp.ne.s32.totalorder %s222, %s224
      %p228 = scmp.eq.s32.totalorder %s20, 0
      %p229 = por %p227, %p228
      %p230 = scmp.ne.s32.totalorder %s222, %s224
      %p231 = scmp.eq.s32.totalorder %s25, 1
      %p232 = por %p230, %p231
      %p233 = scmp.ne.s32.totalorder %s224, %s225
      %p234 = scmp.eq.s32.totalorder %s25, 0
      %p235 = por %p233, %p234
      %p236 = scmp.ne.s32.totalorder %s224, %s225
      %p237 = scmp.eq.s32.totalorder %s26, 1
      %p238 = por %p236, %p237
      %p240 = scmp.ne.s32.totalorder %s225, %s239
      %p241 = scmp.eq.s32.totalorder %s26, 0
      %p242 = por %p240, %p241
      %s244 = sadd.s32 %s243, 1
      %p247 = scmp.eq.s32.totalorder %s20, 1
      %p248 = scmp.ne.s32.totalorder %s243, %s245
      %p249 = scmp.eq.s32.totalorder %s20, 0
      %p250 = por %p248, %p249
      %p251 = scmp.ne.s32.totalorder %s243, %s245
      %p252 = scmp.eq.s32.totalorder %s25, 1
      %p253 = por %p251, %p252
      %p254 = scmp.ne.s32.totalorder %s245, %s246
      %p255 = scmp.eq.s32.totalorder %s25, 0
      %p256 = por %p254, %p255
      %p257 = scmp.ne.s32.totalorder %s245, %s246
      %p258 = scmp.eq.s32.totalorder %s26, 1
      %p259 = por %p257, %p258
      %p261 = scmp.ne.s32.totalorder %s246, %s260
      %p262 = scmp.eq.s32.totalorder %s26, 0
      %p263 = por %p261, %p262
      %s264 = ssub.s32 %s20, %s27
      %p265 = scmp.eq.s32.totalorder %s264, 0
      %s267 = sadd.s32 %s266, 1
      %s268 = scalar_select %p265, %s266, %s267
      %p271 = pneg %p265
      %p272 = scmp.eq.s32.totalorder %s20, 1
      %p273 = por %p271, %p272
      %p274 = scmp.ne.s32.totalorder %s266, %s269
      %p275 = scmp.eq.s32.totalorder %s20, 0
      %p276 = por %p274, %p275
      %p277 = scmp.ne.s32.totalorder %s266, %s269
      %p278 = scmp.eq.s32.totalorder %s25, 1
      %p279 = por %p277, %p278
      %p280 = scmp.ne.s32.totalorder %s269, %s270
      %p281 = scmp.eq.s32.totalorder %s25, 0
      %p282 = por %p280, %p281
      %p283 = scmp.ne.s32.totalorder %s269, %s270
      %p284 = scmp.eq.s32.totalorder %s26, 1
      %p285 = por %p283, %p284
      %p287 = scmp.ne.s32.totalorder %s270, %s286
      %p288 = scmp.eq.s32.totalorder %s26, 0
      %p289 = por %p287, %p288
      %p290 = scmp.le.s32.totalorder 1, %s20
      %p291 = scmp.lt.s32.totalorder %s20, 3
      %p292 = pnand %p290, %p291
      %p293 = pneg %p292
      // Predicated region
      $region9: #{lenet5_forward.1} parent=5 // pred_check
        _
      $region10: #{lenet5_forward.1} parent=5 // pred_check_branch
        %295 = sbr.rel (%p292) target = $region12
      $region11: #{lenet5_forward.1} parent=5 // pred_region
        %s296 = ssub.s32 %s20, 1
        // Predicated region
        $region13: #{lenet5_forward.1} parent=11 // pred_check
          %p297 = pneg %p67
        $region14: #{lenet5_forward.1} parent=11 // pred_check_branch
          %299 = sbr.rel (%p297) target = $region16
        $region15: #{lenet5_forward.1} parent=11 // pred_region
          _
        $region16: #{lenet5_forward.1} parent=11 // pred_fallthru
          _
        // Predicated region
        $region17: #{lenet5_forward.1} parent=11 // pred_check
          %p300 = pneg %p88
        $region18: #{lenet5_forward.1} parent=11 // pred_check_branch
          %302 = sbr.rel (%p300) target = $region20
        $region19: #{lenet5_forward.1} parent=11 // pred_region
          _
        $region20: #{lenet5_forward.1} parent=11 // pred_fallthru
          _
        // Predicated region
        $region21: #{lenet5_forward.1} parent=11 // pred_check
          %p303 = pneg %p109
        $region22: #{lenet5_forward.1} parent=11 // pred_check_branch
          %305 = sbr.rel (%p303) target = $region24
        $region23: #{lenet5_forward.1} parent=11 // pred_region
          _
        $region24: #{lenet5_forward.1} parent=11 // pred_fallthru
          _
        // Predicated region
        $region25: #{lenet5_forward.1} parent=11 // pred_check
          %p306 = pneg %p130
        $region26: #{lenet5_forward.1} parent=11 // pred_check_branch
          %308 = sbr.rel (%p306) target = $region28
        $region27: #{lenet5_forward.1} parent=11 // pred_region
          _
        $region28: #{lenet5_forward.1} parent=11 // pred_fallthru
          _
        // Predicated region
        $region29: #{lenet5_forward.1} parent=11 // pred_check
          %p309 = pneg %p151
        $region30: #{lenet5_forward.1} parent=11 // pred_check_branch
          %311 = sbr.rel (%p309) target = $region32
        $region31: #{lenet5_forward.1} parent=11 // pred_region
          %313 = vsyncadd [#allocation3], 0
          %s314 = sshll.u32 %s5, 4
          %s315 = int_to_ptr.hbm [resolvable:$true] %s314
          %s316 = sshll.u32 [#allocation2], 4
          %s317 = int_to_ptr.vmem [resolvable:$true] %s316
          %322 = dma.hbm_to_vmem [thread:$0]  %s315, 11520, %s317, [#allocation3], 128, 128, 8
        $region32: #{lenet5_forward.1} parent=11 // pred_fallthru
          _
        // Predicated region
        $region33: #{lenet5_forward.1} parent=11 // pred_check
          %p323 = pneg %p172
        $region34: #{lenet5_forward.1} parent=11 // pred_check_branch
          %325 = sbr.rel (%p323) target = $region36
        $region35: #{lenet5_forward.1} parent=11 // pred_region
          _
        $region36: #{lenet5_forward.1} parent=11 // pred_fallthru
          _
        // Predicated region
        $region37: #{lenet5_forward.1} parent=11 // pred_check
          %p326 = pneg %p193
        $region38: #{lenet5_forward.1} parent=11 // pred_check_branch
          %328 = sbr.rel (%p326) target = $region40
        $region39: #{lenet5_forward.1} parent=11 // pred_region
          %330 = vsyncadd [#allocation5], 0
          %s331 = sshll.u32 %s7, 4
          %s332 = int_to_ptr.hbm [resolvable:$true] %s331
          %s333 = sshll.u32 [#allocation4], 4
          %s334 = int_to_ptr.vmem [resolvable:$true] %s333
          %339 = dma.hbm_to_vmem [thread:$0]  %s332, 1408, %s334, [#allocation5], 128, 128, 8
        $region40: #{lenet5_forward.1} parent=11 // pred_fallthru
          _
        // Predicated region
        $region41: #{lenet5_forward.1} parent=11 // pred_check
          %p340 = pneg %p214
        $region42: #{lenet5_forward.1} parent=11 // pred_check_branch
          %342 = sbr.rel (%p340) target = $region44
        $region43: #{lenet5_forward.1} parent=11 // pred_region
          %344 = vsyncadd [#allocation5], 0
          %s345 = sshll.u32 %s8, 4
          %s346 = int_to_ptr.hbm [resolvable:$true] %s345
          %s347 = sshll.u32 [#allocation6], 4
          %s348 = int_to_ptr.vmem [resolvable:$true] %s347
          %353 = dma.hbm_to_vmem [thread:$0]  %s346, 1408, %s348, [#allocation5], 128, 128, 8
        $region44: #{lenet5_forward.1} parent=11 // pred_fallthru
          _
        // Predicated region
        $region45: #{lenet5_forward.1} parent=11 // pred_check
          %p354 = pneg %p235
        $region46: #{lenet5_forward.1} parent=11 // pred_check_branch
          %356 = sbr.rel (%p354) target = $region48
        $region47: #{lenet5_forward.1} parent=11 // pred_region
          %358 = vsyncadd [#allocation8], 0
          %s359 = sshll.u32 %s9, 4
          %s360 = int_to_ptr.hbm [resolvable:$true] %s359
          %s361 = sshll.u32 [#allocation7], 4
          %s362 = int_to_ptr.vmem [resolvable:$true] %s361
          %367 = dma.hbm_to_vmem [thread:$0]  %s360, 256, %s362, [#allocation8], 128, 128, 8
        $region48: #{lenet5_forward.1} parent=11 // pred_fallthru
          _
        // Predicated region
        $region49: #{lenet5_forward.1} parent=11 // pred_check
          %p368 = pneg %p256
        $region50: #{lenet5_forward.1} parent=11 // pred_check_branch
          %370 = sbr.rel (%p368) target = $region52
        $region51: #{lenet5_forward.1} parent=11 // pred_region
          %372 = vsyncadd [#allocation8], 0
          %s373 = sshll.u32 %s10, 4
          %s374 = int_to_ptr.hbm [resolvable:$true] %s373
          %s375 = sshll.u32 [#allocation9], 4
          %s376 = int_to_ptr.vmem [resolvable:$true] %s375
          %381 = dma.hbm_to_vmem [thread:$0]  %s374, 256, %s376, [#allocation8], 128, 128, 8
        $region52: #{lenet5_forward.1} parent=11 // pred_fallthru
          _
      $region12: #{lenet5_forward.1} parent=5 // pred_fallthru
        _
      %p382 = scmp.lt.s32.totalorder %s20, 2
      // Predicated region
      $region53: #{lenet5_forward.1} parent=5 // pred_check
        %p383 = pneg %p382
      $region54: #{lenet5_forward.1} parent=5 // pred_check_branch
        %385 = sbr.rel (%p383) target = $region56
      $region55: #{lenet5_forward.1} parent=5 // pred_region
        // Predicated region
        $region57: #{lenet5_forward.1} parent=55 // pred_check
          %p386 = pneg %p40
        $region58: #{lenet5_forward.1} parent=55 // pred_check_branch
          %388 = sbr.rel (%p386) target = $region60
        $region59: #{lenet5_forward.1} parent=55 // pred_region
          %p389 = scmp.lt.s32.totalorder %s20, 1
          %s390 = scalar_select %p389, %s20, 1
          %s391 = smul.addr %s390, 20
          %s392 = smul.addr %s391, 8
          %s393 = scalar_lea.vmem %s0, %s392
        $region60: #{lenet5_forward.1} parent=55 // pred_fallthru
          _
      $region56: #{lenet5_forward.1} parent=5 // pred_fallthru
        _
      %p394 = scmp.le.s32.totalorder 1, %s20
      %p395 = scmp.lt.s32.totalorder %s20, 3
      %p396 = pnand %p394, %p395
      %p397 = pneg %p396
      // Predicated region
      $region61: #{lenet5_forward.1} parent=5 // pred_check
        _
      $region62: #{lenet5_forward.1} parent=5 // pred_check_branch
        %399 = sbr.rel (%p396) target = $region64
      $region63: #{lenet5_forward.1} parent=5 // pred_region
        %s400 = ssub.s32 %s20, 1
        // Predicated region
        $region65: #{lenet5_forward.1} parent=63 // pred_check
          %p401 = pneg %p151
        $region66: #{lenet5_forward.1} parent=63 // pred_check_branch
          %403 = sbr.rel (%p401) target = $region68
        $region67: #{lenet5_forward.1} parent=63 // pred_region
          %405 = dma.done [#allocation3], 11520
        $region68: #{lenet5_forward.1} parent=63 // pred_fallthru
          _
        // Predicated region
        $region69: #{lenet5_forward.1} parent=63 // pred_check
          %p406 = pneg %p193
        $region70: #{lenet5_forward.1} parent=63 // pred_check_branch
          %408 = sbr.rel (%p406) target = $region72
        $region71: #{lenet5_forward.1} parent=63 // pred_region
          %410 = dma.done [#allocation5], 1408
        $region72: #{lenet5_forward.1} parent=63 // pred_fallthru
          _
        // Predicated region
        $region73: #{lenet5_forward.1} parent=63 // pred_check
          %p411 = pneg %p214
        $region74: #{lenet5_forward.1} parent=63 // pred_check_branch
          %413 = sbr.rel (%p411) target = $region76
        $region75: #{lenet5_forward.1} parent=63 // pred_region
          %415 = dma.done [#allocation5], 1408
        $region76: #{lenet5_forward.1} parent=63 // pred_fallthru
          _
        // Predicated region
        $region77: #{lenet5_forward.1} parent=63 // pred_check
          %p416 = pneg %p235
        $region78: #{lenet5_forward.1} parent=63 // pred_check_branch
          %418 = sbr.rel (%p416) target = $region80
        $region79: #{lenet5_forward.1} parent=63 // pred_region
          %420 = dma.done [#allocation8], 256
        $region80: #{lenet5_forward.1} parent=63 // pred_fallthru
          _
        // Predicated region
        $region81: #{lenet5_forward.1} parent=63 // pred_check
          %p421 = pneg %p256
        $region82: #{lenet5_forward.1} parent=63 // pred_check_branch
          %423 = sbr.rel (%p421) target = $region84
        $region83: #{lenet5_forward.1} parent=63 // pred_region
          %425 = dma.done [#allocation8], 256
        $region84: #{lenet5_forward.1} parent=63 // pred_fallthru
          _
        %p426 = scmp.lt.s32.totalorder %s25, 1
        %s427 = scalar_select %p426, %s25, 1
        %s428 = smul.addr %s427, 20
        %s429 = smul.addr %s428, 8
        %s430 = scalar_lea.vmem %s0, %s429
        %p431 = pneg %p46
        %p432 = pneg %p43
        %p433 = pneg %p67
        %p434 = pneg %p64
        %p435 = pneg %p88
        %p436 = pneg %p85
        %p437 = pneg %p109
        %p438 = pneg %p106
        %p439 = pneg %p130
        %p440 = pneg %p127
        %p441 = pneg %p151
        %p442 = pneg %p148
        %p443 = pneg %p172
        %p444 = pneg %p169
        %p445 = pneg %p193
        %p446 = pneg %p190
        %p447 = pneg %p214
        %p448 = pneg %p211
        %p449 = pneg %p235
        %p450 = pneg %p232
        %p451 = pneg %p256
        %p452 = pneg %p253
        %p453 = pneg %p282
        %p454 = pneg %p279
        %p455 = scmp.lt.s32.totalorder %s25, 1
        %s456 = scalar_select %p455, %s25, 1
        %s457 = smul.addr %s456, 2
        %s458 = smul.addr %s457, 8
        %s459 = scalar_lea.vmem %s11, %s458
        %p460 = scmp.lt.s32.totalorder %s25, 1
        %s461 = scalar_select %p460, %s25, 1
        %s462 = smul.addr %s461, 20
        %s463 = smul.addr %s462, 8
        %s464 = scalar_lea.vmem %s0, %s463
        %p465 = scmp.lt.s32.totalorder %s25, 1
        %s466 = scalar_select %p465, %s25, 1
        %s467 = smul.addr %s466, 2
        %s468 = smul.addr %s467, 8
        %s469 = scalar_lea.vmem %s11, %s468
        %v470 = vld [vmem:[%s464] sm:$0xff]
        %v471 = vld [vmem:[%s464 + $0x8] sm:$0xff]
        %v472 = vld [vmem:[%s464 + $0x10] sm:$0xff]
        %v473 = vld [vmem:[%s464 + $0x18] sm:$0xff]
        %v474 = vld [vmem:[%s464 + $0x20] sm:$0xf]
        %v475 = vld [vmem:[%s464 + $0x28] sm:$0xff]
        %v476 = vld [vmem:[%s464 + $0x30] sm:$0xff]
        %v477 = vld [vmem:[%s464 + $0x38] sm:$0xff]
        %v478 = vld [vmem:[%s464 + $0x40] sm:$0xff]
        %v479 = vld [vmem:[%s464 + $0x48] sm:$0xf]
        %v480 = vld [vmem:[%s464 + $0x50] sm:$0xff]
        %v481 = vld [vmem:[%s464 + $0x58] sm:$0xff]
        %v482 = vld [vmem:[%s464 + $0x60] sm:$0xff]
        %v483 = vld [vmem:[%s464 + $0x68] sm:$0xff]
        %v484 = vld [vmem:[%s464 + $0x70] sm:$0xf]
        %v485 = vld [vmem:[%s464 + $0x78] sm:$0xff]
        %v486 = vld [vmem:[%s464 + $0x80] sm:$0xff]
        %v487 = vld [vmem:[%s464 + $0x88] sm:$0xff]
        %v488 = vld [vmem:[%s464 + $0x90] sm:$0xff]
        %v489 = vld [vmem:[%s464 + $0x98] sm:$0xf]
        %v490 = vld [vmem:[%s1] sm:$0xff]
        %v491 = vld [vmem:[%s1 + $0x8] sm:$0xff]
        %v492 = vld [vmem:[%s1 + $0x10] sm:$0xff]
        %v493 = vld [vmem:[%s1 + $0x18] sm:$0xff]
        %v494 = vld [vmem:[%s1 + $0x20] sm:$0xff]
        %v495 = vld [vmem:[%s1 + $0x28] sm:$0xff]
        %v496 = vld [vmem:[%s1 + $0x30] sm:$0xff]
        %v497 = vld [vmem:[%s1 + $0x38] sm:$0xff]
        %v498 = vld [vmem:[%s1 + $0x40] sm:$0xff]
        %v499 = vld [vmem:[%s1 + $0x48] sm:$0xff]
        %v500 = vld [vmem:[%s1 + $0x50] sm:$0xff]
        %v501 = vld [vmem:[%s1 + $0x58] sm:$0xff]
        %s502 = scalar_lea.vmem %s1, 96
        %v503 = vld [vmem:[%s502] sm:$0xff]
        %v504 = vld [vmem:[%s502 + $0x8] sm:$0xff]
        %v505 = vld [vmem:[%s502 + $0x10] sm:$0xff]
        %v506 = vld [vmem:[%s502 + $0x18] sm:$0xff]
        %v507 = vld [vmem:[%s502 + $0x20] sm:$0xff]
        %v508 = vld [vmem:[%s502 + $0x28] sm:$0xff]
        %v509 = vld [vmem:[%s502 + $0x30] sm:$0xff]
        %v510 = vld [vmem:[%s502 + $0x38] sm:$0xff]
        %v511 = vld [vmem:[%s502 + $0x40] sm:$0xff]
        %v512 = vld [vmem:[%s502 + $0x48] sm:$0xff]
        %v513 = vld [vmem:[%s502 + $0x50] sm:$0xff]
        %v514 = vld [vmem:[%s502 + $0x58] sm:$0xff]
        %vm515 = vcmask 293888
        %v517 = vsel %vm515, %v503, 0
        %v520 = vsel %vm515, %v504, 0
        %v523 = vsel %vm515, %v505, 0
        %v526 = vsel %vm515, %v506, 0
        %v529 = vsel %vm515, %v507, 0
        %v532 = vsel %vm515, %v508, 0
        %v535 = vsel %vm515, %v509, 0
        %v538 = vsel %vm515, %v510, 0
        %v541 = vsel %vm515, %v511, 0
        %v544 = vsel %vm515, %v512, 0
        %v547 = vsel %vm515, %v513, 0
        %v550 = vsel %vm515, %v514, 0
        %vm552 = vcmask 1043456
        %v554 = vsel %vm552, %v479, 0
        %556 = vmatpush.msra.mxu0 0.0
        %557 = vmatpush.msra.mxu0 0.0
        %558 = vmatpush.msra.mxu0 0.0
        %559 = vmatpush.msra.mxu0 0.0
        %560 = vmatpush.msra.mxu0 0.0
        %561 = vmatpush.msra.mxu0 0.0
        %562 = vmatpush.msra.mxu0 0.0
        %563 = vmatpush.msra.mxu0 0.0
        %564 = vmatpush.msra.mxu0 0.0
        %565 = vmatpush.msra.mxu0 0.0
        %566 = vmatpush.msra.mxu0 0.0
        %567 = vmatpush.msra.mxu0 %v554
        %568 = vmatpush.msra.mxu0 %v478
        %569 = vmatpush.msra.mxu0 %v477
        %570 = vmatpush.msra.mxu0 %v476
        %571 = vmatpush.msra.mxu0 %v475
        %572 = vmatmul.f32.gmra.mxu0 %v517
        %v573 = vpop.f32.mrf.mxu0
        %v574 = vadd.f32 0.0, %v573
        %575 = vmatmul.f32.gmra.mxu0 %v520
        %v576 = vpop.f32.mrf.mxu0
        %v577 = vadd.f32 0.0, %v576
        %578 = vmatmul.f32.gmra.mxu0 %v523
        %v579 = vpop.f32.mrf.mxu0
        %v580 = vadd.f32 0.0, %v579
        %581 = vmatmul.f32.gmra.mxu0 %v526
        %v582 = vpop.f32.mrf.mxu0
        %v583 = vadd.f32 0.0, %v582
        %584 = vmatmul.f32.gmra.mxu0 %v529
        %v585 = vpop.f32.mrf.mxu0
        %v586 = vadd.f32 0.0, %v585
        %587 = vmatmul.f32.gmra.mxu0 %v532
        %v588 = vpop.f32.mrf.mxu0
        %v589 = vadd.f32 0.0, %v588
        %590 = vmatmul.f32.gmra.mxu0 %v535
        %v591 = vpop.f32.mrf.mxu0
        %v592 = vadd.f32 0.0, %v591
        %593 = vmatmul.f32.gmra.mxu0 %v538
        %v594 = vpop.f32.mrf.mxu0
        %v595 = vadd.f32 0.0, %v594
        %596 = vmatmul.f32.gmra.mxu0 %v541
        %v597 = vpop.f32.mrf.mxu0
        %v598 = vadd.f32 0.0, %v597
        %599 = vmatmul.f32.gmra.mxu0 %v544
        %v600 = vpop.f32.mrf.mxu0
        %v601 = vadd.f32 0.0, %v600
        %602 = vmatmul.f32.gmra.mxu0 %v547
        %v603 = vpop.f32.mrf.mxu0
        %v604 = vadd.f32 0.0, %v603
        %605 = vmatmul.f32.gmra.mxu0 %v550
        %v606 = vpop.f32.mrf.mxu0
        %v607 = vadd.f32 0.0, %v606
        %608 = vdwg.mxu0
        %v610 = vsel %vm515, %v490, 0
        %v613 = vsel %vm515, %v491, 0
        %v616 = vsel %vm515, %v492, 0
        %v619 = vsel %vm515, %v493, 0
        %v622 = vsel %vm515, %v494, 0
        %v625 = vsel %vm515, %v495, 0
        %v628 = vsel %vm515, %v496, 0
        %v631 = vsel %vm515, %v497, 0
        %v634 = vsel %vm515, %v498, 0
        %v637 = vsel %vm515, %v499, 0
        %v640 = vsel %vm515, %v500, 0
        %v643 = vsel %vm515, %v501, 0
        %v646 = vsel %vm552, %v474, 0
        %648 = vmatpush.msra.mxu0 0.0
        %649 = vmatpush.msra.mxu0 0.0
        %650 = vmatpush.msra.mxu0 0.0
        %651 = vmatpush.msra.mxu0 0.0
        %652 = vmatpush.msra.mxu0 0.0
        %653 = vmatpush.msra.mxu0 0.0
        %654 = vmatpush.msra.mxu0 0.0
        %655 = vmatpush.msra.mxu0 0.0
        %656 = vmatpush.msra.mxu0 0.0
        %657 = vmatpush.msra.mxu0 0.0
        %658 = vmatpush.msra.mxu0 0.0
        %659 = vmatpush.msra.mxu0 %v646
        %660 = vmatpush.msra.mxu0 %v473
        %661 = vmatpush.msra.mxu0 %v472
        %662 = vmatpush.msra.mxu0 %v471
        %663 = vmatpush.msra.mxu0 %v470
        %664 = vmatmul.f32.gmra.mxu0 %v610
        %v665 = vpop.f32.mrf.mxu0
        %v666 = vadd.f32 %v574, %v665
        %667 = vmatmul.f32.gmra.mxu0 %v613
        %v668 = vpop.f32.mrf.mxu0
        %v669 = vadd.f32 %v577, %v668
        %670 = vmatmul.f32.gmra.mxu0 %v616
        %v671 = vpop.f32.mrf.mxu0
        %v672 = vadd.f32 %v580, %v671
        %673 = vmatmul.f32.gmra.mxu0 %v619
        %v674 = vpop.f32.mrf.mxu0
        %v675 = vadd.f32 %v583, %v674
        %676 = vmatmul.f32.gmra.mxu0 %v622
        %v677 = vpop.f32.mrf.mxu0
        %v678 = vadd.f32 %v586, %v677
        %679 = vmatmul.f32.gmra.mxu0 %v625
        %v680 = vpop.f32.mrf.mxu0
        %v681 = vadd.f32 %v589, %v680
        %682 = vmatmul.f32.gmra.mxu0 %v628
        %v683 = vpop.f32.mrf.mxu0
        %v684 = vadd.f32 %v592, %v683
        %685 = vmatmul.f32.gmra.mxu0 %v631
        %v686 = vpop.f32.mrf.mxu0
        %v687 = vadd.f32 %v595, %v686
        %688 = vmatmul.f32.gmra.mxu0 %v634
        %v689 = vpop.f32.mrf.mxu0
        %v690 = vadd.f32 %v598, %v689
        %691 = vmatmul.f32.gmra.mxu0 %v637
        %v692 = vpop.f32.mrf.mxu0
        %v693 = vadd.f32 %v601, %v692
        %694 = vmatmul.f32.gmra.mxu0 %v640
        %v695 = vpop.f32.mrf.mxu0
        %v696 = vadd.f32 %v604, %v695
        %697 = vmatmul.f32.gmra.mxu0 %v643
        %v698 = vpop.f32.mrf.mxu0
        %v699 = vadd.f32 %v607, %v698
        %700 = vdwg.mxu0
        %s701 = scalar_lea.vmem %s1, 192
        %v702 = vld [vmem:[%s701] sm:$0xff]
        %v703 = vld [vmem:[%s701 + $0x8] sm:$0xff]
        %v704 = vld [vmem:[%s701 + $0x10] sm:$0xff]
        %v705 = vld [vmem:[%s701 + $0x18] sm:$0xff]
        %v706 = vld [vmem:[%s701 + $0x20] sm:$0xff]
        %v707 = vld [vmem:[%s701 + $0x28] sm:$0xff]
        %v708 = vld [vmem:[%s701 + $0x30] sm:$0xff]
        %v709 = vld [vmem:[%s701 + $0x38] sm:$0xff]
        %v710 = vld [vmem:[%s701 + $0x40] sm:$0xff]
        %v711 = vld [vmem:[%s701 + $0x48] sm:$0xff]
        %v712 = vld [vmem:[%s701 + $0x50] sm:$0xff]
        %v713 = vld [vmem:[%s701 + $0x58] sm:$0xff]
        %v715 = vsel %vm515, %v702, 0
        %v718 = vsel %vm515, %v703, 0
        %v721 = vsel %vm515, %v704, 0
        %v724 = vsel %vm515, %v705, 0
        %v727 = vsel %vm515, %v706, 0
        %v730 = vsel %vm515, %v707, 0
        %v733 = vsel %vm515, %v708, 0
        %v736 = vsel %vm515, %v709, 0
        %v739 = vsel %vm515, %v710, 0
        %v742 = vsel %vm515, %v711, 0
        %v745 = vsel %vm515, %v712, 0
        %v748 = vsel %vm515, %v713, 0
        %v751 = vsel %vm552, %v484, 0
        %753 = vmatpush.msra.mxu0 0.0
        %754 = vmatpush.msra.mxu0 0.0
        %755 = vmatpush.msra.mxu0 0.0
        %756 = vmatpush.msra.mxu0 0.0
        %757 = vmatpush.msra.mxu0 0.0
        %758 = vmatpush.msra.mxu0 0.0
        %759 = vmatpush.msra.mxu0 0.0
        %760 = vmatpush.msra.mxu0 0.0
        %761 = vmatpush.msra.mxu0 0.0
        %762 = vmatpush.msra.mxu0 0.0
        %763 = vmatpush.msra.mxu0 0.0
        %764 = vmatpush.msra.mxu0 %v751
        %765 = vmatpush.msra.mxu0 %v483
        %766 = vmatpush.msra.mxu0 %v482
        %767 = vmatpush.msra.mxu0 %v481
        %768 = vmatpush.msra.mxu0 %v480
        %769 = vmatmul.f32.gmra.mxu0 %v715
        %v770 = vpop.f32.mrf.mxu0
        %v771 = vadd.f32 0.0, %v770
        %772 = vmatmul.f32.gmra.mxu0 %v718
        %v773 = vpop.f32.mrf.mxu0
        %v774 = vadd.f32 0.0, %v773
        %775 = vmatmul.f32.gmra.mxu0 %v721
        %v776 = vpop.f32.mrf.mxu0
        %v777 = vadd.f32 0.0, %v776
        %778 = vmatmul.f32.gmra.mxu0 %v724
        %v779 = vpop.f32.mrf.mxu0
        %v780 = vadd.f32 0.0, %v779
        %781 = vmatmul.f32.gmra.mxu0 %v727
        %v782 = vpop.f32.mrf.mxu0
        %v783 = vadd.f32 0.0, %v782
        %784 = vmatmul.f32.gmra.mxu0 %v730
        %v785 = vpop.f32.mrf.mxu0
        %v786 = vadd.f32 0.0, %v785
        %787 = vmatmul.f32.gmra.mxu0 %v733
        %v788 = vpop.f32.mrf.mxu0
        %v789 = vadd.f32 0.0, %v788
        %790 = vmatmul.f32.gmra.mxu0 %v736
        %v791 = vpop.f32.mrf.mxu0
        %v792 = vadd.f32 0.0, %v791
        %793 = vmatmul.f32.gmra.mxu0 %v739
        %v794 = vpop.f32.mrf.mxu0
        %v795 = vadd.f32 0.0, %v794
        %796 = vmatmul.f32.gmra.mxu0 %v742
        %v797 = vpop.f32.mrf.mxu0
        %v798 = vadd.f32 0.0, %v797
        %799 = vmatmul.f32.gmra.mxu0 %v745
        %v800 = vpop.f32.mrf.mxu0
        %v801 = vadd.f32 0.0, %v800
        %802 = vmatmul.f32.gmra.mxu0 %v748
        %v803 = vpop.f32.mrf.mxu0
        %v804 = vadd.f32 0.0, %v803
        %805 = vdwg.mxu0
        %v806 = vadd.f32 %v666, %v771
        %v807 = vadd.f32 %v669, %v774
        %v808 = vadd.f32 %v672, %v777
        %v809 = vadd.f32 %v675, %v780
        %v810 = vadd.f32 %v678, %v783
        %v811 = vadd.f32 %v681, %v786
        %v812 = vadd.f32 %v684, %v789
        %v813 = vadd.f32 %v687, %v792
        %v814 = vadd.f32 %v690, %v795
        %v815 = vadd.f32 %v693, %v798
        %v816 = vadd.f32 %v696, %v801
        %v817 = vadd.f32 %v699, %v804
        %s818 = scalar_lea.vmem %s1, 288
        %v819 = vld [vmem:[%s818] sm:$0xff]
        %v820 = vld [vmem:[%s818 + $0x8] sm:$0xff]
        %v821 = vld [vmem:[%s818 + $0x10] sm:$0xff]
        %v822 = vld [vmem:[%s818 + $0x18] sm:$0xff]
        %v823 = vld [vmem:[%s818 + $0x20] sm:$0xff]
        %v824 = vld [vmem:[%s818 + $0x28] sm:$0xff]
        %v825 = vld [vmem:[%s818 + $0x30] sm:$0xff]
        %v826 = vld [vmem:[%s818 + $0x38] sm:$0xff]
        %v827 = vld [vmem:[%s818 + $0x40] sm:$0xff]
        %v828 = vld [vmem:[%s818 + $0x48] sm:$0xff]
        %v829 = vld [vmem:[%s818 + $0x50] sm:$0xff]
        %v830 = vld [vmem:[%s818 + $0x58] sm:$0xff]
        %v832 = vsel %vm515, %v819, 0
        %v835 = vsel %vm515, %v820, 0
        %v838 = vsel %vm515, %v821, 0
        %v841 = vsel %vm515, %v822, 0
        %v844 = vsel %vm515, %v823, 0
        %v847 = vsel %vm515, %v824, 0
        %v850 = vsel %vm515, %v825, 0
        %v853 = vsel %vm515, %v826, 0
        %v856 = vsel %vm515, %v827, 0
        %v859 = vsel %vm515, %v828, 0
        %v862 = vsel %vm515, %v829, 0
        %v865 = vsel %vm515, %v830, 0
        %v868 = vsel %vm552, %v489, 0
        %870 = vmatpush.msra.mxu0 0.0
        %871 = vmatpush.msra.mxu0 0.0
        %872 = vmatpush.msra.mxu0 0.0
        %873 = vmatpush.msra.mxu0 0.0
        %874 = vmatpush.msra.mxu0 0.0
        %875 = vmatpush.msra.mxu0 0.0
        %876 = vmatpush.msra.mxu0 0.0
        %877 = vmatpush.msra.mxu0 0.0
        %878 = vmatpush.msra.mxu0 0.0
        %879 = vmatpush.msra.mxu0 0.0
        %880 = vmatpush.msra.mxu0 0.0
        %881 = vmatpush.msra.mxu0 %v868
        %882 = vmatpush.msra.mxu0 %v488
        %883 = vmatpush.msra.mxu0 %v487
        %884 = vmatpush.msra.mxu0 %v486
        %885 = vmatpush.msra.mxu0 %v485
        %886 = vmatmul.f32.gmra.mxu0 %v832
        %v887 = vpop.f32.mrf.mxu0
        %v888 = vadd.f32 0.0, %v887
        %889 = vmatmul.f32.gmra.mxu0 %v835
        %v890 = vpop.f32.mrf.mxu0
        %v891 = vadd.f32 0.0, %v890
        %892 = vmatmul.f32.gmra.mxu0 %v838
        %v893 = vpop.f32.mrf.mxu0
        %v894 = vadd.f32 0.0, %v893
        %895 = vmatmul.f32.gmra.mxu0 %v841
        %v896 = vpop.f32.mrf.mxu0
        %v897 = vadd.f32 0.0, %v896
        %898 = vmatmul.f32.gmra.mxu0 %v844
        %v899 = vpop.f32.mrf.mxu0
        %v900 = vadd.f32 0.0, %v899
        %901 = vmatmul.f32.gmra.mxu0 %v847
        %v902 = vpop.f32.mrf.mxu0
        %v903 = vadd.f32 0.0, %v902
        %904 = vmatmul.f32.gmra.mxu0 %v850
        %v905 = vpop.f32.mrf.mxu0
        %v906 = vadd.f32 0.0, %v905
        %907 = vmatmul.f32.gmra.mxu0 %v853
        %v908 = vpop.f32.mrf.mxu0
        %v909 = vadd.f32 0.0, %v908
        %910 = vmatmul.f32.gmra.mxu0 %v856
        %v911 = vpop.f32.mrf.mxu0
        %v912 = vadd.f32 0.0, %v911
        %913 = vmatmul.f32.gmra.mxu0 %v859
        %v914 = vpop.f32.mrf.mxu0
        %v915 = vadd.f32 0.0, %v914
        %916 = vmatmul.f32.gmra.mxu0 %v862
        %v917 = vpop.f32.mrf.mxu0
        %v918 = vadd.f32 0.0, %v917
        %919 = vmatmul.f32.gmra.mxu0 %v865
        %v920 = vpop.f32.mrf.mxu0
        %v921 = vadd.f32 0.0, %v920
        %922 = vdwg.mxu0
        %v923 = vadd.f32 %v806, %v888
        %v924 = vadd.f32 %v807, %v891
        %v925 = vadd.f32 %v808, %v894
        %v926 = vadd.f32 %v809, %v897
        %v927 = vadd.f32 %v810, %v900
        %v928 = vadd.f32 %v811, %v903
        %v929 = vadd.f32 %v812, %v906
        %v930 = vadd.f32 %v813, %v909
        %v931 = vadd.f32 %v814, %v912
        %v932 = vadd.f32 %v815, %v915
        %v933 = vadd.f32 %v816, %v918
        %v934 = vadd.f32 %v817, %v921
        %s935 = scalar_lea.vmem %s1, 384
        %v936 = vld [vmem:[%s935] sm:$0xff]
        %v937 = vld [vmem:[%s935 + $0x8] sm:$0xff]
        %v938 = vld [vmem:[%s935 + $0x10] sm:$0xff]
        %v939 = vld [vmem:[%s935 + $0x18] sm:$0xff]
        %v940 = vld [vmem:[%s935 + $0x20] sm:$0xff]
        %v941 = vld [vmem:[%s935 + $0x28] sm:$0xff]
        %v942 = vld [vmem:[%s935 + $0x30] sm:$0xff]
        %v943 = vld [vmem:[%s935 + $0x38] sm:$0xff]
        %v944 = vld [vmem:[%s935 + $0x40] sm:$0xff]
        %v945 = vld [vmem:[%s935 + $0x48] sm:$0xff]
        %v946 = vld [vmem:[%s935 + $0x50] sm:$0xff]
        %v947 = vld [vmem:[%s935 + $0x58] sm:$0xff]
        %952 = vrot.lane.b32.xlu0 %v470, 124
        %v953 = vpop.permute.xlu0 %952
        %954 = vrot.lane.b32.xlu0 %v471, 124
        %v955 = vpop.permute.xlu0 %954
        %956 = vrot.lane.b32.xlu0 %v472, 124
        %v957 = vpop.permute.xlu0 %956
        %958 = vrot.lane.b32.xlu0 %v473, 124
        %v959 = vpop.permute.xlu0 %958
        %960 = vrot.lane.b32.xlu0 %v474, 124
        %v961 = vpop.permute.xlu0 %960
        %v967 = vsel %vm515, %v936, 0
        %v970 = vsel %vm515, %v937, 0
        %v973 = vsel %vm515, %v938, 0
        %v976 = vsel %vm515, %v939, 0
        %v979 = vsel %vm515, %v940, 0
        %v982 = vsel %vm515, %v941, 0
        %v985 = vsel %vm515, %v942, 0
        %v988 = vsel %vm515, %v943, 0
        %v991 = vsel %vm515, %v944, 0
        %v994 = vsel %vm515, %v945, 0
        %v997 = vsel %vm515, %v946, 0
        %v1000 = vsel %vm515, %v947, 0
        %v1002 = vsel %vm552, %v961, 0
        %1004 = vmatpush.msra.mxu0 0.0
        %1005 = vmatpush.msra.mxu0 0.0
        %1006 = vmatpush.msra.mxu0 0.0
        %1007 = vmatpush.msra.mxu0 0.0
        %1008 = vmatpush.msra.mxu0 0.0
        %1009 = vmatpush.msra.mxu0 0.0
        %1010 = vmatpush.msra.mxu0 0.0
        %1011 = vmatpush.msra.mxu0 0.0
        %1012 = vmatpush.msra.mxu0 0.0
        %1013 = vmatpush.msra.mxu0 0.0
        %1014 = vmatpush.msra.mxu0 0.0
        %1015 = vmatpush.msra.mxu0 %v1002
        %1016 = vmatpush.msra.mxu0 %v959
        %1017 = vmatpush.msra.mxu0 %v957
        %1018 = vmatpush.msra.mxu0 %v955
        %1019 = vmatpush.msra.mxu0 %v953
        %1020 = vmatmul.f32.gmra.mxu0 %v967
        %v1021 = vpop.f32.mrf.mxu0
        %v1022 = vadd.f32 0.0, %v1021
        %1023 = vmatmul.f32.gmra.mxu0 %v970
        %v1024 = vpop.f32.mrf.mxu0
        %v1025 = vadd.f32 0.0, %v1024
        %1026 = vmatmul.f32.gmra.mxu0 %v973
        %v1027 = vpop.f32.mrf.mxu0
        %v1028 = vadd.f32 0.0, %v1027
        %1029 = vmatmul.f32.gmra.mxu0 %v976
        %v1030 = vpop.f32.mrf.mxu0
        %v1031 = vadd.f32 0.0, %v1030
        %1032 = vmatmul.f32.gmra.mxu0 %v979
        %v1033 = vpop.f32.mrf.mxu0
        %v1034 = vadd.f32 0.0, %v1033
        %1035 = vmatmul.f32.gmra.mxu0 %v982
        %v1036 = vpop.f32.mrf.mxu0
        %v1037 = vadd.f32 0.0, %v1036
        %1038 = vmatmul.f32.gmra.mxu0 %v985
        %v1039 = vpop.f32.mrf.mxu0
        %v1040 = vadd.f32 0.0, %v1039
        %1041 = vmatmul.f32.gmra.mxu0 %v988
        %v1042 = vpop.f32.mrf.mxu0
        %v1043 = vadd.f32 0.0, %v1042
        %1044 = vmatmul.f32.gmra.mxu0 %v991
        %v1045 = vpop.f32.mrf.mxu0
        %v1046 = vadd.f32 0.0, %v1045
        %1047 = vmatmul.f32.gmra.mxu0 %v994
        %v1048 = vpop.f32.mrf.mxu0
        %v1049 = vadd.f32 0.0, %v1048
        %1050 = vmatmul.f32.gmra.mxu0 %v997
        %v1051 = vpop.f32.mrf.mxu0
        %v1052 = vadd.f32 0.0, %v1051
        %1053 = vmatmul.f32.gmra.mxu0 %v1000
        %v1054 = vpop.f32.mrf.mxu0
        %v1055 = vadd.f32 0.0, %v1054
        %1056 = vdwg.mxu0
        %v1057 = vadd.f32 %v923, %v1022
        %v1058 = vadd.f32 %v924, %v1025
        %v1059 = vadd.f32 %v925, %v1028
        %v1060 = vadd.f32 %v926, %v1031
        %v1061 = vadd.f32 %v927, %v1034
        %v1062 = vadd.f32 %v928, %v1037
        %v1063 = vadd.f32 %v929, %v1040
        %v1064 = vadd.f32 %v930, %v1043
        %v1065 = vadd.f32 %v931, %v1046
        %v1066 = vadd.f32 %v932, %v1049
        %v1067 = vadd.f32 %v933, %v1052
        %v1068 = vadd.f32 %v934, %v1055
        %1069 = vmatpush.msra.mxu0 0.0
        %1070 = vmatpush.msra.mxu0 0.0
        %1071 = vmatpush.msra.mxu0 0.0
        %1072 = vmatpush.msra.mxu0 0.0
        %1073 = vmatpush.msra.mxu0 0.0
        %1074 = vmatpush.msra.mxu0 0.0
        %1075 = vmatpush.msra.mxu0 0.0
        %1076 = vmatpush.msra.mxu0 0.0
        %1077 = vmatpush.msra.mxu0 0.0
        %1078 = vmatpush.msra.mxu0 0.0
        %1079 = vmatpush.msra.mxu0 0.0
        %1080 = vmatpush.msra.mxu0 %v751
        %1081 = vmatpush.msra.mxu0 %v483
        %1082 = vmatpush.msra.mxu0 %v482
        %1083 = vmatpush.msra.mxu0 %v481
        %1084 = vmatpush.msra.mxu0 %v480
        %1085 = vmatmul.f32.gmra.mxu0 %v517
        %v1086 = vpop.f32.mrf.mxu0
        %v1087 = vadd.f32 0.0, %v1086
        %1088 = vmatmul.f32.gmra.mxu0 %v520
        %v1089 = vpop.f32.mrf.mxu0
        %v1090 = vadd.f32 0.0, %v1089
        %1091 = vmatmul.f32.gmra.mxu0 %v523
        %v1092 = vpop.f32.mrf.mxu0
        %v1093 = vadd.f32 0.0, %v1092
        %1094 = vmatmul.f32.gmra.mxu0 %v526
        %v1095 = vpop.f32.mrf.mxu0
        %v1096 = vadd.f32 0.0, %v1095
        %1097 = vmatmul.f32.gmra.mxu0 %v529
        %v1098 = vpop.f32.mrf.mxu0
        %v1099 = vadd.f32 0.0, %v1098
        %1100 = vmatmul.f32.gmra.mxu0 %v532
        %v1101 = vpop.f32.mrf.mxu0
        %v1102 = vadd.f32 0.0, %v1101
        %1103 = vmatmul.f32.gmra.mxu0 %v535
        %v1104 = vpop.f32.mrf.mxu0
        %v1105 = vadd.f32 0.0, %v1104
        %1106 = vmatmul.f32.gmra.mxu0 %v538
        %v1107 = vpop.f32.mrf.mxu0
        %v1108 = vadd.f32 0.0, %v1107
        %1109 = vmatmul.f32.gmra.mxu0 %v541
        %v1110 = vpop.f32.mrf.mxu0
        %v1111 = vadd.f32 0.0, %v1110
        %1112 = vmatmul.f32.gmra.mxu0 %v544
        %v1113 = vpop.f32.mrf.mxu0
        %v1114 = vadd.f32 0.0, %v1113
        %1115 = vmatmul.f32.gmra.mxu0 %v547
        %v1116 = vpop.f32.mrf.mxu0
        %v1117 = vadd.f32 0.0, %v1116
        %1118 = vmatmul.f32.gmra.mxu0 %v550
        %v1119 = vpop.f32.mrf.mxu0
        %v1120 = vadd.f32 0.0, %v1119
        %1121 = vdwg.mxu0
        %1122 = vmatpush.msra.mxu0 0.0
        %1123 = vmatpush.msra.mxu0 0.0
        %1124 = vmatpush.msra.mxu0 0.0
        %1125 = vmatpush.msra.mxu0 0.0
        %1126 = vmatpush.msra.mxu0 0.0
        %1127 = vmatpush.msra.mxu0 0.0
        %1128 = vmatpush.msra.mxu0 0.0
        %1129 = vmatpush.msra.mxu0 0.0
        %1130 = vmatpush.msra.mxu0 0.0
        %1131 = vmatpush.msra.mxu0 0.0
        %1132 = vmatpush.msra.mxu0 0.0
        %1133 = vmatpush.msra.mxu0 %v554
        %1134 = vmatpush.msra.mxu0 %v478
        %1135 = vmatpush.msra.mxu0 %v477
        %1136 = vmatpush.msra.mxu0 %v476
        %1137 = vmatpush.msra.mxu0 %v475
        %1138 = vmatmul.f32.gmra.mxu0 %v610
        %v1139 = vpop.f32.mrf.mxu0
        %v1140 = vadd.f32 %v1087, %v1139
        %1141 = vmatmul.f32.gmra.mxu0 %v613
        %v1142 = vpop.f32.mrf.mxu0
        %v1143 = vadd.f32 %v1090, %v1142
        %1144 = vmatmul.f32.gmra.mxu0 %v616
        %v1145 = vpop.f32.mrf.mxu0
        %v1146 = vadd.f32 %v1093, %v1145
        %1147 = vmatmul.f32.gmra.mxu0 %v619
        %v1148 = vpop.f32.mrf.mxu0
        %v1149 = vadd.f32 %v1096, %v1148
        %1150 = vmatmul.f32.gmra.mxu0 %v622
        %v1151 = vpop.f32.mrf.mxu0
        %v1152 = vadd.f32 %v1099, %v1151
        %1153 = vmatmul.f32.gmra.mxu0 %v625
        %v1154 = vpop.f32.mrf.mxu0
        %v1155 = vadd.f32 %v1102, %v1154
        %1156 = vmatmul.f32.gmra.mxu0 %v628
        %v1157 = vpop.f32.mrf.mxu0
        %v1158 = vadd.f32 %v1105, %v1157
        %1159 = vmatmul.f32.gmra.mxu0 %v631
        %v1160 = vpop.f32.mrf.mxu0
        %v1161 = vadd.f32 %v1108, %v1160
        %1162 = vmatmul.f32.gmra.mxu0 %v634
        %v1163 = vpop.f32.mrf.mxu0
        %v1164 = vadd.f32 %v1111, %v1163
        %1165 = vmatmul.f32.gmra.mxu0 %v637
        %v1166 = vpop.f32.mrf.mxu0
        %v1167 = vadd.f32 %v1114, %v1166
        %1168 = vmatmul.f32.gmra.mxu0 %v640
        %v1169 = vpop.f32.mrf.mxu0
        %v1170 = vadd.f32 %v1117, %v1169
        %1171 = vmatmul.f32.gmra.mxu0 %v643
        %v1172 = vpop.f32.mrf.mxu0
        %v1173 = vadd.f32 %v1120, %v1172
        %1174 = vdwg.mxu0
        %1175 = vmatpush.msra.mxu0 0.0
        %1176 = vmatpush.msra.mxu0 0.0
        %1177 = vmatpush.msra.mxu0 0.0
        %1178 = vmatpush.msra.mxu0 0.0
        %1179 = vmatpush.msra.mxu0 0.0
        %1180 = vmatpush.msra.mxu0 0.0
        %1181 = vmatpush.msra.mxu0 0.0
        %1182 = vmatpush.msra.mxu0 0.0
        %1183 = vmatpush.msra.mxu0 0.0
        %1184 = vmatpush.msra.mxu0 0.0
        %1185 = vmatpush.msra.mxu0 0.0
        %1186 = vmatpush.msra.mxu0 %v868
        %1187 = vmatpush.msra.mxu0 %v488
        %1188 = vmatpush.msra.mxu0 %v487
        %1189 = vmatpush.msra.mxu0 %v486
        %1190 = vmatpush.msra.mxu0 %v485
        %1191 = vmatmul.f32.gmra.mxu0 %v715
        %v1192 = vpop.f32.mrf.mxu0
        %v1193 = vadd.f32 0.0, %v1192
        %1194 = vmatmul.f32.gmra.mxu0 %v718
        %v1195 = vpop.f32.mrf.mxu0
        %v1196 = vadd.f32 0.0, %v1195
        %1197 = vmatmul.f32.gmra.mxu0 %v721
        %v1198 = vpop.f32.mrf.mxu0
        %v1199 = vadd.f32 0.0, %v1198
        %1200 = vmatmul.f32.gmra.mxu0 %v724
        %v1201 = vpop.f32.mrf.mxu0
        %v1202 = vadd.f32 0.0, %v1201
        %1203 = vmatmul.f32.gmra.mxu0 %v727
        %v1204 = vpop.f32.mrf.mxu0
        %v1205 = vadd.f32 0.0, %v1204
        %1206 = vmatmul.f32.gmra.mxu0 %v730
        %v1207 = vpop.f32.mrf.mxu0
        %v1208 = vadd.f32 0.0, %v1207
        %1209 = vmatmul.f32.gmra.mxu0 %v733
        %v1210 = vpop.f32.mrf.mxu0
        %v1211 = vadd.f32 0.0, %v1210
        %1212 = vmatmul.f32.gmra.mxu0 %v736
        %v1213 = vpop.f32.mrf.mxu0
        %v1214 = vadd.f32 0.0, %v1213
        %1215 = vmatmul.f32.gmra.mxu0 %v739
        %v1216 = vpop.f32.mrf.mxu0
        %v1217 = vadd.f32 0.0, %v1216
        %1218 = vmatmul.f32.gmra.mxu0 %v742
        %v1219 = vpop.f32.mrf.mxu0
        %v1220 = vadd.f32 0.0, %v1219
        %1221 = vmatmul.f32.gmra.mxu0 %v745
        %v1222 = vpop.f32.mrf.mxu0
        %v1223 = vadd.f32 0.0, %v1222
        %1224 = vmatmul.f32.gmra.mxu0 %v748
        %v1225 = vpop.f32.mrf.mxu0
        %v1226 = vadd.f32 0.0, %v1225
        %1227 = vdwg.mxu0
        %v1228 = vadd.f32 %v1140, %v1193
        %v1229 = vadd.f32 %v1143, %v1196
        %v1230 = vadd.f32 %v1146, %v1199
        %v1231 = vadd.f32 %v1149, %v1202
        %v1232 = vadd.f32 %v1152, %v1205
        %v1233 = vadd.f32 %v1155, %v1208
        %v1234 = vadd.f32 %v1158, %v1211
        %v1235 = vadd.f32 %v1161, %v1214
        %v1236 = vadd.f32 %v1164, %v1217
        %v1237 = vadd.f32 %v1167, %v1220
        %v1238 = vadd.f32 %v1170, %v1223
        %v1239 = vadd.f32 %v1173, %v1226
        %1240 = vmatpush.msra.mxu0 0.0
        %1241 = vmatpush.msra.mxu0 0.0
        %1242 = vmatpush.msra.mxu0 0.0
        %1243 = vmatpush.msra.mxu0 0.0
        %1244 = vmatpush.msra.mxu0 0.0
        %1245 = vmatpush.msra.mxu0 0.0
        %1246 = vmatpush.msra.mxu0 0.0
        %1247 = vmatpush.msra.mxu0 0.0
        %1248 = vmatpush.msra.mxu0 0.0
        %1249 = vmatpush.msra.mxu0 0.0
        %1250 = vmatpush.msra.mxu0 0.0
        %1251 = vmatpush.msra.mxu0 %v1002
        %1252 = vmatpush.msra.mxu0 %v959
        %1253 = vmatpush.msra.mxu0 %v957
        %1254 = vmatpush.msra.mxu0 %v955
        %1255 = vmatpush.msra.mxu0 %v953
        %1256 = vmatmul.f32.gmra.mxu0 %v832
        %v1257 = vpop.f32.mrf.mxu0
        %v1258 = vadd.f32 0.0, %v1257
        %1259 = vmatmul.f32.gmra.mxu0 %v835
        %v1260 = vpop.f32.mrf.mxu0
        %v1261 = vadd.f32 0.0, %v1260
        %1262 = vmatmul.f32.gmra.mxu0 %v838
        %v1263 = vpop.f32.mrf.mxu0
        %v1264 = vadd.f32 0.0, %v1263
        %1265 = vmatmul.f32.gmra.mxu0 %v841
        %v1266 = vpop.f32.mrf.mxu0
        %v1267 = vadd.f32 0.0, %v1266
        %1268 = vmatmul.f32.gmra.mxu0 %v844
        %v1269 = vpop.f32.mrf.mxu0
        %v1270 = vadd.f32 0.0, %v1269
        %1271 = vmatmul.f32.gmra.mxu0 %v847
        %v1272 = vpop.f32.mrf.mxu0
        %v1273 = vadd.f32 0.0, %v1272
        %1274 = vmatmul.f32.gmra.mxu0 %v850
        %v1275 = vpop.f32.mrf.mxu0
        %v1276 = vadd.f32 0.0, %v1275
        %1277 = vmatmul.f32.gmra.mxu0 %v853
        %v1278 = vpop.f32.mrf.mxu0
        %v1279 = vadd.f32 0.0, %v1278
        %1280 = vmatmul.f32.gmra.mxu0 %v856
        %v1281 = vpop.f32.mrf.mxu0
        %v1282 = vadd.f32 0.0, %v1281
        %1283 = vmatmul.f32.gmra.mxu0 %v859
        %v1284 = vpop.f32.mrf.mxu0
        %v1285 = vadd.f32 0.0, %v1284
        %1286 = vmatmul.f32.gmra.mxu0 %v862
        %v1287 = vpop.f32.mrf.mxu0
        %v1288 = vadd.f32 0.0, %v1287
        %1289 = vmatmul.f32.gmra.mxu0 %v865
        %v1290 = vpop.f32.mrf.mxu0
        %v1291 = vadd.f32 0.0, %v1290
        %1292 = vdwg.mxu0
        %v1293 = vadd.f32 %v1228, %v1258
        %v1294 = vadd.f32 %v1229, %v1261
        %v1295 = vadd.f32 %v1230, %v1264
        %v1296 = vadd.f32 %v1231, %v1267
        %v1297 = vadd.f32 %v1232, %v1270
        %v1298 = vadd.f32 %v1233, %v1273
        %v1299 = vadd.f32 %v1234, %v1276
        %v1300 = vadd.f32 %v1235, %v1279
        %v1301 = vadd.f32 %v1236, %v1282
        %v1302 = vadd.f32 %v1237, %v1285
        %v1303 = vadd.f32 %v1238, %v1288
        %v1304 = vadd.f32 %v1239, %v1291
        %1309 = vrot.lane.b32.xlu0 %v475, 124
        %v1310 = vpop.permute.xlu0 %1309
        %1311 = vrot.lane.b32.xlu0 %v476, 124
        %v1312 = vpop.permute.xlu0 %1311
        %1313 = vrot.lane.b32.xlu0 %v477, 124
        %v1314 = vpop.permute.xlu0 %1313
        %1315 = vrot.lane.b32.xlu0 %v478, 124
        %v1316 = vpop.permute.xlu0 %1315
        %1317 = vrot.lane.b32.xlu0 %v479, 124
        %v1318 = vpop.permute.xlu0 %1317
        %v1323 = vsel %vm552, %v1318, 0
        %1325 = vmatpush.msra.mxu0 0.0
        %1326 = vmatpush.msra.mxu0 0.0
        %1327 = vmatpush.msra.mxu0 0.0
        %1328 = vmatpush.msra.mxu0 0.0
        %1329 = vmatpush.msra.mxu0 0.0
        %1330 = vmatpush.msra.mxu0 0.0
        %1331 = vmatpush.msra.mxu0 0.0
        %1332 = vmatpush.msra.mxu0 0.0
        %1333 = vmatpush.msra.mxu0 0.0
        %1334 = vmatpush.msra.mxu0 0.0
        %1335 = vmatpush.msra.mxu0 0.0
        %1336 = vmatpush.msra.mxu0 %v1323
        %1337 = vmatpush.msra.mxu0 %v1316
        %1338 = vmatpush.msra.mxu0 %v1314
        %1339 = vmatpush.msra.mxu0 %v1312
        %1340 = vmatpush.msra.mxu0 %v1310
        %1341 = vmatmul.f32.gmra.mxu0 %v967
        %v1342 = vpop.f32.mrf.mxu0
        %v1343 = vadd.f32 0.0, %v1342
        %1344 = vmatmul.f32.gmra.mxu0 %v970
        %v1345 = vpop.f32.mrf.mxu0
        %v1346 = vadd.f32 0.0, %v1345
        %1347 = vmatmul.f32.gmra.mxu0 %v973
        %v1348 = vpop.f32.mrf.mxu0
        %v1349 = vadd.f32 0.0, %v1348
        %1350 = vmatmul.f32.gmra.mxu0 %v976
        %v1351 = vpop.f32.mrf.mxu0
        %v1352 = vadd.f32 0.0, %v1351
        %1353 = vmatmul.f32.gmra.mxu0 %v979
        %v1354 = vpop.f32.mrf.mxu0
        %v1355 = vadd.f32 0.0, %v1354
        %1356 = vmatmul.f32.gmra.mxu0 %v982
        %v1357 = vpop.f32.mrf.mxu0
        %v1358 = vadd.f32 0.0, %v1357
        %1359 = vmatmul.f32.gmra.mxu0 %v985
        %v1360 = vpop.f32.mrf.mxu0
        %v1361 = vadd.f32 0.0, %v1360
        %1362 = vmatmul.f32.gmra.mxu0 %v988
        %v1363 = vpop.f32.mrf.mxu0
        %v1364 = vadd.f32 0.0, %v1363
        %1365 = vmatmul.f32.gmra.mxu0 %v991
        %v1366 = vpop.f32.mrf.mxu0
        %v1367 = vadd.f32 0.0, %v1366
        %1368 = vmatmul.f32.gmra.mxu0 %v994
        %v1369 = vpop.f32.mrf.mxu0
        %v1370 = vadd.f32 0.0, %v1369
        %1371 = vmatmul.f32.gmra.mxu0 %v997
        %v1372 = vpop.f32.mrf.mxu0
        %v1373 = vadd.f32 0.0, %v1372
        %1374 = vmatmul.f32.gmra.mxu0 %v1000
        %v1375 = vpop.f32.mrf.mxu0
        %v1376 = vadd.f32 0.0, %v1375
        %1377 = vdwg.mxu0
        %v1378 = vadd.f32 %v1293, %v1343
        %v1379 = vadd.f32 %v1294, %v1346
        %v1380 = vadd.f32 %v1295, %v1349
        %v1381 = vadd.f32 %v1296, %v1352
        %v1382 = vadd.f32 %v1297, %v1355
        %v1383 = vadd.f32 %v1298, %v1358
        %v1384 = vadd.f32 %v1299, %v1361
        %v1385 = vadd.f32 %v1300, %v1364
        %v1386 = vadd.f32 %v1301, %v1367
        %v1387 = vadd.f32 %v1302, %v1370
        %v1388 = vadd.f32 %v1303, %v1373
        %v1389 = vadd.f32 %v1304, %v1376
        %v1390 = vmax.f32 %v1057, %v1378
        %v1391 = vmax.f32 %v1058, %v1379
        %v1392 = vmax.f32 %v1059, %v1380
        %v1393 = vmax.f32 %v1060, %v1381
        %v1394 = vmax.f32 %v1061, %v1382
        %v1395 = vmax.f32 %v1062, %v1383
        %v1396 = vmax.f32 %v1063, %v1384
        %v1397 = vmax.f32 %v1064, %v1385
        %v1398 = vmax.f32 %v1065, %v1386
        %v1399 = vmax.f32 %v1066, %v1387
        %v1400 = vmax.f32 %v1067, %v1388
        %v1401 = vmax.f32 %v1068, %v1389
        %s1402 = scalar_lea.vmem %s1, 480
        %v1403 = vld [vmem:[%s1402] sm:$0xff]
        %v1404 = vld [vmem:[%s1402 + $0x8] sm:$0xff]
        %v1405 = vld [vmem:[%s1402 + $0x10] sm:$0xff]
        %v1406 = vld [vmem:[%s1402 + $0x18] sm:$0xff]
        %v1407 = vld [vmem:[%s1402 + $0x20] sm:$0xff]
        %v1408 = vld [vmem:[%s1402 + $0x28] sm:$0xff]
        %v1409 = vld [vmem:[%s1402 + $0x30] sm:$0xff]
        %v1410 = vld [vmem:[%s1402 + $0x38] sm:$0xff]
        %v1411 = vld [vmem:[%s1402 + $0x40] sm:$0xff]
        %v1412 = vld [vmem:[%s1402 + $0x48] sm:$0xff]
        %v1413 = vld [vmem:[%s1402 + $0x50] sm:$0xff]
        %v1414 = vld [vmem:[%s1402 + $0x58] sm:$0xff]
        %s1415 = scalar_lea.vmem %s1, 576
        %v1416 = vld [vmem:[%s1415] sm:$0xff]
        %v1417 = vld [vmem:[%s1415 + $0x8] sm:$0xff]
        %v1418 = vld [vmem:[%s1415 + $0x10] sm:$0xff]
        %v1419 = vld [vmem:[%s1415 + $0x18] sm:$0xff]
        %v1420 = vld [vmem:[%s1415 + $0x20] sm:$0xff]
        %v1421 = vld [vmem:[%s1415 + $0x28] sm:$0xff]
        %v1422 = vld [vmem:[%s1415 + $0x30] sm:$0xff]
        %v1423 = vld [vmem:[%s1415 + $0x38] sm:$0xff]
        %v1424 = vld [vmem:[%s1415 + $0x40] sm:$0xff]
        %v1425 = vld [vmem:[%s1415 + $0x48] sm:$0xff]
        %v1426 = vld [vmem:[%s1415 + $0x50] sm:$0xff]
        %v1427 = vld [vmem:[%s1415 + $0x58] sm:$0xff]
        %v1429 = vsel %vm515, %v1416, 0
        %v1432 = vsel %vm515, %v1417, 0
        %v1435 = vsel %vm515, %v1418, 0
        %v1438 = vsel %vm515, %v1419, 0
        %v1441 = vsel %vm515, %v1420, 0
        %v1444 = vsel %vm515, %v1421, 0
        %v1447 = vsel %vm515, %v1422, 0
        %v1450 = vsel %vm515, %v1423, 0
        %v1453 = vsel %vm515, %v1424, 0
        %v1456 = vsel %vm515, %v1425, 0
        %v1459 = vsel %vm515, %v1426, 0
        %v1462 = vsel %vm515, %v1427, 0
        %1464 = vmatpush.msra.mxu0 0.0
        %1465 = vmatpush.msra.mxu0 0.0
        %1466 = vmatpush.msra.mxu0 0.0
        %1467 = vmatpush.msra.mxu0 0.0
        %1468 = vmatpush.msra.mxu0 0.0
        %1469 = vmatpush.msra.mxu0 0.0
        %1470 = vmatpush.msra.mxu0 0.0
        %1471 = vmatpush.msra.mxu0 0.0
        %1472 = vmatpush.msra.mxu0 0.0
        %1473 = vmatpush.msra.mxu0 0.0
        %1474 = vmatpush.msra.mxu0 0.0
        %1475 = vmatpush.msra.mxu0 %v554
        %1476 = vmatpush.msra.mxu0 %v478
        %1477 = vmatpush.msra.mxu0 %v477
        %1478 = vmatpush.msra.mxu0 %v476
        %1479 = vmatpush.msra.mxu0 %v475
        %1480 = vmatmul.f32.gmra.mxu0 %v1429
        %v1481 = vpop.f32.mrf.mxu0
        %v1482 = vadd.f32 0.0, %v1481
        %1483 = vmatmul.f32.gmra.mxu0 %v1432
        %v1484 = vpop.f32.mrf.mxu0
        %v1485 = vadd.f32 0.0, %v1484
        %1486 = vmatmul.f32.gmra.mxu0 %v1435
        %v1487 = vpop.f32.mrf.mxu0
        %v1488 = vadd.f32 0.0, %v1487
        %1489 = vmatmul.f32.gmra.mxu0 %v1438
        %v1490 = vpop.f32.mrf.mxu0
        %v1491 = vadd.f32 0.0, %v1490
        %1492 = vmatmul.f32.gmra.mxu0 %v1441
        %v1493 = vpop.f32.mrf.mxu0
        %v1494 = vadd.f32 0.0, %v1493
        %1495 = vmatmul.f32.gmra.mxu0 %v1444
        %v1496 = vpop.f32.mrf.mxu0
        %v1497 = vadd.f32 0.0, %v1496
        %1498 = vmatmul.f32.gmra.mxu0 %v1447
        %v1499 = vpop.f32.mrf.mxu0
        %v1500 = vadd.f32 0.0, %v1499
        %1501 = vmatmul.f32.gmra.mxu0 %v1450
        %v1502 = vpop.f32.mrf.mxu0
        %v1503 = vadd.f32 0.0, %v1502
        %1504 = vmatmul.f32.gmra.mxu0 %v1453
        %v1505 = vpop.f32.mrf.mxu0
        %v1506 = vadd.f32 0.0, %v1505
        %1507 = vmatmul.f32.gmra.mxu0 %v1456
        %v1508 = vpop.f32.mrf.mxu0
        %v1509 = vadd.f32 0.0, %v1508
        %1510 = vmatmul.f32.gmra.mxu0 %v1459
        %v1511 = vpop.f32.mrf.mxu0
        %v1512 = vadd.f32 0.0, %v1511
        %1513 = vmatmul.f32.gmra.mxu0 %v1462
        %v1514 = vpop.f32.mrf.mxu0
        %v1515 = vadd.f32 0.0, %v1514
        %1516 = vdwg.mxu0
        %v1518 = vsel %vm515, %v1403, 0
        %v1521 = vsel %vm515, %v1404, 0
        %v1524 = vsel %vm515, %v1405, 0
        %v1527 = vsel %vm515, %v1406, 0
        %v1530 = vsel %vm515, %v1407, 0
        %v1533 = vsel %vm515, %v1408, 0
        %v1536 = vsel %vm515, %v1409, 0
        %v1539 = vsel %vm515, %v1410, 0
        %v1542 = vsel %vm515, %v1411, 0
        %v1545 = vsel %vm515, %v1412, 0
        %v1548 = vsel %vm515, %v1413, 0
        %v1551 = vsel %vm515, %v1414, 0
        %1553 = vmatpush.msra.mxu0 0.0
        %1554 = vmatpush.msra.mxu0 0.0
        %1555 = vmatpush.msra.mxu0 0.0
        %1556 = vmatpush.msra.mxu0 0.0
        %1557 = vmatpush.msra.mxu0 0.0
        %1558 = vmatpush.msra.mxu0 0.0
        %1559 = vmatpush.msra.mxu0 0.0
        %1560 = vmatpush.msra.mxu0 0.0
        %1561 = vmatpush.msra.mxu0 0.0
        %1562 = vmatpush.msra.mxu0 0.0
        %1563 = vmatpush.msra.mxu0 0.0
        %1564 = vmatpush.msra.mxu0 %v646
        %1565 = vmatpush.msra.mxu0 %v473
        %1566 = vmatpush.msra.mxu0 %v472
        %1567 = vmatpush.msra.mxu0 %v471
        %1568 = vmatpush.msra.mxu0 %v470
        %1569 = vmatmul.f32.gmra.mxu0 %v1518
        %v1570 = vpop.f32.mrf.mxu0
        %v1571 = vadd.f32 %v1482, %v1570
        %1572 = vmatmul.f32.gmra.mxu0 %v1521
        %v1573 = vpop.f32.mrf.mxu0
        %v1574 = vadd.f32 %v1485, %v1573
        %1575 = vmatmul.f32.gmra.mxu0 %v1524
        %v1576 = vpop.f32.mrf.mxu0
        %v1577 = vadd.f32 %v1488, %v1576
        %1578 = vmatmul.f32.gmra.mxu0 %v1527
        %v1579 = vpop.f32.mrf.mxu0
        %v1580 = vadd.f32 %v1491, %v1579
        %1581 = vmatmul.f32.gmra.mxu0 %v1530
        %v1582 = vpop.f32.mrf.mxu0
        %v1583 = vadd.f32 %v1494, %v1582
        %1584 = vmatmul.f32.gmra.mxu0 %v1533
        %v1585 = vpop.f32.mrf.mxu0
        %v1586 = vadd.f32 %v1497, %v1585
        %1587 = vmatmul.f32.gmra.mxu0 %v1536
        %v1588 = vpop.f32.mrf.mxu0
        %v1589 = vadd.f32 %v1500, %v1588
        %1590 = vmatmul.f32.gmra.mxu0 %v1539
        %v1591 = vpop.f32.mrf.mxu0
        %v1592 = vadd.f32 %v1503, %v1591
        %1593 = vmatmul.f32.gmra.mxu0 %v1542
        %v1594 = vpop.f32.mrf.mxu0
        %v1595 = vadd.f32 %v1506, %v1594
        %1596 = vmatmul.f32.gmra.mxu0 %v1545
        %v1597 = vpop.f32.mrf.mxu0
        %v1598 = vadd.f32 %v1509, %v1597
        %1599 = vmatmul.f32.gmra.mxu0 %v1548
        %v1600 = vpop.f32.mrf.mxu0
        %v1601 = vadd.f32 %v1512, %v1600
        %1602 = vmatmul.f32.gmra.mxu0 %v1551
        %v1603 = vpop.f32.mrf.mxu0
        %v1604 = vadd.f32 %v1515, %v1603
        %1605 = vdwg.mxu0
        %s1606 = scalar_lea.vmem %s1, 672
        %v1607 = vld [vmem:[%s1606] sm:$0xff]
        %v1608 = vld [vmem:[%s1606 + $0x8] sm:$0xff]
        %v1609 = vld [vmem:[%s1606 + $0x10] sm:$0xff]
        %v1610 = vld [vmem:[%s1606 + $0x18] sm:$0xff]
        %v1611 = vld [vmem:[%s1606 + $0x20] sm:$0xff]
        %v1612 = vld [vmem:[%s1606 + $0x28] sm:$0xff]
        %v1613 = vld [vmem:[%s1606 + $0x30] sm:$0xff]
        %v1614 = vld [vmem:[%s1606 + $0x38] sm:$0xff]
        %v1615 = vld [vmem:[%s1606 + $0x40] sm:$0xff]
        %v1616 = vld [vmem:[%s1606 + $0x48] sm:$0xff]
        %v1617 = vld [vmem:[%s1606 + $0x50] sm:$0xff]
        %v1618 = vld [vmem:[%s1606 + $0x58] sm:$0xff]
        %v1620 = vsel %vm515, %v1607, 0
        %v1623 = vsel %vm515, %v1608, 0
        %v1626 = vsel %vm515, %v1609, 0
        %v1629 = vsel %vm515, %v1610, 0
        %v1632 = vsel %vm515, %v1611, 0
        %v1635 = vsel %vm515, %v1612, 0
        %v1638 = vsel %vm515, %v1613, 0
        %v1641 = vsel %vm515, %v1614, 0
        %v1644 = vsel %vm515, %v1615, 0
        %v1647 = vsel %vm515, %v1616, 0
        %v1650 = vsel %vm515, %v1617, 0
        %v1653 = vsel %vm515, %v1618, 0
        %1655 = vmatpush.msra.mxu0 0.0
        %1656 = vmatpush.msra.mxu0 0.0
        %1657 = vmatpush.msra.mxu0 0.0
        %1658 = vmatpush.msra.mxu0 0.0
        %1659 = vmatpush.msra.mxu0 0.0
        %1660 = vmatpush.msra.mxu0 0.0
        %1661 = vmatpush.msra.mxu0 0.0
        %1662 = vmatpush.msra.mxu0 0.0
        %1663 = vmatpush.msra.mxu0 0.0
        %1664 = vmatpush.msra.mxu0 0.0
        %1665 = vmatpush.msra.mxu0 0.0
        %1666 = vmatpush.msra.mxu0 %v751
        %1667 = vmatpush.msra.mxu0 %v483
        %1668 = vmatpush.msra.mxu0 %v482
        %1669 = vmatpush.msra.mxu0 %v481
        %1670 = vmatpush.msra.mxu0 %v480
        %1671 = vmatmul.f32.gmra.mxu0 %v1620
        %v1672 = vpop.f32.mrf.mxu0
        %v1673 = vadd.f32 0.0, %v1672
        %1674 = vmatmul.f32.gmra.mxu0 %v1623
        %v1675 = vpop.f32.mrf.mxu0
        %v1676 = vadd.f32 0.0, %v1675
        %1677 = vmatmul.f32.gmra.mxu0 %v1626
        %v1678 = vpop.f32.mrf.mxu0
        %v1679 = vadd.f32 0.0, %v1678
        %1680 = vmatmul.f32.gmra.mxu0 %v1629
        %v1681 = vpop.f32.mrf.mxu0
        %v1682 = vadd.f32 0.0, %v1681
        %1683 = vmatmul.f32.gmra.mxu0 %v1632
        %v1684 = vpop.f32.mrf.mxu0
        %v1685 = vadd.f32 0.0, %v1684
        %1686 = vmatmul.f32.gmra.mxu0 %v1635
        %v1687 = vpop.f32.mrf.mxu0
        %v1688 = vadd.f32 0.0, %v1687
        %1689 = vmatmul.f32.gmra.mxu0 %v1638
        %v1690 = vpop.f32.mrf.mxu0
        %v1691 = vadd.f32 0.0, %v1690
        %1692 = vmatmul.f32.gmra.mxu0 %v1641
        %v1693 = vpop.f32.mrf.mxu0
        %v1694 = vadd.f32 0.0, %v1693
        %1695 = vmatmul.f32.gmra.mxu0 %v1644
        %v1696 = vpop.f32.mrf.mxu0
        %v1697 = vadd.f32 0.0, %v1696
        %1698 = vmatmul.f32.gmra.mxu0 %v1647
        %v1699 = vpop.f32.mrf.mxu0
        %v1700 = vadd.f32 0.0, %v1699
        %1701 = vmatmul.f32.gmra.mxu0 %v1650
        %v1702 = vpop.f32.mrf.mxu0
        %v1703 = vadd.f32 0.0, %v1702
        %1704 = vmatmul.f32.gmra.mxu0 %v1653
        %v1705 = vpop.f32.mrf.mxu0
        %v1706 = vadd.f32 0.0, %v1705
        %1707 = vdwg.mxu0
        %v1708 = vadd.f32 %v1571, %v1673
        %v1709 = vadd.f32 %v1574, %v1676
        %v1710 = vadd.f32 %v1577, %v1679
        %v1711 = vadd.f32 %v1580, %v1682
        %v1712 = vadd.f32 %v1583, %v1685
        %v1713 = vadd.f32 %v1586, %v1688
        %v1714 = vadd.f32 %v1589, %v1691
        %v1715 = vadd.f32 %v1592, %v1694
        %v1716 = vadd.f32 %v1595, %v1697
        %v1717 = vadd.f32 %v1598, %v1700
        %v1718 = vadd.f32 %v1601, %v1703
        %v1719 = vadd.f32 %v1604, %v1706
        %s1720 = scalar_lea.vmem %s1, 768
        %v1721 = vld [vmem:[%s1720] sm:$0xff]
        %v1722 = vld [vmem:[%s1720 + $0x8] sm:$0xff]
        %v1723 = vld [vmem:[%s1720 + $0x10] sm:$0xff]
        %v1724 = vld [vmem:[%s1720 + $0x18] sm:$0xff]
        %v1725 = vld [vmem:[%s1720 + $0x20] sm:$0xff]
        %v1726 = vld [vmem:[%s1720 + $0x28] sm:$0xff]
        %v1727 = vld [vmem:[%s1720 + $0x30] sm:$0xff]
        %v1728 = vld [vmem:[%s1720 + $0x38] sm:$0xff]
        %v1729 = vld [vmem:[%s1720 + $0x40] sm:$0xff]
        %v1730 = vld [vmem:[%s1720 + $0x48] sm:$0xff]
        %v1731 = vld [vmem:[%s1720 + $0x50] sm:$0xff]
        %v1732 = vld [vmem:[%s1720 + $0x58] sm:$0xff]
        %v1734 = vsel %vm515, %v1721, 0
        %v1737 = vsel %vm515, %v1722, 0
        %v1740 = vsel %vm515, %v1723, 0
        %v1743 = vsel %vm515, %v1724, 0
        %v1746 = vsel %vm515, %v1725, 0
        %v1749 = vsel %vm515, %v1726, 0
        %v1752 = vsel %vm515, %v1727, 0
        %v1755 = vsel %vm515, %v1728, 0
        %v1758 = vsel %vm515, %v1729, 0
        %v1761 = vsel %vm515, %v1730, 0
        %v1764 = vsel %vm515, %v1731, 0
        %v1767 = vsel %vm515, %v1732, 0
        %1769 = vmatpush.msra.mxu0 0.0
        %1770 = vmatpush.msra.mxu0 0.0
        %1771 = vmatpush.msra.mxu0 0.0
        %1772 = vmatpush.msra.mxu0 0.0
        %1773 = vmatpush.msra.mxu0 0.0
        %1774 = vmatpush.msra.mxu0 0.0
        %1775 = vmatpush.msra.mxu0 0.0
        %1776 = vmatpush.msra.mxu0 0.0
        %1777 = vmatpush.msra.mxu0 0.0
        %1778 = vmatpush.msra.mxu0 0.0
        %1779 = vmatpush.msra.mxu0 0.0
        %1780 = vmatpush.msra.mxu0 %v868
        %1781 = vmatpush.msra.mxu0 %v488
        %1782 = vmatpush.msra.mxu0 %v487
        %1783 = vmatpush.msra.mxu0 %v486
        %1784 = vmatpush.msra.mxu0 %v485
        %1785 = vmatmul.f32.gmra.mxu0 %v1734
        %v1786 = vpop.f32.mrf.mxu0
        %v1787 = vadd.f32 0.0, %v1786
        %1788 = vmatmul.f32.gmra.mxu0 %v1737
        %v1789 = vpop.f32.mrf.mxu0
        %v1790 = vadd.f32 0.0, %v1789
        %1791 = vmatmul.f32.gmra.mxu0 %v1740
        %v1792 = vpop.f32.mrf.mxu0
        %v1793 = vadd.f32 0.0, %v1792
        %1794 = vmatmul.f32.gmra.mxu0 %v1743
        %v1795 = vpop.f32.mrf.mxu0
        %v1796 = vadd.f32 0.0, %v1795
        %1797 = vmatmul.f32.gmra.mxu0 %v1746
        %v1798 = vpop.f32.mrf.mxu0
        %v1799 = vadd.f32 0.0, %v1798
        %1800 = vmatmul.f32.gmra.mxu0 %v1749
        %v1801 = vpop.f32.mrf.mxu0
        %v1802 = vadd.f32 0.0, %v1801
        %1803 = vmatmul.f32.gmra.mxu0 %v1752
        %v1804 = vpop.f32.mrf.mxu0
        %v1805 = vadd.f32 0.0, %v1804
        %1806 = vmatmul.f32.gmra.mxu0 %v1755
        %v1807 = vpop.f32.mrf.mxu0
        %v1808 = vadd.f32 0.0, %v1807
        %1809 = vmatmul.f32.gmra.mxu0 %v1758
        %v1810 = vpop.f32.mrf.mxu0
        %v1811 = vadd.f32 0.0, %v1810
        %1812 = vmatmul.f32.gmra.mxu0 %v1761
        %v1813 = vpop.f32.mrf.mxu0
        %v1814 = vadd.f32 0.0, %v1813
        %1815 = vmatmul.f32.gmra.mxu0 %v1764
        %v1816 = vpop.f32.mrf.mxu0
        %v1817 = vadd.f32 0.0, %v1816
        %1818 = vmatmul.f32.gmra.mxu0 %v1767
        %v1819 = vpop.f32.mrf.mxu0
        %v1820 = vadd.f32 0.0, %v1819
        %1821 = vdwg.mxu0
        %v1822 = vadd.f32 %v1708, %v1787
        %v1823 = vadd.f32 %v1709, %v1790
        %v1824 = vadd.f32 %v1710, %v1793
        %v1825 = vadd.f32 %v1711, %v1796
        %v1826 = vadd.f32 %v1712, %v1799
        %v1827 = vadd.f32 %v1713, %v1802
        %v1828 = vadd.f32 %v1714, %v1805
        %v1829 = vadd.f32 %v1715, %v1808
        %v1830 = vadd.f32 %v1716, %v1811
        %v1831 = vadd.f32 %v1717, %v1814
        %v1832 = vadd.f32 %v1718, %v1817
        %v1833 = vadd.f32 %v1719, %v1820
        %s1834 = scalar_lea.vmem %s1, 864
        %v1835 = vld [vmem:[%s1834] sm:$0xff]
        %v1836 = vld [vmem:[%s1834 + $0x8] sm:$0xff]
        %v1837 = vld [vmem:[%s1834 + $0x10] sm:$0xff]
        %v1838 = vld [vmem:[%s1834 + $0x18] sm:$0xff]
        %v1839 = vld [vmem:[%s1834 + $0x20] sm:$0xff]
        %v1840 = vld [vmem:[%s1834 + $0x28] sm:$0xff]
        %v1841 = vld [vmem:[%s1834 + $0x30] sm:$0xff]
        %v1842 = vld [vmem:[%s1834 + $0x38] sm:$0xff]
        %v1843 = vld [vmem:[%s1834 + $0x40] sm:$0xff]
        %v1844 = vld [vmem:[%s1834 + $0x48] sm:$0xff]
        %v1845 = vld [vmem:[%s1834 + $0x50] sm:$0xff]
        %v1846 = vld [vmem:[%s1834 + $0x58] sm:$0xff]
        %v1848 = vsel %vm515, %v1835, 0
        %v1851 = vsel %vm515, %v1836, 0
        %v1854 = vsel %vm515, %v1837, 0
        %v1857 = vsel %vm515, %v1838, 0
        %v1860 = vsel %vm515, %v1839, 0
        %v1863 = vsel %vm515, %v1840, 0
        %v1866 = vsel %vm515, %v1841, 0
        %v1869 = vsel %vm515, %v1842, 0
        %v1872 = vsel %vm515, %v1843, 0
        %v1875 = vsel %vm515, %v1844, 0
        %v1878 = vsel %vm515, %v1845, 0
        %v1881 = vsel %vm515, %v1846, 0
        %1883 = vmatpush.msra.mxu0 0.0
        %1884 = vmatpush.msra.mxu0 0.0
        %1885 = vmatpush.msra.mxu0 0.0
        %1886 = vmatpush.msra.mxu0 0.0
        %1887 = vmatpush.msra.mxu0 0.0
        %1888 = vmatpush.msra.mxu0 0.0
        %1889 = vmatpush.msra.mxu0 0.0
        %1890 = vmatpush.msra.mxu0 0.0
        %1891 = vmatpush.msra.mxu0 0.0
        %1892 = vmatpush.msra.mxu0 0.0
        %1893 = vmatpush.msra.mxu0 0.0
        %1894 = vmatpush.msra.mxu0 %v1002
        %1895 = vmatpush.msra.mxu0 %v959
        %1896 = vmatpush.msra.mxu0 %v957
        %1897 = vmatpush.msra.mxu0 %v955
        %1898 = vmatpush.msra.mxu0 %v953
        %1899 = vmatmul.f32.gmra.mxu0 %v1848
        %v1900 = vpop.f32.mrf.mxu0
        %v1901 = vadd.f32 0.0, %v1900
        %1902 = vmatmul.f32.gmra.mxu0 %v1851
        %v1903 = vpop.f32.mrf.mxu0
        %v1904 = vadd.f32 0.0, %v1903
        %1905 = vmatmul.f32.gmra.mxu0 %v1854
        %v1906 = vpop.f32.mrf.mxu0
        %v1907 = vadd.f32 0.0, %v1906
        %1908 = vmatmul.f32.gmra.mxu0 %v1857
        %v1909 = vpop.f32.mrf.mxu0
        %v1910 = vadd.f32 0.0, %v1909
        %1911 = vmatmul.f32.gmra.mxu0 %v1860
        %v1912 = vpop.f32.mrf.mxu0
        %v1913 = vadd.f32 0.0, %v1912
        %1914 = vmatmul.f32.gmra.mxu0 %v1863
        %v1915 = vpop.f32.mrf.mxu0
        %v1916 = vadd.f32 0.0, %v1915
        %1917 = vmatmul.f32.gmra.mxu0 %v1866
        %v1918 = vpop.f32.mrf.mxu0
        %v1919 = vadd.f32 0.0, %v1918
        %1920 = vmatmul.f32.gmra.mxu0 %v1869
        %v1921 = vpop.f32.mrf.mxu0
        %v1922 = vadd.f32 0.0, %v1921
        %1923 = vmatmul.f32.gmra.mxu0 %v1872
        %v1924 = vpop.f32.mrf.mxu0
        %v1925 = vadd.f32 0.0, %v1924
        %1926 = vmatmul.f32.gmra.mxu0 %v1875
        %v1927 = vpop.f32.mrf.mxu0
        %v1928 = vadd.f32 0.0, %v1927
        %1929 = vmatmul.f32.gmra.mxu0 %v1878
        %v1930 = vpop.f32.mrf.mxu0
        %v1931 = vadd.f32 0.0, %v1930
        %1932 = vmatmul.f32.gmra.mxu0 %v1881
        %v1933 = vpop.f32.mrf.mxu0
        %v1934 = vadd.f32 0.0, %v1933
        %1935 = vdwg.mxu0
        %v1936 = vadd.f32 %v1822, %v1901
        %v1937 = vadd.f32 %v1823, %v1904
        %v1938 = vadd.f32 %v1824, %v1907
        %v1939 = vadd.f32 %v1825, %v1910
        %v1940 = vadd.f32 %v1826, %v1913
        %v1941 = vadd.f32 %v1827, %v1916
        %v1942 = vadd.f32 %v1828, %v1919
        %v1943 = vadd.f32 %v1829, %v1922
        %v1944 = vadd.f32 %v1830, %v1925
        %v1945 = vadd.f32 %v1831, %v1928
        %v1946 = vadd.f32 %v1832, %v1931
        %v1947 = vadd.f32 %v1833, %v1934
        %1948 = vmatpush.msra.mxu0 0.0
        %1949 = vmatpush.msra.mxu0 0.0
        %1950 = vmatpush.msra.mxu0 0.0
        %1951 = vmatpush.msra.mxu0 0.0
        %1952 = vmatpush.msra.mxu0 0.0
        %1953 = vmatpush.msra.mxu0 0.0
        %1954 = vmatpush.msra.mxu0 0.0
        %1955 = vmatpush.msra.mxu0 0.0
        %1956 = vmatpush.msra.mxu0 0.0
        %1957 = vmatpush.msra.mxu0 0.0
        %1958 = vmatpush.msra.mxu0 0.0
        %1959 = vmatpush.msra.mxu0 %v751
        %1960 = vmatpush.msra.mxu0 %v483
        %1961 = vmatpush.msra.mxu0 %v482
        %1962 = vmatpush.msra.mxu0 %v481
        %1963 = vmatpush.msra.mxu0 %v480
        %1964 = vmatmul.f32.gmra.mxu0 %v1429
        %v1965 = vpop.f32.mrf.mxu0
        %v1966 = vadd.f32 0.0, %v1965
        %1967 = vmatmul.f32.gmra.mxu0 %v1432
        %v1968 = vpop.f32.mrf.mxu0
        %v1969 = vadd.f32 0.0, %v1968
        %1970 = vmatmul.f32.gmra.mxu0 %v1435
        %v1971 = vpop.f32.mrf.mxu0
        %v1972 = vadd.f32 0.0, %v1971
        %1973 = vmatmul.f32.gmra.mxu0 %v1438
        %v1974 = vpop.f32.mrf.mxu0
        %v1975 = vadd.f32 0.0, %v1974
        %1976 = vmatmul.f32.gmra.mxu0 %v1441
        %v1977 = vpop.f32.mrf.mxu0
        %v1978 = vadd.f32 0.0, %v1977
        %1979 = vmatmul.f32.gmra.mxu0 %v1444
        %v1980 = vpop.f32.mrf.mxu0
        %v1981 = vadd.f32 0.0, %v1980
        %1982 = vmatmul.f32.gmra.mxu0 %v1447
        %v1983 = vpop.f32.mrf.mxu0
        %v1984 = vadd.f32 0.0, %v1983
        %1985 = vmatmul.f32.gmra.mxu0 %v1450
        %v1986 = vpop.f32.mrf.mxu0
        %v1987 = vadd.f32 0.0, %v1986
        %1988 = vmatmul.f32.gmra.mxu0 %v1453
        %v1989 = vpop.f32.mrf.mxu0
        %v1990 = vadd.f32 0.0, %v1989
        %1991 = vmatmul.f32.gmra.mxu0 %v1456
        %v1992 = vpop.f32.mrf.mxu0
        %v1993 = vadd.f32 0.0, %v1992
        %1994 = vmatmul.f32.gmra.mxu0 %v1459
        %v1995 = vpop.f32.mrf.mxu0
        %v1996 = vadd.f32 0.0, %v1995
        %1997 = vmatmul.f32.gmra.mxu0 %v1462
        %v1998 = vpop.f32.mrf.mxu0
        %v1999 = vadd.f32 0.0, %v1998
        %2000 = vdwg.mxu0
        %2001 = vmatpush.msra.mxu0 0.0
        %2002 = vmatpush.msra.mxu0 0.0
        %2003 = vmatpush.msra.mxu0 0.0
        %2004 = vmatpush.msra.mxu0 0.0
        %2005 = vmatpush.msra.mxu0 0.0
        %2006 = vmatpush.msra.mxu0 0.0
        %2007 = vmatpush.msra.mxu0 0.0
        %2008 = vmatpush.msra.mxu0 0.0
        %2009 = vmatpush.msra.mxu0 0.0
        %2010 = vmatpush.msra.mxu0 0.0
        %2011 = vmatpush.msra.mxu0 0.0
        %2012 = vmatpush.msra.mxu0 %v554
        %2013 = vmatpush.msra.mxu0 %v478
        %2014 = vmatpush.msra.mxu0 %v477
        %2015 = vmatpush.msra.mxu0 %v476
        %2016 = vmatpush.msra.mxu0 %v475
        %2017 = vmatmul.f32.gmra.mxu0 %v1518
        %v2018 = vpop.f32.mrf.mxu0
        %v2019 = vadd.f32 %v1966, %v2018
        %2020 = vmatmul.f32.gmra.mxu0 %v1521
        %v2021 = vpop.f32.mrf.mxu0
        %v2022 = vadd.f32 %v1969, %v2021
        %2023 = vmatmul.f32.gmra.mxu0 %v1524
        %v2024 = vpop.f32.mrf.mxu0
        %v2025 = vadd.f32 %v1972, %v2024
        %2026 = vmatmul.f32.gmra.mxu0 %v1527
        %v2027 = vpop.f32.mrf.mxu0
        %v2028 = vadd.f32 %v1975, %v2027
        %2029 = vmatmul.f32.gmra.mxu0 %v1530
        %v2030 = vpop.f32.mrf.mxu0
        %v2031 = vadd.f32 %v1978, %v2030
        %2032 = vmatmul.f32.gmra.mxu0 %v1533
        %v2033 = vpop.f32.mrf.mxu0
        %v2034 = vadd.f32 %v1981, %v2033
        %2035 = vmatmul.f32.gmra.mxu0 %v1536
        %v2036 = vpop.f32.mrf.mxu0
        %v2037 = vadd.f32 %v1984, %v2036
        %2038 = vmatmul.f32.gmra.mxu0 %v1539
        %v2039 = vpop.f32.mrf.mxu0
        %v2040 = vadd.f32 %v1987, %v2039
        %2041 = vmatmul.f32.gmra.mxu0 %v1542
        %v2042 = vpop.f32.mrf.mxu0
        %v2043 = vadd.f32 %v1990, %v2042
        %2044 = vmatmul.f32.gmra.mxu0 %v1545
        %v2045 = vpop.f32.mrf.mxu0
        %v2046 = vadd.f32 %v1993, %v2045
        %2047 = vmatmul.f32.gmra.mxu0 %v1548
        %v2048 = vpop.f32.mrf.mxu0
        %v2049 = vadd.f32 %v1996, %v2048
        %2050 = vmatmul.f32.gmra.mxu0 %v1551
        %v2051 = vpop.f32.mrf.mxu0
        %v2052 = vadd.f32 %v1999, %v2051
        %2053 = vdwg.mxu0
        %2054 = vmatpush.msra.mxu0 0.0
        %2055 = vmatpush.msra.mxu0 0.0
        %2056 = vmatpush.msra.mxu0 0.0
        %2057 = vmatpush.msra.mxu0 0.0
        %2058 = vmatpush.msra.mxu0 0.0
        %2059 = vmatpush.msra.mxu0 0.0
        %2060 = vmatpush.msra.mxu0 0.0
        %2061 = vmatpush.msra.mxu0 0.0
        %2062 = vmatpush.msra.mxu0 0.0
        %2063 = vmatpush.msra.mxu0 0.0
        %2064 = vmatpush.msra.mxu0 0.0
        %2065 = vmatpush.msra.mxu0 %v868
        %2066 = vmatpush.msra.mxu0 %v488
        %2067 = vmatpush.msra.mxu0 %v487
        %2068 = vmatpush.msra.mxu0 %v486
        %2069 = vmatpush.msra.mxu0 %v485
        %2070 = vmatmul.f32.gmra.mxu0 %v1620
        %v2071 = vpop.f32.mrf.mxu0
        %v2072 = vadd.f32 0.0, %v2071
        %2073 = vmatmul.f32.gmra.mxu0 %v1623
        %v2074 = vpop.f32.mrf.mxu0
        %v2075 = vadd.f32 0.0, %v2074
        %2076 = vmatmul.f32.gmra.mxu0 %v1626
        %v2077 = vpop.f32.mrf.mxu0
        %v2078 = vadd.f32 0.0, %v2077
        %2079 = vmatmul.f32.gmra.mxu0 %v1629
        %v2080 = vpop.f32.mrf.mxu0
        %v2081 = vadd.f32 0.0, %v2080
        %2082 = vmatmul.f32.gmra.mxu0 %v1632
        %v2083 = vpop.f32.mrf.mxu0
        %v2084 = vadd.f32 0.0, %v2083
        %2085 = vmatmul.f32.gmra.mxu0 %v1635
        %v2086 = vpop.f32.mrf.mxu0
        %v2087 = vadd.f32 0.0, %v2086
        %2088 = vmatmul.f32.gmra.mxu0 %v1638
        %v2089 = vpop.f32.mrf.mxu0
        %v2090 = vadd.f32 0.0, %v2089
        %2091 = vmatmul.f32.gmra.mxu0 %v1641
        %v2092 = vpop.f32.mrf.mxu0
        %v2093 = vadd.f32 0.0, %v2092
        %2094 = vmatmul.f32.gmra.mxu0 %v1644
        %v2095 = vpop.f32.mrf.mxu0
        %v2096 = vadd.f32 0.0, %v2095
        %2097 = vmatmul.f32.gmra.mxu0 %v1647
        %v2098 = vpop.f32.mrf.mxu0
        %v2099 = vadd.f32 0.0, %v2098
        %2100 = vmatmul.f32.gmra.mxu0 %v1650
        %v2101 = vpop.f32.mrf.mxu0
        %v2102 = vadd.f32 0.0, %v2101
        %2103 = vmatmul.f32.gmra.mxu0 %v1653
        %v2104 = vpop.f32.mrf.mxu0
        %v2105 = vadd.f32 0.0, %v2104
        %2106 = vdwg.mxu0
        %v2107 = vadd.f32 %v2019, %v2072
        %v2108 = vadd.f32 %v2022, %v2075
        %v2109 = vadd.f32 %v2025, %v2078
        %v2110 = vadd.f32 %v2028, %v2081
        %v2111 = vadd.f32 %v2031, %v2084
        %v2112 = vadd.f32 %v2034, %v2087
        %v2113 = vadd.f32 %v2037, %v2090
        %v2114 = vadd.f32 %v2040, %v2093
        %v2115 = vadd.f32 %v2043, %v2096
        %v2116 = vadd.f32 %v2046, %v2099
        %v2117 = vadd.f32 %v2049, %v2102
        %v2118 = vadd.f32 %v2052, %v2105
        %2119 = vmatpush.msra.mxu0 0.0
        %2120 = vmatpush.msra.mxu0 0.0
        %2121 = vmatpush.msra.mxu0 0.0
        %2122 = vmatpush.msra.mxu0 0.0
        %2123 = vmatpush.msra.mxu0 0.0
        %2124 = vmatpush.msra.mxu0 0.0
        %2125 = vmatpush.msra.mxu0 0.0
        %2126 = vmatpush.msra.mxu0 0.0
        %2127 = vmatpush.msra.mxu0 0.0
        %2128 = vmatpush.msra.mxu0 0.0
        %2129 = vmatpush.msra.mxu0 0.0
        %2130 = vmatpush.msra.mxu0 %v1002
        %2131 = vmatpush.msra.mxu0 %v959
        %2132 = vmatpush.msra.mxu0 %v957
        %2133 = vmatpush.msra.mxu0 %v955
        %2134 = vmatpush.msra.mxu0 %v953
        %2135 = vmatmul.f32.gmra.mxu0 %v1734
        %v2136 = vpop.f32.mrf.mxu0
        %v2137 = vadd.f32 0.0, %v2136
        %2138 = vmatmul.f32.gmra.mxu0 %v1737
        %v2139 = vpop.f32.mrf.mxu0
        %v2140 = vadd.f32 0.0, %v2139
        %2141 = vmatmul.f32.gmra.mxu0 %v1740
        %v2142 = vpop.f32.mrf.mxu0
        %v2143 = vadd.f32 0.0, %v2142
        %2144 = vmatmul.f32.gmra.mxu0 %v1743
        %v2145 = vpop.f32.mrf.mxu0
        %v2146 = vadd.f32 0.0, %v2145
        %2147 = vmatmul.f32.gmra.mxu0 %v1746
        %v2148 = vpop.f32.mrf.mxu0
        %v2149 = vadd.f32 0.0, %v2148
        %2150 = vmatmul.f32.gmra.mxu0 %v1749
        %v2151 = vpop.f32.mrf.mxu0
        %v2152 = vadd.f32 0.0, %v2151
        %2153 = vmatmul.f32.gmra.mxu0 %v1752
        %v2154 = vpop.f32.mrf.mxu0
        %v2155 = vadd.f32 0.0, %v2154
        %2156 = vmatmul.f32.gmra.mxu0 %v1755
        %v2157 = vpop.f32.mrf.mxu0
        %v2158 = vadd.f32 0.0, %v2157
        %2159 = vmatmul.f32.gmra.mxu0 %v1758
        %v2160 = vpop.f32.mrf.mxu0
        %v2161 = vadd.f32 0.0, %v2160
        %2162 = vmatmul.f32.gmra.mxu0 %v1761
        %v2163 = vpop.f32.mrf.mxu0
        %v2164 = vadd.f32 0.0, %v2163
        %2165 = vmatmul.f32.gmra.mxu0 %v1764
        %v2166 = vpop.f32.mrf.mxu0
        %v2167 = vadd.f32 0.0, %v2166
        %2168 = vmatmul.f32.gmra.mxu0 %v1767
        %v2169 = vpop.f32.mrf.mxu0
        %v2170 = vadd.f32 0.0, %v2169
        %2171 = vdwg.mxu0
        %v2172 = vadd.f32 %v2107, %v2137
        %v2173 = vadd.f32 %v2108, %v2140
        %v2174 = vadd.f32 %v2109, %v2143
        %v2175 = vadd.f32 %v2110, %v2146
        %v2176 = vadd.f32 %v2111, %v2149
        %v2177 = vadd.f32 %v2112, %v2152
        %v2178 = vadd.f32 %v2113, %v2155
        %v2179 = vadd.f32 %v2114, %v2158
        %v2180 = vadd.f32 %v2115, %v2161
        %v2181 = vadd.f32 %v2116, %v2164
        %v2182 = vadd.f32 %v2117, %v2167
        %v2183 = vadd.f32 %v2118, %v2170
        %2184 = vmatpush.msra.mxu0 0.0
        %2185 = vmatpush.msra.mxu0 0.0
        %2186 = vmatpush.msra.mxu0 0.0
        %2187 = vmatpush.msra.mxu0 0.0
        %2188 = vmatpush.msra.mxu0 0.0
        %2189 = vmatpush.msra.mxu0 0.0
        %2190 = vmatpush.msra.mxu0 0.0
        %2191 = vmatpush.msra.mxu0 0.0
        %2192 = vmatpush.msra.mxu0 0.0
        %2193 = vmatpush.msra.mxu0 0.0
        %2194 = vmatpush.msra.mxu0 0.0
        %2195 = vmatpush.msra.mxu0 %v1323
        %2196 = vmatpush.msra.mxu0 %v1316
        %2197 = vmatpush.msra.mxu0 %v1314
        %2198 = vmatpush.msra.mxu0 %v1312
        %2199 = vmatpush.msra.mxu0 %v1310
        %2200 = vmatmul.f32.gmra.mxu0 %v1848
        %v2201 = vpop.f32.mrf.mxu0
        %v2202 = vadd.f32 0.0, %v2201
        %2203 = vmatmul.f32.gmra.mxu0 %v1851
        %v2204 = vpop.f32.mrf.mxu0
        %v2205 = vadd.f32 0.0, %v2204
        %2206 = vmatmul.f32.gmra.mxu0 %v1854
        %v2207 = vpop.f32.mrf.mxu0
        %v2208 = vadd.f32 0.0, %v2207
        %2209 = vmatmul.f32.gmra.mxu0 %v1857
        %v2210 = vpop.f32.mrf.mxu0
        %v2211 = vadd.f32 0.0, %v2210
        %2212 = vmatmul.f32.gmra.mxu0 %v1860
        %v2213 = vpop.f32.mrf.mxu0
        %v2214 = vadd.f32 0.0, %v2213
        %2215 = vmatmul.f32.gmra.mxu0 %v1863
        %v2216 = vpop.f32.mrf.mxu0
        %v2217 = vadd.f32 0.0, %v2216
        %2218 = vmatmul.f32.gmra.mxu0 %v1866
        %v2219 = vpop.f32.mrf.mxu0
        %v2220 = vadd.f32 0.0, %v2219
        %2221 = vmatmul.f32.gmra.mxu0 %v1869
        %v2222 = vpop.f32.mrf.mxu0
        %v2223 = vadd.f32 0.0, %v2222
        %2224 = vmatmul.f32.gmra.mxu0 %v1872
        %v2225 = vpop.f32.mrf.mxu0
        %v2226 = vadd.f32 0.0, %v2225
        %2227 = vmatmul.f32.gmra.mxu0 %v1875
        %v2228 = vpop.f32.mrf.mxu0
        %v2229 = vadd.f32 0.0, %v2228
        %2230 = vmatmul.f32.gmra.mxu0 %v1878
        %v2231 = vpop.f32.mrf.mxu0
        %v2232 = vadd.f32 0.0, %v2231
        %2233 = vmatmul.f32.gmra.mxu0 %v1881
        %v2234 = vpop.f32.mrf.mxu0
        %v2235 = vadd.f32 0.0, %v2234
        %2236 = vdwg.mxu0
        %v2237 = vadd.f32 %v2172, %v2202
        %v2238 = vadd.f32 %v2173, %v2205
        %v2239 = vadd.f32 %v2174, %v2208
        %v2240 = vadd.f32 %v2175, %v2211
        %v2241 = vadd.f32 %v2176, %v2214
        %v2242 = vadd.f32 %v2177, %v2217
        %v2243 = vadd.f32 %v2178, %v2220
        %v2244 = vadd.f32 %v2179, %v2223
        %v2245 = vadd.f32 %v2180, %v2226
        %v2246 = vadd.f32 %v2181, %v2229
        %v2247 = vadd.f32 %v2182, %v2232
        %v2248 = vadd.f32 %v2183, %v2235
        %v2249 = vmax.f32 %v1936, %v2237
        %v2250 = vmax.f32 %v1937, %v2238
        %v2251 = vmax.f32 %v1938, %v2239
        %v2252 = vmax.f32 %v1939, %v2240
        %v2253 = vmax.f32 %v1940, %v2241
        %v2254 = vmax.f32 %v1941, %v2242
        %v2255 = vmax.f32 %v1942, %v2243
        %v2256 = vmax.f32 %v1943, %v2244
        %v2257 = vmax.f32 %v1944, %v2245
        %v2258 = vmax.f32 %v1945, %v2246
        %v2259 = vmax.f32 %v1946, %v2247
        %v2260 = vmax.f32 %v1947, %v2248
        %v2261 = vmax.f32 %v1390, %v2249
        %v2262 = vmax.f32 %v1391, %v2250
        %v2263 = vmax.f32 %v1392, %v2251
        %v2264 = vmax.f32 %v1393, %v2252
        %v2265 = vmax.f32 %v1394, %v2253
        %v2266 = vmax.f32 %v1395, %v2254
        %v2267 = vmax.f32 %v1396, %v2255
        %v2268 = vmax.f32 %v1397, %v2256
        %v2269 = vmax.f32 %v1398, %v2257
        %v2270 = vmax.f32 %v1399, %v2258
        %v2271 = vmax.f32 %v1400, %v2259
        %v2272 = vmax.f32 %v1401, %v2260
        %2273 = vmatpush.msra.mxu0 0.0
        %2274 = vmatpush.msra.mxu0 0.0
        %2275 = vmatpush.msra.mxu0 0.0
        %2276 = vmatpush.msra.mxu0 0.0
        %2277 = vmatpush.msra.mxu0 0.0
        %2278 = vmatpush.msra.mxu0 0.0
        %2279 = vmatpush.msra.mxu0 0.0
        %2280 = vmatpush.msra.mxu0 0.0
        %2281 = vmatpush.msra.mxu0 0.0
        %2282 = vmatpush.msra.mxu0 0.0
        %2283 = vmatpush.msra.mxu0 0.0
        %2284 = vmatpush.msra.mxu0 %v868
        %2285 = vmatpush.msra.mxu0 %v488
        %2286 = vmatpush.msra.mxu0 %v487
        %2287 = vmatpush.msra.mxu0 %v486
        %2288 = vmatpush.msra.mxu0 %v485
        %2289 = vmatmul.f32.gmra.mxu0 %v517
        %v2290 = vpop.f32.mrf.mxu0
        %v2291 = vadd.f32 0.0, %v2290
        %2292 = vmatmul.f32.gmra.mxu0 %v520
        %v2293 = vpop.f32.mrf.mxu0
        %v2294 = vadd.f32 0.0, %v2293
        %2295 = vmatmul.f32.gmra.mxu0 %v523
        %v2296 = vpop.f32.mrf.mxu0
        %v2297 = vadd.f32 0.0, %v2296
        %2298 = vmatmul.f32.gmra.mxu0 %v526
        %v2299 = vpop.f32.mrf.mxu0
        %v2300 = vadd.f32 0.0, %v2299
        %2301 = vmatmul.f32.gmra.mxu0 %v529
        %v2302 = vpop.f32.mrf.mxu0
        %v2303 = vadd.f32 0.0, %v2302
        %2304 = vmatmul.f32.gmra.mxu0 %v532
        %v2305 = vpop.f32.mrf.mxu0
        %v2306 = vadd.f32 0.0, %v2305
        %2307 = vmatmul.f32.gmra.mxu0 %v535
        %v2308 = vpop.f32.mrf.mxu0
        %v2309 = vadd.f32 0.0, %v2308
        %2310 = vmatmul.f32.gmra.mxu0 %v538
        %v2311 = vpop.f32.mrf.mxu0
        %v2312 = vadd.f32 0.0, %v2311
        %2313 = vmatmul.f32.gmra.mxu0 %v541
        %v2314 = vpop.f32.mrf.mxu0
        %v2315 = vadd.f32 0.0, %v2314
        %2316 = vmatmul.f32.gmra.mxu0 %v544
        %v2317 = vpop.f32.mrf.mxu0
        %v2318 = vadd.f32 0.0, %v2317
        %2319 = vmatmul.f32.gmra.mxu0 %v547
        %v2320 = vpop.f32.mrf.mxu0
        %v2321 = vadd.f32 0.0, %v2320
        %2322 = vmatmul.f32.gmra.mxu0 %v550
        %v2323 = vpop.f32.mrf.mxu0
        %v2324 = vadd.f32 0.0, %v2323
        %2325 = vdwg.mxu0
        %2326 = vmatpush.msra.mxu0 0.0
        %2327 = vmatpush.msra.mxu0 0.0
        %2328 = vmatpush.msra.mxu0 0.0
        %2329 = vmatpush.msra.mxu0 0.0
        %2330 = vmatpush.msra.mxu0 0.0
        %2331 = vmatpush.msra.mxu0 0.0
        %2332 = vmatpush.msra.mxu0 0.0
        %2333 = vmatpush.msra.mxu0 0.0
        %2334 = vmatpush.msra.mxu0 0.0
        %2335 = vmatpush.msra.mxu0 0.0
        %2336 = vmatpush.msra.mxu0 0.0
        %2337 = vmatpush.msra.mxu0 %v751
        %2338 = vmatpush.msra.mxu0 %v483
        %2339 = vmatpush.msra.mxu0 %v482
        %2340 = vmatpush.msra.mxu0 %v481
        %2341 = vmatpush.msra.mxu0 %v480
        %2342 = vmatmul.f32.gmra.mxu0 %v610
        %v2343 = vpop.f32.mrf.mxu0
        %v2344 = vadd.f32 %v2291, %v2343
        %2345 = vmatmul.f32.gmra.mxu0 %v613
        %v2346 = vpop.f32.mrf.mxu0
        %v2347 = vadd.f32 %v2294, %v2346
        %2348 = vmatmul.f32.gmra.mxu0 %v616
        %v2349 = vpop.f32.mrf.mxu0
        %v2350 = vadd.f32 %v2297, %v2349
        %2351 = vmatmul.f32.gmra.mxu0 %v619
        %v2352 = vpop.f32.mrf.mxu0
        %v2353 = vadd.f32 %v2300, %v2352
        %2354 = vmatmul.f32.gmra.mxu0 %v622
        %v2355 = vpop.f32.mrf.mxu0
        %v2356 = vadd.f32 %v2303, %v2355
        %2357 = vmatmul.f32.gmra.mxu0 %v625
        %v2358 = vpop.f32.mrf.mxu0
        %v2359 = vadd.f32 %v2306, %v2358
        %2360 = vmatmul.f32.gmra.mxu0 %v628
        %v2361 = vpop.f32.mrf.mxu0
        %v2362 = vadd.f32 %v2309, %v2361
        %2363 = vmatmul.f32.gmra.mxu0 %v631
        %v2364 = vpop.f32.mrf.mxu0
        %v2365 = vadd.f32 %v2312, %v2364
        %2366 = vmatmul.f32.gmra.mxu0 %v634
        %v2367 = vpop.f32.mrf.mxu0
        %v2368 = vadd.f32 %v2315, %v2367
        %2369 = vmatmul.f32.gmra.mxu0 %v637
        %v2370 = vpop.f32.mrf.mxu0
        %v2371 = vadd.f32 %v2318, %v2370
        %2372 = vmatmul.f32.gmra.mxu0 %v640
        %v2373 = vpop.f32.mrf.mxu0
        %v2374 = vadd.f32 %v2321, %v2373
        %2375 = vmatmul.f32.gmra.mxu0 %v643
        %v2376 = vpop.f32.mrf.mxu0
        %v2377 = vadd.f32 %v2324, %v2376
        %2378 = vdwg.mxu0
        %2379 = vmatpush.msra.mxu0 0.0
        %2380 = vmatpush.msra.mxu0 0.0
        %2381 = vmatpush.msra.mxu0 0.0
        %2382 = vmatpush.msra.mxu0 0.0
        %2383 = vmatpush.msra.mxu0 0.0
        %2384 = vmatpush.msra.mxu0 0.0
        %2385 = vmatpush.msra.mxu0 0.0
        %2386 = vmatpush.msra.mxu0 0.0
        %2387 = vmatpush.msra.mxu0 0.0
        %2388 = vmatpush.msra.mxu0 0.0
        %2389 = vmatpush.msra.mxu0 0.0
        %2390 = vmatpush.msra.mxu0 %v1002
        %2391 = vmatpush.msra.mxu0 %v959
        %2392 = vmatpush.msra.mxu0 %v957
        %2393 = vmatpush.msra.mxu0 %v955
        %2394 = vmatpush.msra.mxu0 %v953
        %2395 = vmatmul.f32.gmra.mxu0 %v715
        %v2396 = vpop.f32.mrf.mxu0
        %v2397 = vadd.f32 0.0, %v2396
        %2398 = vmatmul.f32.gmra.mxu0 %v718
        %v2399 = vpop.f32.mrf.mxu0
        %v2400 = vadd.f32 0.0, %v2399
        %2401 = vmatmul.f32.gmra.mxu0 %v721
        %v2402 = vpop.f32.mrf.mxu0
        %v2403 = vadd.f32 0.0, %v2402
        %2404 = vmatmul.f32.gmra.mxu0 %v724
        %v2405 = vpop.f32.mrf.mxu0
        %v2406 = vadd.f32 0.0, %v2405
        %2407 = vmatmul.f32.gmra.mxu0 %v727
        %v2408 = vpop.f32.mrf.mxu0
        %v2409 = vadd.f32 0.0, %v2408
        %2410 = vmatmul.f32.gmra.mxu0 %v730
        %v2411 = vpop.f32.mrf.mxu0
        %v2412 = vadd.f32 0.0, %v2411
        %2413 = vmatmul.f32.gmra.mxu0 %v733
        %v2414 = vpop.f32.mrf.mxu0
        %v2415 = vadd.f32 0.0, %v2414
        %2416 = vmatmul.f32.gmra.mxu0 %v736
        %v2417 = vpop.f32.mrf.mxu0
        %v2418 = vadd.f32 0.0, %v2417
        %2419 = vmatmul.f32.gmra.mxu0 %v739
        %v2420 = vpop.f32.mrf.mxu0
        %v2421 = vadd.f32 0.0, %v2420
        %2422 = vmatmul.f32.gmra.mxu0 %v742
        %v2423 = vpop.f32.mrf.mxu0
        %v2424 = vadd.f32 0.0, %v2423
        %2425 = vmatmul.f32.gmra.mxu0 %v745
        %v2426 = vpop.f32.mrf.mxu0
        %v2427 = vadd.f32 0.0, %v2426
        %2428 = vmatmul.f32.gmra.mxu0 %v748
        %v2429 = vpop.f32.mrf.mxu0
        %v2430 = vadd.f32 0.0, %v2429
        %2431 = vdwg.mxu0
        %v2432 = vadd.f32 %v2344, %v2397
        %v2433 = vadd.f32 %v2347, %v2400
        %v2434 = vadd.f32 %v2350, %v2403
        %v2435 = vadd.f32 %v2353, %v2406
        %v2436 = vadd.f32 %v2356, %v2409
        %v2437 = vadd.f32 %v2359, %v2412
        %v2438 = vadd.f32 %v2362, %v2415
        %v2439 = vadd.f32 %v2365, %v2418
        %v2440 = vadd.f32 %v2368, %v2421
        %v2441 = vadd.f32 %v2371, %v2424
        %v2442 = vadd.f32 %v2374, %v2427
        %v2443 = vadd.f32 %v2377, %v2430
        %2444 = vmatpush.msra.mxu0 0.0
        %2445 = vmatpush.msra.mxu0 0.0
        %2446 = vmatpush.msra.mxu0 0.0
        %2447 = vmatpush.msra.mxu0 0.0
        %2448 = vmatpush.msra.mxu0 0.0
        %2449 = vmatpush.msra.mxu0 0.0
        %2450 = vmatpush.msra.mxu0 0.0
        %2451 = vmatpush.msra.mxu0 0.0
        %2452 = vmatpush.msra.mxu0 0.0
        %2453 = vmatpush.msra.mxu0 0.0
        %2454 = vmatpush.msra.mxu0 0.0
        %2455 = vmatpush.msra.mxu0 %v1323
        %2456 = vmatpush.msra.mxu0 %v1316
        %2457 = vmatpush.msra.mxu0 %v1314
        %2458 = vmatpush.msra.mxu0 %v1312
        %2459 = vmatpush.msra.mxu0 %v1310
        %2460 = vmatmul.f32.gmra.mxu0 %v832
        %v2461 = vpop.f32.mrf.mxu0
        %v2462 = vadd.f32 0.0, %v2461
        %2463 = vmatmul.f32.gmra.mxu0 %v835
        %v2464 = vpop.f32.mrf.mxu0
        %v2465 = vadd.f32 0.0, %v2464
        %2466 = vmatmul.f32.gmra.mxu0 %v838
        %v2467 = vpop.f32.mrf.mxu0
        %v2468 = vadd.f32 0.0, %v2467
        %2469 = vmatmul.f32.gmra.mxu0 %v841
        %v2470 = vpop.f32.mrf.mxu0
        %v2471 = vadd.f32 0.0, %v2470
        %2472 = vmatmul.f32.gmra.mxu0 %v844
        %v2473 = vpop.f32.mrf.mxu0
        %v2474 = vadd.f32 0.0, %v2473
        %2475 = vmatmul.f32.gmra.mxu0 %v847
        %v2476 = vpop.f32.mrf.mxu0
        %v2477 = vadd.f32 0.0, %v2476
        %2478 = vmatmul.f32.gmra.mxu0 %v850
        %v2479 = vpop.f32.mrf.mxu0
        %v2480 = vadd.f32 0.0, %v2479
        %2481 = vmatmul.f32.gmra.mxu0 %v853
        %v2482 = vpop.f32.mrf.mxu0
        %v2483 = vadd.f32 0.0, %v2482
        %2484 = vmatmul.f32.gmra.mxu0 %v856
        %v2485 = vpop.f32.mrf.mxu0
        %v2486 = vadd.f32 0.0, %v2485
        %2487 = vmatmul.f32.gmra.mxu0 %v859
        %v2488 = vpop.f32.mrf.mxu0
        %v2489 = vadd.f32 0.0, %v2488
        %2490 = vmatmul.f32.gmra.mxu0 %v862
        %v2491 = vpop.f32.mrf.mxu0
        %v2492 = vadd.f32 0.0, %v2491
        %2493 = vmatmul.f32.gmra.mxu0 %v865
        %v2494 = vpop.f32.mrf.mxu0
        %v2495 = vadd.f32 0.0, %v2494
        %2496 = vdwg.mxu0
        %v2497 = vadd.f32 %v2432, %v2462
        %v2498 = vadd.f32 %v2433, %v2465
        %v2499 = vadd.f32 %v2434, %v2468
        %v2500 = vadd.f32 %v2435, %v2471
        %v2501 = vadd.f32 %v2436, %v2474
        %v2502 = vadd.f32 %v2437, %v2477
        %v2503 = vadd.f32 %v2438, %v2480
        %v2504 = vadd.f32 %v2439, %v2483
        %v2505 = vadd.f32 %v2440, %v2486
        %v2506 = vadd.f32 %v2441, %v2489
        %v2507 = vadd.f32 %v2442, %v2492
        %v2508 = vadd.f32 %v2443, %v2495
        %2513 = vrot.lane.b32.xlu0 %v480, 124
        %v2514 = vpop.permute.xlu0 %2513
        %2515 = vrot.lane.b32.xlu0 %v481, 124
        %v2516 = vpop.permute.xlu0 %2515
        %2517 = vrot.lane.b32.xlu0 %v482, 124
        %v2518 = vpop.permute.xlu0 %2517
        %2519 = vrot.lane.b32.xlu0 %v483, 124
        %v2520 = vpop.permute.xlu0 %2519
        %2521 = vrot.lane.b32.xlu0 %v484, 124
        %v2522 = vpop.permute.xlu0 %2521
        %v2527 = vsel %vm552, %v2522, 0
        %2529 = vmatpush.msra.mxu0 0.0
        %2530 = vmatpush.msra.mxu0 0.0
        %2531 = vmatpush.msra.mxu0 0.0
        %2532 = vmatpush.msra.mxu0 0.0
        %2533 = vmatpush.msra.mxu0 0.0
        %2534 = vmatpush.msra.mxu0 0.0
        %2535 = vmatpush.msra.mxu0 0.0
        %2536 = vmatpush.msra.mxu0 0.0
        %2537 = vmatpush.msra.mxu0 0.0
        %2538 = vmatpush.msra.mxu0 0.0
        %2539 = vmatpush.msra.mxu0 0.0
        %2540 = vmatpush.msra.mxu0 %v2527
        %2541 = vmatpush.msra.mxu0 %v2520
        %2542 = vmatpush.msra.mxu0 %v2518
        %2543 = vmatpush.msra.mxu0 %v2516
        %2544 = vmatpush.msra.mxu0 %v2514
        %2545 = vmatmul.f32.gmra.mxu0 %v967
        %v2546 = vpop.f32.mrf.mxu0
        %v2547 = vadd.f32 0.0, %v2546
        %2548 = vmatmul.f32.gmra.mxu0 %v970
        %v2549 = vpop.f32.mrf.mxu0
        %v2550 = vadd.f32 0.0, %v2549
        %2551 = vmatmul.f32.gmra.mxu0 %v973
        %v2552 = vpop.f32.mrf.mxu0
        %v2553 = vadd.f32 0.0, %v2552
        %2554 = vmatmul.f32.gmra.mxu0 %v976
        %v2555 = vpop.f32.mrf.mxu0
        %v2556 = vadd.f32 0.0, %v2555
        %2557 = vmatmul.f32.gmra.mxu0 %v979
        %v2558 = vpop.f32.mrf.mxu0
        %v2559 = vadd.f32 0.0, %v2558
        %2560 = vmatmul.f32.gmra.mxu0 %v982
        %v2561 = vpop.f32.mrf.mxu0
        %v2562 = vadd.f32 0.0, %v2561
        %2563 = vmatmul.f32.gmra.mxu0 %v985
        %v2564 = vpop.f32.mrf.mxu0
        %v2565 = vadd.f32 0.0, %v2564
        %2566 = vmatmul.f32.gmra.mxu0 %v988
        %v2567 = vpop.f32.mrf.mxu0
        %v2568 = vadd.f32 0.0, %v2567
        %2569 = vmatmul.f32.gmra.mxu0 %v991
        %v2570 = vpop.f32.mrf.mxu0
        %v2571 = vadd.f32 0.0, %v2570
        %2572 = vmatmul.f32.gmra.mxu0 %v994
        %v2573 = vpop.f32.mrf.mxu0
        %v2574 = vadd.f32 0.0, %v2573
        %2575 = vmatmul.f32.gmra.mxu0 %v997
        %v2576 = vpop.f32.mrf.mxu0
        %v2577 = vadd.f32 0.0, %v2576
        %2578 = vmatmul.f32.gmra.mxu0 %v1000
        %v2579 = vpop.f32.mrf.mxu0
        %v2580 = vadd.f32 0.0, %v2579
        %2581 = vdwg.mxu0
        %v2582 = vadd.f32 %v2497, %v2547
        %v2583 = vadd.f32 %v2498, %v2550
        %v2584 = vadd.f32 %v2499, %v2553
        %v2585 = vadd.f32 %v2500, %v2556
        %v2586 = vadd.f32 %v2501, %v2559
        %v2587 = vadd.f32 %v2502, %v2562
        %v2588 = vadd.f32 %v2503, %v2565
        %v2589 = vadd.f32 %v2504, %v2568
        %v2590 = vadd.f32 %v2505, %v2571
        %v2591 = vadd.f32 %v2506, %v2574
        %v2592 = vadd.f32 %v2507, %v2577
        %v2593 = vadd.f32 %v2508, %v2580
        %2594 = vmatpush.msra.mxu0 0.0
        %2595 = vmatpush.msra.mxu0 0.0
        %2596 = vmatpush.msra.mxu0 0.0
        %2597 = vmatpush.msra.mxu0 0.0
        %2598 = vmatpush.msra.mxu0 0.0
        %2599 = vmatpush.msra.mxu0 0.0
        %2600 = vmatpush.msra.mxu0 0.0
        %2601 = vmatpush.msra.mxu0 0.0
        %2602 = vmatpush.msra.mxu0 0.0
        %2603 = vmatpush.msra.mxu0 0.0
        %2604 = vmatpush.msra.mxu0 0.0
        %2605 = vmatpush.msra.mxu0 %v1002
        %2606 = vmatpush.msra.mxu0 %v959
        %2607 = vmatpush.msra.mxu0 %v957
        %2608 = vmatpush.msra.mxu0 %v955
        %2609 = vmatpush.msra.mxu0 %v953
        %2610 = vmatmul.f32.gmra.mxu0 %v517
        %v2611 = vpop.f32.mrf.mxu0
        %v2612 = vadd.f32 0.0, %v2611
        %2613 = vmatmul.f32.gmra.mxu0 %v520
        %v2614 = vpop.f32.mrf.mxu0
        %v2615 = vadd.f32 0.0, %v2614
        %2616 = vmatmul.f32.gmra.mxu0 %v523
        %v2617 = vpop.f32.mrf.mxu0
        %v2618 = vadd.f32 0.0, %v2617
        %2619 = vmatmul.f32.gmra.mxu0 %v526
        %v2620 = vpop.f32.mrf.mxu0
        %v2621 = vadd.f32 0.0, %v2620
        %2622 = vmatmul.f32.gmra.mxu0 %v529
        %v2623 = vpop.f32.mrf.mxu0
        %v2624 = vadd.f32 0.0, %v2623
        %2625 = vmatmul.f32.gmra.mxu0 %v532
        %v2626 = vpop.f32.mrf.mxu0
        %v2627 = vadd.f32 0.0, %v2626
        %2628 = vmatmul.f32.gmra.mxu0 %v535
        %v2629 = vpop.f32.mrf.mxu0
        %v2630 = vadd.f32 0.0, %v2629
        %2631 = vmatmul.f32.gmra.mxu0 %v538
        %v2632 = vpop.f32.mrf.mxu0
        %v2633 = vadd.f32 0.0, %v2632
        %2634 = vmatmul.f32.gmra.mxu0 %v541
        %v2635 = vpop.f32.mrf.mxu0
        %v2636 = vadd.f32 0.0, %v2635
        %2637 = vmatmul.f32.gmra.mxu0 %v544
        %v2638 = vpop.f32.mrf.mxu0
        %v2639 = vadd.f32 0.0, %v2638
        %2640 = vmatmul.f32.gmra.mxu0 %v547
        %v2641 = vpop.f32.mrf.mxu0
        %v2642 = vadd.f32 0.0, %v2641
        %2643 = vmatmul.f32.gmra.mxu0 %v550
        %v2644 = vpop.f32.mrf.mxu0
        %v2645 = vadd.f32 0.0, %v2644
        %2646 = vdwg.mxu0
        %2647 = vmatpush.msra.mxu0 0.0
        %2648 = vmatpush.msra.mxu0 0.0
        %2649 = vmatpush.msra.mxu0 0.0
        %2650 = vmatpush.msra.mxu0 0.0
        %2651 = vmatpush.msra.mxu0 0.0
        %2652 = vmatpush.msra.mxu0 0.0
        %2653 = vmatpush.msra.mxu0 0.0
        %2654 = vmatpush.msra.mxu0 0.0
        %2655 = vmatpush.msra.mxu0 0.0
        %2656 = vmatpush.msra.mxu0 0.0
        %2657 = vmatpush.msra.mxu0 0.0
        %2658 = vmatpush.msra.mxu0 %v868
        %2659 = vmatpush.msra.mxu0 %v488
        %2660 = vmatpush.msra.mxu0 %v487
        %2661 = vmatpush.msra.mxu0 %v486
        %2662 = vmatpush.msra.mxu0 %v485
        %2663 = vmatmul.f32.gmra.mxu0 %v610
        %v2664 = vpop.f32.mrf.mxu0
        %v2665 = vadd.f32 %v2612, %v2664
        %2666 = vmatmul.f32.gmra.mxu0 %v613
        %v2667 = vpop.f32.mrf.mxu0
        %v2668 = vadd.f32 %v2615, %v2667
        %2669 = vmatmul.f32.gmra.mxu0 %v616
        %v2670 = vpop.f32.mrf.mxu0
        %v2671 = vadd.f32 %v2618, %v2670
        %2672 = vmatmul.f32.gmra.mxu0 %v619
        %v2673 = vpop.f32.mrf.mxu0
        %v2674 = vadd.f32 %v2621, %v2673
        %2675 = vmatmul.f32.gmra.mxu0 %v622
        %v2676 = vpop.f32.mrf.mxu0
        %v2677 = vadd.f32 %v2624, %v2676
        %2678 = vmatmul.f32.gmra.mxu0 %v625
        %v2679 = vpop.f32.mrf.mxu0
        %v2680 = vadd.f32 %v2627, %v2679
        %2681 = vmatmul.f32.gmra.mxu0 %v628
        %v2682 = vpop.f32.mrf.mxu0
        %v2683 = vadd.f32 %v2630, %v2682
        %2684 = vmatmul.f32.gmra.mxu0 %v631
        %v2685 = vpop.f32.mrf.mxu0
        %v2686 = vadd.f32 %v2633, %v2685
        %2687 = vmatmul.f32.gmra.mxu0 %v634
        %v2688 = vpop.f32.mrf.mxu0
        %v2689 = vadd.f32 %v2636, %v2688
        %2690 = vmatmul.f32.gmra.mxu0 %v637
        %v2691 = vpop.f32.mrf.mxu0
        %v2692 = vadd.f32 %v2639, %v2691
        %2693 = vmatmul.f32.gmra.mxu0 %v640
        %v2694 = vpop.f32.mrf.mxu0
        %v2695 = vadd.f32 %v2642, %v2694
        %2696 = vmatmul.f32.gmra.mxu0 %v643
        %v2697 = vpop.f32.mrf.mxu0
        %v2698 = vadd.f32 %v2645, %v2697
        %2699 = vdwg.mxu0
        %2700 = vmatpush.msra.mxu0 0.0
        %2701 = vmatpush.msra.mxu0 0.0
        %2702 = vmatpush.msra.mxu0 0.0
        %2703 = vmatpush.msra.mxu0 0.0
        %2704 = vmatpush.msra.mxu0 0.0
        %2705 = vmatpush.msra.mxu0 0.0
        %2706 = vmatpush.msra.mxu0 0.0
        %2707 = vmatpush.msra.mxu0 0.0
        %2708 = vmatpush.msra.mxu0 0.0
        %2709 = vmatpush.msra.mxu0 0.0
        %2710 = vmatpush.msra.mxu0 0.0
        %2711 = vmatpush.msra.mxu0 %v1323
        %2712 = vmatpush.msra.mxu0 %v1316
        %2713 = vmatpush.msra.mxu0 %v1314
        %2714 = vmatpush.msra.mxu0 %v1312
        %2715 = vmatpush.msra.mxu0 %v1310
        %2716 = vmatmul.f32.gmra.mxu0 %v715
        %v2717 = vpop.f32.mrf.mxu0
        %v2718 = vadd.f32 0.0, %v2717
        %2719 = vmatmul.f32.gmra.mxu0 %v718
        %v2720 = vpop.f32.mrf.mxu0
        %v2721 = vadd.f32 0.0, %v2720
        %2722 = vmatmul.f32.gmra.mxu0 %v721
        %v2723 = vpop.f32.mrf.mxu0
        %v2724 = vadd.f32 0.0, %v2723
        %2725 = vmatmul.f32.gmra.mxu0 %v724
        %v2726 = vpop.f32.mrf.mxu0
        %v2727 = vadd.f32 0.0, %v2726
        %2728 = vmatmul.f32.gmra.mxu0 %v727
        %v2729 = vpop.f32.mrf.mxu0
        %v2730 = vadd.f32 0.0, %v2729
        %2731 = vmatmul.f32.gmra.mxu0 %v730
        %v2732 = vpop.f32.mrf.mxu0
        %v2733 = vadd.f32 0.0, %v2732
        %2734 = vmatmul.f32.gmra.mxu0 %v733
        %v2735 = vpop.f32.mrf.mxu0
        %v2736 = vadd.f32 0.0, %v2735
        %2737 = vmatmul.f32.gmra.mxu0 %v736
        %v2738 = vpop.f32.mrf.mxu0
        %v2739 = vadd.f32 0.0, %v2738
        %2740 = vmatmul.f32.gmra.mxu0 %v739
        %v2741 = vpop.f32.mrf.mxu0
        %v2742 = vadd.f32 0.0, %v2741
        %2743 = vmatmul.f32.gmra.mxu0 %v742
        %v2744 = vpop.f32.mrf.mxu0
        %v2745 = vadd.f32 0.0, %v2744
        %2746 = vmatmul.f32.gmra.mxu0 %v745
        %v2747 = vpop.f32.mrf.mxu0
        %v2748 = vadd.f32 0.0, %v2747
        %2749 = vmatmul.f32.gmra.mxu0 %v748
        %v2750 = vpop.f32.mrf.mxu0
        %v2751 = vadd.f32 0.0, %v2750
        %2752 = vdwg.mxu0
        %v2753 = vadd.f32 %v2665, %v2718
        %v2754 = vadd.f32 %v2668, %v2721
        %v2755 = vadd.f32 %v2671, %v2724
        %v2756 = vadd.f32 %v2674, %v2727
        %v2757 = vadd.f32 %v2677, %v2730
        %v2758 = vadd.f32 %v2680, %v2733
        %v2759 = vadd.f32 %v2683, %v2736
        %v2760 = vadd.f32 %v2686, %v2739
        %v2761 = vadd.f32 %v2689, %v2742
        %v2762 = vadd.f32 %v2692, %v2745
        %v2763 = vadd.f32 %v2695, %v2748
        %v2764 = vadd.f32 %v2698, %v2751
        %2765 = vmatpush.msra.mxu0 0.0
        %2766 = vmatpush.msra.mxu0 0.0
        %2767 = vmatpush.msra.mxu0 0.0
        %2768 = vmatpush.msra.mxu0 0.0
        %2769 = vmatpush.msra.mxu0 0.0
        %2770 = vmatpush.msra.mxu0 0.0
        %2771 = vmatpush.msra.mxu0 0.0
        %2772 = vmatpush.msra.mxu0 0.0
        %2773 = vmatpush.msra.mxu0 0.0
        %2774 = vmatpush.msra.mxu0 0.0
        %2775 = vmatpush.msra.mxu0 0.0
        %2776 = vmatpush.msra.mxu0 %v2527
        %2777 = vmatpush.msra.mxu0 %v2520
        %2778 = vmatpush.msra.mxu0 %v2518
        %2779 = vmatpush.msra.mxu0 %v2516
        %2780 = vmatpush.msra.mxu0 %v2514
        %2781 = vmatmul.f32.gmra.mxu0 %v832
        %v2782 = vpop.f32.mrf.mxu0
        %v2783 = vadd.f32 0.0, %v2782
        %2784 = vmatmul.f32.gmra.mxu0 %v835
        %v2785 = vpop.f32.mrf.mxu0
        %v2786 = vadd.f32 0.0, %v2785
        %2787 = vmatmul.f32.gmra.mxu0 %v838
        %v2788 = vpop.f32.mrf.mxu0
        %v2789 = vadd.f32 0.0, %v2788
        %2790 = vmatmul.f32.gmra.mxu0 %v841
        %v2791 = vpop.f32.mrf.mxu0
        %v2792 = vadd.f32 0.0, %v2791
        %2793 = vmatmul.f32.gmra.mxu0 %v844
        %v2794 = vpop.f32.mrf.mxu0
        %v2795 = vadd.f32 0.0, %v2794
        %2796 = vmatmul.f32.gmra.mxu0 %v847
        %v2797 = vpop.f32.mrf.mxu0
        %v2798 = vadd.f32 0.0, %v2797
        %2799 = vmatmul.f32.gmra.mxu0 %v850
        %v2800 = vpop.f32.mrf.mxu0
        %v2801 = vadd.f32 0.0, %v2800
        %2802 = vmatmul.f32.gmra.mxu0 %v853
        %v2803 = vpop.f32.mrf.mxu0
        %v2804 = vadd.f32 0.0, %v2803
        %2805 = vmatmul.f32.gmra.mxu0 %v856
        %v2806 = vpop.f32.mrf.mxu0
        %v2807 = vadd.f32 0.0, %v2806
        %2808 = vmatmul.f32.gmra.mxu0 %v859
        %v2809 = vpop.f32.mrf.mxu0
        %v2810 = vadd.f32 0.0, %v2809
        %2811 = vmatmul.f32.gmra.mxu0 %v862
        %v2812 = vpop.f32.mrf.mxu0
        %v2813 = vadd.f32 0.0, %v2812
        %2814 = vmatmul.f32.gmra.mxu0 %v865
        %v2815 = vpop.f32.mrf.mxu0
        %v2816 = vadd.f32 0.0, %v2815
        %2817 = vdwg.mxu0
        %v2818 = vadd.f32 %v2753, %v2783
        %v2819 = vadd.f32 %v2754, %v2786
        %v2820 = vadd.f32 %v2755, %v2789
        %v2821 = vadd.f32 %v2756, %v2792
        %v2822 = vadd.f32 %v2757, %v2795
        %v2823 = vadd.f32 %v2758, %v2798
        %v2824 = vadd.f32 %v2759, %v2801
        %v2825 = vadd.f32 %v2760, %v2804
        %v2826 = vadd.f32 %v2761, %v2807
        %v2827 = vadd.f32 %v2762, %v2810
        %v2828 = vadd.f32 %v2763, %v2813
        %v2829 = vadd.f32 %v2764, %v2816
        %2834 = vrot.lane.b32.xlu0 %v485, 124
        %v2835 = vpop.permute.xlu0 %2834
        %2836 = vrot.lane.b32.xlu0 %v486, 124
        %v2837 = vpop.permute.xlu0 %2836
        %2838 = vrot.lane.b32.xlu0 %v487, 124
        %v2839 = vpop.permute.xlu0 %2838
        %2840 = vrot.lane.b32.xlu0 %v488, 124
        %v2841 = vpop.permute.xlu0 %2840
        %2842 = vrot.lane.b32.xlu0 %v489, 124
        %v2843 = vpop.permute.xlu0 %2842
        %v2848 = vsel %vm552, %v2843, 0
        %2850 = vmatpush.msra.mxu0 0.0
        %2851 = vmatpush.msra.mxu0 0.0
        %2852 = vmatpush.msra.mxu0 0.0
        %2853 = vmatpush.msra.mxu0 0.0
        %2854 = vmatpush.msra.mxu0 0.0
        %2855 = vmatpush.msra.mxu0 0.0
        %2856 = vmatpush.msra.mxu0 0.0
        %2857 = vmatpush.msra.mxu0 0.0
        %2858 = vmatpush.msra.mxu0 0.0
        %2859 = vmatpush.msra.mxu0 0.0
        %2860 = vmatpush.msra.mxu0 0.0
        %2861 = vmatpush.msra.mxu0 %v2848
        %2862 = vmatpush.msra.mxu0 %v2841
        %2863 = vmatpush.msra.mxu0 %v2839
        %2864 = vmatpush.msra.mxu0 %v2837
        %2865 = vmatpush.msra.mxu0 %v2835
        %2866 = vmatmul.f32.gmra.mxu0 %v967
        %v2867 = vpop.f32.mrf.mxu0
        %v2868 = vadd.f32 0.0, %v2867
        %2869 = vmatmul.f32.gmra.mxu0 %v970
        %v2870 = vpop.f32.mrf.mxu0
        %v2871 = vadd.f32 0.0, %v2870
        %2872 = vmatmul.f32.gmra.mxu0 %v973
        %v2873 = vpop.f32.mrf.mxu0
        %v2874 = vadd.f32 0.0, %v2873
        %2875 = vmatmul.f32.gmra.mxu0 %v976
        %v2876 = vpop.f32.mrf.mxu0
        %v2877 = vadd.f32 0.0, %v2876
        %2878 = vmatmul.f32.gmra.mxu0 %v979
        %v2879 = vpop.f32.mrf.mxu0
        %v2880 = vadd.f32 0.0, %v2879
        %2881 = vmatmul.f32.gmra.mxu0 %v982
        %v2882 = vpop.f32.mrf.mxu0
        %v2883 = vadd.f32 0.0, %v2882
        %2884 = vmatmul.f32.gmra.mxu0 %v985
        %v2885 = vpop.f32.mrf.mxu0
        %v2886 = vadd.f32 0.0, %v2885
        %2887 = vmatmul.f32.gmra.mxu0 %v988
        %v2888 = vpop.f32.mrf.mxu0
        %v2889 = vadd.f32 0.0, %v2888
        %2890 = vmatmul.f32.gmra.mxu0 %v991
        %v2891 = vpop.f32.mrf.mxu0
        %v2892 = vadd.f32 0.0, %v2891
        %2893 = vmatmul.f32.gmra.mxu0 %v994
        %v2894 = vpop.f32.mrf.mxu0
        %v2895 = vadd.f32 0.0, %v2894
        %2896 = vmatmul.f32.gmra.mxu0 %v997
        %v2897 = vpop.f32.mrf.mxu0
        %v2898 = vadd.f32 0.0, %v2897
        %2899 = vmatmul.f32.gmra.mxu0 %v1000
        %v2900 = vpop.f32.mrf.mxu0
        %v2901 = vadd.f32 0.0, %v2900
        %2902 = vdwg.mxu0
        %v2903 = vadd.f32 %v2818, %v2868
        %v2904 = vadd.f32 %v2819, %v2871
        %v2905 = vadd.f32 %v2820, %v2874
        %v2906 = vadd.f32 %v2821, %v2877
        %v2907 = vadd.f32 %v2822, %v2880
        %v2908 = vadd.f32 %v2823, %v2883
        %v2909 = vadd.f32 %v2824, %v2886
        %v2910 = vadd.f32 %v2825, %v2889
        %v2911 = vadd.f32 %v2826, %v2892
        %v2912 = vadd.f32 %v2827, %v2895
        %v2913 = vadd.f32 %v2828, %v2898
        %v2914 = vadd.f32 %v2829, %v2901
        %v2915 = vmax.f32 %v2582, %v2903
        %v2916 = vmax.f32 %v2583, %v2904
        %v2917 = vmax.f32 %v2584, %v2905
        %v2918 = vmax.f32 %v2585, %v2906
        %v2919 = vmax.f32 %v2586, %v2907
        %v2920 = vmax.f32 %v2587, %v2908
        %v2921 = vmax.f32 %v2588, %v2909
        %v2922 = vmax.f32 %v2589, %v2910
        %v2923 = vmax.f32 %v2590, %v2911
        %v2924 = vmax.f32 %v2591, %v2912
        %v2925 = vmax.f32 %v2592, %v2913
        %v2926 = vmax.f32 %v2593, %v2914
        %2927 = vmatpush.msra.mxu0 0.0
        %2928 = vmatpush.msra.mxu0 0.0
        %2929 = vmatpush.msra.mxu0 0.0
        %2930 = vmatpush.msra.mxu0 0.0
        %2931 = vmatpush.msra.mxu0 0.0
        %2932 = vmatpush.msra.mxu0 0.0
        %2933 = vmatpush.msra.mxu0 0.0
        %2934 = vmatpush.msra.mxu0 0.0
        %2935 = vmatpush.msra.mxu0 0.0
        %2936 = vmatpush.msra.mxu0 0.0
        %2937 = vmatpush.msra.mxu0 0.0
        %2938 = vmatpush.msra.mxu0 %v868
        %2939 = vmatpush.msra.mxu0 %v488
        %2940 = vmatpush.msra.mxu0 %v487
        %2941 = vmatpush.msra.mxu0 %v486
        %2942 = vmatpush.msra.mxu0 %v485
        %2943 = vmatmul.f32.gmra.mxu0 %v1429
        %v2944 = vpop.f32.mrf.mxu0
        %v2945 = vadd.f32 0.0, %v2944
        %2946 = vmatmul.f32.gmra.mxu0 %v1432
        %v2947 = vpop.f32.mrf.mxu0
        %v2948 = vadd.f32 0.0, %v2947
        %2949 = vmatmul.f32.gmra.mxu0 %v1435
        %v2950 = vpop.f32.mrf.mxu0
        %v2951 = vadd.f32 0.0, %v2950
        %2952 = vmatmul.f32.gmra.mxu0 %v1438
        %v2953 = vpop.f32.mrf.mxu0
        %v2954 = vadd.f32 0.0, %v2953
        %2955 = vmatmul.f32.gmra.mxu0 %v1441
        %v2956 = vpop.f32.mrf.mxu0
        %v2957 = vadd.f32 0.0, %v2956
        %2958 = vmatmul.f32.gmra.mxu0 %v1444
        %v2959 = vpop.f32.mrf.mxu0
        %v2960 = vadd.f32 0.0, %v2959
        %2961 = vmatmul.f32.gmra.mxu0 %v1447
        %v2962 = vpop.f32.mrf.mxu0
        %v2963 = vadd.f32 0.0, %v2962
        %2964 = vmatmul.f32.gmra.mxu0 %v1450
        %v2965 = vpop.f32.mrf.mxu0
        %v2966 = vadd.f32 0.0, %v2965
        %2967 = vmatmul.f32.gmra.mxu0 %v1453
        %v2968 = vpop.f32.mrf.mxu0
        %v2969 = vadd.f32 0.0, %v2968
        %2970 = vmatmul.f32.gmra.mxu0 %v1456
        %v2971 = vpop.f32.mrf.mxu0
        %v2972 = vadd.f32 0.0, %v2971
        %2973 = vmatmul.f32.gmra.mxu0 %v1459
        %v2974 = vpop.f32.mrf.mxu0
        %v2975 = vadd.f32 0.0, %v2974
        %2976 = vmatmul.f32.gmra.mxu0 %v1462
        %v2977 = vpop.f32.mrf.mxu0
        %v2978 = vadd.f32 0.0, %v2977
        %2979 = vdwg.mxu0
        %2980 = vmatpush.msra.mxu0 0.0
        %2981 = vmatpush.msra.mxu0 0.0
        %2982 = vmatpush.msra.mxu0 0.0
        %2983 = vmatpush.msra.mxu0 0.0
        %2984 = vmatpush.msra.mxu0 0.0
        %2985 = vmatpush.msra.mxu0 0.0
        %2986 = vmatpush.msra.mxu0 0.0
        %2987 = vmatpush.msra.mxu0 0.0
        %2988 = vmatpush.msra.mxu0 0.0
        %2989 = vmatpush.msra.mxu0 0.0
        %2990 = vmatpush.msra.mxu0 0.0
        %2991 = vmatpush.msra.mxu0 %v751
        %2992 = vmatpush.msra.mxu0 %v483
        %2993 = vmatpush.msra.mxu0 %v482
        %2994 = vmatpush.msra.mxu0 %v481
        %2995 = vmatpush.msra.mxu0 %v480
        %2996 = vmatmul.f32.gmra.mxu0 %v1518
        %v2997 = vpop.f32.mrf.mxu0
        %v2998 = vadd.f32 %v2945, %v2997
        %2999 = vmatmul.f32.gmra.mxu0 %v1521
        %v3000 = vpop.f32.mrf.mxu0
        %v3001 = vadd.f32 %v2948, %v3000
        %3002 = vmatmul.f32.gmra.mxu0 %v1524
        %v3003 = vpop.f32.mrf.mxu0
        %v3004 = vadd.f32 %v2951, %v3003
        %3005 = vmatmul.f32.gmra.mxu0 %v1527
        %v3006 = vpop.f32.mrf.mxu0
        %v3007 = vadd.f32 %v2954, %v3006
        %3008 = vmatmul.f32.gmra.mxu0 %v1530
        %v3009 = vpop.f32.mrf.mxu0
        %v3010 = vadd.f32 %v2957, %v3009
        %3011 = vmatmul.f32.gmra.mxu0 %v1533
        %v3012 = vpop.f32.mrf.mxu0
        %v3013 = vadd.f32 %v2960, %v3012
        %3014 = vmatmul.f32.gmra.mxu0 %v1536
        %v3015 = vpop.f32.mrf.mxu0
        %v3016 = vadd.f32 %v2963, %v3015
        %3017 = vmatmul.f32.gmra.mxu0 %v1539
        %v3018 = vpop.f32.mrf.mxu0
        %v3019 = vadd.f32 %v2966, %v3018
        %3020 = vmatmul.f32.gmra.mxu0 %v1542
        %v3021 = vpop.f32.mrf.mxu0
        %v3022 = vadd.f32 %v2969, %v3021
        %3023 = vmatmul.f32.gmra.mxu0 %v1545
        %v3024 = vpop.f32.mrf.mxu0
        %v3025 = vadd.f32 %v2972, %v3024
        %3026 = vmatmul.f32.gmra.mxu0 %v1548
        %v3027 = vpop.f32.mrf.mxu0
        %v3028 = vadd.f32 %v2975, %v3027
        %3029 = vmatmul.f32.gmra.mxu0 %v1551
        %v3030 = vpop.f32.mrf.mxu0
        %v3031 = vadd.f32 %v2978, %v3030
        %3032 = vdwg.mxu0
        %3033 = vmatpush.msra.mxu0 0.0
        %3034 = vmatpush.msra.mxu0 0.0
        %3035 = vmatpush.msra.mxu0 0.0
        %3036 = vmatpush.msra.mxu0 0.0
        %3037 = vmatpush.msra.mxu0 0.0
        %3038 = vmatpush.msra.mxu0 0.0
        %3039 = vmatpush.msra.mxu0 0.0
        %3040 = vmatpush.msra.mxu0 0.0
        %3041 = vmatpush.msra.mxu0 0.0
        %3042 = vmatpush.msra.mxu0 0.0
        %3043 = vmatpush.msra.mxu0 0.0
        %3044 = vmatpush.msra.mxu0 %v1002
        %3045 = vmatpush.msra.mxu0 %v959
        %3046 = vmatpush.msra.mxu0 %v957
        %3047 = vmatpush.msra.mxu0 %v955
        %3048 = vmatpush.msra.mxu0 %v953
        %3049 = vmatmul.f32.gmra.mxu0 %v1620
        %v3050 = vpop.f32.mrf.mxu0
        %v3051 = vadd.f32 0.0, %v3050
        %3052 = vmatmul.f32.gmra.mxu0 %v1623
        %v3053 = vpop.f32.mrf.mxu0
        %v3054 = vadd.f32 0.0, %v3053
        %3055 = vmatmul.f32.gmra.mxu0 %v1626
        %v3056 = vpop.f32.mrf.mxu0
        %v3057 = vadd.f32 0.0, %v3056
        %3058 = vmatmul.f32.gmra.mxu0 %v1629
        %v3059 = vpop.f32.mrf.mxu0
        %v3060 = vadd.f32 0.0, %v3059
        %3061 = vmatmul.f32.gmra.mxu0 %v1632
        %v3062 = vpop.f32.mrf.mxu0
        %v3063 = vadd.f32 0.0, %v3062
        %3064 = vmatmul.f32.gmra.mxu0 %v1635
        %v3065 = vpop.f32.mrf.mxu0
        %v3066 = vadd.f32 0.0, %v3065
        %3067 = vmatmul.f32.gmra.mxu0 %v1638
        %v3068 = vpop.f32.mrf.mxu0
        %v3069 = vadd.f32 0.0, %v3068
        %3070 = vmatmul.f32.gmra.mxu0 %v1641
        %v3071 = vpop.f32.mrf.mxu0
        %v3072 = vadd.f32 0.0, %v3071
        %3073 = vmatmul.f32.gmra.mxu0 %v1644
        %v3074 = vpop.f32.mrf.mxu0
        %v3075 = vadd.f32 0.0, %v3074
        %3076 = vmatmul.f32.gmra.mxu0 %v1647
        %v3077 = vpop.f32.mrf.mxu0
        %v3078 = vadd.f32 0.0, %v3077
        %3079 = vmatmul.f32.gmra.mxu0 %v1650
        %v3080 = vpop.f32.mrf.mxu0
        %v3081 = vadd.f32 0.0, %v3080
        %3082 = vmatmul.f32.gmra.mxu0 %v1653
        %v3083 = vpop.f32.mrf.mxu0
        %v3084 = vadd.f32 0.0, %v3083
        %3085 = vdwg.mxu0
        %v3086 = vadd.f32 %v2998, %v3051
        %v3087 = vadd.f32 %v3001, %v3054
        %v3088 = vadd.f32 %v3004, %v3057
        %v3089 = vadd.f32 %v3007, %v3060
        %v3090 = vadd.f32 %v3010, %v3063
        %v3091 = vadd.f32 %v3013, %v3066
        %v3092 = vadd.f32 %v3016, %v3069
        %v3093 = vadd.f32 %v3019, %v3072
        %v3094 = vadd.f32 %v3022, %v3075
        %v3095 = vadd.f32 %v3025, %v3078
        %v3096 = vadd.f32 %v3028, %v3081
        %v3097 = vadd.f32 %v3031, %v3084
        %3098 = vmatpush.msra.mxu0 0.0
        %3099 = vmatpush.msra.mxu0 0.0
        %3100 = vmatpush.msra.mxu0 0.0
        %3101 = vmatpush.msra.mxu0 0.0
        %3102 = vmatpush.msra.mxu0 0.0
        %3103 = vmatpush.msra.mxu0 0.0
        %3104 = vmatpush.msra.mxu0 0.0
        %3105 = vmatpush.msra.mxu0 0.0
        %3106 = vmatpush.msra.mxu0 0.0
        %3107 = vmatpush.msra.mxu0 0.0
        %3108 = vmatpush.msra.mxu0 0.0
        %3109 = vmatpush.msra.mxu0 %v1323
        %3110 = vmatpush.msra.mxu0 %v1316
        %3111 = vmatpush.msra.mxu0 %v1314
        %3112 = vmatpush.msra.mxu0 %v1312
        %3113 = vmatpush.msra.mxu0 %v1310
        %3114 = vmatmul.f32.gmra.mxu0 %v1734
        %v3115 = vpop.f32.mrf.mxu0
        %v3116 = vadd.f32 0.0, %v3115
        %3117 = vmatmul.f32.gmra.mxu0 %v1737
        %v3118 = vpop.f32.mrf.mxu0
        %v3119 = vadd.f32 0.0, %v3118
        %3120 = vmatmul.f32.gmra.mxu0 %v1740
        %v3121 = vpop.f32.mrf.mxu0
        %v3122 = vadd.f32 0.0, %v3121
        %3123 = vmatmul.f32.gmra.mxu0 %v1743
        %v3124 = vpop.f32.mrf.mxu0
        %v3125 = vadd.f32 0.0, %v3124
        %3126 = vmatmul.f32.gmra.mxu0 %v1746
        %v3127 = vpop.f32.mrf.mxu0
        %v3128 = vadd.f32 0.0, %v3127
        %3129 = vmatmul.f32.gmra.mxu0 %v1749
        %v3130 = vpop.f32.mrf.mxu0
        %v3131 = vadd.f32 0.0, %v3130
        %3132 = vmatmul.f32.gmra.mxu0 %v1752
        %v3133 = vpop.f32.mrf.mxu0
        %v3134 = vadd.f32 0.0, %v3133
        %3135 = vmatmul.f32.gmra.mxu0 %v1755
        %v3136 = vpop.f32.mrf.mxu0
        %v3137 = vadd.f32 0.0, %v3136
        %3138 = vmatmul.f32.gmra.mxu0 %v1758
        %v3139 = vpop.f32.mrf.mxu0
        %v3140 = vadd.f32 0.0, %v3139
        %3141 = vmatmul.f32.gmra.mxu0 %v1761
        %v3142 = vpop.f32.mrf.mxu0
        %v3143 = vadd.f32 0.0, %v3142
        %3144 = vmatmul.f32.gmra.mxu0 %v1764
        %v3145 = vpop.f32.mrf.mxu0
        %v3146 = vadd.f32 0.0, %v3145
        %3147 = vmatmul.f32.gmra.mxu0 %v1767
        %v3148 = vpop.f32.mrf.mxu0
        %v3149 = vadd.f32 0.0, %v3148
        %3150 = vdwg.mxu0
        %v3151 = vadd.f32 %v3086, %v3116
        %v3152 = vadd.f32 %v3087, %v3119
        %v3153 = vadd.f32 %v3088, %v3122
        %v3154 = vadd.f32 %v3089, %v3125
        %v3155 = vadd.f32 %v3090, %v3128
        %v3156 = vadd.f32 %v3091, %v3131
        %v3157 = vadd.f32 %v3092, %v3134
        %v3158 = vadd.f32 %v3093, %v3137
        %v3159 = vadd.f32 %v3094, %v3140
        %v3160 = vadd.f32 %v3095, %v3143
        %v3161 = vadd.f32 %v3096, %v3146
        %v3162 = vadd.f32 %v3097, %v3149
        %3163 = vmatpush.msra.mxu0 0.0
        %3164 = vmatpush.msra.mxu0 0.0
        %3165 = vmatpush.msra.mxu0 0.0
        %3166 = vmatpush.msra.mxu0 0.0
        %3167 = vmatpush.msra.mxu0 0.0
        %3168 = vmatpush.msra.mxu0 0.0
        %3169 = vmatpush.msra.mxu0 0.0
        %3170 = vmatpush.msra.mxu0 0.0
        %3171 = vmatpush.msra.mxu0 0.0
        %3172 = vmatpush.msra.mxu0 0.0
        %3173 = vmatpush.msra.mxu0 0.0
        %3174 = vmatpush.msra.mxu0 %v2527
        %3175 = vmatpush.msra.mxu0 %v2520
        %3176 = vmatpush.msra.mxu0 %v2518
        %3177 = vmatpush.msra.mxu0 %v2516
        %3178 = vmatpush.msra.mxu0 %v2514
        %3179 = vmatmul.f32.gmra.mxu0 %v1848
        %v3180 = vpop.f32.mrf.mxu0
        %v3181 = vadd.f32 0.0, %v3180
        %3182 = vmatmul.f32.gmra.mxu0 %v1851
        %v3183 = vpop.f32.mrf.mxu0
        %v3184 = vadd.f32 0.0, %v3183
        %3185 = vmatmul.f32.gmra.mxu0 %v1854
        %v3186 = vpop.f32.mrf.mxu0
        %v3187 = vadd.f32 0.0, %v3186
        %3188 = vmatmul.f32.gmra.mxu0 %v1857
        %v3189 = vpop.f32.mrf.mxu0
        %v3190 = vadd.f32 0.0, %v3189
        %3191 = vmatmul.f32.gmra.mxu0 %v1860
        %v3192 = vpop.f32.mrf.mxu0
        %v3193 = vadd.f32 0.0, %v3192
        %3194 = vmatmul.f32.gmra.mxu0 %v1863
        %v3195 = vpop.f32.mrf.mxu0
        %v3196 = vadd.f32 0.0, %v3195
        %3197 = vmatmul.f32.gmra.mxu0 %v1866
        %v3198 = vpop.f32.mrf.mxu0
        %v3199 = vadd.f32 0.0, %v3198
        %3200 = vmatmul.f32.gmra.mxu0 %v1869
        %v3201 = vpop.f32.mrf.mxu0
        %v3202 = vadd.f32 0.0, %v3201
        %3203 = vmatmul.f32.gmra.mxu0 %v1872
        %v3204 = vpop.f32.mrf.mxu0
        %v3205 = vadd.f32 0.0, %v3204
        %3206 = vmatmul.f32.gmra.mxu0 %v1875
        %v3207 = vpop.f32.mrf.mxu0
        %v3208 = vadd.f32 0.0, %v3207
        %3209 = vmatmul.f32.gmra.mxu0 %v1878
        %v3210 = vpop.f32.mrf.mxu0
        %v3211 = vadd.f32 0.0, %v3210
        %3212 = vmatmul.f32.gmra.mxu0 %v1881
        %v3213 = vpop.f32.mrf.mxu0
        %v3214 = vadd.f32 0.0, %v3213
        %3215 = vdwg.mxu0
        %v3216 = vadd.f32 %v3151, %v3181
        %v3217 = vadd.f32 %v3152, %v3184
        %v3218 = vadd.f32 %v3153, %v3187
        %v3219 = vadd.f32 %v3154, %v3190
        %v3220 = vadd.f32 %v3155, %v3193
        %v3221 = vadd.f32 %v3156, %v3196
        %v3222 = vadd.f32 %v3157, %v3199
        %v3223 = vadd.f32 %v3158, %v3202
        %v3224 = vadd.f32 %v3159, %v3205
        %v3225 = vadd.f32 %v3160, %v3208
        %v3226 = vadd.f32 %v3161, %v3211
        %v3227 = vadd.f32 %v3162, %v3214
        %3228 = vmatpush.msra.mxu0 0.0
        %3229 = vmatpush.msra.mxu0 0.0
        %3230 = vmatpush.msra.mxu0 0.0
        %3231 = vmatpush.msra.mxu0 0.0
        %3232 = vmatpush.msra.mxu0 0.0
        %3233 = vmatpush.msra.mxu0 0.0
        %3234 = vmatpush.msra.mxu0 0.0
        %3235 = vmatpush.msra.mxu0 0.0
        %3236 = vmatpush.msra.mxu0 0.0
        %3237 = vmatpush.msra.mxu0 0.0
        %3238 = vmatpush.msra.mxu0 0.0
        %3239 = vmatpush.msra.mxu0 %v1002
        %3240 = vmatpush.msra.mxu0 %v959
        %3241 = vmatpush.msra.mxu0 %v957
        %3242 = vmatpush.msra.mxu0 %v955
        %3243 = vmatpush.msra.mxu0 %v953
        %3244 = vmatmul.f32.gmra.mxu0 %v1429
        %v3245 = vpop.f32.mrf.mxu0
        %v3246 = vadd.f32 0.0, %v3245
        %3247 = vmatmul.f32.gmra.mxu0 %v1432
        %v3248 = vpop.f32.mrf.mxu0
        %v3249 = vadd.f32 0.0, %v3248
        %3250 = vmatmul.f32.gmra.mxu0 %v1435
        %v3251 = vpop.f32.mrf.mxu0
        %v3252 = vadd.f32 0.0, %v3251
        %3253 = vmatmul.f32.gmra.mxu0 %v1438
        %v3254 = vpop.f32.mrf.mxu0
        %v3255 = vadd.f32 0.0, %v3254
        %3256 = vmatmul.f32.gmra.mxu0 %v1441
        %v3257 = vpop.f32.mrf.mxu0
        %v3258 = vadd.f32 0.0, %v3257
        %3259 = vmatmul.f32.gmra.mxu0 %v1444
        %v3260 = vpop.f32.mrf.mxu0
        %v3261 = vadd.f32 0.0, %v3260
        %3262 = vmatmul.f32.gmra.mxu0 %v1447
        %v3263 = vpop.f32.mrf.mxu0
        %v3264 = vadd.f32 0.0, %v3263
        %3265 = vmatmul.f32.gmra.mxu0 %v1450
        %v3266 = vpop.f32.mrf.mxu0
        %v3267 = vadd.f32 0.0, %v3266
        %3268 = vmatmul.f32.gmra.mxu0 %v1453
        %v3269 = vpop.f32.mrf.mxu0
        %v3270 = vadd.f32 0.0, %v3269
        %3271 = vmatmul.f32.gmra.mxu0 %v1456
        %v3272 = vpop.f32.mrf.mxu0
        %v3273 = vadd.f32 0.0, %v3272
        %3274 = vmatmul.f32.gmra.mxu0 %v1459
        %v3275 = vpop.f32.mrf.mxu0
        %v3276 = vadd.f32 0.0, %v3275
        %3277 = vmatmul.f32.gmra.mxu0 %v1462
        %v3278 = vpop.f32.mrf.mxu0
        %v3279 = vadd.f32 0.0, %v3278
        %3280 = vdwg.mxu0
        %3281 = vmatpush.msra.mxu0 0.0
        %3282 = vmatpush.msra.mxu0 0.0
        %3283 = vmatpush.msra.mxu0 0.0
        %3284 = vmatpush.msra.mxu0 0.0
        %3285 = vmatpush.msra.mxu0 0.0
        %3286 = vmatpush.msra.mxu0 0.0
        %3287 = vmatpush.msra.mxu0 0.0
        %3288 = vmatpush.msra.mxu0 0.0
        %3289 = vmatpush.msra.mxu0 0.0
        %3290 = vmatpush.msra.mxu0 0.0
        %3291 = vmatpush.msra.mxu0 0.0
        %3292 = vmatpush.msra.mxu0 %v868
        %3293 = vmatpush.msra.mxu0 %v488
        %3294 = vmatpush.msra.mxu0 %v487
        %3295 = vmatpush.msra.mxu0 %v486
        %3296 = vmatpush.msra.mxu0 %v485
        %3297 = vmatmul.f32.gmra.mxu0 %v1518
        %v3298 = vpop.f32.mrf.mxu0
        %v3299 = vadd.f32 %v3246, %v3298
        %3300 = vmatmul.f32.gmra.mxu0 %v1521
        %v3301 = vpop.f32.mrf.mxu0
        %v3302 = vadd.f32 %v3249, %v3301
        %3303 = vmatmul.f32.gmra.mxu0 %v1524
        %v3304 = vpop.f32.mrf.mxu0
        %v3305 = vadd.f32 %v3252, %v3304
        %3306 = vmatmul.f32.gmra.mxu0 %v1527
        %v3307 = vpop.f32.mrf.mxu0
        %v3308 = vadd.f32 %v3255, %v3307
        %3309 = vmatmul.f32.gmra.mxu0 %v1530
        %v3310 = vpop.f32.mrf.mxu0
        %v3311 = vadd.f32 %v3258, %v3310
        %3312 = vmatmul.f32.gmra.mxu0 %v1533
        %v3313 = vpop.f32.mrf.mxu0
        %v3314 = vadd.f32 %v3261, %v3313
        %3315 = vmatmul.f32.gmra.mxu0 %v1536
        %v3316 = vpop.f32.mrf.mxu0
        %v3317 = vadd.f32 %v3264, %v3316
        %3318 = vmatmul.f32.gmra.mxu0 %v1539
        %v3319 = vpop.f32.mrf.mxu0
        %v3320 = vadd.f32 %v3267, %v3319
        %3321 = vmatmul.f32.gmra.mxu0 %v1542
        %v3322 = vpop.f32.mrf.mxu0
        %v3323 = vadd.f32 %v3270, %v3322
        %3324 = vmatmul.f32.gmra.mxu0 %v1545
        %v3325 = vpop.f32.mrf.mxu0
        %v3326 = vadd.f32 %v3273, %v3325
        %3327 = vmatmul.f32.gmra.mxu0 %v1548
        %v3328 = vpop.f32.mrf.mxu0
        %v3329 = vadd.f32 %v3276, %v3328
        %3330 = vmatmul.f32.gmra.mxu0 %v1551
        %v3331 = vpop.f32.mrf.mxu0
        %v3332 = vadd.f32 %v3279, %v3331
        %3333 = vdwg.mxu0
        %3334 = vmatpush.msra.mxu0 0.0
        %3335 = vmatpush.msra.mxu0 0.0
        %3336 = vmatpush.msra.mxu0 0.0
        %3337 = vmatpush.msra.mxu0 0.0
        %3338 = vmatpush.msra.mxu0 0.0
        %3339 = vmatpush.msra.mxu0 0.0
        %3340 = vmatpush.msra.mxu0 0.0
        %3341 = vmatpush.msra.mxu0 0.0
        %3342 = vmatpush.msra.mxu0 0.0
        %3343 = vmatpush.msra.mxu0 0.0
        %3344 = vmatpush.msra.mxu0 0.0
        %3345 = vmatpush.msra.mxu0 %v1323
        %3346 = vmatpush.msra.mxu0 %v1316
        %3347 = vmatpush.msra.mxu0 %v1314
        %3348 = vmatpush.msra.mxu0 %v1312
        %3349 = vmatpush.msra.mxu0 %v1310
        %3350 = vmatmul.f32.gmra.mxu0 %v1620
        %v3351 = vpop.f32.mrf.mxu0
        %v3352 = vadd.f32 0.0, %v3351
        %3353 = vmatmul.f32.gmra.mxu0 %v1623
        %v3354 = vpop.f32.mrf.mxu0
        %v3355 = vadd.f32 0.0, %v3354
        %3356 = vmatmul.f32.gmra.mxu0 %v1626
        %v3357 = vpop.f32.mrf.mxu0
        %v3358 = vadd.f32 0.0, %v3357
        %3359 = vmatmul.f32.gmra.mxu0 %v1629
        %v3360 = vpop.f32.mrf.mxu0
        %v3361 = vadd.f32 0.0, %v3360
        %3362 = vmatmul.f32.gmra.mxu0 %v1632
        %v3363 = vpop.f32.mrf.mxu0
        %v3364 = vadd.f32 0.0, %v3363
        %3365 = vmatmul.f32.gmra.mxu0 %v1635
        %v3366 = vpop.f32.mrf.mxu0
        %v3367 = vadd.f32 0.0, %v3366
        %3368 = vmatmul.f32.gmra.mxu0 %v1638
        %v3369 = vpop.f32.mrf.mxu0
        %v3370 = vadd.f32 0.0, %v3369
        %3371 = vmatmul.f32.gmra.mxu0 %v1641
        %v3372 = vpop.f32.mrf.mxu0
        %v3373 = vadd.f32 0.0, %v3372
        %3374 = vmatmul.f32.gmra.mxu0 %v1644
        %v3375 = vpop.f32.mrf.mxu0
        %v3376 = vadd.f32 0.0, %v3375
        %3377 = vmatmul.f32.gmra.mxu0 %v1647
        %v3378 = vpop.f32.mrf.mxu0
        %v3379 = vadd.f32 0.0, %v3378
        %3380 = vmatmul.f32.gmra.mxu0 %v1650
        %v3381 = vpop.f32.mrf.mxu0
        %v3382 = vadd.f32 0.0, %v3381
        %3383 = vmatmul.f32.gmra.mxu0 %v1653
        %v3384 = vpop.f32.mrf.mxu0
        %v3385 = vadd.f32 0.0, %v3384
        %3386 = vdwg.mxu0
        %v3387 = vadd.f32 %v3299, %v3352
        %v3388 = vadd.f32 %v3302, %v3355
        %v3389 = vadd.f32 %v3305, %v3358
        %v3390 = vadd.f32 %v3308, %v3361
        %v3391 = vadd.f32 %v3311, %v3364
        %v3392 = vadd.f32 %v3314, %v3367
        %v3393 = vadd.f32 %v3317, %v3370
        %v3394 = vadd.f32 %v3320, %v3373
        %v3395 = vadd.f32 %v3323, %v3376
        %v3396 = vadd.f32 %v3326, %v3379
        %v3397 = vadd.f32 %v3329, %v3382
        %v3398 = vadd.f32 %v3332, %v3385
        %3399 = vmatpush.msra.mxu0 0.0
        %3400 = vmatpush.msra.mxu0 0.0
        %3401 = vmatpush.msra.mxu0 0.0
        %3402 = vmatpush.msra.mxu0 0.0
        %3403 = vmatpush.msra.mxu0 0.0
        %3404 = vmatpush.msra.mxu0 0.0
        %3405 = vmatpush.msra.mxu0 0.0
        %3406 = vmatpush.msra.mxu0 0.0
        %3407 = vmatpush.msra.mxu0 0.0
        %3408 = vmatpush.msra.mxu0 0.0
        %3409 = vmatpush.msra.mxu0 0.0
        %3410 = vmatpush.msra.mxu0 %v2527
        %3411 = vmatpush.msra.mxu0 %v2520
        %3412 = vmatpush.msra.mxu0 %v2518
        %3413 = vmatpush.msra.mxu0 %v2516
        %3414 = vmatpush.msra.mxu0 %v2514
        %3415 = vmatmul.f32.gmra.mxu0 %v1734
        %v3416 = vpop.f32.mrf.mxu0
        %v3417 = vadd.f32 0.0, %v3416
        %3418 = vmatmul.f32.gmra.mxu0 %v1737
        %v3419 = vpop.f32.mrf.mxu0
        %v3420 = vadd.f32 0.0, %v3419
        %3421 = vmatmul.f32.gmra.mxu0 %v1740
        %v3422 = vpop.f32.mrf.mxu0
        %v3423 = vadd.f32 0.0, %v3422
        %3424 = vmatmul.f32.gmra.mxu0 %v1743
        %v3425 = vpop.f32.mrf.mxu0
        %v3426 = vadd.f32 0.0, %v3425
        %3427 = vmatmul.f32.gmra.mxu0 %v1746
        %v3428 = vpop.f32.mrf.mxu0
        %v3429 = vadd.f32 0.0, %v3428
        %3430 = vmatmul.f32.gmra.mxu0 %v1749
        %v3431 = vpop.f32.mrf.mxu0
        %v3432 = vadd.f32 0.0, %v3431
        %3433 = vmatmul.f32.gmra.mxu0 %v1752
        %v3434 = vpop.f32.mrf.mxu0
        %v3435 = vadd.f32 0.0, %v3434
        %3436 = vmatmul.f32.gmra.mxu0 %v1755
        %v3437 = vpop.f32.mrf.mxu0
        %v3438 = vadd.f32 0.0, %v3437
        %3439 = vmatmul.f32.gmra.mxu0 %v1758
        %v3440 = vpop.f32.mrf.mxu0
        %v3441 = vadd.f32 0.0, %v3440
        %3442 = vmatmul.f32.gmra.mxu0 %v1761
        %v3443 = vpop.f32.mrf.mxu0
        %v3444 = vadd.f32 0.0, %v3443
        %3445 = vmatmul.f32.gmra.mxu0 %v1764
        %v3446 = vpop.f32.mrf.mxu0
        %v3447 = vadd.f32 0.0, %v3446
        %3448 = vmatmul.f32.gmra.mxu0 %v1767
        %v3449 = vpop.f32.mrf.mxu0
        %v3450 = vadd.f32 0.0, %v3449
        %3451 = vdwg.mxu0
        %v3452 = vadd.f32 %v3387, %v3417
        %v3453 = vadd.f32 %v3388, %v3420
        %v3454 = vadd.f32 %v3389, %v3423
        %v3455 = vadd.f32 %v3390, %v3426
        %v3456 = vadd.f32 %v3391, %v3429
        %v3457 = vadd.f32 %v3392, %v3432
        %v3458 = vadd.f32 %v3393, %v3435
        %v3459 = vadd.f32 %v3394, %v3438
        %v3460 = vadd.f32 %v3395, %v3441
        %v3461 = vadd.f32 %v3396, %v3444
        %v3462 = vadd.f32 %v3397, %v3447
        %v3463 = vadd.f32 %v3398, %v3450
        %3464 = vmatpush.msra.mxu0 0.0
        %3465 = vmatpush.msra.mxu0 0.0
        %3466 = vmatpush.msra.mxu0 0.0
        %3467 = vmatpush.msra.mxu0 0.0
        %3468 = vmatpush.msra.mxu0 0.0
        %3469 = vmatpush.msra.mxu0 0.0
        %3470 = vmatpush.msra.mxu0 0.0
        %3471 = vmatpush.msra.mxu0 0.0
        %3472 = vmatpush.msra.mxu0 0.0
        %3473 = vmatpush.msra.mxu0 0.0
        %3474 = vmatpush.msra.mxu0 0.0
        %3475 = vmatpush.msra.mxu0 %v2848
        %3476 = vmatpush.msra.mxu0 %v2841
        %3477 = vmatpush.msra.mxu0 %v2839
        %3478 = vmatpush.msra.mxu0 %v2837
        %3479 = vmatpush.msra.mxu0 %v2835
        %3480 = vmatmul.f32.gmra.mxu0 %v1848
        %v3481 = vpop.f32.mrf.mxu0
        %v3482 = vadd.f32 0.0, %v3481
        %3483 = vmatmul.f32.gmra.mxu0 %v1851
        %v3484 = vpop.f32.mrf.mxu0
        %v3485 = vadd.f32 0.0, %v3484
        %3486 = vmatmul.f32.gmra.mxu0 %v1854
        %v3487 = vpop.f32.mrf.mxu0
        %v3488 = vadd.f32 0.0, %v3487
        %3489 = vmatmul.f32.gmra.mxu0 %v1857
        %v3490 = vpop.f32.mrf.mxu0
        %v3491 = vadd.f32 0.0, %v3490
        %3492 = vmatmul.f32.gmra.mxu0 %v1860
        %v3493 = vpop.f32.mrf.mxu0
        %v3494 = vadd.f32 0.0, %v3493
        %3495 = vmatmul.f32.gmra.mxu0 %v1863
        %v3496 = vpop.f32.mrf.mxu0
        %v3497 = vadd.f32 0.0, %v3496
        %3498 = vmatmul.f32.gmra.mxu0 %v1866
        %v3499 = vpop.f32.mrf.mxu0
        %v3500 = vadd.f32 0.0, %v3499
        %3501 = vmatmul.f32.gmra.mxu0 %v1869
        %v3502 = vpop.f32.mrf.mxu0
        %v3503 = vadd.f32 0.0, %v3502
        %3504 = vmatmul.f32.gmra.mxu0 %v1872
        %v3505 = vpop.f32.mrf.mxu0
        %v3506 = vadd.f32 0.0, %v3505
        %3507 = vmatmul.f32.gmra.mxu0 %v1875
        %v3508 = vpop.f32.mrf.mxu0
        %v3509 = vadd.f32 0.0, %v3508
        %3510 = vmatmul.f32.gmra.mxu0 %v1878
        %v3511 = vpop.f32.mrf.mxu0
        %v3512 = vadd.f32 0.0, %v3511
        %3513 = vmatmul.f32.gmra.mxu0 %v1881
        %v3514 = vpop.f32.mrf.mxu0
        %v3515 = vadd.f32 0.0, %v3514
        %3516 = vdwg.mxu0
        %v3517 = vadd.f32 %v3452, %v3482
        %v3518 = vadd.f32 %v3453, %v3485
        %v3519 = vadd.f32 %v3454, %v3488
        %v3520 = vadd.f32 %v3455, %v3491
        %v3521 = vadd.f32 %v3456, %v3494
        %v3522 = vadd.f32 %v3457, %v3497
        %v3523 = vadd.f32 %v3458, %v3500
        %v3524 = vadd.f32 %v3459, %v3503
        %v3525 = vadd.f32 %v3460, %v3506
        %v3526 = vadd.f32 %v3461, %v3509
        %v3527 = vadd.f32 %v3462, %v3512
        %v3528 = vadd.f32 %v3463, %v3515
        %v3529 = vmax.f32 %v3216, %v3517
        %v3530 = vmax.f32 %v3217, %v3518
        %v3531 = vmax.f32 %v3218, %v3519
        %v3532 = vmax.f32 %v3219, %v3520
        %v3533 = vmax.f32 %v3220, %v3521
        %v3534 = vmax.f32 %v3221, %v3522
        %v3535 = vmax.f32 %v3222, %v3523
        %v3536 = vmax.f32 %v3223, %v3524
        %v3537 = vmax.f32 %v3224, %v3525
        %v3538 = vmax.f32 %v3225, %v3526
        %v3539 = vmax.f32 %v3226, %v3527
        %v3540 = vmax.f32 %v3227, %v3528
        %v3541 = vmax.f32 %v2915, %v3529
        %v3542 = vmax.f32 %v2916, %v3530
        %v3543 = vmax.f32 %v2917, %v3531
        %v3544 = vmax.f32 %v2918, %v3532
        %v3545 = vmax.f32 %v2919, %v3533
        %v3546 = vmax.f32 %v2920, %v3534
        %v3547 = vmax.f32 %v2921, %v3535
        %v3548 = vmax.f32 %v2922, %v3536
        %v3549 = vmax.f32 %v2923, %v3537
        %v3550 = vmax.f32 %v2924, %v3538
        %v3551 = vmax.f32 %v2925, %v3539
        %v3552 = vmax.f32 %v2926, %v3540
        %v3553 = vld [vmem:[%s2] sm:$0xff]
        %v3554 = vld [vmem:[%s2 + $0x8] sm:$0xff]
        %v3555 = vld [vmem:[%s2 + $0x10] sm:$0xff]
        %v3556 = vld [vmem:[%s2 + $0x18] sm:$0xff]
        %v3557 = vld [vmem:[%s2 + $0x20] sm:$0xff]
        %v3558 = vld [vmem:[%s2 + $0x28] sm:$0xff]
        %v3559 = vld [vmem:[%s2 + $0x30] sm:$0xff]
        %v3560 = vld [vmem:[%s2 + $0x38] sm:$0xff]
        %v3561 = vld [vmem:[%s2 + $0x40] sm:$0xff]
        %v3562 = vld [vmem:[%s2 + $0x48] sm:$0xff]
        %v3563 = vld [vmem:[%s2 + $0x50] sm:$0xff]
        %v3564 = vld [vmem:[%s2 + $0x58] sm:$0xff]
        %3566 = vset.pattern.permute.xlu0 0
        %3567 = vperm.xlu0 %3566, %v3553
        %v3568 = vpop.permute.xlu0 %3567
        %3571 = vset.pattern.permute.xlu0 0
        %3572 = vperm.xlu0 %3571, %v3554
        %v3573 = vpop.permute.xlu0 %3572
        %3576 = vset.pattern.permute.xlu0 0
        %3577 = vperm.xlu0 %3576, %v3555
        %v3578 = vpop.permute.xlu0 %3577
        %3581 = vset.pattern.permute.xlu0 0
        %3582 = vperm.xlu0 %3581, %v3556
        %v3583 = vpop.permute.xlu0 %3582
        %3586 = vset.pattern.permute.xlu0 0
        %3587 = vperm.xlu0 %3586, %v3557
        %v3588 = vpop.permute.xlu0 %3587
        %3591 = vset.pattern.permute.xlu0 0
        %3592 = vperm.xlu0 %3591, %v3558
        %v3593 = vpop.permute.xlu0 %3592
        %3596 = vset.pattern.permute.xlu0 0
        %3597 = vperm.xlu0 %3596, %v3559
        %v3598 = vpop.permute.xlu0 %3597
        %3601 = vset.pattern.permute.xlu0 0
        %3602 = vperm.xlu0 %3601, %v3560
        %v3603 = vpop.permute.xlu0 %3602
        %3606 = vset.pattern.permute.xlu0 0
        %3607 = vperm.xlu0 %3606, %v3561
        %v3608 = vpop.permute.xlu0 %3607
        %3611 = vset.pattern.permute.xlu0 0
        %3612 = vperm.xlu0 %3611, %v3562
        %v3613 = vpop.permute.xlu0 %3612
        %3616 = vset.pattern.permute.xlu0 0
        %3617 = vperm.xlu0 %3616, %v3563
        %v3618 = vpop.permute.xlu0 %3617
        %3621 = vset.pattern.permute.xlu0 0
        %3622 = vperm.xlu0 %3621, %v3564
        %v3623 = vpop.permute.xlu0 %3622
        %v3625 = vadd.f32 %v2261, %v3568
        %v3626 = vadd.f32 %v2262, %v3573
        %v3627 = vadd.f32 %v2263, %v3578
        %v3628 = vadd.f32 %v2264, %v3583
        %v3629 = vadd.f32 %v2265, %v3588
        %v3630 = vadd.f32 %v2266, %v3593
        %v3631 = vadd.f32 %v2267, %v3598
        %v3632 = vadd.f32 %v2268, %v3603
        %v3633 = vadd.f32 %v2269, %v3608
        %v3634 = vadd.f32 %v2270, %v3613
        %v3635 = vadd.f32 %v2271, %v3618
        %v3636 = vadd.f32 %v2272, %v3623
        %v3637 = vmax.f32 %v3625, 0.0
        %v3638 = vmax.f32 %v3626, 0.0
        %v3639 = vmax.f32 %v3627, 0.0
        %v3640 = vmax.f32 %v3628, 0.0
        %v3641 = vmax.f32 %v3629, 0.0
        %v3642 = vmax.f32 %v3630, 0.0
        %v3643 = vmax.f32 %v3631, 0.0
        %v3644 = vmax.f32 %v3632, 0.0
        %v3645 = vmax.f32 %v3633, 0.0
        %v3646 = vmax.f32 %v3634, 0.0
        %v3647 = vmax.f32 %v3635, 0.0
        %v3648 = vmax.f32 %v3636, 0.0
        %v3649 = vadd.f32 %v3541, %v3568
        %v3650 = vadd.f32 %v3542, %v3573
        %v3651 = vadd.f32 %v3543, %v3578
        %v3652 = vadd.f32 %v3544, %v3583
        %v3653 = vadd.f32 %v3545, %v3588
        %v3654 = vadd.f32 %v3546, %v3593
        %v3655 = vadd.f32 %v3547, %v3598
        %v3656 = vadd.f32 %v3548, %v3603
        %v3657 = vadd.f32 %v3549, %v3608
        %v3658 = vadd.f32 %v3550, %v3613
        %v3659 = vadd.f32 %v3551, %v3618
        %v3660 = vadd.f32 %v3552, %v3623
        %v3661 = vmax.f32 %v3649, 0.0
        %v3662 = vmax.f32 %v3650, 0.0
        %v3663 = vmax.f32 %v3651, 0.0
        %v3664 = vmax.f32 %v3652, 0.0
        %v3665 = vmax.f32 %v3653, 0.0
        %v3666 = vmax.f32 %v3654, 0.0
        %v3667 = vmax.f32 %v3655, 0.0
        %v3668 = vmax.f32 %v3656, 0.0
        %v3669 = vmax.f32 %v3657, 0.0
        %v3670 = vmax.f32 %v3658, 0.0
        %v3671 = vmax.f32 %v3659, 0.0
        %v3672 = vmax.f32 %v3660, 0.0
        %v3673 = vld [vmem:[%s3] sm:$0xff]
        %v3674 = vld [vmem:[%s3 + $0x8] sm:$0xff]
        %v3675 = vld [vmem:[%s3 + $0x10] sm:$0xff]
        %v3676 = vld [vmem:[%s3 + $0x18] sm:$0xff]
        %v3677 = vld [vmem:[%s3 + $0x20] sm:$0xff]
        %v3678 = vld [vmem:[%s3 + $0x28] sm:$0xff]
        %v3679 = vld [vmem:[%s3 + $0x30] sm:$0xff]
        %v3680 = vld [vmem:[%s3 + $0x38] sm:$0xff]
        %v3681 = vld [vmem:[%s3 + $0x40] sm:$0xff]
        %v3682 = vld [vmem:[%s3 + $0x48] sm:$0xff]
        %v3683 = vld [vmem:[%s3 + $0x50] sm:$0xff]
        %v3684 = vld [vmem:[%s3 + $0x58] sm:$0xff]
        %s3685 = scalar_lea.vmem %s3, 96
        %v3686 = vld [vmem:[%s3685] sm:$0xff]
        %v3687 = vld [vmem:[%s3685 + $0x8] sm:$0xff]
        %v3688 = vld [vmem:[%s3685 + $0x10] sm:$0xff]
        %v3689 = vld [vmem:[%s3685 + $0x18] sm:$0xff]
        %v3690 = vld [vmem:[%s3685 + $0x20] sm:$0xff]
        %v3691 = vld [vmem:[%s3685 + $0x28] sm:$0xff]
        %v3692 = vld [vmem:[%s3685 + $0x30] sm:$0xff]
        %v3693 = vld [vmem:[%s3685 + $0x38] sm:$0xff]
        %v3694 = vld [vmem:[%s3685 + $0x40] sm:$0xff]
        %v3695 = vld [vmem:[%s3685 + $0x48] sm:$0xff]
        %v3696 = vld [vmem:[%s3685 + $0x50] sm:$0xff]
        %v3697 = vld [vmem:[%s3685 + $0x58] sm:$0xff]
        %vm3698 = vcmask 785408
        %v3700 = vsel %vm3698, %v3686, 0
        %v3703 = vsel %vm3698, %v3687, 0
        %v3706 = vsel %vm3698, %v3688, 0
        %v3709 = vsel %vm3698, %v3689, 0
        %v3712 = vsel %vm3698, %v3690, 0
        %v3715 = vsel %vm3698, %v3691, 0
        %v3718 = vsel %vm3698, %v3692, 0
        %v3721 = vsel %vm3698, %v3693, 0
        %v3724 = vsel %vm3698, %v3694, 0
        %v3727 = vsel %vm3698, %v3695, 0
        %v3730 = vsel %vm3698, %v3696, 0
        %v3733 = vsel %vm3698, %v3697, 0
        %3735 = vmatpush.msra.mxu0 0.0
        %3736 = vmatpush.msra.mxu0 0.0
        %3737 = vmatpush.msra.mxu0 0.0
        %3738 = vmatpush.msra.mxu0 0.0
        %3739 = vmatpush.msra.mxu0 %v3672
        %3740 = vmatpush.msra.mxu0 %v3671
        %3741 = vmatpush.msra.mxu0 %v3670
        %3742 = vmatpush.msra.mxu0 %v3669
        %3743 = vmatpush.msra.mxu0 %v3668
        %3744 = vmatpush.msra.mxu0 %v3667
        %3745 = vmatpush.msra.mxu0 %v3666
        %3746 = vmatpush.msra.mxu0 %v3665
        %3747 = vmatpush.msra.mxu0 %v3664
        %3748 = vmatpush.msra.mxu0 %v3663
        %3749 = vmatpush.msra.mxu0 %v3662
        %3750 = vmatpush.msra.mxu0 %v3661
        %3751 = vmatmul.f32.gmra.mxu0 %v3700
        %v3752 = vpop.f32.mrf.mxu0
        %v3753 = vadd.f32 0.0, %v3752
        %3754 = vmatmul.f32.gmra.mxu0 %v3703
        %v3755 = vpop.f32.mrf.mxu0
        %v3756 = vadd.f32 0.0, %v3755
        %3757 = vmatmul.f32.gmra.mxu0 %v3706
        %v3758 = vpop.f32.mrf.mxu0
        %v3759 = vadd.f32 0.0, %v3758
        %3760 = vmatmul.f32.gmra.mxu0 %v3709
        %v3761 = vpop.f32.mrf.mxu0
        %v3762 = vadd.f32 0.0, %v3761
        %3763 = vmatmul.f32.gmra.mxu0 %v3712
        %v3764 = vpop.f32.mrf.mxu0
        %v3765 = vadd.f32 0.0, %v3764
        %3766 = vmatmul.f32.gmra.mxu0 %v3715
        %v3767 = vpop.f32.mrf.mxu0
        %v3768 = vadd.f32 0.0, %v3767
        %3769 = vmatmul.f32.gmra.mxu0 %v3718
        %v3770 = vpop.f32.mrf.mxu0
        %v3771 = vadd.f32 0.0, %v3770
        %3772 = vmatmul.f32.gmra.mxu0 %v3721
        %v3773 = vpop.f32.mrf.mxu0
        %v3774 = vadd.f32 0.0, %v3773
        %3775 = vmatmul.f32.gmra.mxu0 %v3724
        %v3776 = vpop.f32.mrf.mxu0
        %v3777 = vadd.f32 0.0, %v3776
        %3778 = vmatmul.f32.gmra.mxu0 %v3727
        %v3779 = vpop.f32.mrf.mxu0
        %v3780 = vadd.f32 0.0, %v3779
        %3781 = vmatmul.f32.gmra.mxu0 %v3730
        %v3782 = vpop.f32.mrf.mxu0
        %v3783 = vadd.f32 0.0, %v3782
        %3784 = vmatmul.f32.gmra.mxu0 %v3733
        %v3785 = vpop.f32.mrf.mxu0
        %v3786 = vadd.f32 0.0, %v3785
        %3787 = vdwg.mxu0
        %v3789 = vsel %vm3698, %v3673, 0
        %v3792 = vsel %vm3698, %v3674, 0
        %v3795 = vsel %vm3698, %v3675, 0
        %v3798 = vsel %vm3698, %v3676, 0
        %v3801 = vsel %vm3698, %v3677, 0
        %v3804 = vsel %vm3698, %v3678, 0
        %v3807 = vsel %vm3698, %v3679, 0
        %v3810 = vsel %vm3698, %v3680, 0
        %v3813 = vsel %vm3698, %v3681, 0
        %v3816 = vsel %vm3698, %v3682, 0
        %v3819 = vsel %vm3698, %v3683, 0
        %v3822 = vsel %vm3698, %v3684, 0
        %3824 = vmatpush.msra.mxu0 0.0
        %3825 = vmatpush.msra.mxu0 0.0
        %3826 = vmatpush.msra.mxu0 0.0
        %3827 = vmatpush.msra.mxu0 0.0
        %3828 = vmatpush.msra.mxu0 %v3648
        %3829 = vmatpush.msra.mxu0 %v3647
        %3830 = vmatpush.msra.mxu0 %v3646
        %3831 = vmatpush.msra.mxu0 %v3645
        %3832 = vmatpush.msra.mxu0 %v3644
        %3833 = vmatpush.msra.mxu0 %v3643
        %3834 = vmatpush.msra.mxu0 %v3642
        %3835 = vmatpush.msra.mxu0 %v3641
        %3836 = vmatpush.msra.mxu0 %v3640
        %3837 = vmatpush.msra.mxu0 %v3639
        %3838 = vmatpush.msra.mxu0 %v3638
        %3839 = vmatpush.msra.mxu0 %v3637
        %3840 = vmatmul.f32.gmra.mxu0 %v3789
        %v3841 = vpop.f32.mrf.mxu0
        %v3842 = vadd.f32 %v3753, %v3841
        %3843 = vmatmul.f32.gmra.mxu0 %v3792
        %v3844 = vpop.f32.mrf.mxu0
        %v3845 = vadd.f32 %v3756, %v3844
        %3846 = vmatmul.f32.gmra.mxu0 %v3795
        %v3847 = vpop.f32.mrf.mxu0
        %v3848 = vadd.f32 %v3759, %v3847
        %3849 = vmatmul.f32.gmra.mxu0 %v3798
        %v3850 = vpop.f32.mrf.mxu0
        %v3851 = vadd.f32 %v3762, %v3850
        %3852 = vmatmul.f32.gmra.mxu0 %v3801
        %v3853 = vpop.f32.mrf.mxu0
        %v3854 = vadd.f32 %v3765, %v3853
        %3855 = vmatmul.f32.gmra.mxu0 %v3804
        %v3856 = vpop.f32.mrf.mxu0
        %v3857 = vadd.f32 %v3768, %v3856
        %3858 = vmatmul.f32.gmra.mxu0 %v3807
        %v3859 = vpop.f32.mrf.mxu0
        %v3860 = vadd.f32 %v3771, %v3859
        %3861 = vmatmul.f32.gmra.mxu0 %v3810
        %v3862 = vpop.f32.mrf.mxu0
        %v3863 = vadd.f32 %v3774, %v3862
        %3864 = vmatmul.f32.gmra.mxu0 %v3813
        %v3865 = vpop.f32.mrf.mxu0
        %v3866 = vadd.f32 %v3777, %v3865
        %3867 = vmatmul.f32.gmra.mxu0 %v3816
        %v3868 = vpop.f32.mrf.mxu0
        %v3869 = vadd.f32 %v3780, %v3868
        %3870 = vmatmul.f32.gmra.mxu0 %v3819
        %v3871 = vpop.f32.mrf.mxu0
        %v3872 = vadd.f32 %v3783, %v3871
        %3873 = vmatmul.f32.gmra.mxu0 %v3822
        %v3874 = vpop.f32.mrf.mxu0
        %v3875 = vadd.f32 %v3786, %v3874
        %3876 = vdwg.mxu0
        %s3877 = scalar_lea.vmem %s3, 192
        %v3878 = vld [vmem:[%s3877] sm:$0xff]
        %v3879 = vld [vmem:[%s3877 + $0x8] sm:$0xff]
        %v3880 = vld [vmem:[%s3877 + $0x10] sm:$0xff]
        %v3881 = vld [vmem:[%s3877 + $0x18] sm:$0xff]
        %v3882 = vld [vmem:[%s3877 + $0x20] sm:$0xff]
        %v3883 = vld [vmem:[%s3877 + $0x28] sm:$0xff]
        %v3884 = vld [vmem:[%s3877 + $0x30] sm:$0xff]
        %v3885 = vld [vmem:[%s3877 + $0x38] sm:$0xff]
        %v3886 = vld [vmem:[%s3877 + $0x40] sm:$0xff]
        %v3887 = vld [vmem:[%s3877 + $0x48] sm:$0xff]
        %v3888 = vld [vmem:[%s3877 + $0x50] sm:$0xff]
        %v3889 = vld [vmem:[%s3877 + $0x58] sm:$0xff]
        %3902 = vrot.lane.b32.xlu0 %v3637, 124
        %v3903 = vpop.permute.xlu0 %3902
        %3904 = vrot.lane.b32.xlu0 %v3638, 124
        %v3905 = vpop.permute.xlu0 %3904
        %3906 = vrot.lane.b32.xlu0 %v3639, 124
        %v3907 = vpop.permute.xlu0 %3906
        %3908 = vrot.lane.b32.xlu0 %v3640, 124
        %v3909 = vpop.permute.xlu0 %3908
        %3910 = vrot.lane.b32.xlu0 %v3641, 124
        %v3911 = vpop.permute.xlu0 %3910
        %3912 = vrot.lane.b32.xlu0 %v3642, 124
        %v3913 = vpop.permute.xlu0 %3912
        %3914 = vrot.lane.b32.xlu0 %v3643, 124
        %v3915 = vpop.permute.xlu0 %3914
        %3916 = vrot.lane.b32.xlu0 %v3644, 124
        %v3917 = vpop.permute.xlu0 %3916
        %3918 = vrot.lane.b32.xlu0 %v3645, 124
        %v3919 = vpop.permute.xlu0 %3918
        %3920 = vrot.lane.b32.xlu0 %v3646, 124
        %v3921 = vpop.permute.xlu0 %3920
        %3922 = vrot.lane.b32.xlu0 %v3647, 124
        %v3923 = vpop.permute.xlu0 %3922
        %3924 = vrot.lane.b32.xlu0 %v3648, 124
        %v3925 = vpop.permute.xlu0 %3924
        %v3939 = vsel %vm3698, %v3878, 0
        %v3942 = vsel %vm3698, %v3879, 0
        %v3945 = vsel %vm3698, %v3880, 0
        %v3948 = vsel %vm3698, %v3881, 0
        %v3951 = vsel %vm3698, %v3882, 0
        %v3954 = vsel %vm3698, %v3883, 0
        %v3957 = vsel %vm3698, %v3884, 0
        %v3960 = vsel %vm3698, %v3885, 0
        %v3963 = vsel %vm3698, %v3886, 0
        %v3966 = vsel %vm3698, %v3887, 0
        %v3969 = vsel %vm3698, %v3888, 0
        %v3972 = vsel %vm3698, %v3889, 0
        %3974 = vmatpush.msra.mxu0 0.0
        %3975 = vmatpush.msra.mxu0 0.0
        %3976 = vmatpush.msra.mxu0 0.0
        %3977 = vmatpush.msra.mxu0 0.0
        %3978 = vmatpush.msra.mxu0 %v3925
        %3979 = vmatpush.msra.mxu0 %v3923
        %3980 = vmatpush.msra.mxu0 %v3921
        %3981 = vmatpush.msra.mxu0 %v3919
        %3982 = vmatpush.msra.mxu0 %v3917
        %3983 = vmatpush.msra.mxu0 %v3915
        %3984 = vmatpush.msra.mxu0 %v3913
        %3985 = vmatpush.msra.mxu0 %v3911
        %3986 = vmatpush.msra.mxu0 %v3909
        %3987 = vmatpush.msra.mxu0 %v3907
        %3988 = vmatpush.msra.mxu0 %v3905
        %3989 = vmatpush.msra.mxu0 %v3903
        %3990 = vmatmul.f32.gmra.mxu0 %v3939
        %v3991 = vpop.f32.mrf.mxu0
        %v3992 = vadd.f32 0.0, %v3991
        %3993 = vmatmul.f32.gmra.mxu0 %v3942
        %v3994 = vpop.f32.mrf.mxu0
        %v3995 = vadd.f32 0.0, %v3994
        %3996 = vmatmul.f32.gmra.mxu0 %v3945
        %v3997 = vpop.f32.mrf.mxu0
        %v3998 = vadd.f32 0.0, %v3997
        %3999 = vmatmul.f32.gmra.mxu0 %v3948
        %v4000 = vpop.f32.mrf.mxu0
        %v4001 = vadd.f32 0.0, %v4000
        %4002 = vmatmul.f32.gmra.mxu0 %v3951
        %v4003 = vpop.f32.mrf.mxu0
        %v4004 = vadd.f32 0.0, %v4003
        %4005 = vmatmul.f32.gmra.mxu0 %v3954
        %v4006 = vpop.f32.mrf.mxu0
        %v4007 = vadd.f32 0.0, %v4006
        %4008 = vmatmul.f32.gmra.mxu0 %v3957
        %v4009 = vpop.f32.mrf.mxu0
        %v4010 = vadd.f32 0.0, %v4009
        %4011 = vmatmul.f32.gmra.mxu0 %v3960
        %v4012 = vpop.f32.mrf.mxu0
        %v4013 = vadd.f32 0.0, %v4012
        %4014 = vmatmul.f32.gmra.mxu0 %v3963
        %v4015 = vpop.f32.mrf.mxu0
        %v4016 = vadd.f32 0.0, %v4015
        %4017 = vmatmul.f32.gmra.mxu0 %v3966
        %v4018 = vpop.f32.mrf.mxu0
        %v4019 = vadd.f32 0.0, %v4018
        %4020 = vmatmul.f32.gmra.mxu0 %v3969
        %v4021 = vpop.f32.mrf.mxu0
        %v4022 = vadd.f32 0.0, %v4021
        %4023 = vmatmul.f32.gmra.mxu0 %v3972
        %v4024 = vpop.f32.mrf.mxu0
        %v4025 = vadd.f32 0.0, %v4024
        %4026 = vdwg.mxu0
        %v4027 = vadd.f32 %v3842, %v3992
        %v4028 = vadd.f32 %v3845, %v3995
        %v4029 = vadd.f32 %v3848, %v3998
        %v4030 = vadd.f32 %v3851, %v4001
        %v4031 = vadd.f32 %v3854, %v4004
        %v4032 = vadd.f32 %v3857, %v4007
        %v4033 = vadd.f32 %v3860, %v4010
        %v4034 = vadd.f32 %v3863, %v4013
        %v4035 = vadd.f32 %v3866, %v4016
        %v4036 = vadd.f32 %v3869, %v4019
        %v4037 = vadd.f32 %v3872, %v4022
        %v4038 = vadd.f32 %v3875, %v4025
        %s4039 = scalar_lea.vmem %s3, 288
        %v4040 = vld [vmem:[%s4039] sm:$0xff]
        %v4041 = vld [vmem:[%s4039 + $0x8] sm:$0xff]
        %v4042 = vld [vmem:[%s4039 + $0x10] sm:$0xff]
        %v4043 = vld [vmem:[%s4039 + $0x18] sm:$0xff]
        %v4044 = vld [vmem:[%s4039 + $0x20] sm:$0xff]
        %v4045 = vld [vmem:[%s4039 + $0x28] sm:$0xff]
        %v4046 = vld [vmem:[%s4039 + $0x30] sm:$0xff]
        %v4047 = vld [vmem:[%s4039 + $0x38] sm:$0xff]
        %v4048 = vld [vmem:[%s4039 + $0x40] sm:$0xff]
        %v4049 = vld [vmem:[%s4039 + $0x48] sm:$0xff]
        %v4050 = vld [vmem:[%s4039 + $0x50] sm:$0xff]
        %v4051 = vld [vmem:[%s4039 + $0x58] sm:$0xff]
        %4064 = vrot.lane.b32.xlu0 %v3661, 124
        %v4065 = vpop.permute.xlu0 %4064
        %4066 = vrot.lane.b32.xlu0 %v3662, 124
        %v4067 = vpop.permute.xlu0 %4066
        %4068 = vrot.lane.b32.xlu0 %v3663, 124
        %v4069 = vpop.permute.xlu0 %4068
        %4070 = vrot.lane.b32.xlu0 %v3664, 124
        %v4071 = vpop.permute.xlu0 %4070
        %4072 = vrot.lane.b32.xlu0 %v3665, 124
        %v4073 = vpop.permute.xlu0 %4072
        %4074 = vrot.lane.b32.xlu0 %v3666, 124
        %v4075 = vpop.permute.xlu0 %4074
        %4076 = vrot.lane.b32.xlu0 %v3667, 124
        %v4077 = vpop.permute.xlu0 %4076
        %4078 = vrot.lane.b32.xlu0 %v3668, 124
        %v4079 = vpop.permute.xlu0 %4078
        %4080 = vrot.lane.b32.xlu0 %v3669, 124
        %v4081 = vpop.permute.xlu0 %4080
        %4082 = vrot.lane.b32.xlu0 %v3670, 124
        %v4083 = vpop.permute.xlu0 %4082
        %4084 = vrot.lane.b32.xlu0 %v3671, 124
        %v4085 = vpop.permute.xlu0 %4084
        %4086 = vrot.lane.b32.xlu0 %v3672, 124
        %v4087 = vpop.permute.xlu0 %4086
        %v4101 = vsel %vm3698, %v4040, 0
        %v4104 = vsel %vm3698, %v4041, 0
        %v4107 = vsel %vm3698, %v4042, 0
        %v4110 = vsel %vm3698, %v4043, 0
        %v4113 = vsel %vm3698, %v4044, 0
        %v4116 = vsel %vm3698, %v4045, 0
        %v4119 = vsel %vm3698, %v4046, 0
        %v4122 = vsel %vm3698, %v4047, 0
        %v4125 = vsel %vm3698, %v4048, 0
        %v4128 = vsel %vm3698, %v4049, 0
        %v4131 = vsel %vm3698, %v4050, 0
        %v4134 = vsel %vm3698, %v4051, 0
        %4136 = vmatpush.msra.mxu0 0.0
        %4137 = vmatpush.msra.mxu0 0.0
        %4138 = vmatpush.msra.mxu0 0.0
        %4139 = vmatpush.msra.mxu0 0.0
        %4140 = vmatpush.msra.mxu0 %v4087
        %4141 = vmatpush.msra.mxu0 %v4085
        %4142 = vmatpush.msra.mxu0 %v4083
        %4143 = vmatpush.msra.mxu0 %v4081
        %4144 = vmatpush.msra.mxu0 %v4079
        %4145 = vmatpush.msra.mxu0 %v4077
        %4146 = vmatpush.msra.mxu0 %v4075
        %4147 = vmatpush.msra.mxu0 %v4073
        %4148 = vmatpush.msra.mxu0 %v4071
        %4149 = vmatpush.msra.mxu0 %v4069
        %4150 = vmatpush.msra.mxu0 %v4067
        %4151 = vmatpush.msra.mxu0 %v4065
        %4152 = vmatmul.f32.gmra.mxu0 %v4101
        %v4153 = vpop.f32.mrf.mxu0
        %v4154 = vadd.f32 0.0, %v4153
        %4155 = vmatmul.f32.gmra.mxu0 %v4104
        %v4156 = vpop.f32.mrf.mxu0
        %v4157 = vadd.f32 0.0, %v4156
        %4158 = vmatmul.f32.gmra.mxu0 %v4107
        %v4159 = vpop.f32.mrf.mxu0
        %v4160 = vadd.f32 0.0, %v4159
        %4161 = vmatmul.f32.gmra.mxu0 %v4110
        %v4162 = vpop.f32.mrf.mxu0
        %v4163 = vadd.f32 0.0, %v4162
        %4164 = vmatmul.f32.gmra.mxu0 %v4113
        %v4165 = vpop.f32.mrf.mxu0
        %v4166 = vadd.f32 0.0, %v4165
        %4167 = vmatmul.f32.gmra.mxu0 %v4116
        %v4168 = vpop.f32.mrf.mxu0
        %v4169 = vadd.f32 0.0, %v4168
        %4170 = vmatmul.f32.gmra.mxu0 %v4119
        %v4171 = vpop.f32.mrf.mxu0
        %v4172 = vadd.f32 0.0, %v4171
        %4173 = vmatmul.f32.gmra.mxu0 %v4122
        %v4174 = vpop.f32.mrf.mxu0
        %v4175 = vadd.f32 0.0, %v4174
        %4176 = vmatmul.f32.gmra.mxu0 %v4125
        %v4177 = vpop.f32.mrf.mxu0
        %v4178 = vadd.f32 0.0, %v4177
        %4179 = vmatmul.f32.gmra.mxu0 %v4128
        %v4180 = vpop.f32.mrf.mxu0
        %v4181 = vadd.f32 0.0, %v4180
        %4182 = vmatmul.f32.gmra.mxu0 %v4131
        %v4183 = vpop.f32.mrf.mxu0
        %v4184 = vadd.f32 0.0, %v4183
        %4185 = vmatmul.f32.gmra.mxu0 %v4134
        %v4186 = vpop.f32.mrf.mxu0
        %v4187 = vadd.f32 0.0, %v4186
        %4188 = vdwg.mxu0
        %v4189 = vadd.f32 %v4027, %v4154
        %v4190 = vadd.f32 %v4028, %v4157
        %v4191 = vadd.f32 %v4029, %v4160
        %v4192 = vadd.f32 %v4030, %v4163
        %v4193 = vadd.f32 %v4031, %v4166
        %v4194 = vadd.f32 %v4032, %v4169
        %v4195 = vadd.f32 %v4033, %v4172
        %v4196 = vadd.f32 %v4034, %v4175
        %v4197 = vadd.f32 %v4035, %v4178
        %v4198 = vadd.f32 %v4036, %v4181
        %v4199 = vadd.f32 %v4037, %v4184
        %v4200 = vadd.f32 %v4038, %v4187
        %s4201 = scalar_lea.vmem %s3, 384
        %v4202 = vld [vmem:[%s4201] sm:$0xff]
        %v4203 = vld [vmem:[%s4201 + $0x8] sm:$0xff]
        %v4204 = vld [vmem:[%s4201 + $0x10] sm:$0xff]
        %v4205 = vld [vmem:[%s4201 + $0x18] sm:$0xff]
        %v4206 = vld [vmem:[%s4201 + $0x20] sm:$0xff]
        %v4207 = vld [vmem:[%s4201 + $0x28] sm:$0xff]
        %v4208 = vld [vmem:[%s4201 + $0x30] sm:$0xff]
        %v4209 = vld [vmem:[%s4201 + $0x38] sm:$0xff]
        %v4210 = vld [vmem:[%s4201 + $0x40] sm:$0xff]
        %v4211 = vld [vmem:[%s4201 + $0x48] sm:$0xff]
        %v4212 = vld [vmem:[%s4201 + $0x50] sm:$0xff]
        %v4213 = vld [vmem:[%s4201 + $0x58] sm:$0xff]
        %4214 = vrot.lane.b32.xlu0 %v3637, 120
        %v4215 = vpop.permute.xlu0 %4214
        %4216 = vrot.lane.b32.xlu0 %v3638, 120
        %v4217 = vpop.permute.xlu0 %4216
        %4218 = vrot.lane.b32.xlu0 %v3639, 120
        %v4219 = vpop.permute.xlu0 %4218
        %4220 = vrot.lane.b32.xlu0 %v3640, 120
        %v4221 = vpop.permute.xlu0 %4220
        %4222 = vrot.lane.b32.xlu0 %v3641, 120
        %v4223 = vpop.permute.xlu0 %4222
        %4224 = vrot.lane.b32.xlu0 %v3642, 120
        %v4225 = vpop.permute.xlu0 %4224
        %4226 = vrot.lane.b32.xlu0 %v3643, 120
        %v4227 = vpop.permute.xlu0 %4226
        %4228 = vrot.lane.b32.xlu0 %v3644, 120
        %v4229 = vpop.permute.xlu0 %4228
        %4230 = vrot.lane.b32.xlu0 %v3645, 120
        %v4231 = vpop.permute.xlu0 %4230
        %4232 = vrot.lane.b32.xlu0 %v3646, 120
        %v4233 = vpop.permute.xlu0 %4232
        %4234 = vrot.lane.b32.xlu0 %v3647, 120
        %v4235 = vpop.permute.xlu0 %4234
        %4236 = vrot.lane.b32.xlu0 %v3648, 120
        %v4237 = vpop.permute.xlu0 %4236
        %v4251 = vsel %vm3698, %v4202, 0
        %v4254 = vsel %vm3698, %v4203, 0
        %v4257 = vsel %vm3698, %v4204, 0
        %v4260 = vsel %vm3698, %v4205, 0
        %v4263 = vsel %vm3698, %v4206, 0
        %v4266 = vsel %vm3698, %v4207, 0
        %v4269 = vsel %vm3698, %v4208, 0
        %v4272 = vsel %vm3698, %v4209, 0
        %v4275 = vsel %vm3698, %v4210, 0
        %v4278 = vsel %vm3698, %v4211, 0
        %v4281 = vsel %vm3698, %v4212, 0
        %v4284 = vsel %vm3698, %v4213, 0
        %4286 = vmatpush.msra.mxu0 0.0
        %4287 = vmatpush.msra.mxu0 0.0
        %4288 = vmatpush.msra.mxu0 0.0
        %4289 = vmatpush.msra.mxu0 0.0
        %4290 = vmatpush.msra.mxu0 %v4237
        %4291 = vmatpush.msra.mxu0 %v4235
        %4292 = vmatpush.msra.mxu0 %v4233
        %4293 = vmatpush.msra.mxu0 %v4231
        %4294 = vmatpush.msra.mxu0 %v4229
        %4295 = vmatpush.msra.mxu0 %v4227
        %4296 = vmatpush.msra.mxu0 %v4225
        %4297 = vmatpush.msra.mxu0 %v4223
        %4298 = vmatpush.msra.mxu0 %v4221
        %4299 = vmatpush.msra.mxu0 %v4219
        %4300 = vmatpush.msra.mxu0 %v4217
        %4301 = vmatpush.msra.mxu0 %v4215
        %4302 = vmatmul.f32.gmra.mxu0 %v4251
        %v4303 = vpop.f32.mrf.mxu0
        %v4304 = vadd.f32 0.0, %v4303
        %4305 = vmatmul.f32.gmra.mxu0 %v4254
        %v4306 = vpop.f32.mrf.mxu0
        %v4307 = vadd.f32 0.0, %v4306
        %4308 = vmatmul.f32.gmra.mxu0 %v4257
        %v4309 = vpop.f32.mrf.mxu0
        %v4310 = vadd.f32 0.0, %v4309
        %4311 = vmatmul.f32.gmra.mxu0 %v4260
        %v4312 = vpop.f32.mrf.mxu0
        %v4313 = vadd.f32 0.0, %v4312
        %4314 = vmatmul.f32.gmra.mxu0 %v4263
        %v4315 = vpop.f32.mrf.mxu0
        %v4316 = vadd.f32 0.0, %v4315
        %4317 = vmatmul.f32.gmra.mxu0 %v4266
        %v4318 = vpop.f32.mrf.mxu0
        %v4319 = vadd.f32 0.0, %v4318
        %4320 = vmatmul.f32.gmra.mxu0 %v4269
        %v4321 = vpop.f32.mrf.mxu0
        %v4322 = vadd.f32 0.0, %v4321
        %4323 = vmatmul.f32.gmra.mxu0 %v4272
        %v4324 = vpop.f32.mrf.mxu0
        %v4325 = vadd.f32 0.0, %v4324
        %4326 = vmatmul.f32.gmra.mxu0 %v4275
        %v4327 = vpop.f32.mrf.mxu0
        %v4328 = vadd.f32 0.0, %v4327
        %4329 = vmatmul.f32.gmra.mxu0 %v4278
        %v4330 = vpop.f32.mrf.mxu0
        %v4331 = vadd.f32 0.0, %v4330
        %4332 = vmatmul.f32.gmra.mxu0 %v4281
        %v4333 = vpop.f32.mrf.mxu0
        %v4334 = vadd.f32 0.0, %v4333
        %4335 = vmatmul.f32.gmra.mxu0 %v4284
        %v4336 = vpop.f32.mrf.mxu0
        %v4337 = vadd.f32 0.0, %v4336
        %4338 = vdwg.mxu0
        %v4339 = vadd.f32 %v4189, %v4304
        %v4340 = vadd.f32 %v4190, %v4307
        %v4341 = vadd.f32 %v4191, %v4310
        %v4342 = vadd.f32 %v4192, %v4313
        %v4343 = vadd.f32 %v4193, %v4316
        %v4344 = vadd.f32 %v4194, %v4319
        %v4345 = vadd.f32 %v4195, %v4322
        %v4346 = vadd.f32 %v4196, %v4325
        %v4347 = vadd.f32 %v4197, %v4328
        %v4348 = vadd.f32 %v4198, %v4331
        %v4349 = vadd.f32 %v4199, %v4334
        %v4350 = vadd.f32 %v4200, %v4337
        %4351 = vmatpush.msra.mxu0 0.0
        %4352 = vmatpush.msra.mxu0 0.0
        %4353 = vmatpush.msra.mxu0 0.0
        %4354 = vmatpush.msra.mxu0 0.0
        %4355 = vmatpush.msra.mxu0 %v3925
        %4356 = vmatpush.msra.mxu0 %v3923
        %4357 = vmatpush.msra.mxu0 %v3921
        %4358 = vmatpush.msra.mxu0 %v3919
        %4359 = vmatpush.msra.mxu0 %v3917
        %4360 = vmatpush.msra.mxu0 %v3915
        %4361 = vmatpush.msra.mxu0 %v3913
        %4362 = vmatpush.msra.mxu0 %v3911
        %4363 = vmatpush.msra.mxu0 %v3909
        %4364 = vmatpush.msra.mxu0 %v3907
        %4365 = vmatpush.msra.mxu0 %v3905
        %4366 = vmatpush.msra.mxu0 %v3903
        %4367 = vmatmul.f32.gmra.mxu0 %v3700
        %v4368 = vpop.f32.mrf.mxu0
        %v4369 = vadd.f32 0.0, %v4368
        %4370 = vmatmul.f32.gmra.mxu0 %v3703
        %v4371 = vpop.f32.mrf.mxu0
        %v4372 = vadd.f32 0.0, %v4371
        %4373 = vmatmul.f32.gmra.mxu0 %v3706
        %v4374 = vpop.f32.mrf.mxu0
        %v4375 = vadd.f32 0.0, %v4374
        %4376 = vmatmul.f32.gmra.mxu0 %v3709
        %v4377 = vpop.f32.mrf.mxu0
        %v4378 = vadd.f32 0.0, %v4377
        %4379 = vmatmul.f32.gmra.mxu0 %v3712
        %v4380 = vpop.f32.mrf.mxu0
        %v4381 = vadd.f32 0.0, %v4380
        %4382 = vmatmul.f32.gmra.mxu0 %v3715
        %v4383 = vpop.f32.mrf.mxu0
        %v4384 = vadd.f32 0.0, %v4383
        %4385 = vmatmul.f32.gmra.mxu0 %v3718
        %v4386 = vpop.f32.mrf.mxu0
        %v4387 = vadd.f32 0.0, %v4386
        %4388 = vmatmul.f32.gmra.mxu0 %v3721
        %v4389 = vpop.f32.mrf.mxu0
        %v4390 = vadd.f32 0.0, %v4389
        %4391 = vmatmul.f32.gmra.mxu0 %v3724
        %v4392 = vpop.f32.mrf.mxu0
        %v4393 = vadd.f32 0.0, %v4392
        %4394 = vmatmul.f32.gmra.mxu0 %v3727
        %v4395 = vpop.f32.mrf.mxu0
        %v4396 = vadd.f32 0.0, %v4395
        %4397 = vmatmul.f32.gmra.mxu0 %v3730
        %v4398 = vpop.f32.mrf.mxu0
        %v4399 = vadd.f32 0.0, %v4398
        %4400 = vmatmul.f32.gmra.mxu0 %v3733
        %v4401 = vpop.f32.mrf.mxu0
        %v4402 = vadd.f32 0.0, %v4401
        %4403 = vdwg.mxu0
        %4404 = vmatpush.msra.mxu0 0.0
        %4405 = vmatpush.msra.mxu0 0.0
        %4406 = vmatpush.msra.mxu0 0.0
        %4407 = vmatpush.msra.mxu0 0.0
        %4408 = vmatpush.msra.mxu0 %v3672
        %4409 = vmatpush.msra.mxu0 %v3671
        %4410 = vmatpush.msra.mxu0 %v3670
        %4411 = vmatpush.msra.mxu0 %v3669
        %4412 = vmatpush.msra.mxu0 %v3668
        %4413 = vmatpush.msra.mxu0 %v3667
        %4414 = vmatpush.msra.mxu0 %v3666
        %4415 = vmatpush.msra.mxu0 %v3665
        %4416 = vmatpush.msra.mxu0 %v3664
        %4417 = vmatpush.msra.mxu0 %v3663
        %4418 = vmatpush.msra.mxu0 %v3662
        %4419 = vmatpush.msra.mxu0 %v3661
        %4420 = vmatmul.f32.gmra.mxu0 %v3789
        %v4421 = vpop.f32.mrf.mxu0
        %v4422 = vadd.f32 %v4369, %v4421
        %4423 = vmatmul.f32.gmra.mxu0 %v3792
        %v4424 = vpop.f32.mrf.mxu0
        %v4425 = vadd.f32 %v4372, %v4424
        %4426 = vmatmul.f32.gmra.mxu0 %v3795
        %v4427 = vpop.f32.mrf.mxu0
        %v4428 = vadd.f32 %v4375, %v4427
        %4429 = vmatmul.f32.gmra.mxu0 %v3798
        %v4430 = vpop.f32.mrf.mxu0
        %v4431 = vadd.f32 %v4378, %v4430
        %4432 = vmatmul.f32.gmra.mxu0 %v3801
        %v4433 = vpop.f32.mrf.mxu0
        %v4434 = vadd.f32 %v4381, %v4433
        %4435 = vmatmul.f32.gmra.mxu0 %v3804
        %v4436 = vpop.f32.mrf.mxu0
        %v4437 = vadd.f32 %v4384, %v4436
        %4438 = vmatmul.f32.gmra.mxu0 %v3807
        %v4439 = vpop.f32.mrf.mxu0
        %v4440 = vadd.f32 %v4387, %v4439
        %4441 = vmatmul.f32.gmra.mxu0 %v3810
        %v4442 = vpop.f32.mrf.mxu0
        %v4443 = vadd.f32 %v4390, %v4442
        %4444 = vmatmul.f32.gmra.mxu0 %v3813
        %v4445 = vpop.f32.mrf.mxu0
        %v4446 = vadd.f32 %v4393, %v4445
        %4447 = vmatmul.f32.gmra.mxu0 %v3816
        %v4448 = vpop.f32.mrf.mxu0
        %v4449 = vadd.f32 %v4396, %v4448
        %4450 = vmatmul.f32.gmra.mxu0 %v3819
        %v4451 = vpop.f32.mrf.mxu0
        %v4452 = vadd.f32 %v4399, %v4451
        %4453 = vmatmul.f32.gmra.mxu0 %v3822
        %v4454 = vpop.f32.mrf.mxu0
        %v4455 = vadd.f32 %v4402, %v4454
        %4456 = vdwg.mxu0
        %4457 = vmatpush.msra.mxu0 0.0
        %4458 = vmatpush.msra.mxu0 0.0
        %4459 = vmatpush.msra.mxu0 0.0
        %4460 = vmatpush.msra.mxu0 0.0
        %4461 = vmatpush.msra.mxu0 %v4087
        %4462 = vmatpush.msra.mxu0 %v4085
        %4463 = vmatpush.msra.mxu0 %v4083
        %4464 = vmatpush.msra.mxu0 %v4081
        %4465 = vmatpush.msra.mxu0 %v4079
        %4466 = vmatpush.msra.mxu0 %v4077
        %4467 = vmatpush.msra.mxu0 %v4075
        %4468 = vmatpush.msra.mxu0 %v4073
        %4469 = vmatpush.msra.mxu0 %v4071
        %4470 = vmatpush.msra.mxu0 %v4069
        %4471 = vmatpush.msra.mxu0 %v4067
        %4472 = vmatpush.msra.mxu0 %v4065
        %4473 = vmatmul.f32.gmra.mxu0 %v3939
        %v4474 = vpop.f32.mrf.mxu0
        %v4475 = vadd.f32 0.0, %v4474
        %4476 = vmatmul.f32.gmra.mxu0 %v3942
        %v4477 = vpop.f32.mrf.mxu0
        %v4478 = vadd.f32 0.0, %v4477
        %4479 = vmatmul.f32.gmra.mxu0 %v3945
        %v4480 = vpop.f32.mrf.mxu0
        %v4481 = vadd.f32 0.0, %v4480
        %4482 = vmatmul.f32.gmra.mxu0 %v3948
        %v4483 = vpop.f32.mrf.mxu0
        %v4484 = vadd.f32 0.0, %v4483
        %4485 = vmatmul.f32.gmra.mxu0 %v3951
        %v4486 = vpop.f32.mrf.mxu0
        %v4487 = vadd.f32 0.0, %v4486
        %4488 = vmatmul.f32.gmra.mxu0 %v3954
        %v4489 = vpop.f32.mrf.mxu0
        %v4490 = vadd.f32 0.0, %v4489
        %4491 = vmatmul.f32.gmra.mxu0 %v3957
        %v4492 = vpop.f32.mrf.mxu0
        %v4493 = vadd.f32 0.0, %v4492
        %4494 = vmatmul.f32.gmra.mxu0 %v3960
        %v4495 = vpop.f32.mrf.mxu0
        %v4496 = vadd.f32 0.0, %v4495
        %4497 = vmatmul.f32.gmra.mxu0 %v3963
        %v4498 = vpop.f32.mrf.mxu0
        %v4499 = vadd.f32 0.0, %v4498
        %4500 = vmatmul.f32.gmra.mxu0 %v3966
        %v4501 = vpop.f32.mrf.mxu0
        %v4502 = vadd.f32 0.0, %v4501
        %4503 = vmatmul.f32.gmra.mxu0 %v3969
        %v4504 = vpop.f32.mrf.mxu0
        %v4505 = vadd.f32 0.0, %v4504
        %4506 = vmatmul.f32.gmra.mxu0 %v3972
        %v4507 = vpop.f32.mrf.mxu0
        %v4508 = vadd.f32 0.0, %v4507
        %4509 = vdwg.mxu0
        %v4510 = vadd.f32 %v4422, %v4475
        %v4511 = vadd.f32 %v4425, %v4478
        %v4512 = vadd.f32 %v4428, %v4481
        %v4513 = vadd.f32 %v4431, %v4484
        %v4514 = vadd.f32 %v4434, %v4487
        %v4515 = vadd.f32 %v4437, %v4490
        %v4516 = vadd.f32 %v4440, %v4493
        %v4517 = vadd.f32 %v4443, %v4496
        %v4518 = vadd.f32 %v4446, %v4499
        %v4519 = vadd.f32 %v4449, %v4502
        %v4520 = vadd.f32 %v4452, %v4505
        %v4521 = vadd.f32 %v4455, %v4508
        %4522 = vmatpush.msra.mxu0 0.0
        %4523 = vmatpush.msra.mxu0 0.0
        %4524 = vmatpush.msra.mxu0 0.0
        %4525 = vmatpush.msra.mxu0 0.0
        %4526 = vmatpush.msra.mxu0 %v4237
        %4527 = vmatpush.msra.mxu0 %v4235
        %4528 = vmatpush.msra.mxu0 %v4233
        %4529 = vmatpush.msra.mxu0 %v4231
        %4530 = vmatpush.msra.mxu0 %v4229
        %4531 = vmatpush.msra.mxu0 %v4227
        %4532 = vmatpush.msra.mxu0 %v4225
        %4533 = vmatpush.msra.mxu0 %v4223
        %4534 = vmatpush.msra.mxu0 %v4221
        %4535 = vmatpush.msra.mxu0 %v4219
        %4536 = vmatpush.msra.mxu0 %v4217
        %4537 = vmatpush.msra.mxu0 %v4215
        %4538 = vmatmul.f32.gmra.mxu0 %v4101
        %v4539 = vpop.f32.mrf.mxu0
        %v4540 = vadd.f32 0.0, %v4539
        %4541 = vmatmul.f32.gmra.mxu0 %v4104
        %v4542 = vpop.f32.mrf.mxu0
        %v4543 = vadd.f32 0.0, %v4542
        %4544 = vmatmul.f32.gmra.mxu0 %v4107
        %v4545 = vpop.f32.mrf.mxu0
        %v4546 = vadd.f32 0.0, %v4545
        %4547 = vmatmul.f32.gmra.mxu0 %v4110
        %v4548 = vpop.f32.mrf.mxu0
        %v4549 = vadd.f32 0.0, %v4548
        %4550 = vmatmul.f32.gmra.mxu0 %v4113
        %v4551 = vpop.f32.mrf.mxu0
        %v4552 = vadd.f32 0.0, %v4551
        %4553 = vmatmul.f32.gmra.mxu0 %v4116
        %v4554 = vpop.f32.mrf.mxu0
        %v4555 = vadd.f32 0.0, %v4554
        %4556 = vmatmul.f32.gmra.mxu0 %v4119
        %v4557 = vpop.f32.mrf.mxu0
        %v4558 = vadd.f32 0.0, %v4557
        %4559 = vmatmul.f32.gmra.mxu0 %v4122
        %v4560 = vpop.f32.mrf.mxu0
        %v4561 = vadd.f32 0.0, %v4560
        %4562 = vmatmul.f32.gmra.mxu0 %v4125
        %v4563 = vpop.f32.mrf.mxu0
        %v4564 = vadd.f32 0.0, %v4563
        %4565 = vmatmul.f32.gmra.mxu0 %v4128
        %v4566 = vpop.f32.mrf.mxu0
        %v4567 = vadd.f32 0.0, %v4566
        %4568 = vmatmul.f32.gmra.mxu0 %v4131
        %v4569 = vpop.f32.mrf.mxu0
        %v4570 = vadd.f32 0.0, %v4569
        %4571 = vmatmul.f32.gmra.mxu0 %v4134
        %v4572 = vpop.f32.mrf.mxu0
        %v4573 = vadd.f32 0.0, %v4572
        %4574 = vdwg.mxu0
        %v4575 = vadd.f32 %v4510, %v4540
        %v4576 = vadd.f32 %v4511, %v4543
        %v4577 = vadd.f32 %v4512, %v4546
        %v4578 = vadd.f32 %v4513, %v4549
        %v4579 = vadd.f32 %v4514, %v4552
        %v4580 = vadd.f32 %v4515, %v4555
        %v4581 = vadd.f32 %v4516, %v4558
        %v4582 = vadd.f32 %v4517, %v4561
        %v4583 = vadd.f32 %v4518, %v4564
        %v4584 = vadd.f32 %v4519, %v4567
        %v4585 = vadd.f32 %v4520, %v4570
        %v4586 = vadd.f32 %v4521, %v4573
        %4587 = vrot.lane.b32.xlu0 %v3661, 120
        %v4588 = vpop.permute.xlu0 %4587
        %4589 = vrot.lane.b32.xlu0 %v3662, 120
        %v4590 = vpop.permute.xlu0 %4589
        %4591 = vrot.lane.b32.xlu0 %v3663, 120
        %v4592 = vpop.permute.xlu0 %4591
        %4593 = vrot.lane.b32.xlu0 %v3664, 120
        %v4594 = vpop.permute.xlu0 %4593
        %4595 = vrot.lane.b32.xlu0 %v3665, 120
        %v4596 = vpop.permute.xlu0 %4595
        %4597 = vrot.lane.b32.xlu0 %v3666, 120
        %v4598 = vpop.permute.xlu0 %4597
        %4599 = vrot.lane.b32.xlu0 %v3667, 120
        %v4600 = vpop.permute.xlu0 %4599
        %4601 = vrot.lane.b32.xlu0 %v3668, 120
        %v4602 = vpop.permute.xlu0 %4601
        %4603 = vrot.lane.b32.xlu0 %v3669, 120
        %v4604 = vpop.permute.xlu0 %4603
        %4605 = vrot.lane.b32.xlu0 %v3670, 120
        %v4606 = vpop.permute.xlu0 %4605
        %4607 = vrot.lane.b32.xlu0 %v3671, 120
        %v4608 = vpop.permute.xlu0 %4607
        %4609 = vrot.lane.b32.xlu0 %v3672, 120
        %v4610 = vpop.permute.xlu0 %4609
        %4623 = vmatpush.msra.mxu0 0.0
        %4624 = vmatpush.msra.mxu0 0.0
        %4625 = vmatpush.msra.mxu0 0.0
        %4626 = vmatpush.msra.mxu0 0.0
        %4627 = vmatpush.msra.mxu0 %v4610
        %4628 = vmatpush.msra.mxu0 %v4608
        %4629 = vmatpush.msra.mxu0 %v4606
        %4630 = vmatpush.msra.mxu0 %v4604
        %4631 = vmatpush.msra.mxu0 %v4602
        %4632 = vmatpush.msra.mxu0 %v4600
        %4633 = vmatpush.msra.mxu0 %v4598
        %4634 = vmatpush.msra.mxu0 %v4596
        %4635 = vmatpush.msra.mxu0 %v4594
        %4636 = vmatpush.msra.mxu0 %v4592
        %4637 = vmatpush.msra.mxu0 %v4590
        %4638 = vmatpush.msra.mxu0 %v4588
        %4639 = vmatmul.f32.gmra.mxu0 %v4251
        %v4640 = vpop.f32.mrf.mxu0
        %v4641 = vadd.f32 0.0, %v4640
        %4642 = vmatmul.f32.gmra.mxu0 %v4254
        %v4643 = vpop.f32.mrf.mxu0
        %v4644 = vadd.f32 0.0, %v4643
        %4645 = vmatmul.f32.gmra.mxu0 %v4257
        %v4646 = vpop.f32.mrf.mxu0
        %v4647 = vadd.f32 0.0, %v4646
        %4648 = vmatmul.f32.gmra.mxu0 %v4260
        %v4649 = vpop.f32.mrf.mxu0
        %v4650 = vadd.f32 0.0, %v4649
        %4651 = vmatmul.f32.gmra.mxu0 %v4263
        %v4652 = vpop.f32.mrf.mxu0
        %v4653 = vadd.f32 0.0, %v4652
        %4654 = vmatmul.f32.gmra.mxu0 %v4266
        %v4655 = vpop.f32.mrf.mxu0
        %v4656 = vadd.f32 0.0, %v4655
        %4657 = vmatmul.f32.gmra.mxu0 %v4269
        %v4658 = vpop.f32.mrf.mxu0
        %v4659 = vadd.f32 0.0, %v4658
        %4660 = vmatmul.f32.gmra.mxu0 %v4272
        %v4661 = vpop.f32.mrf.mxu0
        %v4662 = vadd.f32 0.0, %v4661
        %4663 = vmatmul.f32.gmra.mxu0 %v4275
        %v4664 = vpop.f32.mrf.mxu0
        %v4665 = vadd.f32 0.0, %v4664
        %4666 = vmatmul.f32.gmra.mxu0 %v4278
        %v4667 = vpop.f32.mrf.mxu0
        %v4668 = vadd.f32 0.0, %v4667
        %4669 = vmatmul.f32.gmra.mxu0 %v4281
        %v4670 = vpop.f32.mrf.mxu0
        %v4671 = vadd.f32 0.0, %v4670
        %4672 = vmatmul.f32.gmra.mxu0 %v4284
        %v4673 = vpop.f32.mrf.mxu0
        %v4674 = vadd.f32 0.0, %v4673
        %4675 = vdwg.mxu0
        %v4676 = vadd.f32 %v4575, %v4641
        %v4677 = vadd.f32 %v4576, %v4644
        %v4678 = vadd.f32 %v4577, %v4647
        %v4679 = vadd.f32 %v4578, %v4650
        %v4680 = vadd.f32 %v4579, %v4653
        %v4681 = vadd.f32 %v4580, %v4656
        %v4682 = vadd.f32 %v4581, %v4659
        %v4683 = vadd.f32 %v4582, %v4662
        %v4684 = vadd.f32 %v4583, %v4665
        %v4685 = vadd.f32 %v4584, %v4668
        %v4686 = vadd.f32 %v4585, %v4671
        %v4687 = vadd.f32 %v4586, %v4674
        %v4688 = vmax.f32 %v4339, %v4676
        %v4689 = vmax.f32 %v4340, %v4677
        %v4690 = vmax.f32 %v4341, %v4678
        %v4691 = vmax.f32 %v4342, %v4679
        %v4692 = vmax.f32 %v4343, %v4680
        %v4693 = vmax.f32 %v4344, %v4681
        %v4694 = vmax.f32 %v4345, %v4682
        %v4695 = vmax.f32 %v4346, %v4683
        %v4696 = vmax.f32 %v4347, %v4684
        %v4697 = vmax.f32 %v4348, %v4685
        %v4698 = vmax.f32 %v4349, %v4686
        %v4699 = vmax.f32 %v4350, %v4687
        %s4700 = scalar_lea.vmem %s3, 480
        %v4701 = vld [vmem:[%s4700] sm:$0xff]
        %v4702 = vld [vmem:[%s4700 + $0x8] sm:$0xff]
        %v4703 = vld [vmem:[%s4700 + $0x10] sm:$0xff]
        %v4704 = vld [vmem:[%s4700 + $0x18] sm:$0xff]
        %v4705 = vld [vmem:[%s4700 + $0x20] sm:$0xff]
        %v4706 = vld [vmem:[%s4700 + $0x28] sm:$0xff]
        %v4707 = vld [vmem:[%s4700 + $0x30] sm:$0xff]
        %v4708 = vld [vmem:[%s4700 + $0x38] sm:$0xff]
        %v4709 = vld [vmem:[%s4700 + $0x40] sm:$0xff]
        %v4710 = vld [vmem:[%s4700 + $0x48] sm:$0xff]
        %v4711 = vld [vmem:[%s4700 + $0x50] sm:$0xff]
        %v4712 = vld [vmem:[%s4700 + $0x58] sm:$0xff]
        %s4713 = scalar_lea.vmem %s3, 576
        %v4714 = vld [vmem:[%s4713] sm:$0xff]
        %v4715 = vld [vmem:[%s4713 + $0x8] sm:$0xff]
        %v4716 = vld [vmem:[%s4713 + $0x10] sm:$0xff]
        %v4717 = vld [vmem:[%s4713 + $0x18] sm:$0xff]
        %v4718 = vld [vmem:[%s4713 + $0x20] sm:$0xff]
        %v4719 = vld [vmem:[%s4713 + $0x28] sm:$0xff]
        %v4720 = vld [vmem:[%s4713 + $0x30] sm:$0xff]
        %v4721 = vld [vmem:[%s4713 + $0x38] sm:$0xff]
        %v4722 = vld [vmem:[%s4713 + $0x40] sm:$0xff]
        %v4723 = vld [vmem:[%s4713 + $0x48] sm:$0xff]
        %v4724 = vld [vmem:[%s4713 + $0x50] sm:$0xff]
        %v4725 = vld [vmem:[%s4713 + $0x58] sm:$0xff]
        %v4727 = vsel %vm3698, %v4714, 0
        %v4730 = vsel %vm3698, %v4715, 0
        %v4733 = vsel %vm3698, %v4716, 0
        %v4736 = vsel %vm3698, %v4717, 0
        %v4739 = vsel %vm3698, %v4718, 0
        %v4742 = vsel %vm3698, %v4719, 0
        %v4745 = vsel %vm3698, %v4720, 0
        %v4748 = vsel %vm3698, %v4721, 0
        %v4751 = vsel %vm3698, %v4722, 0
        %v4754 = vsel %vm3698, %v4723, 0
        %v4757 = vsel %vm3698, %v4724, 0
        %v4760 = vsel %vm3698, %v4725, 0
        %4762 = vmatpush.msra.mxu0 0.0
        %4763 = vmatpush.msra.mxu0 0.0
        %4764 = vmatpush.msra.mxu0 0.0
        %4765 = vmatpush.msra.mxu0 0.0
        %4766 = vmatpush.msra.mxu0 %v3672
        %4767 = vmatpush.msra.mxu0 %v3671
        %4768 = vmatpush.msra.mxu0 %v3670
        %4769 = vmatpush.msra.mxu0 %v3669
        %4770 = vmatpush.msra.mxu0 %v3668
        %4771 = vmatpush.msra.mxu0 %v3667
        %4772 = vmatpush.msra.mxu0 %v3666
        %4773 = vmatpush.msra.mxu0 %v3665
        %4774 = vmatpush.msra.mxu0 %v3664
        %4775 = vmatpush.msra.mxu0 %v3663
        %4776 = vmatpush.msra.mxu0 %v3662
        %4777 = vmatpush.msra.mxu0 %v3661
        %4778 = vmatmul.f32.gmra.mxu0 %v4727
        %v4779 = vpop.f32.mrf.mxu0
        %v4780 = vadd.f32 0.0, %v4779
        %4781 = vmatmul.f32.gmra.mxu0 %v4730
        %v4782 = vpop.f32.mrf.mxu0
        %v4783 = vadd.f32 0.0, %v4782
        %4784 = vmatmul.f32.gmra.mxu0 %v4733
        %v4785 = vpop.f32.mrf.mxu0
        %v4786 = vadd.f32 0.0, %v4785
        %4787 = vmatmul.f32.gmra.mxu0 %v4736
        %v4788 = vpop.f32.mrf.mxu0
        %v4789 = vadd.f32 0.0, %v4788
        %4790 = vmatmul.f32.gmra.mxu0 %v4739
        %v4791 = vpop.f32.mrf.mxu0
        %v4792 = vadd.f32 0.0, %v4791
        %4793 = vmatmul.f32.gmra.mxu0 %v4742
        %v4794 = vpop.f32.mrf.mxu0
        %v4795 = vadd.f32 0.0, %v4794
        %4796 = vmatmul.f32.gmra.mxu0 %v4745
        %v4797 = vpop.f32.mrf.mxu0
        %v4798 = vadd.f32 0.0, %v4797
        %4799 = vmatmul.f32.gmra.mxu0 %v4748
        %v4800 = vpop.f32.mrf.mxu0
        %v4801 = vadd.f32 0.0, %v4800
        %4802 = vmatmul.f32.gmra.mxu0 %v4751
        %v4803 = vpop.f32.mrf.mxu0
        %v4804 = vadd.f32 0.0, %v4803
        %4805 = vmatmul.f32.gmra.mxu0 %v4754
        %v4806 = vpop.f32.mrf.mxu0
        %v4807 = vadd.f32 0.0, %v4806
        %4808 = vmatmul.f32.gmra.mxu0 %v4757
        %v4809 = vpop.f32.mrf.mxu0
        %v4810 = vadd.f32 0.0, %v4809
        %4811 = vmatmul.f32.gmra.mxu0 %v4760
        %v4812 = vpop.f32.mrf.mxu0
        %v4813 = vadd.f32 0.0, %v4812
        %4814 = vdwg.mxu0
        %v4816 = vsel %vm3698, %v4701, 0
        %v4819 = vsel %vm3698, %v4702, 0
        %v4822 = vsel %vm3698, %v4703, 0
        %v4825 = vsel %vm3698, %v4704, 0
        %v4828 = vsel %vm3698, %v4705, 0
        %v4831 = vsel %vm3698, %v4706, 0
        %v4834 = vsel %vm3698, %v4707, 0
        %v4837 = vsel %vm3698, %v4708, 0
        %v4840 = vsel %vm3698, %v4709, 0
        %v4843 = vsel %vm3698, %v4710, 0
        %v4846 = vsel %vm3698, %v4711, 0
        %v4849 = vsel %vm3698, %v4712, 0
        %4851 = vmatpush.msra.mxu0 0.0
        %4852 = vmatpush.msra.mxu0 0.0
        %4853 = vmatpush.msra.mxu0 0.0
        %4854 = vmatpush.msra.mxu0 0.0
        %4855 = vmatpush.msra.mxu0 %v3648
        %4856 = vmatpush.msra.mxu0 %v3647
        %4857 = vmatpush.msra.mxu0 %v3646
        %4858 = vmatpush.msra.mxu0 %v3645
        %4859 = vmatpush.msra.mxu0 %v3644
        %4860 = vmatpush.msra.mxu0 %v3643
        %4861 = vmatpush.msra.mxu0 %v3642
        %4862 = vmatpush.msra.mxu0 %v3641
        %4863 = vmatpush.msra.mxu0 %v3640
        %4864 = vmatpush.msra.mxu0 %v3639
        %4865 = vmatpush.msra.mxu0 %v3638
        %4866 = vmatpush.msra.mxu0 %v3637
        %4867 = vmatmul.f32.gmra.mxu0 %v4816
        %v4868 = vpop.f32.mrf.mxu0
        %v4869 = vadd.f32 %v4780, %v4868
        %4870 = vmatmul.f32.gmra.mxu0 %v4819
        %v4871 = vpop.f32.mrf.mxu0
        %v4872 = vadd.f32 %v4783, %v4871
        %4873 = vmatmul.f32.gmra.mxu0 %v4822
        %v4874 = vpop.f32.mrf.mxu0
        %v4875 = vadd.f32 %v4786, %v4874
        %4876 = vmatmul.f32.gmra.mxu0 %v4825
        %v4877 = vpop.f32.mrf.mxu0
        %v4878 = vadd.f32 %v4789, %v4877
        %4879 = vmatmul.f32.gmra.mxu0 %v4828
        %v4880 = vpop.f32.mrf.mxu0
        %v4881 = vadd.f32 %v4792, %v4880
        %4882 = vmatmul.f32.gmra.mxu0 %v4831
        %v4883 = vpop.f32.mrf.mxu0
        %v4884 = vadd.f32 %v4795, %v4883
        %4885 = vmatmul.f32.gmra.mxu0 %v4834
        %v4886 = vpop.f32.mrf.mxu0
        %v4887 = vadd.f32 %v4798, %v4886
        %4888 = vmatmul.f32.gmra.mxu0 %v4837
        %v4889 = vpop.f32.mrf.mxu0
        %v4890 = vadd.f32 %v4801, %v4889
        %4891 = vmatmul.f32.gmra.mxu0 %v4840
        %v4892 = vpop.f32.mrf.mxu0
        %v4893 = vadd.f32 %v4804, %v4892
        %4894 = vmatmul.f32.gmra.mxu0 %v4843
        %v4895 = vpop.f32.mrf.mxu0
        %v4896 = vadd.f32 %v4807, %v4895
        %4897 = vmatmul.f32.gmra.mxu0 %v4846
        %v4898 = vpop.f32.mrf.mxu0
        %v4899 = vadd.f32 %v4810, %v4898
        %4900 = vmatmul.f32.gmra.mxu0 %v4849
        %v4901 = vpop.f32.mrf.mxu0
        %v4902 = vadd.f32 %v4813, %v4901
        %4903 = vdwg.mxu0
        %s4904 = scalar_lea.vmem %s3, 672
        %v4905 = vld [vmem:[%s4904] sm:$0xff]
        %v4906 = vld [vmem:[%s4904 + $0x8] sm:$0xff]
        %v4907 = vld [vmem:[%s4904 + $0x10] sm:$0xff]
        %v4908 = vld [vmem:[%s4904 + $0x18] sm:$0xff]
        %v4909 = vld [vmem:[%s4904 + $0x20] sm:$0xff]
        %v4910 = vld [vmem:[%s4904 + $0x28] sm:$0xff]
        %v4911 = vld [vmem:[%s4904 + $0x30] sm:$0xff]
        %v4912 = vld [vmem:[%s4904 + $0x38] sm:$0xff]
        %v4913 = vld [vmem:[%s4904 + $0x40] sm:$0xff]
        %v4914 = vld [vmem:[%s4904 + $0x48] sm:$0xff]
        %v4915 = vld [vmem:[%s4904 + $0x50] sm:$0xff]
        %v4916 = vld [vmem:[%s4904 + $0x58] sm:$0xff]
        %v4918 = vsel %vm3698, %v4905, 0
        %v4921 = vsel %vm3698, %v4906, 0
        %v4924 = vsel %vm3698, %v4907, 0
        %v4927 = vsel %vm3698, %v4908, 0
        %v4930 = vsel %vm3698, %v4909, 0
        %v4933 = vsel %vm3698, %v4910, 0
        %v4936 = vsel %vm3698, %v4911, 0
        %v4939 = vsel %vm3698, %v4912, 0
        %v4942 = vsel %vm3698, %v4913, 0
        %v4945 = vsel %vm3698, %v4914, 0
        %v4948 = vsel %vm3698, %v4915, 0
        %v4951 = vsel %vm3698, %v4916, 0
        %4953 = vmatpush.msra.mxu0 0.0
        %4954 = vmatpush.msra.mxu0 0.0
        %4955 = vmatpush.msra.mxu0 0.0
        %4956 = vmatpush.msra.mxu0 0.0
        %4957 = vmatpush.msra.mxu0 %v3925
        %4958 = vmatpush.msra.mxu0 %v3923
        %4959 = vmatpush.msra.mxu0 %v3921
        %4960 = vmatpush.msra.mxu0 %v3919
        %4961 = vmatpush.msra.mxu0 %v3917
        %4962 = vmatpush.msra.mxu0 %v3915
        %4963 = vmatpush.msra.mxu0 %v3913
        %4964 = vmatpush.msra.mxu0 %v3911
        %4965 = vmatpush.msra.mxu0 %v3909
        %4966 = vmatpush.msra.mxu0 %v3907
        %4967 = vmatpush.msra.mxu0 %v3905
        %4968 = vmatpush.msra.mxu0 %v3903
        %4969 = vmatmul.f32.gmra.mxu0 %v4918
        %v4970 = vpop.f32.mrf.mxu0
        %v4971 = vadd.f32 0.0, %v4970
        %4972 = vmatmul.f32.gmra.mxu0 %v4921
        %v4973 = vpop.f32.mrf.mxu0
        %v4974 = vadd.f32 0.0, %v4973
        %4975 = vmatmul.f32.gmra.mxu0 %v4924
        %v4976 = vpop.f32.mrf.mxu0
        %v4977 = vadd.f32 0.0, %v4976
        %4978 = vmatmul.f32.gmra.mxu0 %v4927
        %v4979 = vpop.f32.mrf.mxu0
        %v4980 = vadd.f32 0.0, %v4979
        %4981 = vmatmul.f32.gmra.mxu0 %v4930
        %v4982 = vpop.f32.mrf.mxu0
        %v4983 = vadd.f32 0.0, %v4982
        %4984 = vmatmul.f32.gmra.mxu0 %v4933
        %v4985 = vpop.f32.mrf.mxu0
        %v4986 = vadd.f32 0.0, %v4985
        %4987 = vmatmul.f32.gmra.mxu0 %v4936
        %v4988 = vpop.f32.mrf.mxu0
        %v4989 = vadd.f32 0.0, %v4988
        %4990 = vmatmul.f32.gmra.mxu0 %v4939
        %v4991 = vpop.f32.mrf.mxu0
        %v4992 = vadd.f32 0.0, %v4991
        %4993 = vmatmul.f32.gmra.mxu0 %v4942
        %v4994 = vpop.f32.mrf.mxu0
        %v4995 = vadd.f32 0.0, %v4994
        %4996 = vmatmul.f32.gmra.mxu0 %v4945
        %v4997 = vpop.f32.mrf.mxu0
        %v4998 = vadd.f32 0.0, %v4997
        %4999 = vmatmul.f32.gmra.mxu0 %v4948
        %v5000 = vpop.f32.mrf.mxu0
        %v5001 = vadd.f32 0.0, %v5000
        %5002 = vmatmul.f32.gmra.mxu0 %v4951
        %v5003 = vpop.f32.mrf.mxu0
        %v5004 = vadd.f32 0.0, %v5003
        %5005 = vdwg.mxu0
        %v5006 = vadd.f32 %v4869, %v4971
        %v5007 = vadd.f32 %v4872, %v4974
        %v5008 = vadd.f32 %v4875, %v4977
        %v5009 = vadd.f32 %v4878, %v4980
        %v5010 = vadd.f32 %v4881, %v4983
        %v5011 = vadd.f32 %v4884, %v4986
        %v5012 = vadd.f32 %v4887, %v4989
        %v5013 = vadd.f32 %v4890, %v4992
        %v5014 = vadd.f32 %v4893, %v4995
        %v5015 = vadd.f32 %v4896, %v4998
        %v5016 = vadd.f32 %v4899, %v5001
        %v5017 = vadd.f32 %v4902, %v5004
        %s5018 = scalar_lea.vmem %s3, 768
        %v5019 = vld [vmem:[%s5018] sm:$0xff]
        %v5020 = vld [vmem:[%s5018 + $0x8] sm:$0xff]
        %v5021 = vld [vmem:[%s5018 + $0x10] sm:$0xff]
        %v5022 = vld [vmem:[%s5018 + $0x18] sm:$0xff]
        %v5023 = vld [vmem:[%s5018 + $0x20] sm:$0xff]
        %v5024 = vld [vmem:[%s5018 + $0x28] sm:$0xff]
        %v5025 = vld [vmem:[%s5018 + $0x30] sm:$0xff]
        %v5026 = vld [vmem:[%s5018 + $0x38] sm:$0xff]
        %v5027 = vld [vmem:[%s5018 + $0x40] sm:$0xff]
        %v5028 = vld [vmem:[%s5018 + $0x48] sm:$0xff]
        %v5029 = vld [vmem:[%s5018 + $0x50] sm:$0xff]
        %v5030 = vld [vmem:[%s5018 + $0x58] sm:$0xff]
        %v5032 = vsel %vm3698, %v5019, 0
        %v5035 = vsel %vm3698, %v5020, 0
        %v5038 = vsel %vm3698, %v5021, 0
        %v5041 = vsel %vm3698, %v5022, 0
        %v5044 = vsel %vm3698, %v5023, 0
        %v5047 = vsel %vm3698, %v5024, 0
        %v5050 = vsel %vm3698, %v5025, 0
        %v5053 = vsel %vm3698, %v5026, 0
        %v5056 = vsel %vm3698, %v5027, 0
        %v5059 = vsel %vm3698, %v5028, 0
        %v5062 = vsel %vm3698, %v5029, 0
        %v5065 = vsel %vm3698, %v5030, 0
        %5067 = vmatpush.msra.mxu0 0.0
        %5068 = vmatpush.msra.mxu0 0.0
        %5069 = vmatpush.msra.mxu0 0.0
        %5070 = vmatpush.msra.mxu0 0.0
        %5071 = vmatpush.msra.mxu0 %v4087
        %5072 = vmatpush.msra.mxu0 %v4085
        %5073 = vmatpush.msra.mxu0 %v4083
        %5074 = vmatpush.msra.mxu0 %v4081
        %5075 = vmatpush.msra.mxu0 %v4079
        %5076 = vmatpush.msra.mxu0 %v4077
        %5077 = vmatpush.msra.mxu0 %v4075
        %5078 = vmatpush.msra.mxu0 %v4073
        %5079 = vmatpush.msra.mxu0 %v4071
        %5080 = vmatpush.msra.mxu0 %v4069
        %5081 = vmatpush.msra.mxu0 %v4067
        %5082 = vmatpush.msra.mxu0 %v4065
        %5083 = vmatmul.f32.gmra.mxu0 %v5032
        %v5084 = vpop.f32.mrf.mxu0
        %v5085 = vadd.f32 0.0, %v5084
        %5086 = vmatmul.f32.gmra.mxu0 %v5035
        %v5087 = vpop.f32.mrf.mxu0
        %v5088 = vadd.f32 0.0, %v5087
        %5089 = vmatmul.f32.gmra.mxu0 %v5038
        %v5090 = vpop.f32.mrf.mxu0
        %v5091 = vadd.f32 0.0, %v5090
        %5092 = vmatmul.f32.gmra.mxu0 %v5041
        %v5093 = vpop.f32.mrf.mxu0
        %v5094 = vadd.f32 0.0, %v5093
        %5095 = vmatmul.f32.gmra.mxu0 %v5044
        %v5096 = vpop.f32.mrf.mxu0
        %v5097 = vadd.f32 0.0, %v5096
        %5098 = vmatmul.f32.gmra.mxu0 %v5047
        %v5099 = vpop.f32.mrf.mxu0
        %v5100 = vadd.f32 0.0, %v5099
        %5101 = vmatmul.f32.gmra.mxu0 %v5050
        %v5102 = vpop.f32.mrf.mxu0
        %v5103 = vadd.f32 0.0, %v5102
        %5104 = vmatmul.f32.gmra.mxu0 %v5053
        %v5105 = vpop.f32.mrf.mxu0
        %v5106 = vadd.f32 0.0, %v5105
        %5107 = vmatmul.f32.gmra.mxu0 %v5056
        %v5108 = vpop.f32.mrf.mxu0
        %v5109 = vadd.f32 0.0, %v5108
        %5110 = vmatmul.f32.gmra.mxu0 %v5059
        %v5111 = vpop.f32.mrf.mxu0
        %v5112 = vadd.f32 0.0, %v5111
        %5113 = vmatmul.f32.gmra.mxu0 %v5062
        %v5114 = vpop.f32.mrf.mxu0
        %v5115 = vadd.f32 0.0, %v5114
        %5116 = vmatmul.f32.gmra.mxu0 %v5065
        %v5117 = vpop.f32.mrf.mxu0
        %v5118 = vadd.f32 0.0, %v5117
        %5119 = vdwg.mxu0
        %v5120 = vadd.f32 %v5006, %v5085
        %v5121 = vadd.f32 %v5007, %v5088
        %v5122 = vadd.f32 %v5008, %v5091
        %v5123 = vadd.f32 %v5009, %v5094
        %v5124 = vadd.f32 %v5010, %v5097
        %v5125 = vadd.f32 %v5011, %v5100
        %v5126 = vadd.f32 %v5012, %v5103
        %v5127 = vadd.f32 %v5013, %v5106
        %v5128 = vadd.f32 %v5014, %v5109
        %v5129 = vadd.f32 %v5015, %v5112
        %v5130 = vadd.f32 %v5016, %v5115
        %v5131 = vadd.f32 %v5017, %v5118
        %s5132 = scalar_lea.vmem %s3, 864
        %v5133 = vld [vmem:[%s5132] sm:$0xff]
        %v5134 = vld [vmem:[%s5132 + $0x8] sm:$0xff]
        %v5135 = vld [vmem:[%s5132 + $0x10] sm:$0xff]
        %v5136 = vld [vmem:[%s5132 + $0x18] sm:$0xff]
        %v5137 = vld [vmem:[%s5132 + $0x20] sm:$0xff]
        %v5138 = vld [vmem:[%s5132 + $0x28] sm:$0xff]
        %v5139 = vld [vmem:[%s5132 + $0x30] sm:$0xff]
        %v5140 = vld [vmem:[%s5132 + $0x38] sm:$0xff]
        %v5141 = vld [vmem:[%s5132 + $0x40] sm:$0xff]
        %v5142 = vld [vmem:[%s5132 + $0x48] sm:$0xff]
        %v5143 = vld [vmem:[%s5132 + $0x50] sm:$0xff]
        %v5144 = vld [vmem:[%s5132 + $0x58] sm:$0xff]
        %v5146 = vsel %vm3698, %v5133, 0
        %v5149 = vsel %vm3698, %v5134, 0
        %v5152 = vsel %vm3698, %v5135, 0
        %v5155 = vsel %vm3698, %v5136, 0
        %v5158 = vsel %vm3698, %v5137, 0
        %v5161 = vsel %vm3698, %v5138, 0
        %v5164 = vsel %vm3698, %v5139, 0
        %v5167 = vsel %vm3698, %v5140, 0
        %v5170 = vsel %vm3698, %v5141, 0
        %v5173 = vsel %vm3698, %v5142, 0
        %v5176 = vsel %vm3698, %v5143, 0
        %v5179 = vsel %vm3698, %v5144, 0
        %5181 = vmatpush.msra.mxu0 0.0
        %5182 = vmatpush.msra.mxu0 0.0
        %5183 = vmatpush.msra.mxu0 0.0
        %5184 = vmatpush.msra.mxu0 0.0
        %5185 = vmatpush.msra.mxu0 %v4237
        %5186 = vmatpush.msra.mxu0 %v4235
        %5187 = vmatpush.msra.mxu0 %v4233
        %5188 = vmatpush.msra.mxu0 %v4231
        %5189 = vmatpush.msra.mxu0 %v4229
        %5190 = vmatpush.msra.mxu0 %v4227
        %5191 = vmatpush.msra.mxu0 %v4225
        %5192 = vmatpush.msra.mxu0 %v4223
        %5193 = vmatpush.msra.mxu0 %v4221
        %5194 = vmatpush.msra.mxu0 %v4219
        %5195 = vmatpush.msra.mxu0 %v4217
        %5196 = vmatpush.msra.mxu0 %v4215
        %5197 = vmatmul.f32.gmra.mxu0 %v5146
        %v5198 = vpop.f32.mrf.mxu0
        %v5199 = vadd.f32 0.0, %v5198
        %5200 = vmatmul.f32.gmra.mxu0 %v5149
        %v5201 = vpop.f32.mrf.mxu0
        %v5202 = vadd.f32 0.0, %v5201
        %5203 = vmatmul.f32.gmra.mxu0 %v5152
        %v5204 = vpop.f32.mrf.mxu0
        %v5205 = vadd.f32 0.0, %v5204
        %5206 = vmatmul.f32.gmra.mxu0 %v5155
        %v5207 = vpop.f32.mrf.mxu0
        %v5208 = vadd.f32 0.0, %v5207
        %5209 = vmatmul.f32.gmra.mxu0 %v5158
        %v5210 = vpop.f32.mrf.mxu0
        %v5211 = vadd.f32 0.0, %v5210
        %5212 = vmatmul.f32.gmra.mxu0 %v5161
        %v5213 = vpop.f32.mrf.mxu0
        %v5214 = vadd.f32 0.0, %v5213
        %5215 = vmatmul.f32.gmra.mxu0 %v5164
        %v5216 = vpop.f32.mrf.mxu0
        %v5217 = vadd.f32 0.0, %v5216
        %5218 = vmatmul.f32.gmra.mxu0 %v5167
        %v5219 = vpop.f32.mrf.mxu0
        %v5220 = vadd.f32 0.0, %v5219
        %5221 = vmatmul.f32.gmra.mxu0 %v5170
        %v5222 = vpop.f32.mrf.mxu0
        %v5223 = vadd.f32 0.0, %v5222
        %5224 = vmatmul.f32.gmra.mxu0 %v5173
        %v5225 = vpop.f32.mrf.mxu0
        %v5226 = vadd.f32 0.0, %v5225
        %5227 = vmatmul.f32.gmra.mxu0 %v5176
        %v5228 = vpop.f32.mrf.mxu0
        %v5229 = vadd.f32 0.0, %v5228
        %5230 = vmatmul.f32.gmra.mxu0 %v5179
        %v5231 = vpop.f32.mrf.mxu0
        %v5232 = vadd.f32 0.0, %v5231
        %5233 = vdwg.mxu0
        %v5234 = vadd.f32 %v5120, %v5199
        %v5235 = vadd.f32 %v5121, %v5202
        %v5236 = vadd.f32 %v5122, %v5205
        %v5237 = vadd.f32 %v5123, %v5208
        %v5238 = vadd.f32 %v5124, %v5211
        %v5239 = vadd.f32 %v5125, %v5214
        %v5240 = vadd.f32 %v5126, %v5217
        %v5241 = vadd.f32 %v5127, %v5220
        %v5242 = vadd.f32 %v5128, %v5223
        %v5243 = vadd.f32 %v5129, %v5226
        %v5244 = vadd.f32 %v5130, %v5229
        %v5245 = vadd.f32 %v5131, %v5232
        %5246 = vmatpush.msra.mxu0 0.0
        %5247 = vmatpush.msra.mxu0 0.0
        %5248 = vmatpush.msra.mxu0 0.0
        %5249 = vmatpush.msra.mxu0 0.0
        %5250 = vmatpush.msra.mxu0 %v3925
        %5251 = vmatpush.msra.mxu0 %v3923
        %5252 = vmatpush.msra.mxu0 %v3921
        %5253 = vmatpush.msra.mxu0 %v3919
        %5254 = vmatpush.msra.mxu0 %v3917
        %5255 = vmatpush.msra.mxu0 %v3915
        %5256 = vmatpush.msra.mxu0 %v3913
        %5257 = vmatpush.msra.mxu0 %v3911
        %5258 = vmatpush.msra.mxu0 %v3909
        %5259 = vmatpush.msra.mxu0 %v3907
        %5260 = vmatpush.msra.mxu0 %v3905
        %5261 = vmatpush.msra.mxu0 %v3903
        %5262 = vmatmul.f32.gmra.mxu0 %v4727
        %v5263 = vpop.f32.mrf.mxu0
        %v5264 = vadd.f32 0.0, %v5263
        %5265 = vmatmul.f32.gmra.mxu0 %v4730
        %v5266 = vpop.f32.mrf.mxu0
        %v5267 = vadd.f32 0.0, %v5266
        %5268 = vmatmul.f32.gmra.mxu0 %v4733
        %v5269 = vpop.f32.mrf.mxu0
        %v5270 = vadd.f32 0.0, %v5269
        %5271 = vmatmul.f32.gmra.mxu0 %v4736
        %v5272 = vpop.f32.mrf.mxu0
        %v5273 = vadd.f32 0.0, %v5272
        %5274 = vmatmul.f32.gmra.mxu0 %v4739
        %v5275 = vpop.f32.mrf.mxu0
        %v5276 = vadd.f32 0.0, %v5275
        %5277 = vmatmul.f32.gmra.mxu0 %v4742
        %v5278 = vpop.f32.mrf.mxu0
        %v5279 = vadd.f32 0.0, %v5278
        %5280 = vmatmul.f32.gmra.mxu0 %v4745
        %v5281 = vpop.f32.mrf.mxu0
        %v5282 = vadd.f32 0.0, %v5281
        %5283 = vmatmul.f32.gmra.mxu0 %v4748
        %v5284 = vpop.f32.mrf.mxu0
        %v5285 = vadd.f32 0.0, %v5284
        %5286 = vmatmul.f32.gmra.mxu0 %v4751
        %v5287 = vpop.f32.mrf.mxu0
        %v5288 = vadd.f32 0.0, %v5287
        %5289 = vmatmul.f32.gmra.mxu0 %v4754
        %v5290 = vpop.f32.mrf.mxu0
        %v5291 = vadd.f32 0.0, %v5290
        %5292 = vmatmul.f32.gmra.mxu0 %v4757
        %v5293 = vpop.f32.mrf.mxu0
        %v5294 = vadd.f32 0.0, %v5293
        %5295 = vmatmul.f32.gmra.mxu0 %v4760
        %v5296 = vpop.f32.mrf.mxu0
        %v5297 = vadd.f32 0.0, %v5296
        %5298 = vdwg.mxu0
        %5299 = vmatpush.msra.mxu0 0.0
        %5300 = vmatpush.msra.mxu0 0.0
        %5301 = vmatpush.msra.mxu0 0.0
        %5302 = vmatpush.msra.mxu0 0.0
        %5303 = vmatpush.msra.mxu0 %v3672
        %5304 = vmatpush.msra.mxu0 %v3671
        %5305 = vmatpush.msra.mxu0 %v3670
        %5306 = vmatpush.msra.mxu0 %v3669
        %5307 = vmatpush.msra.mxu0 %v3668
        %5308 = vmatpush.msra.mxu0 %v3667
        %5309 = vmatpush.msra.mxu0 %v3666
        %5310 = vmatpush.msra.mxu0 %v3665
        %5311 = vmatpush.msra.mxu0 %v3664
        %5312 = vmatpush.msra.mxu0 %v3663
        %5313 = vmatpush.msra.mxu0 %v3662
        %5314 = vmatpush.msra.mxu0 %v3661
        %5315 = vmatmul.f32.gmra.mxu0 %v4816
        %v5316 = vpop.f32.mrf.mxu0
        %v5317 = vadd.f32 %v5264, %v5316
        %5318 = vmatmul.f32.gmra.mxu0 %v4819
        %v5319 = vpop.f32.mrf.mxu0
        %v5320 = vadd.f32 %v5267, %v5319
        %5321 = vmatmul.f32.gmra.mxu0 %v4822
        %v5322 = vpop.f32.mrf.mxu0
        %v5323 = vadd.f32 %v5270, %v5322
        %5324 = vmatmul.f32.gmra.mxu0 %v4825
        %v5325 = vpop.f32.mrf.mxu0
        %v5326 = vadd.f32 %v5273, %v5325
        %5327 = vmatmul.f32.gmra.mxu0 %v4828
        %v5328 = vpop.f32.mrf.mxu0
        %v5329 = vadd.f32 %v5276, %v5328
        %5330 = vmatmul.f32.gmra.mxu0 %v4831
        %v5331 = vpop.f32.mrf.mxu0
        %v5332 = vadd.f32 %v5279, %v5331
        %5333 = vmatmul.f32.gmra.mxu0 %v4834
        %v5334 = vpop.f32.mrf.mxu0
        %v5335 = vadd.f32 %v5282, %v5334
        %5336 = vmatmul.f32.gmra.mxu0 %v4837
        %v5337 = vpop.f32.mrf.mxu0
        %v5338 = vadd.f32 %v5285, %v5337
        %5339 = vmatmul.f32.gmra.mxu0 %v4840
        %v5340 = vpop.f32.mrf.mxu0
        %v5341 = vadd.f32 %v5288, %v5340
        %5342 = vmatmul.f32.gmra.mxu0 %v4843
        %v5343 = vpop.f32.mrf.mxu0
        %v5344 = vadd.f32 %v5291, %v5343
        %5345 = vmatmul.f32.gmra.mxu0 %v4846
        %v5346 = vpop.f32.mrf.mxu0
        %v5347 = vadd.f32 %v5294, %v5346
        %5348 = vmatmul.f32.gmra.mxu0 %v4849
        %v5349 = vpop.f32.mrf.mxu0
        %v5350 = vadd.f32 %v5297, %v5349
        %5351 = vdwg.mxu0
        %5352 = vmatpush.msra.mxu0 0.0
        %5353 = vmatpush.msra.mxu0 0.0
        %5354 = vmatpush.msra.mxu0 0.0
        %5355 = vmatpush.msra.mxu0 0.0
        %5356 = vmatpush.msra.mxu0 %v4087
        %5357 = vmatpush.msra.mxu0 %v4085
        %5358 = vmatpush.msra.mxu0 %v4083
        %5359 = vmatpush.msra.mxu0 %v4081
        %5360 = vmatpush.msra.mxu0 %v4079
        %5361 = vmatpush.msra.mxu0 %v4077
        %5362 = vmatpush.msra.mxu0 %v4075
        %5363 = vmatpush.msra.mxu0 %v4073
        %5364 = vmatpush.msra.mxu0 %v4071
        %5365 = vmatpush.msra.mxu0 %v4069
        %5366 = vmatpush.msra.mxu0 %v4067
        %5367 = vmatpush.msra.mxu0 %v4065
        %5368 = vmatmul.f32.gmra.mxu0 %v4918
        %v5369 = vpop.f32.mrf.mxu0
        %v5370 = vadd.f32 0.0, %v5369
        %5371 = vmatmul.f32.gmra.mxu0 %v4921
        %v5372 = vpop.f32.mrf.mxu0
        %v5373 = vadd.f32 0.0, %v5372
        %5374 = vmatmul.f32.gmra.mxu0 %v4924
        %v5375 = vpop.f32.mrf.mxu0
        %v5376 = vadd.f32 0.0, %v5375
        %5377 = vmatmul.f32.gmra.mxu0 %v4927
        %v5378 = vpop.f32.mrf.mxu0
        %v5379 = vadd.f32 0.0, %v5378
        %5380 = vmatmul.f32.gmra.mxu0 %v4930
        %v5381 = vpop.f32.mrf.mxu0
        %v5382 = vadd.f32 0.0, %v5381
        %5383 = vmatmul.f32.gmra.mxu0 %v4933
        %v5384 = vpop.f32.mrf.mxu0
        %v5385 = vadd.f32 0.0, %v5384
        %5386 = vmatmul.f32.gmra.mxu0 %v4936
        %v5387 = vpop.f32.mrf.mxu0
        %v5388 = vadd.f32 0.0, %v5387
        %5389 = vmatmul.f32.gmra.mxu0 %v4939
        %v5390 = vpop.f32.mrf.mxu0
        %v5391 = vadd.f32 0.0, %v5390
        %5392 = vmatmul.f32.gmra.mxu0 %v4942
        %v5393 = vpop.f32.mrf.mxu0
        %v5394 = vadd.f32 0.0, %v5393
        %5395 = vmatmul.f32.gmra.mxu0 %v4945
        %v5396 = vpop.f32.mrf.mxu0
        %v5397 = vadd.f32 0.0, %v5396
        %5398 = vmatmul.f32.gmra.mxu0 %v4948
        %v5399 = vpop.f32.mrf.mxu0
        %v5400 = vadd.f32 0.0, %v5399
        %5401 = vmatmul.f32.gmra.mxu0 %v4951
        %v5402 = vpop.f32.mrf.mxu0
        %v5403 = vadd.f32 0.0, %v5402
        %5404 = vdwg.mxu0
        %v5405 = vadd.f32 %v5317, %v5370
        %v5406 = vadd.f32 %v5320, %v5373
        %v5407 = vadd.f32 %v5323, %v5376
        %v5408 = vadd.f32 %v5326, %v5379
        %v5409 = vadd.f32 %v5329, %v5382
        %v5410 = vadd.f32 %v5332, %v5385
        %v5411 = vadd.f32 %v5335, %v5388
        %v5412 = vadd.f32 %v5338, %v5391
        %v5413 = vadd.f32 %v5341, %v5394
        %v5414 = vadd.f32 %v5344, %v5397
        %v5415 = vadd.f32 %v5347, %v5400
        %v5416 = vadd.f32 %v5350, %v5403
        %5417 = vmatpush.msra.mxu0 0.0
        %5418 = vmatpush.msra.mxu0 0.0
        %5419 = vmatpush.msra.mxu0 0.0
        %5420 = vmatpush.msra.mxu0 0.0
        %5421 = vmatpush.msra.mxu0 %v4237
        %5422 = vmatpush.msra.mxu0 %v4235
        %5423 = vmatpush.msra.mxu0 %v4233
        %5424 = vmatpush.msra.mxu0 %v4231
        %5425 = vmatpush.msra.mxu0 %v4229
        %5426 = vmatpush.msra.mxu0 %v4227
        %5427 = vmatpush.msra.mxu0 %v4225
        %5428 = vmatpush.msra.mxu0 %v4223
        %5429 = vmatpush.msra.mxu0 %v4221
        %5430 = vmatpush.msra.mxu0 %v4219
        %5431 = vmatpush.msra.mxu0 %v4217
        %5432 = vmatpush.msra.mxu0 %v4215
        %5433 = vmatmul.f32.gmra.mxu0 %v5032
        %v5434 = vpop.f32.mrf.mxu0
        %v5435 = vadd.f32 0.0, %v5434
        %5436 = vmatmul.f32.gmra.mxu0 %v5035
        %v5437 = vpop.f32.mrf.mxu0
        %v5438 = vadd.f32 0.0, %v5437
        %5439 = vmatmul.f32.gmra.mxu0 %v5038
        %v5440 = vpop.f32.mrf.mxu0
        %v5441 = vadd.f32 0.0, %v5440
        %5442 = vmatmul.f32.gmra.mxu0 %v5041
        %v5443 = vpop.f32.mrf.mxu0
        %v5444 = vadd.f32 0.0, %v5443
        %5445 = vmatmul.f32.gmra.mxu0 %v5044
        %v5446 = vpop.f32.mrf.mxu0
        %v5447 = vadd.f32 0.0, %v5446
        %5448 = vmatmul.f32.gmra.mxu0 %v5047
        %v5449 = vpop.f32.mrf.mxu0
        %v5450 = vadd.f32 0.0, %v5449
        %5451 = vmatmul.f32.gmra.mxu0 %v5050
        %v5452 = vpop.f32.mrf.mxu0
        %v5453 = vadd.f32 0.0, %v5452
        %5454 = vmatmul.f32.gmra.mxu0 %v5053
        %v5455 = vpop.f32.mrf.mxu0
        %v5456 = vadd.f32 0.0, %v5455
        %5457 = vmatmul.f32.gmra.mxu0 %v5056
        %v5458 = vpop.f32.mrf.mxu0
        %v5459 = vadd.f32 0.0, %v5458
        %5460 = vmatmul.f32.gmra.mxu0 %v5059
        %v5461 = vpop.f32.mrf.mxu0
        %v5462 = vadd.f32 0.0, %v5461
        %5463 = vmatmul.f32.gmra.mxu0 %v5062
        %v5464 = vpop.f32.mrf.mxu0
        %v5465 = vadd.f32 0.0, %v5464
        %5466 = vmatmul.f32.gmra.mxu0 %v5065
        %v5467 = vpop.f32.mrf.mxu0
        %v5468 = vadd.f32 0.0, %v5467
        %5469 = vdwg.mxu0
        %v5470 = vadd.f32 %v5405, %v5435
        %v5471 = vadd.f32 %v5406, %v5438
        %v5472 = vadd.f32 %v5407, %v5441
        %v5473 = vadd.f32 %v5408, %v5444
        %v5474 = vadd.f32 %v5409, %v5447
        %v5475 = vadd.f32 %v5410, %v5450
        %v5476 = vadd.f32 %v5411, %v5453
        %v5477 = vadd.f32 %v5412, %v5456
        %v5478 = vadd.f32 %v5413, %v5459
        %v5479 = vadd.f32 %v5414, %v5462
        %v5480 = vadd.f32 %v5415, %v5465
        %v5481 = vadd.f32 %v5416, %v5468
        %5482 = vmatpush.msra.mxu0 0.0
        %5483 = vmatpush.msra.mxu0 0.0
        %5484 = vmatpush.msra.mxu0 0.0
        %5485 = vmatpush.msra.mxu0 0.0
        %5486 = vmatpush.msra.mxu0 %v4610
        %5487 = vmatpush.msra.mxu0 %v4608
        %5488 = vmatpush.msra.mxu0 %v4606
        %5489 = vmatpush.msra.mxu0 %v4604
        %5490 = vmatpush.msra.mxu0 %v4602
        %5491 = vmatpush.msra.mxu0 %v4600
        %5492 = vmatpush.msra.mxu0 %v4598
        %5493 = vmatpush.msra.mxu0 %v4596
        %5494 = vmatpush.msra.mxu0 %v4594
        %5495 = vmatpush.msra.mxu0 %v4592
        %5496 = vmatpush.msra.mxu0 %v4590
        %5497 = vmatpush.msra.mxu0 %v4588
        %5498 = vmatmul.f32.gmra.mxu0 %v5146
        %v5499 = vpop.f32.mrf.mxu0
        %v5500 = vadd.f32 0.0, %v5499
        %5501 = vmatmul.f32.gmra.mxu0 %v5149
        %v5502 = vpop.f32.mrf.mxu0
        %v5503 = vadd.f32 0.0, %v5502
        %5504 = vmatmul.f32.gmra.mxu0 %v5152
        %v5505 = vpop.f32.mrf.mxu0
        %v5506 = vadd.f32 0.0, %v5505
        %5507 = vmatmul.f32.gmra.mxu0 %v5155
        %v5508 = vpop.f32.mrf.mxu0
        %v5509 = vadd.f32 0.0, %v5508
        %5510 = vmatmul.f32.gmra.mxu0 %v5158
        %v5511 = vpop.f32.mrf.mxu0
        %v5512 = vadd.f32 0.0, %v5511
        %5513 = vmatmul.f32.gmra.mxu0 %v5161
        %v5514 = vpop.f32.mrf.mxu0
        %v5515 = vadd.f32 0.0, %v5514
        %5516 = vmatmul.f32.gmra.mxu0 %v5164
        %v5517 = vpop.f32.mrf.mxu0
        %v5518 = vadd.f32 0.0, %v5517
        %5519 = vmatmul.f32.gmra.mxu0 %v5167
        %v5520 = vpop.f32.mrf.mxu0
        %v5521 = vadd.f32 0.0, %v5520
        %5522 = vmatmul.f32.gmra.mxu0 %v5170
        %v5523 = vpop.f32.mrf.mxu0
        %v5524 = vadd.f32 0.0, %v5523
        %5525 = vmatmul.f32.gmra.mxu0 %v5173
        %v5526 = vpop.f32.mrf.mxu0
        %v5527 = vadd.f32 0.0, %v5526
        %5528 = vmatmul.f32.gmra.mxu0 %v5176
        %v5529 = vpop.f32.mrf.mxu0
        %v5530 = vadd.f32 0.0, %v5529
        %5531 = vmatmul.f32.gmra.mxu0 %v5179
        %v5532 = vpop.f32.mrf.mxu0
        %v5533 = vadd.f32 0.0, %v5532
        %5534 = vdwg.mxu0
        %v5535 = vadd.f32 %v5470, %v5500
        %v5536 = vadd.f32 %v5471, %v5503
        %v5537 = vadd.f32 %v5472, %v5506
        %v5538 = vadd.f32 %v5473, %v5509
        %v5539 = vadd.f32 %v5474, %v5512
        %v5540 = vadd.f32 %v5475, %v5515
        %v5541 = vadd.f32 %v5476, %v5518
        %v5542 = vadd.f32 %v5477, %v5521
        %v5543 = vadd.f32 %v5478, %v5524
        %v5544 = vadd.f32 %v5479, %v5527
        %v5545 = vadd.f32 %v5480, %v5530
        %v5546 = vadd.f32 %v5481, %v5533
        %v5547 = vmax.f32 %v5234, %v5535
        %v5548 = vmax.f32 %v5235, %v5536
        %v5549 = vmax.f32 %v5236, %v5537
        %v5550 = vmax.f32 %v5237, %v5538
        %v5551 = vmax.f32 %v5238, %v5539
        %v5552 = vmax.f32 %v5239, %v5540
        %v5553 = vmax.f32 %v5240, %v5541
        %v5554 = vmax.f32 %v5241, %v5542
        %v5555 = vmax.f32 %v5242, %v5543
        %v5556 = vmax.f32 %v5243, %v5544
        %v5557 = vmax.f32 %v5244, %v5545
        %v5558 = vmax.f32 %v5245, %v5546
        %v5559 = vmax.f32 %v4688, %v5547
        %v5560 = vmax.f32 %v4689, %v5548
        %v5561 = vmax.f32 %v4690, %v5549
        %v5562 = vmax.f32 %v4691, %v5550
        %v5563 = vmax.f32 %v4692, %v5551
        %v5564 = vmax.f32 %v4693, %v5552
        %v5565 = vmax.f32 %v4694, %v5553
        %v5566 = vmax.f32 %v4695, %v5554
        %v5567 = vmax.f32 %v4696, %v5555
        %v5568 = vmax.f32 %v4697, %v5556
        %v5569 = vmax.f32 %v4698, %v5557
        %v5570 = vmax.f32 %v4699, %v5558
        %v5571 = vld [vmem:[%s4] sm:$0xff]
        %v5572 = vld [vmem:[%s4 + $0x8] sm:$0xff]
        %v5573 = vld [vmem:[%s4 + $0x10] sm:$0xff]
        %v5574 = vld [vmem:[%s4 + $0x18] sm:$0xff]
        %v5575 = vld [vmem:[%s4 + $0x20] sm:$0xff]
        %v5576 = vld [vmem:[%s4 + $0x28] sm:$0xff]
        %v5577 = vld [vmem:[%s4 + $0x30] sm:$0xff]
        %v5578 = vld [vmem:[%s4 + $0x38] sm:$0xff]
        %v5579 = vld [vmem:[%s4 + $0x40] sm:$0xff]
        %v5580 = vld [vmem:[%s4 + $0x48] sm:$0xff]
        %v5581 = vld [vmem:[%s4 + $0x50] sm:$0xff]
        %v5582 = vld [vmem:[%s4 + $0x58] sm:$0xff]
        %5584 = vset.pattern.permute.xlu0 0
        %5585 = vperm.xlu0 %5584, %v5571
        %v5586 = vpop.permute.xlu0 %5585
        %5589 = vset.pattern.permute.xlu0 0
        %5590 = vperm.xlu0 %5589, %v5572
        %v5591 = vpop.permute.xlu0 %5590
        %5594 = vset.pattern.permute.xlu0 0
        %5595 = vperm.xlu0 %5594, %v5573
        %v5596 = vpop.permute.xlu0 %5595
        %5599 = vset.pattern.permute.xlu0 0
        %5600 = vperm.xlu0 %5599, %v5574
        %v5601 = vpop.permute.xlu0 %5600
        %5604 = vset.pattern.permute.xlu0 0
        %5605 = vperm.xlu0 %5604, %v5575
        %v5606 = vpop.permute.xlu0 %5605
        %5609 = vset.pattern.permute.xlu0 0
        %5610 = vperm.xlu0 %5609, %v5576
        %v5611 = vpop.permute.xlu0 %5610
        %5614 = vset.pattern.permute.xlu0 0
        %5615 = vperm.xlu0 %5614, %v5577
        %v5616 = vpop.permute.xlu0 %5615
        %5619 = vset.pattern.permute.xlu0 0
        %5620 = vperm.xlu0 %5619, %v5578
        %v5621 = vpop.permute.xlu0 %5620
        %5624 = vset.pattern.permute.xlu0 0
        %5625 = vperm.xlu0 %5624, %v5579
        %v5626 = vpop.permute.xlu0 %5625
        %5629 = vset.pattern.permute.xlu0 0
        %5630 = vperm.xlu0 %5629, %v5580
        %v5631 = vpop.permute.xlu0 %5630
        %5634 = vset.pattern.permute.xlu0 0
        %5635 = vperm.xlu0 %5634, %v5581
        %v5636 = vpop.permute.xlu0 %5635
        %5639 = vset.pattern.permute.xlu0 0
        %5640 = vperm.xlu0 %5639, %v5582
        %v5641 = vpop.permute.xlu0 %5640
        %v5643 = vadd.f32 %v5559, %v5586
        %v5644 = vadd.f32 %v5560, %v5591
        %v5645 = vadd.f32 %v5561, %v5596
        %v5646 = vadd.f32 %v5562, %v5601
        %v5647 = vadd.f32 %v5563, %v5606
        %v5648 = vadd.f32 %v5564, %v5611
        %v5649 = vadd.f32 %v5565, %v5616
        %v5650 = vadd.f32 %v5566, %v5621
        %v5651 = vadd.f32 %v5567, %v5626
        %v5652 = vadd.f32 %v5568, %v5631
        %v5653 = vadd.f32 %v5569, %v5636
        %v5654 = vadd.f32 %v5570, %v5641
        %v5655 = vmax.f32 %v5643, 0.0
        %v5656 = vmax.f32 %v5644, 0.0
        %v5657 = vmax.f32 %v5645, 0.0
        %v5658 = vmax.f32 %v5646, 0.0
        %v5659 = vmax.f32 %v5647, 0.0
        %v5660 = vmax.f32 %v5648, 0.0
        %v5661 = vmax.f32 %v5649, 0.0
        %v5662 = vmax.f32 %v5650, 0.0
        %v5663 = vmax.f32 %v5651, 0.0
        %v5664 = vmax.f32 %v5652, 0.0
        %v5665 = vmax.f32 %v5653, 0.0
        %v5666 = vmax.f32 %v5654, 0.0
        %v5667 = vld [vmem:[#allocation2] sm:$0xff]
        %v5668 = vld [vmem:[#allocation2 + $0x8] sm:$0xff]
        %v5669 = vld [vmem:[#allocation2 + $0x10] sm:$0xff]
        %v5670 = vld [vmem:[#allocation2 + $0x18] sm:$0xff]
        %v5671 = vld [vmem:[#allocation2 + $0x20] sm:$0xff]
        %v5672 = vld [vmem:[#allocation2 + $0x28] sm:$0xff]
        %v5673 = vld [vmem:[#allocation2 + $0x30] sm:$0xff]
        %v5674 = vld [vmem:[#allocation2 + $0x38] sm:$0xff]
        %v5675 = vld [vmem:[#allocation2 + $0x40] sm:$0xff]
        %v5676 = vld [vmem:[#allocation2 + $0x48] sm:$0xff]
        %v5677 = vld [vmem:[#allocation2 + $0x50] sm:$0xff]
        %v5678 = vld [vmem:[#allocation2 + $0x58] sm:$0xff]
        %v5679 = vld [vmem:[#allocation2 + $0x60] sm:$0xff]
        %v5680 = vld [vmem:[#allocation2 + $0x68] sm:$0xff]
        %v5681 = vld [vmem:[#allocation2 + $0x70] sm:$0xff]
        %s5682 = scalar_lea.vmem [#allocation2], 120
        %v5683 = vld [vmem:[%s5682] sm:$0xff]
        %v5684 = vld [vmem:[%s5682 + $0x8] sm:$0xff]
        %v5685 = vld [vmem:[%s5682 + $0x10] sm:$0xff]
        %v5686 = vld [vmem:[%s5682 + $0x18] sm:$0xff]
        %v5687 = vld [vmem:[%s5682 + $0x20] sm:$0xff]
        %v5688 = vld [vmem:[%s5682 + $0x28] sm:$0xff]
        %v5689 = vld [vmem:[%s5682 + $0x30] sm:$0xff]
        %v5690 = vld [vmem:[%s5682 + $0x38] sm:$0xff]
        %v5691 = vld [vmem:[%s5682 + $0x40] sm:$0xff]
        %v5692 = vld [vmem:[%s5682 + $0x48] sm:$0xff]
        %v5693 = vld [vmem:[%s5682 + $0x50] sm:$0xff]
        %v5694 = vld [vmem:[%s5682 + $0x58] sm:$0xff]
        %v5695 = vld [vmem:[%s5682 + $0x60] sm:$0xff]
        %v5696 = vld [vmem:[%s5682 + $0x68] sm:$0xff]
        %v5697 = vld [vmem:[%s5682 + $0x70] sm:$0xff]
        %5710 = vrot.lane.b32.xlu0 %v5655, 124
        %v5711 = vpop.permute.xlu0 %5710
        %5712 = vrot.lane.b32.xlu0 %v5656, 124
        %v5713 = vpop.permute.xlu0 %5712
        %5714 = vrot.lane.b32.xlu0 %v5657, 124
        %v5715 = vpop.permute.xlu0 %5714
        %5716 = vrot.lane.b32.xlu0 %v5658, 124
        %v5717 = vpop.permute.xlu0 %5716
        %5718 = vrot.lane.b32.xlu0 %v5659, 124
        %v5719 = vpop.permute.xlu0 %5718
        %5720 = vrot.lane.b32.xlu0 %v5660, 124
        %v5721 = vpop.permute.xlu0 %5720
        %5722 = vrot.lane.b32.xlu0 %v5661, 124
        %v5723 = vpop.permute.xlu0 %5722
        %5724 = vrot.lane.b32.xlu0 %v5662, 124
        %v5725 = vpop.permute.xlu0 %5724
        %5726 = vrot.lane.b32.xlu0 %v5663, 124
        %v5727 = vpop.permute.xlu0 %5726
        %5728 = vrot.lane.b32.xlu0 %v5664, 124
        %v5729 = vpop.permute.xlu0 %5728
        %5730 = vrot.lane.b32.xlu0 %v5665, 124
        %v5731 = vpop.permute.xlu0 %5730
        %5732 = vrot.lane.b32.xlu0 %v5666, 124
        %v5733 = vpop.permute.xlu0 %5732
        %v5747 = vsel %vm3698, %v5683, 0
        %v5750 = vsel %vm3698, %v5684, 0
        %v5753 = vsel %vm3698, %v5685, 0
        %v5756 = vsel %vm3698, %v5686, 0
        %v5759 = vsel %vm3698, %v5687, 0
        %v5762 = vsel %vm3698, %v5688, 0
        %v5765 = vsel %vm3698, %v5689, 0
        %v5768 = vsel %vm3698, %v5690, 0
        %v5771 = vsel %vm3698, %v5691, 0
        %v5774 = vsel %vm3698, %v5692, 0
        %v5777 = vsel %vm3698, %v5693, 0
        %v5780 = vsel %vm3698, %v5694, 0
        %v5783 = vsel %vm3698, %v5695, 0
        %v5786 = vsel %vm3698, %v5696, 0
        %v5789 = vsel %vm3698, %v5697, 0
        %5791 = vmatpush.msra.mxu0 0.0
        %5792 = vmatpush.msra.mxu0 0.0
        %5793 = vmatpush.msra.mxu0 0.0
        %5794 = vmatpush.msra.mxu0 0.0
        %5795 = vmatpush.msra.mxu0 %v5733
        %5796 = vmatpush.msra.mxu0 %v5731
        %5797 = vmatpush.msra.mxu0 %v5729
        %5798 = vmatpush.msra.mxu0 %v5727
        %5799 = vmatpush.msra.mxu0 %v5725
        %5800 = vmatpush.msra.mxu0 %v5723
        %5801 = vmatpush.msra.mxu0 %v5721
        %5802 = vmatpush.msra.mxu0 %v5719
        %5803 = vmatpush.msra.mxu0 %v5717
        %5804 = vmatpush.msra.mxu0 %v5715
        %5805 = vmatpush.msra.mxu0 %v5713
        %5806 = vmatpush.msra.mxu0 %v5711
        %5807 = vmatmul.f32.gmra.mxu0 %v5747
        %v5808 = vpop.f32.mrf.mxu0
        %v5809 = vadd.f32 0.0, %v5808
        %5810 = vmatmul.f32.gmra.mxu0 %v5750
        %v5811 = vpop.f32.mrf.mxu0
        %v5812 = vadd.f32 0.0, %v5811
        %5813 = vmatmul.f32.gmra.mxu0 %v5753
        %v5814 = vpop.f32.mrf.mxu0
        %v5815 = vadd.f32 0.0, %v5814
        %5816 = vmatmul.f32.gmra.mxu0 %v5756
        %v5817 = vpop.f32.mrf.mxu0
        %v5818 = vadd.f32 0.0, %v5817
        %5819 = vmatmul.f32.gmra.mxu0 %v5759
        %v5820 = vpop.f32.mrf.mxu0
        %v5821 = vadd.f32 0.0, %v5820
        %5822 = vmatmul.f32.gmra.mxu0 %v5762
        %v5823 = vpop.f32.mrf.mxu0
        %v5824 = vadd.f32 0.0, %v5823
        %5825 = vmatmul.f32.gmra.mxu0 %v5765
        %v5826 = vpop.f32.mrf.mxu0
        %v5827 = vadd.f32 0.0, %v5826
        %5828 = vmatmul.f32.gmra.mxu0 %v5768
        %v5829 = vpop.f32.mrf.mxu0
        %v5830 = vadd.f32 0.0, %v5829
        %5831 = vmatmul.f32.gmra.mxu0 %v5771
        %v5832 = vpop.f32.mrf.mxu0
        %v5833 = vadd.f32 0.0, %v5832
        %5834 = vmatmul.f32.gmra.mxu0 %v5774
        %v5835 = vpop.f32.mrf.mxu0
        %v5836 = vadd.f32 0.0, %v5835
        %5837 = vmatmul.f32.gmra.mxu0 %v5777
        %v5838 = vpop.f32.mrf.mxu0
        %v5839 = vadd.f32 0.0, %v5838
        %5840 = vmatmul.f32.gmra.mxu0 %v5780
        %v5841 = vpop.f32.mrf.mxu0
        %v5842 = vadd.f32 0.0, %v5841
        %5843 = vmatmul.f32.gmra.mxu0 %v5783
        %v5844 = vpop.f32.mrf.mxu0
        %v5845 = vadd.f32 0.0, %v5844
        %5846 = vmatmul.f32.gmra.mxu0 %v5786
        %v5847 = vpop.f32.mrf.mxu0
        %v5848 = vadd.f32 0.0, %v5847
        %5849 = vmatmul.f32.gmra.mxu0 %v5789
        %v5850 = vpop.f32.mrf.mxu0
        %v5851 = vadd.f32 0.0, %v5850
        %5852 = vdwg.mxu0
        %v5854 = vsel %vm3698, %v5667, 0
        %v5857 = vsel %vm3698, %v5668, 0
        %v5860 = vsel %vm3698, %v5669, 0
        %v5863 = vsel %vm3698, %v5670, 0
        %v5866 = vsel %vm3698, %v5671, 0
        %v5869 = vsel %vm3698, %v5672, 0
        %v5872 = vsel %vm3698, %v5673, 0
        %v5875 = vsel %vm3698, %v5674, 0
        %v5878 = vsel %vm3698, %v5675, 0
        %v5881 = vsel %vm3698, %v5676, 0
        %v5884 = vsel %vm3698, %v5677, 0
        %v5887 = vsel %vm3698, %v5678, 0
        %v5890 = vsel %vm3698, %v5679, 0
        %v5893 = vsel %vm3698, %v5680, 0
        %v5896 = vsel %vm3698, %v5681, 0
        %5898 = vmatpush.msra.mxu0 0.0
        %5899 = vmatpush.msra.mxu0 0.0
        %5900 = vmatpush.msra.mxu0 0.0
        %5901 = vmatpush.msra.mxu0 0.0
        %5902 = vmatpush.msra.mxu0 %v5666
        %5903 = vmatpush.msra.mxu0 %v5665
        %5904 = vmatpush.msra.mxu0 %v5664
        %5905 = vmatpush.msra.mxu0 %v5663
        %5906 = vmatpush.msra.mxu0 %v5662
        %5907 = vmatpush.msra.mxu0 %v5661
        %5908 = vmatpush.msra.mxu0 %v5660
        %5909 = vmatpush.msra.mxu0 %v5659
        %5910 = vmatpush.msra.mxu0 %v5658
        %5911 = vmatpush.msra.mxu0 %v5657
        %5912 = vmatpush.msra.mxu0 %v5656
        %5913 = vmatpush.msra.mxu0 %v5655
        %5914 = vmatmul.f32.gmra.mxu0 %v5854
        %v5915 = vpop.f32.mrf.mxu0
        %v5916 = vadd.f32 %v5809, %v5915
        %5917 = vmatmul.f32.gmra.mxu0 %v5857
        %v5918 = vpop.f32.mrf.mxu0
        %v5919 = vadd.f32 %v5812, %v5918
        %5920 = vmatmul.f32.gmra.mxu0 %v5860
        %v5921 = vpop.f32.mrf.mxu0
        %v5922 = vadd.f32 %v5815, %v5921
        %5923 = vmatmul.f32.gmra.mxu0 %v5863
        %v5924 = vpop.f32.mrf.mxu0
        %v5925 = vadd.f32 %v5818, %v5924
        %5926 = vmatmul.f32.gmra.mxu0 %v5866
        %v5927 = vpop.f32.mrf.mxu0
        %v5928 = vadd.f32 %v5821, %v5927
        %5929 = vmatmul.f32.gmra.mxu0 %v5869
        %v5930 = vpop.f32.mrf.mxu0
        %v5931 = vadd.f32 %v5824, %v5930
        %5932 = vmatmul.f32.gmra.mxu0 %v5872
        %v5933 = vpop.f32.mrf.mxu0
        %v5934 = vadd.f32 %v5827, %v5933
        %5935 = vmatmul.f32.gmra.mxu0 %v5875
        %v5936 = vpop.f32.mrf.mxu0
        %v5937 = vadd.f32 %v5830, %v5936
        %5938 = vmatmul.f32.gmra.mxu0 %v5878
        %v5939 = vpop.f32.mrf.mxu0
        %v5940 = vadd.f32 %v5833, %v5939
        %5941 = vmatmul.f32.gmra.mxu0 %v5881
        %v5942 = vpop.f32.mrf.mxu0
        %v5943 = vadd.f32 %v5836, %v5942
        %5944 = vmatmul.f32.gmra.mxu0 %v5884
        %v5945 = vpop.f32.mrf.mxu0
        %v5946 = vadd.f32 %v5839, %v5945
        %5947 = vmatmul.f32.gmra.mxu0 %v5887
        %v5948 = vpop.f32.mrf.mxu0
        %v5949 = vadd.f32 %v5842, %v5948
        %5950 = vmatmul.f32.gmra.mxu0 %v5890
        %v5951 = vpop.f32.mrf.mxu0
        %v5952 = vadd.f32 %v5845, %v5951
        %5953 = vmatmul.f32.gmra.mxu0 %v5893
        %v5954 = vpop.f32.mrf.mxu0
        %v5955 = vadd.f32 %v5848, %v5954
        %5956 = vmatmul.f32.gmra.mxu0 %v5896
        %v5957 = vpop.f32.mrf.mxu0
        %v5958 = vadd.f32 %v5851, %v5957
        %5959 = vdwg.mxu0
        %s5960 = scalar_lea.vmem [#allocation2], 240
        %v5961 = vld [vmem:[%s5960] sm:$0xff]
        %v5962 = vld [vmem:[%s5960 + $0x8] sm:$0xff]
        %v5963 = vld [vmem:[%s5960 + $0x10] sm:$0xff]
        %v5964 = vld [vmem:[%s5960 + $0x18] sm:$0xff]
        %v5965 = vld [vmem:[%s5960 + $0x20] sm:$0xff]
        %v5966 = vld [vmem:[%s5960 + $0x28] sm:$0xff]
        %v5967 = vld [vmem:[%s5960 + $0x30] sm:$0xff]
        %v5968 = vld [vmem:[%s5960 + $0x38] sm:$0xff]
        %v5969 = vld [vmem:[%s5960 + $0x40] sm:$0xff]
        %v5970 = vld [vmem:[%s5960 + $0x48] sm:$0xff]
        %v5971 = vld [vmem:[%s5960 + $0x50] sm:$0xff]
        %v5972 = vld [vmem:[%s5960 + $0x58] sm:$0xff]
        %v5973 = vld [vmem:[%s5960 + $0x60] sm:$0xff]
        %v5974 = vld [vmem:[%s5960 + $0x68] sm:$0xff]
        %v5975 = vld [vmem:[%s5960 + $0x70] sm:$0xff]
        %5976 = vrot.lane.b32.xlu0 %v5655, 120
        %v5977 = vpop.permute.xlu0 %5976
        %5978 = vrot.lane.b32.xlu0 %v5656, 120
        %v5979 = vpop.permute.xlu0 %5978
        %5980 = vrot.lane.b32.xlu0 %v5657, 120
        %v5981 = vpop.permute.xlu0 %5980
        %5982 = vrot.lane.b32.xlu0 %v5658, 120
        %v5983 = vpop.permute.xlu0 %5982
        %5984 = vrot.lane.b32.xlu0 %v5659, 120
        %v5985 = vpop.permute.xlu0 %5984
        %5986 = vrot.lane.b32.xlu0 %v5660, 120
        %v5987 = vpop.permute.xlu0 %5986
        %5988 = vrot.lane.b32.xlu0 %v5661, 120
        %v5989 = vpop.permute.xlu0 %5988
        %5990 = vrot.lane.b32.xlu0 %v5662, 120
        %v5991 = vpop.permute.xlu0 %5990
        %5992 = vrot.lane.b32.xlu0 %v5663, 120
        %v5993 = vpop.permute.xlu0 %5992
        %5994 = vrot.lane.b32.xlu0 %v5664, 120
        %v5995 = vpop.permute.xlu0 %5994
        %5996 = vrot.lane.b32.xlu0 %v5665, 120
        %v5997 = vpop.permute.xlu0 %5996
        %5998 = vrot.lane.b32.xlu0 %v5666, 120
        %v5999 = vpop.permute.xlu0 %5998
        %v6013 = vsel %vm3698, %v5961, 0
        %v6016 = vsel %vm3698, %v5962, 0
        %v6019 = vsel %vm3698, %v5963, 0
        %v6022 = vsel %vm3698, %v5964, 0
        %v6025 = vsel %vm3698, %v5965, 0
        %v6028 = vsel %vm3698, %v5966, 0
        %v6031 = vsel %vm3698, %v5967, 0
        %v6034 = vsel %vm3698, %v5968, 0
        %v6037 = vsel %vm3698, %v5969, 0
        %v6040 = vsel %vm3698, %v5970, 0
        %v6043 = vsel %vm3698, %v5971, 0
        %v6046 = vsel %vm3698, %v5972, 0
        %v6049 = vsel %vm3698, %v5973, 0
        %v6052 = vsel %vm3698, %v5974, 0
        %v6055 = vsel %vm3698, %v5975, 0
        %6057 = vmatpush.msra.mxu0 0.0
        %6058 = vmatpush.msra.mxu0 0.0
        %6059 = vmatpush.msra.mxu0 0.0
        %6060 = vmatpush.msra.mxu0 0.0
        %6061 = vmatpush.msra.mxu0 %v5999
        %6062 = vmatpush.msra.mxu0 %v5997
        %6063 = vmatpush.msra.mxu0 %v5995
        %6064 = vmatpush.msra.mxu0 %v5993
        %6065 = vmatpush.msra.mxu0 %v5991
        %6066 = vmatpush.msra.mxu0 %v5989
        %6067 = vmatpush.msra.mxu0 %v5987
        %6068 = vmatpush.msra.mxu0 %v5985
        %6069 = vmatpush.msra.mxu0 %v5983
        %6070 = vmatpush.msra.mxu0 %v5981
        %6071 = vmatpush.msra.mxu0 %v5979
        %6072 = vmatpush.msra.mxu0 %v5977
        %6073 = vmatmul.f32.gmra.mxu0 %v6013
        %v6074 = vpop.f32.mrf.mxu0
        %v6075 = vadd.f32 0.0, %v6074
        %6076 = vmatmul.f32.gmra.mxu0 %v6016
        %v6077 = vpop.f32.mrf.mxu0
        %v6078 = vadd.f32 0.0, %v6077
        %6079 = vmatmul.f32.gmra.mxu0 %v6019
        %v6080 = vpop.f32.mrf.mxu0
        %v6081 = vadd.f32 0.0, %v6080
        %6082 = vmatmul.f32.gmra.mxu0 %v6022
        %v6083 = vpop.f32.mrf.mxu0
        %v6084 = vadd.f32 0.0, %v6083
        %6085 = vmatmul.f32.gmra.mxu0 %v6025
        %v6086 = vpop.f32.mrf.mxu0
        %v6087 = vadd.f32 0.0, %v6086
        %6088 = vmatmul.f32.gmra.mxu0 %v6028
        %v6089 = vpop.f32.mrf.mxu0
        %v6090 = vadd.f32 0.0, %v6089
        %6091 = vmatmul.f32.gmra.mxu0 %v6031
        %v6092 = vpop.f32.mrf.mxu0
        %v6093 = vadd.f32 0.0, %v6092
        %6094 = vmatmul.f32.gmra.mxu0 %v6034
        %v6095 = vpop.f32.mrf.mxu0
        %v6096 = vadd.f32 0.0, %v6095
        %6097 = vmatmul.f32.gmra.mxu0 %v6037
        %v6098 = vpop.f32.mrf.mxu0
        %v6099 = vadd.f32 0.0, %v6098
        %6100 = vmatmul.f32.gmra.mxu0 %v6040
        %v6101 = vpop.f32.mrf.mxu0
        %v6102 = vadd.f32 0.0, %v6101
        %6103 = vmatmul.f32.gmra.mxu0 %v6043
        %v6104 = vpop.f32.mrf.mxu0
        %v6105 = vadd.f32 0.0, %v6104
        %6106 = vmatmul.f32.gmra.mxu0 %v6046
        %v6107 = vpop.f32.mrf.mxu0
        %v6108 = vadd.f32 0.0, %v6107
        %6109 = vmatmul.f32.gmra.mxu0 %v6049
        %v6110 = vpop.f32.mrf.mxu0
        %v6111 = vadd.f32 0.0, %v6110
        %6112 = vmatmul.f32.gmra.mxu0 %v6052
        %v6113 = vpop.f32.mrf.mxu0
        %v6114 = vadd.f32 0.0, %v6113
        %6115 = vmatmul.f32.gmra.mxu0 %v6055
        %v6116 = vpop.f32.mrf.mxu0
        %v6117 = vadd.f32 0.0, %v6116
        %6118 = vdwg.mxu0
        %v6119 = vadd.f32 %v5916, %v6075
        %v6120 = vadd.f32 %v5919, %v6078
        %v6121 = vadd.f32 %v5922, %v6081
        %v6122 = vadd.f32 %v5925, %v6084
        %v6123 = vadd.f32 %v5928, %v6087
        %v6124 = vadd.f32 %v5931, %v6090
        %v6125 = vadd.f32 %v5934, %v6093
        %v6126 = vadd.f32 %v5937, %v6096
        %v6127 = vadd.f32 %v5940, %v6099
        %v6128 = vadd.f32 %v5943, %v6102
        %v6129 = vadd.f32 %v5946, %v6105
        %v6130 = vadd.f32 %v5949, %v6108
        %v6131 = vadd.f32 %v5952, %v6111
        %v6132 = vadd.f32 %v5955, %v6114
        %v6133 = vadd.f32 %v5958, %v6117
        %s6134 = scalar_lea.vmem [#allocation2], 360
        %v6135 = vld [vmem:[%s6134] sm:$0xff]
        %v6136 = vld [vmem:[%s6134 + $0x8] sm:$0xff]
        %v6137 = vld [vmem:[%s6134 + $0x10] sm:$0xff]
        %v6138 = vld [vmem:[%s6134 + $0x18] sm:$0xff]
        %v6139 = vld [vmem:[%s6134 + $0x20] sm:$0xff]
        %v6140 = vld [vmem:[%s6134 + $0x28] sm:$0xff]
        %v6141 = vld [vmem:[%s6134 + $0x30] sm:$0xff]
        %v6142 = vld [vmem:[%s6134 + $0x38] sm:$0xff]
        %v6143 = vld [vmem:[%s6134 + $0x40] sm:$0xff]
        %v6144 = vld [vmem:[%s6134 + $0x48] sm:$0xff]
        %v6145 = vld [vmem:[%s6134 + $0x50] sm:$0xff]
        %v6146 = vld [vmem:[%s6134 + $0x58] sm:$0xff]
        %v6147 = vld [vmem:[%s6134 + $0x60] sm:$0xff]
        %v6148 = vld [vmem:[%s6134 + $0x68] sm:$0xff]
        %v6149 = vld [vmem:[%s6134 + $0x70] sm:$0xff]
        %6150 = vrot.lane.b32.xlu0 %v5655, 116
        %v6151 = vpop.permute.xlu0 %6150
        %6152 = vrot.lane.b32.xlu0 %v5656, 116
        %v6153 = vpop.permute.xlu0 %6152
        %6154 = vrot.lane.b32.xlu0 %v5657, 116
        %v6155 = vpop.permute.xlu0 %6154
        %6156 = vrot.lane.b32.xlu0 %v5658, 116
        %v6157 = vpop.permute.xlu0 %6156
        %6158 = vrot.lane.b32.xlu0 %v5659, 116
        %v6159 = vpop.permute.xlu0 %6158
        %6160 = vrot.lane.b32.xlu0 %v5660, 116
        %v6161 = vpop.permute.xlu0 %6160
        %6162 = vrot.lane.b32.xlu0 %v5661, 116
        %v6163 = vpop.permute.xlu0 %6162
        %6164 = vrot.lane.b32.xlu0 %v5662, 116
        %v6165 = vpop.permute.xlu0 %6164
        %6166 = vrot.lane.b32.xlu0 %v5663, 116
        %v6167 = vpop.permute.xlu0 %6166
        %6168 = vrot.lane.b32.xlu0 %v5664, 116
        %v6169 = vpop.permute.xlu0 %6168
        %6170 = vrot.lane.b32.xlu0 %v5665, 116
        %v6171 = vpop.permute.xlu0 %6170
        %6172 = vrot.lane.b32.xlu0 %v5666, 116
        %v6173 = vpop.permute.xlu0 %6172
        %v6187 = vsel %vm3698, %v6135, 0
        %v6190 = vsel %vm3698, %v6136, 0
        %v6193 = vsel %vm3698, %v6137, 0
        %v6196 = vsel %vm3698, %v6138, 0
        %v6199 = vsel %vm3698, %v6139, 0
        %v6202 = vsel %vm3698, %v6140, 0
        %v6205 = vsel %vm3698, %v6141, 0
        %v6208 = vsel %vm3698, %v6142, 0
        %v6211 = vsel %vm3698, %v6143, 0
        %v6214 = vsel %vm3698, %v6144, 0
        %v6217 = vsel %vm3698, %v6145, 0
        %v6220 = vsel %vm3698, %v6146, 0
        %v6223 = vsel %vm3698, %v6147, 0
        %v6226 = vsel %vm3698, %v6148, 0
        %v6229 = vsel %vm3698, %v6149, 0
        %6231 = vmatpush.msra.mxu0 0.0
        %6232 = vmatpush.msra.mxu0 0.0
        %6233 = vmatpush.msra.mxu0 0.0
        %6234 = vmatpush.msra.mxu0 0.0
        %6235 = vmatpush.msra.mxu0 %v6173
        %6236 = vmatpush.msra.mxu0 %v6171
        %6237 = vmatpush.msra.mxu0 %v6169
        %6238 = vmatpush.msra.mxu0 %v6167
        %6239 = vmatpush.msra.mxu0 %v6165
        %6240 = vmatpush.msra.mxu0 %v6163
        %6241 = vmatpush.msra.mxu0 %v6161
        %6242 = vmatpush.msra.mxu0 %v6159
        %6243 = vmatpush.msra.mxu0 %v6157
        %6244 = vmatpush.msra.mxu0 %v6155
        %6245 = vmatpush.msra.mxu0 %v6153
        %6246 = vmatpush.msra.mxu0 %v6151
        %6247 = vmatmul.f32.gmra.mxu0 %v6187
        %v6248 = vpop.f32.mrf.mxu0
        %v6249 = vadd.f32 0.0, %v6248
        %6250 = vmatmul.f32.gmra.mxu0 %v6190
        %v6251 = vpop.f32.mrf.mxu0
        %v6252 = vadd.f32 0.0, %v6251
        %6253 = vmatmul.f32.gmra.mxu0 %v6193
        %v6254 = vpop.f32.mrf.mxu0
        %v6255 = vadd.f32 0.0, %v6254
        %6256 = vmatmul.f32.gmra.mxu0 %v6196
        %v6257 = vpop.f32.mrf.mxu0
        %v6258 = vadd.f32 0.0, %v6257
        %6259 = vmatmul.f32.gmra.mxu0 %v6199
        %v6260 = vpop.f32.mrf.mxu0
        %v6261 = vadd.f32 0.0, %v6260
        %6262 = vmatmul.f32.gmra.mxu0 %v6202
        %v6263 = vpop.f32.mrf.mxu0
        %v6264 = vadd.f32 0.0, %v6263
        %6265 = vmatmul.f32.gmra.mxu0 %v6205
        %v6266 = vpop.f32.mrf.mxu0
        %v6267 = vadd.f32 0.0, %v6266
        %6268 = vmatmul.f32.gmra.mxu0 %v6208
        %v6269 = vpop.f32.mrf.mxu0
        %v6270 = vadd.f32 0.0, %v6269
        %6271 = vmatmul.f32.gmra.mxu0 %v6211
        %v6272 = vpop.f32.mrf.mxu0
        %v6273 = vadd.f32 0.0, %v6272
        %6274 = vmatmul.f32.gmra.mxu0 %v6214
        %v6275 = vpop.f32.mrf.mxu0
        %v6276 = vadd.f32 0.0, %v6275
        %6277 = vmatmul.f32.gmra.mxu0 %v6217
        %v6278 = vpop.f32.mrf.mxu0
        %v6279 = vadd.f32 0.0, %v6278
        %6280 = vmatmul.f32.gmra.mxu0 %v6220
        %v6281 = vpop.f32.mrf.mxu0
        %v6282 = vadd.f32 0.0, %v6281
        %6283 = vmatmul.f32.gmra.mxu0 %v6223
        %v6284 = vpop.f32.mrf.mxu0
        %v6285 = vadd.f32 0.0, %v6284
        %6286 = vmatmul.f32.gmra.mxu0 %v6226
        %v6287 = vpop.f32.mrf.mxu0
        %v6288 = vadd.f32 0.0, %v6287
        %6289 = vmatmul.f32.gmra.mxu0 %v6229
        %v6290 = vpop.f32.mrf.mxu0
        %v6291 = vadd.f32 0.0, %v6290
        %6292 = vdwg.mxu0
        %v6293 = vadd.f32 %v6119, %v6249
        %v6294 = vadd.f32 %v6120, %v6252
        %v6295 = vadd.f32 %v6121, %v6255
        %v6296 = vadd.f32 %v6122, %v6258
        %v6297 = vadd.f32 %v6123, %v6261
        %v6298 = vadd.f32 %v6124, %v6264
        %v6299 = vadd.f32 %v6125, %v6267
        %v6300 = vadd.f32 %v6126, %v6270
        %v6301 = vadd.f32 %v6127, %v6273
        %v6302 = vadd.f32 %v6128, %v6276
        %v6303 = vadd.f32 %v6129, %v6279
        %v6304 = vadd.f32 %v6130, %v6282
        %v6305 = vadd.f32 %v6131, %v6285
        %v6306 = vadd.f32 %v6132, %v6288
        %v6307 = vadd.f32 %v6133, %v6291
        %s6308 = scalar_lea.vmem [#allocation2], 480
        %v6309 = vld [vmem:[%s6308] sm:$0xff]
        %v6310 = vld [vmem:[%s6308 + $0x8] sm:$0xff]
        %v6311 = vld [vmem:[%s6308 + $0x10] sm:$0xff]
        %v6312 = vld [vmem:[%s6308 + $0x18] sm:$0xff]
        %v6313 = vld [vmem:[%s6308 + $0x20] sm:$0xff]
        %v6314 = vld [vmem:[%s6308 + $0x28] sm:$0xff]
        %v6315 = vld [vmem:[%s6308 + $0x30] sm:$0xff]
        %v6316 = vld [vmem:[%s6308 + $0x38] sm:$0xff]
        %v6317 = vld [vmem:[%s6308 + $0x40] sm:$0xff]
        %v6318 = vld [vmem:[%s6308 + $0x48] sm:$0xff]
        %v6319 = vld [vmem:[%s6308 + $0x50] sm:$0xff]
        %v6320 = vld [vmem:[%s6308 + $0x58] sm:$0xff]
        %v6321 = vld [vmem:[%s6308 + $0x60] sm:$0xff]
        %v6322 = vld [vmem:[%s6308 + $0x68] sm:$0xff]
        %v6323 = vld [vmem:[%s6308 + $0x70] sm:$0xff]
        %6324 = vrot.lane.b32.xlu0 %v5655, 112
        %v6325 = vpop.permute.xlu0 %6324
        %6326 = vrot.lane.b32.xlu0 %v5656, 112
        %v6327 = vpop.permute.xlu0 %6326
        %6328 = vrot.lane.b32.xlu0 %v5657, 112
        %v6329 = vpop.permute.xlu0 %6328
        %6330 = vrot.lane.b32.xlu0 %v5658, 112
        %v6331 = vpop.permute.xlu0 %6330
        %6332 = vrot.lane.b32.xlu0 %v5659, 112
        %v6333 = vpop.permute.xlu0 %6332
        %6334 = vrot.lane.b32.xlu0 %v5660, 112
        %v6335 = vpop.permute.xlu0 %6334
        %6336 = vrot.lane.b32.xlu0 %v5661, 112
        %v6337 = vpop.permute.xlu0 %6336
        %6338 = vrot.lane.b32.xlu0 %v5662, 112
        %v6339 = vpop.permute.xlu0 %6338
        %6340 = vrot.lane.b32.xlu0 %v5663, 112
        %v6341 = vpop.permute.xlu0 %6340
        %6342 = vrot.lane.b32.xlu0 %v5664, 112
        %v6343 = vpop.permute.xlu0 %6342
        %6344 = vrot.lane.b32.xlu0 %v5665, 112
        %v6345 = vpop.permute.xlu0 %6344
        %6346 = vrot.lane.b32.xlu0 %v5666, 112
        %v6347 = vpop.permute.xlu0 %6346
        %v6361 = vsel %vm3698, %v6309, 0
        %v6364 = vsel %vm3698, %v6310, 0
        %v6367 = vsel %vm3698, %v6311, 0
        %v6370 = vsel %vm3698, %v6312, 0
        %v6373 = vsel %vm3698, %v6313, 0
        %v6376 = vsel %vm3698, %v6314, 0
        %v6379 = vsel %vm3698, %v6315, 0
        %v6382 = vsel %vm3698, %v6316, 0
        %v6385 = vsel %vm3698, %v6317, 0
        %v6388 = vsel %vm3698, %v6318, 0
        %v6391 = vsel %vm3698, %v6319, 0
        %v6394 = vsel %vm3698, %v6320, 0
        %v6397 = vsel %vm3698, %v6321, 0
        %v6400 = vsel %vm3698, %v6322, 0
        %v6403 = vsel %vm3698, %v6323, 0
        %6405 = vmatpush.msra.mxu0 0.0
        %6406 = vmatpush.msra.mxu0 0.0
        %6407 = vmatpush.msra.mxu0 0.0
        %6408 = vmatpush.msra.mxu0 0.0
        %6409 = vmatpush.msra.mxu0 %v6347
        %6410 = vmatpush.msra.mxu0 %v6345
        %6411 = vmatpush.msra.mxu0 %v6343
        %6412 = vmatpush.msra.mxu0 %v6341
        %6413 = vmatpush.msra.mxu0 %v6339
        %6414 = vmatpush.msra.mxu0 %v6337
        %6415 = vmatpush.msra.mxu0 %v6335
        %6416 = vmatpush.msra.mxu0 %v6333
        %6417 = vmatpush.msra.mxu0 %v6331
        %6418 = vmatpush.msra.mxu0 %v6329
        %6419 = vmatpush.msra.mxu0 %v6327
        %6420 = vmatpush.msra.mxu0 %v6325
        %6421 = vmatmul.f32.gmra.mxu0 %v6361
        %v6422 = vpop.f32.mrf.mxu0
        %v6423 = vadd.f32 0.0, %v6422
        %6424 = vmatmul.f32.gmra.mxu0 %v6364
        %v6425 = vpop.f32.mrf.mxu0
        %v6426 = vadd.f32 0.0, %v6425
        %6427 = vmatmul.f32.gmra.mxu0 %v6367
        %v6428 = vpop.f32.mrf.mxu0
        %v6429 = vadd.f32 0.0, %v6428
        %6430 = vmatmul.f32.gmra.mxu0 %v6370
        %v6431 = vpop.f32.mrf.mxu0
        %v6432 = vadd.f32 0.0, %v6431
        %6433 = vmatmul.f32.gmra.mxu0 %v6373
        %v6434 = vpop.f32.mrf.mxu0
        %v6435 = vadd.f32 0.0, %v6434
        %6436 = vmatmul.f32.gmra.mxu0 %v6376
        %v6437 = vpop.f32.mrf.mxu0
        %v6438 = vadd.f32 0.0, %v6437
        %6439 = vmatmul.f32.gmra.mxu0 %v6379
        %v6440 = vpop.f32.mrf.mxu0
        %v6441 = vadd.f32 0.0, %v6440
        %6442 = vmatmul.f32.gmra.mxu0 %v6382
        %v6443 = vpop.f32.mrf.mxu0
        %v6444 = vadd.f32 0.0, %v6443
        %6445 = vmatmul.f32.gmra.mxu0 %v6385
        %v6446 = vpop.f32.mrf.mxu0
        %v6447 = vadd.f32 0.0, %v6446
        %6448 = vmatmul.f32.gmra.mxu0 %v6388
        %v6449 = vpop.f32.mrf.mxu0
        %v6450 = vadd.f32 0.0, %v6449
        %6451 = vmatmul.f32.gmra.mxu0 %v6391
        %v6452 = vpop.f32.mrf.mxu0
        %v6453 = vadd.f32 0.0, %v6452
        %6454 = vmatmul.f32.gmra.mxu0 %v6394
        %v6455 = vpop.f32.mrf.mxu0
        %v6456 = vadd.f32 0.0, %v6455
        %6457 = vmatmul.f32.gmra.mxu0 %v6397
        %v6458 = vpop.f32.mrf.mxu0
        %v6459 = vadd.f32 0.0, %v6458
        %6460 = vmatmul.f32.gmra.mxu0 %v6400
        %v6461 = vpop.f32.mrf.mxu0
        %v6462 = vadd.f32 0.0, %v6461
        %6463 = vmatmul.f32.gmra.mxu0 %v6403
        %v6464 = vpop.f32.mrf.mxu0
        %v6465 = vadd.f32 0.0, %v6464
        %6466 = vdwg.mxu0
        %v6467 = vadd.f32 %v6293, %v6423
        %v6468 = vadd.f32 %v6294, %v6426
        %v6469 = vadd.f32 %v6295, %v6429
        %v6470 = vadd.f32 %v6296, %v6432
        %v6471 = vadd.f32 %v6297, %v6435
        %v6472 = vadd.f32 %v6298, %v6438
        %v6473 = vadd.f32 %v6299, %v6441
        %v6474 = vadd.f32 %v6300, %v6444
        %v6475 = vadd.f32 %v6301, %v6447
        %v6476 = vadd.f32 %v6302, %v6450
        %v6477 = vadd.f32 %v6303, %v6453
        %v6478 = vadd.f32 %v6304, %v6456
        %v6479 = vadd.f32 %v6305, %v6459
        %v6480 = vadd.f32 %v6306, %v6462
        %v6481 = vadd.f32 %v6307, %v6465
        %s6482 = scalar_lea.vmem [#allocation2], 600
        %v6483 = vld [vmem:[%s6482] sm:$0xff]
        %v6484 = vld [vmem:[%s6482 + $0x8] sm:$0xff]
        %v6485 = vld [vmem:[%s6482 + $0x10] sm:$0xff]
        %v6486 = vld [vmem:[%s6482 + $0x18] sm:$0xff]
        %v6487 = vld [vmem:[%s6482 + $0x20] sm:$0xff]
        %v6488 = vld [vmem:[%s6482 + $0x28] sm:$0xff]
        %v6489 = vld [vmem:[%s6482 + $0x30] sm:$0xff]
        %v6490 = vld [vmem:[%s6482 + $0x38] sm:$0xff]
        %v6491 = vld [vmem:[%s6482 + $0x40] sm:$0xff]
        %v6492 = vld [vmem:[%s6482 + $0x48] sm:$0xff]
        %v6493 = vld [vmem:[%s6482 + $0x50] sm:$0xff]
        %v6494 = vld [vmem:[%s6482 + $0x58] sm:$0xff]
        %v6495 = vld [vmem:[%s6482 + $0x60] sm:$0xff]
        %v6496 = vld [vmem:[%s6482 + $0x68] sm:$0xff]
        %v6497 = vld [vmem:[%s6482 + $0x70] sm:$0xff]
        %6498 = vrot.lane.b32.xlu0 %v5655, 108
        %v6499 = vpop.permute.xlu0 %6498
        %6500 = vrot.lane.b32.xlu0 %v5656, 108
        %v6501 = vpop.permute.xlu0 %6500
        %6502 = vrot.lane.b32.xlu0 %v5657, 108
        %v6503 = vpop.permute.xlu0 %6502
        %6504 = vrot.lane.b32.xlu0 %v5658, 108
        %v6505 = vpop.permute.xlu0 %6504
        %6506 = vrot.lane.b32.xlu0 %v5659, 108
        %v6507 = vpop.permute.xlu0 %6506
        %6508 = vrot.lane.b32.xlu0 %v5660, 108
        %v6509 = vpop.permute.xlu0 %6508
        %6510 = vrot.lane.b32.xlu0 %v5661, 108
        %v6511 = vpop.permute.xlu0 %6510
        %6512 = vrot.lane.b32.xlu0 %v5662, 108
        %v6513 = vpop.permute.xlu0 %6512
        %6514 = vrot.lane.b32.xlu0 %v5663, 108
        %v6515 = vpop.permute.xlu0 %6514
        %6516 = vrot.lane.b32.xlu0 %v5664, 108
        %v6517 = vpop.permute.xlu0 %6516
        %6518 = vrot.lane.b32.xlu0 %v5665, 108
        %v6519 = vpop.permute.xlu0 %6518
        %6520 = vrot.lane.b32.xlu0 %v5666, 108
        %v6521 = vpop.permute.xlu0 %6520
        %v6535 = vsel %vm3698, %v6483, 0
        %v6538 = vsel %vm3698, %v6484, 0
        %v6541 = vsel %vm3698, %v6485, 0
        %v6544 = vsel %vm3698, %v6486, 0
        %v6547 = vsel %vm3698, %v6487, 0
        %v6550 = vsel %vm3698, %v6488, 0
        %v6553 = vsel %vm3698, %v6489, 0
        %v6556 = vsel %vm3698, %v6490, 0
        %v6559 = vsel %vm3698, %v6491, 0
        %v6562 = vsel %vm3698, %v6492, 0
        %v6565 = vsel %vm3698, %v6493, 0
        %v6568 = vsel %vm3698, %v6494, 0
        %v6571 = vsel %vm3698, %v6495, 0
        %v6574 = vsel %vm3698, %v6496, 0
        %v6577 = vsel %vm3698, %v6497, 0
        %6579 = vmatpush.msra.mxu0 0.0
        %6580 = vmatpush.msra.mxu0 0.0
        %6581 = vmatpush.msra.mxu0 0.0
        %6582 = vmatpush.msra.mxu0 0.0
        %6583 = vmatpush.msra.mxu0 %v6521
        %6584 = vmatpush.msra.mxu0 %v6519
        %6585 = vmatpush.msra.mxu0 %v6517
        %6586 = vmatpush.msra.mxu0 %v6515
        %6587 = vmatpush.msra.mxu0 %v6513
        %6588 = vmatpush.msra.mxu0 %v6511
        %6589 = vmatpush.msra.mxu0 %v6509
        %6590 = vmatpush.msra.mxu0 %v6507
        %6591 = vmatpush.msra.mxu0 %v6505
        %6592 = vmatpush.msra.mxu0 %v6503
        %6593 = vmatpush.msra.mxu0 %v6501
        %6594 = vmatpush.msra.mxu0 %v6499
        %6595 = vmatmul.f32.gmra.mxu0 %v6535
        %v6596 = vpop.f32.mrf.mxu0
        %v6597 = vadd.f32 0.0, %v6596
        %6598 = vmatmul.f32.gmra.mxu0 %v6538
        %v6599 = vpop.f32.mrf.mxu0
        %v6600 = vadd.f32 0.0, %v6599
        %6601 = vmatmul.f32.gmra.mxu0 %v6541
        %v6602 = vpop.f32.mrf.mxu0
        %v6603 = vadd.f32 0.0, %v6602
        %6604 = vmatmul.f32.gmra.mxu0 %v6544
        %v6605 = vpop.f32.mrf.mxu0
        %v6606 = vadd.f32 0.0, %v6605
        %6607 = vmatmul.f32.gmra.mxu0 %v6547
        %v6608 = vpop.f32.mrf.mxu0
        %v6609 = vadd.f32 0.0, %v6608
        %6610 = vmatmul.f32.gmra.mxu0 %v6550
        %v6611 = vpop.f32.mrf.mxu0
        %v6612 = vadd.f32 0.0, %v6611
        %6613 = vmatmul.f32.gmra.mxu0 %v6553
        %v6614 = vpop.f32.mrf.mxu0
        %v6615 = vadd.f32 0.0, %v6614
        %6616 = vmatmul.f32.gmra.mxu0 %v6556
        %v6617 = vpop.f32.mrf.mxu0
        %v6618 = vadd.f32 0.0, %v6617
        %6619 = vmatmul.f32.gmra.mxu0 %v6559
        %v6620 = vpop.f32.mrf.mxu0
        %v6621 = vadd.f32 0.0, %v6620
        %6622 = vmatmul.f32.gmra.mxu0 %v6562
        %v6623 = vpop.f32.mrf.mxu0
        %v6624 = vadd.f32 0.0, %v6623
        %6625 = vmatmul.f32.gmra.mxu0 %v6565
        %v6626 = vpop.f32.mrf.mxu0
        %v6627 = vadd.f32 0.0, %v6626
        %6628 = vmatmul.f32.gmra.mxu0 %v6568
        %v6629 = vpop.f32.mrf.mxu0
        %v6630 = vadd.f32 0.0, %v6629
        %6631 = vmatmul.f32.gmra.mxu0 %v6571
        %v6632 = vpop.f32.mrf.mxu0
        %v6633 = vadd.f32 0.0, %v6632
        %6634 = vmatmul.f32.gmra.mxu0 %v6574
        %v6635 = vpop.f32.mrf.mxu0
        %v6636 = vadd.f32 0.0, %v6635
        %6637 = vmatmul.f32.gmra.mxu0 %v6577
        %v6638 = vpop.f32.mrf.mxu0
        %v6639 = vadd.f32 0.0, %v6638
        %6640 = vdwg.mxu0
        %v6641 = vadd.f32 %v6467, %v6597
        %v6642 = vadd.f32 %v6468, %v6600
        %v6643 = vadd.f32 %v6469, %v6603
        %v6644 = vadd.f32 %v6470, %v6606
        %v6645 = vadd.f32 %v6471, %v6609
        %v6646 = vadd.f32 %v6472, %v6612
        %v6647 = vadd.f32 %v6473, %v6615
        %v6648 = vadd.f32 %v6474, %v6618
        %v6649 = vadd.f32 %v6475, %v6621
        %v6650 = vadd.f32 %v6476, %v6624
        %v6651 = vadd.f32 %v6477, %v6627
        %v6652 = vadd.f32 %v6478, %v6630
        %v6653 = vadd.f32 %v6479, %v6633
        %v6654 = vadd.f32 %v6480, %v6636
        %v6655 = vadd.f32 %v6481, %v6639
        %v6656 = vld [vmem:[%s6] sm:$0xff]
        %v6657 = vld [vmem:[%s6 + $0x8] sm:$0xff]
        %v6658 = vld [vmem:[%s6 + $0x10] sm:$0xff]
        %v6659 = vld [vmem:[%s6 + $0x18] sm:$0xff]
        %v6660 = vld [vmem:[%s6 + $0x20] sm:$0xff]
        %v6661 = vld [vmem:[%s6 + $0x28] sm:$0xff]
        %v6662 = vld [vmem:[%s6 + $0x30] sm:$0xff]
        %v6663 = vld [vmem:[%s6 + $0x38] sm:$0xff]
        %v6664 = vld [vmem:[%s6 + $0x40] sm:$0xff]
        %v6665 = vld [vmem:[%s6 + $0x48] sm:$0xff]
        %v6666 = vld [vmem:[%s6 + $0x50] sm:$0xff]
        %v6667 = vld [vmem:[%s6 + $0x58] sm:$0xff]
        %v6668 = vld [vmem:[%s6 + $0x60] sm:$0xff]
        %v6669 = vld [vmem:[%s6 + $0x68] sm:$0xff]
        %v6670 = vld [vmem:[%s6 + $0x70] sm:$0xff]
        %6672 = vset.pattern.permute.xlu0 0
        %6673 = vperm.xlu0 %6672, %v6656
        %v6674 = vpop.permute.xlu0 %6673
        %6677 = vset.pattern.permute.xlu0 0
        %6678 = vperm.xlu0 %6677, %v6657
        %v6679 = vpop.permute.xlu0 %6678
        %6682 = vset.pattern.permute.xlu0 0
        %6683 = vperm.xlu0 %6682, %v6658
        %v6684 = vpop.permute.xlu0 %6683
        %6687 = vset.pattern.permute.xlu0 0
        %6688 = vperm.xlu0 %6687, %v6659
        %v6689 = vpop.permute.xlu0 %6688
        %6692 = vset.pattern.permute.xlu0 0
        %6693 = vperm.xlu0 %6692, %v6660
        %v6694 = vpop.permute.xlu0 %6693
        %6697 = vset.pattern.permute.xlu0 0
        %6698 = vperm.xlu0 %6697, %v6661
        %v6699 = vpop.permute.xlu0 %6698
        %6702 = vset.pattern.permute.xlu0 0
        %6703 = vperm.xlu0 %6702, %v6662
        %v6704 = vpop.permute.xlu0 %6703
        %6707 = vset.pattern.permute.xlu0 0
        %6708 = vperm.xlu0 %6707, %v6663
        %v6709 = vpop.permute.xlu0 %6708
        %6712 = vset.pattern.permute.xlu0 0
        %6713 = vperm.xlu0 %6712, %v6664
        %v6714 = vpop.permute.xlu0 %6713
        %6717 = vset.pattern.permute.xlu0 0
        %6718 = vperm.xlu0 %6717, %v6665
        %v6719 = vpop.permute.xlu0 %6718
        %6722 = vset.pattern.permute.xlu0 0
        %6723 = vperm.xlu0 %6722, %v6666
        %v6724 = vpop.permute.xlu0 %6723
        %6727 = vset.pattern.permute.xlu0 0
        %6728 = vperm.xlu0 %6727, %v6667
        %v6729 = vpop.permute.xlu0 %6728
        %6732 = vset.pattern.permute.xlu0 0
        %6733 = vperm.xlu0 %6732, %v6668
        %v6734 = vpop.permute.xlu0 %6733
        %6737 = vset.pattern.permute.xlu0 0
        %6738 = vperm.xlu0 %6737, %v6669
        %v6739 = vpop.permute.xlu0 %6738
        %6742 = vset.pattern.permute.xlu0 0
        %6743 = vperm.xlu0 %6742, %v6670
        %v6744 = vpop.permute.xlu0 %6743
        %v6746 = vadd.f32 %v6641, %v6674
        %v6747 = vadd.f32 %v6642, %v6679
        %v6748 = vadd.f32 %v6643, %v6684
        %v6749 = vadd.f32 %v6644, %v6689
        %v6750 = vadd.f32 %v6645, %v6694
        %v6751 = vadd.f32 %v6646, %v6699
        %v6752 = vadd.f32 %v6647, %v6704
        %v6753 = vadd.f32 %v6648, %v6709
        %v6754 = vadd.f32 %v6649, %v6714
        %v6755 = vadd.f32 %v6650, %v6719
        %v6756 = vadd.f32 %v6651, %v6724
        %v6757 = vadd.f32 %v6652, %v6729
        %v6758 = vadd.f32 %v6653, %v6734
        %v6759 = vadd.f32 %v6654, %v6739
        %v6760 = vadd.f32 %v6655, %v6744
        %v6761 = vmax.f32 %v6746, 0.0
        %v6762 = vmax.f32 %v6747, 0.0
        %v6763 = vmax.f32 %v6748, 0.0
        %v6764 = vmax.f32 %v6749, 0.0
        %v6765 = vmax.f32 %v6750, 0.0
        %v6766 = vmax.f32 %v6751, 0.0
        %v6767 = vmax.f32 %v6752, 0.0
        %v6768 = vmax.f32 %v6753, 0.0
        %v6769 = vmax.f32 %v6754, 0.0
        %v6770 = vmax.f32 %v6755, 0.0
        %v6771 = vmax.f32 %v6756, 0.0
        %v6772 = vmax.f32 %v6757, 0.0
        %v6773 = vmax.f32 %v6758, 0.0
        %v6774 = vmax.f32 %v6759, 0.0
        %v6775 = vmax.f32 %v6760, 0.0
        %v6776 = vld [vmem:[#allocation4] sm:$0xff]
        %v6777 = vld [vmem:[#allocation4 + $0x8] sm:$0xff]
        %v6778 = vld [vmem:[#allocation4 + $0x10] sm:$0xff]
        %v6779 = vld [vmem:[#allocation4 + $0x18] sm:$0xff]
        %v6780 = vld [vmem:[#allocation4 + $0x20] sm:$0xff]
        %v6781 = vld [vmem:[#allocation4 + $0x28] sm:$0xff]
        %v6782 = vld [vmem:[#allocation4 + $0x30] sm:$0xff]
        %v6783 = vld [vmem:[#allocation4 + $0x38] sm:$0xff]
        %v6784 = vld [vmem:[#allocation4 + $0x40] sm:$0xff]
        %v6785 = vld [vmem:[#allocation4 + $0x48] sm:$0xff]
        %v6786 = vld [vmem:[#allocation4 + $0x50] sm:$0xf]
        %v6787 = vld [vmem:[#allocation6] sm:$0xff]
        %v6788 = vld [vmem:[#allocation6 + $0x8] sm:$0xff]
        %v6789 = vld [vmem:[#allocation6 + $0x10] sm:$0xff]
        %v6790 = vld [vmem:[#allocation6 + $0x18] sm:$0xff]
        %v6791 = vld [vmem:[#allocation6 + $0x20] sm:$0xff]
        %v6792 = vld [vmem:[#allocation6 + $0x28] sm:$0xff]
        %v6793 = vld [vmem:[#allocation6 + $0x30] sm:$0xff]
        %v6794 = vld [vmem:[#allocation6 + $0x38] sm:$0xff]
        %v6795 = vld [vmem:[#allocation6 + $0x40] sm:$0xff]
        %v6796 = vld [vmem:[#allocation6 + $0x48] sm:$0xff]
        %v6797 = vld [vmem:[#allocation6 + $0x50] sm:$0xf]
        %6799 = vset.pattern.permute.xlu0 0
        %6800 = vperm.xlu0 %6799, %v6787
        %v6801 = vpop.permute.xlu0 %6800
        %6804 = vset.pattern.permute.xlu0 0
        %6805 = vperm.xlu0 %6804, %v6788
        %v6806 = vpop.permute.xlu0 %6805
        %6809 = vset.pattern.permute.xlu0 0
        %6810 = vperm.xlu0 %6809, %v6789
        %v6811 = vpop.permute.xlu0 %6810
        %6814 = vset.pattern.permute.xlu0 0
        %6815 = vperm.xlu0 %6814, %v6790
        %v6816 = vpop.permute.xlu0 %6815
        %6819 = vset.pattern.permute.xlu0 0
        %6820 = vperm.xlu0 %6819, %v6791
        %v6821 = vpop.permute.xlu0 %6820
        %6824 = vset.pattern.permute.xlu0 0
        %6825 = vperm.xlu0 %6824, %v6792
        %v6826 = vpop.permute.xlu0 %6825
        %6829 = vset.pattern.permute.xlu0 0
        %6830 = vperm.xlu0 %6829, %v6793
        %v6831 = vpop.permute.xlu0 %6830
        %6834 = vset.pattern.permute.xlu0 0
        %6835 = vperm.xlu0 %6834, %v6794
        %v6836 = vpop.permute.xlu0 %6835
        %6839 = vset.pattern.permute.xlu0 0
        %6840 = vperm.xlu0 %6839, %v6795
        %v6841 = vpop.permute.xlu0 %6840
        %6844 = vset.pattern.permute.xlu0 0
        %6845 = vperm.xlu0 %6844, %v6796
        %v6846 = vpop.permute.xlu0 %6845
        %6849 = vset.pattern.permute.xlu0 0
        %6850 = vperm.xlu0 %6849, %v6797
        %v6851 = vpop.permute.xlu0 %6850
        %vm6853 = vcmask 982016
        %v6855 = vsel %vm6853, %v6776, 0
        %v6858 = vsel %vm6853, %v6777, 0
        %v6861 = vsel %vm6853, %v6778, 0
        %v6864 = vsel %vm6853, %v6779, 0
        %v6867 = vsel %vm6853, %v6780, 0
        %v6870 = vsel %vm6853, %v6781, 0
        %v6873 = vsel %vm6853, %v6782, 0
        %v6876 = vsel %vm6853, %v6783, 0
        %v6879 = vsel %vm6853, %v6784, 0
        %v6882 = vsel %vm6853, %v6785, 0
        %v6885 = vsel %vm6853, %v6786, 0
        %6887 = vmatpush.msra.mxu0 0.0
        %6888 = vmatpush.msra.mxu0 %v6775
        %6889 = vmatpush.msra.mxu0 %v6774
        %6890 = vmatpush.msra.mxu0 %v6773
        %6891 = vmatpush.msra.mxu0 %v6772
        %6892 = vmatpush.msra.mxu0 %v6771
        %6893 = vmatpush.msra.mxu0 %v6770
        %6894 = vmatpush.msra.mxu0 %v6769
        %6895 = vmatpush.msra.mxu0 %v6768
        %6896 = vmatpush.msra.mxu0 %v6767
        %6897 = vmatpush.msra.mxu0 %v6766
        %6898 = vmatpush.msra.mxu0 %v6765
        %6899 = vmatpush.msra.mxu0 %v6764
        %6900 = vmatpush.msra.mxu0 %v6763
        %6901 = vmatpush.msra.mxu0 %v6762
        %6902 = vmatpush.msra.mxu0 %v6761
        %6903 = vmatmul.f32.gmra.mxu0 %v6855
        %v6904 = vpop.f32.mrf.mxu0
        %v6905 = vadd.f32 %v6801, %v6904
        %6906 = vmatmul.f32.gmra.mxu0 %v6858
        %v6907 = vpop.f32.mrf.mxu0
        %v6908 = vadd.f32 %v6806, %v6907
        %6909 = vmatmul.f32.gmra.mxu0 %v6861
        %v6910 = vpop.f32.mrf.mxu0
        %v6911 = vadd.f32 %v6811, %v6910
        %6912 = vmatmul.f32.gmra.mxu0 %v6864
        %v6913 = vpop.f32.mrf.mxu0
        %v6914 = vadd.f32 %v6816, %v6913
        %6915 = vmatmul.f32.gmra.mxu0 %v6867
        %v6916 = vpop.f32.mrf.mxu0
        %v6917 = vadd.f32 %v6821, %v6916
        %6918 = vmatmul.f32.gmra.mxu0 %v6870
        %v6919 = vpop.f32.mrf.mxu0
        %v6920 = vadd.f32 %v6826, %v6919
        %6921 = vmatmul.f32.gmra.mxu0 %v6873
        %v6922 = vpop.f32.mrf.mxu0
        %v6923 = vadd.f32 %v6831, %v6922
        %6924 = vmatmul.f32.gmra.mxu0 %v6876
        %v6925 = vpop.f32.mrf.mxu0
        %v6926 = vadd.f32 %v6836, %v6925
        %6927 = vmatmul.f32.gmra.mxu0 %v6879
        %v6928 = vpop.f32.mrf.mxu0
        %v6929 = vadd.f32 %v6841, %v6928
        %6930 = vmatmul.f32.gmra.mxu0 %v6882
        %v6931 = vpop.f32.mrf.mxu0
        %v6932 = vadd.f32 %v6846, %v6931
        %6933 = vmatmul.f32.gmra.mxu0 %v6885
        %v6934 = vpop.f32.mrf.mxu0
        %v6935 = vadd.f32 %v6851, %v6934
        %6936 = vdwg.mxu0
        %v6937 = vmax.f32 %v6905, 0.0
        %v6938 = vmax.f32 %v6908, 0.0
        %v6939 = vmax.f32 %v6911, 0.0
        %v6940 = vmax.f32 %v6914, 0.0
        %v6941 = vmax.f32 %v6917, 0.0
        %v6942 = vmax.f32 %v6920, 0.0
        %v6943 = vmax.f32 %v6923, 0.0
        %v6944 = vmax.f32 %v6926, 0.0
        %v6945 = vmax.f32 %v6929, 0.0
        %v6946 = vmax.f32 %v6932, 0.0
        %v6947 = vmax.f32 %v6935, 0.0
        %v6948 = vld [vmem:[#allocation7] sm:$0xff]
        %v6949 = vld [vmem:[#allocation7 + $0x8] sm:$0x3]
        %v6950 = vld [vmem:[#allocation9] sm:$0xff]
        %v6951 = vld [vmem:[#allocation9 + $0x8] sm:$0x3]
        %6953 = vset.pattern.permute.xlu0 0
        %6954 = vperm.xlu0 %6953, %v6950
        %v6955 = vpop.permute.xlu0 %6954
        %6958 = vset.pattern.permute.xlu0 0
        %6959 = vperm.xlu0 %6958, %v6951
        %v6960 = vpop.permute.xlu0 %6959
        %vm6962 = vcmask 687104
        %v6964 = vsel %vm6962, %v6948, 0
        %v6967 = vsel %vm6962, %v6949, 0
        %v6970 = vsel %vm552, %v6947, 0
        %6972 = vmatpush.msra.mxu0 0.0
        %6973 = vmatpush.msra.mxu0 0.0
        %6974 = vmatpush.msra.mxu0 0.0
        %6975 = vmatpush.msra.mxu0 0.0
        %6976 = vmatpush.msra.mxu0 0.0
        %6977 = vmatpush.msra.mxu0 %v6970
        %6978 = vmatpush.msra.mxu0 %v6946
        %6979 = vmatpush.msra.mxu0 %v6945
        %6980 = vmatpush.msra.mxu0 %v6944
        %6981 = vmatpush.msra.mxu0 %v6943
        %6982 = vmatpush.msra.mxu0 %v6942
        %6983 = vmatpush.msra.mxu0 %v6941
        %6984 = vmatpush.msra.mxu0 %v6940
        %6985 = vmatpush.msra.mxu0 %v6939
        %6986 = vmatpush.msra.mxu0 %v6938
        %6987 = vmatpush.msra.mxu0 %v6937
        %6988 = vmatmul.f32.gmra.mxu0 %v6964
        %v6989 = vpop.f32.mrf.mxu0
        %v6990 = vadd.f32 %v6955, %v6989
        %6991 = vmatmul.f32.gmra.mxu0 %v6967
        %v6992 = vpop.f32.mrf.mxu0
        %v6993 = vadd.f32 %v6960, %v6992
        %6994 = vdwg.mxu0
        %vm6995 = vcmask 31744
        %6996 = vst.msk [vmem:[%s469] sm:$0xff] %vm6995, %v6990
        %vm6997 = vcmask 25600
        %6998 = vst.msk [vmem:[%s469 + $0x8] sm:$0x3] %vm6997, %v6993
        %p6999 = scmp.lt.s32.totalorder %s25, 1
        %s7000 = scalar_select %p6999, %s25, 1
        %s7001 = smul.addr %s7000, 2
        %s7002 = smul.addr %s7001, 8
        %s7003 = scalar_lea.vmem %s11, %s7002
        // Predicated region
        $region85: #{lenet5_forward.1} parent=63 // pred_check
          %p7004 = pneg %p279
        $region86: #{lenet5_forward.1} parent=63 // pred_check_branch
          %7006 = sbr.rel (%p7004) target = $region88
        $region87: #{lenet5_forward.1} parent=63 // pred_region
          _
        $region88: #{lenet5_forward.1} parent=63 // pred_fallthru
          _
      $region64: #{lenet5_forward.1} parent=5 // pred_fallthru
        _
      %p7007 = scmp.le.s32.totalorder 2, %s20
      // Predicated region
      $region89: #{lenet5_forward.1} parent=5 // pred_check
        %p7008 = pneg %p7007
      $region90: #{lenet5_forward.1} parent=5 // pred_check_branch
        %7010 = sbr.rel (%p7008) target = $region92
      $region91: #{lenet5_forward.1} parent=5 // pred_region
        %s7011 = ssub.s32 %s20, 2
        // Predicated region
        $region93: #{lenet5_forward.1} parent=91 // pred_check
          %p7012 = pneg %p285
        $region94: #{lenet5_forward.1} parent=91 // pred_check_branch
          %7014 = sbr.rel (%p7012) target = $region96
        $region95: #{lenet5_forward.1} parent=91 // pred_region
          %p7015 = scmp.lt.s32.totalorder %s26, 1
          %s7016 = scalar_select %p7015, %s26, 1
          %s7017 = smul.addr %s7016, 2
          %s7018 = smul.addr %s7017, 8
          %s7019 = scalar_lea.vmem %s11, %s7018
        $region96: #{lenet5_forward.1} parent=91 // pred_fallthru
          _
      $region92: #{lenet5_forward.1} parent=5 // pred_fallthru
        _
    $region6: #{lenet5_forward.1} parent=1 // loop_footer
      %s24 = sadd.s32 1, %s20
    $region7: #{lenet5_forward.1} parent=1 // loop_footer_branch
      %19 = sbr.rel target = $region3
    $region8: #{lenet5_forward.1} parent=1 // loop_exit
      _
    %7020 = vsyncpa [#allocation3], 1
    %s7021 = scalar_lea.sflag [#allocation3], 1
    %7022 = vsyncpa %s7021, 1
    %7023 = vsyncpa [#allocation5], 1
    %7024 = vsyncpa [#allocation8], 1

</llo_original>
